<compile_context>
chip_gen: v6e
topology: v6e:2x2x1
jax: 0.10.0
libtpu: 0.0.40
codegen_flags: <defaults>
</compile_context>

<pallas_src>
import functools

import numpy as np
import jax
import jax.numpy as jnp
from jax.experimental import pallas as pl
from jax.experimental.pallas import tpu as pltpu

EPS = 1e-5  # PyTorch BatchNorm2d default eps


# --------------------------- in-kernel compute helpers ---------------------------

def _bn_relu(z, mask, gamma, beta, inv_count):
  """Training-mode BatchNorm2d (batch stats over `mask`, two-pass variance) + ReLU.

  z: (rows, C) with zeros outside the valid region; mask: (rows, 1) bool; gamma/beta:
  (1, C); inv_count: 1 / number-of-valid-pixels (compile-time constant).
  """
  mean = jnp.sum(z, axis=0, keepdims=True) * inv_count            # rows reduced first
  centered = jnp.where(mask, z - mean, 0.0)
  var = jnp.sum(centered * centered, axis=0, keepdims=True) * inv_count
  scale = gamma * jax.lax.rsqrt(var + EPS)
  shift = beta - mean * scale
  return jnp.where(mask, jnp.maximum(z * scale + shift, 0.0), 0.0)


def _dw_conv3x3(src_ref, w_ref, n_rows, wc, halo):
  """Depthwise 3x3 as 9 shifted-row VPU MACs.

  src_ref: (halo + n_rows + halo, C) zero-haloed VMEM ref holding the flattened
  (N, Hc, Wc, C) canvas; w_ref: (9, C) per-channel taps, entry [3*di+dj, c].
  """
  acc = None
  for di in range(3):
    for dj in range(3):
      shift = (di - 1) * wc + (dj - 1)
      tap = src_ref[pl.ds(halo + shift, n_rows), :]               # static, zero-filled halo
      term = w_ref[3 * di + dj: 3 * di + dj + 1, :] * tap
      acc = term if acc is None else acc + term
  return acc


# ----------------------------------- kernel -----------------------------------

def double_conv_ds_kernel(x_ref, region_ref, dw1_ref, dw2_ref, pw1_ref, pw2_ref,
                          vec1_ref, vec2_ref, out_ref, a1_halo_ref, *,
                          n_rows, wc, halo, inv_count1, inv_count2):
  cpad = out_ref.shape[1]

  region = region_ref[...]              # (n_rows, 1) int32 ring depth; -1 = padded row
  mask2 = region >= 2                   # offset-2 interior: the original HxW pixels
  mask1 = region >= 1                   # offset-1 interior: the (H+2)x(W+2) pixels
  mask0 = region >= 0                   # full (H+4)x(W+4) canvas (valid rows only)

  dw1_b = vec1_ref[...]                 # (1, cin)
  v2 = vec2_ref[...]                    # (7, cpad) packed channel vectors
  dw2_b, pw1_b, bn1_g, bn1_b, pw2_b, bn2_g, bn2_b = (
      v2[0:1], v2[1:2], v2[2:3], v2[3:4], v2[4:5], v2[5:6], v2[6:7])

  # Stage 1: depthwise 3x3 #1 (pad=1) on the pre-haloed input canvas (VPU, f32).
  y1 = jnp.where(mask2, _dw_conv3x3(x_ref, dw1_ref, n_rows, wc, halo) + dw1_b, 0.0)

  # Stage 2: 1x1 conv #1 with padding=1 -> dense MXU matmul (bf16 in, f32 acc);
  # the pad ring (region == 1) sees zero input, so it receives exactly the bias.
  z1 = jnp.dot(y1.astype(jnp.bfloat16), pw1_ref[...],
               preferred_element_type=jnp.float32)
  z1 = jnp.where(mask1, z1 + pw1_b, 0.0)

  # BatchNorm #1 (batch stats over the N*(H+2)*(W+2) valid pixels) + ReLU.
  a1 = _bn_relu(z1, mask1, bn1_g, bn1_b, inv_count1)

  # Stage 3: depthwise 3x3 #2 (pad=1): stage a1 into a zero-haloed VMEM scratch and
  # repeat the 9 shifted-row MACs.
  a1_halo_ref[pl.ds(0, halo), :] = jnp.zeros((halo, cpad), jnp.float32)
  a1_halo_ref[pl.ds(halo + n_rows, halo), :] = jnp.zeros((halo, cpad), jnp.float32)
  a1_halo_ref[pl.ds(halo, n_rows), :] = a1
  y2 = jnp.where(mask1, _dw_conv3x3(a1_halo_ref, dw2_ref, n_rows, wc, halo) + dw2_b, 0.0)

  # Stage 4: 1x1 conv #2 with padding=1 -> covers the full canvas (border = bias).
  z2 = jnp.dot(y2.astype(jnp.bfloat16), pw2_ref[...],
               preferred_element_type=jnp.float32)
  z2 = jnp.where(mask0, z2 + pw2_b, 0.0)

  # BatchNorm #2 over the full N*(H+4)*(W+4) output + ReLU; single lane-dense store.
  out_ref[...] = _bn_relu(z2, mask0, bn2_g, bn2_b, inv_count2)


# ------------------------- parameter packing (once/params) -------------------------

def _round_up(x, m):
  return ((x + m - 1) // m) * m


def pack_params(params, cpad=128):
  """Pack module parameters into MXU/VPU-friendly slabs. Runs once per parameter set."""
  cin = params["dw1_w"].shape[1]
  cout = params["pw1_w"].shape[1]

  def row(v):  # (1, cout) -> (1, cpad), zero-padded lanes
    v = jnp.asarray(v, jnp.float32).reshape(1, -1)
    return jnp.pad(v, ((0, 0), (0, cpad - v.shape[1])))

  return {
      "cin": cin, "cout": cout, "cpad": cpad,
      "dw1_w": jnp.asarray(params["dw1_w"], jnp.float32),                      # (9, cin)
      "dw1_b": jnp.asarray(params["dw1_b"], jnp.float32).reshape(1, cin),      # (1, cin)
      "dw2_w": jnp.pad(jnp.asarray(params["dw2_w"], jnp.float32),
                       ((0, 0), (0, cpad - cout))),                            # (9, cpad)
      # bf16 MXU operands; zero-padded channels stay exactly zero downstream
      # (padded gamma/beta/bias lanes are zero too).
      "pw1_w": jnp.pad(jnp.asarray(params["pw1_w"], jnp.float32),
                       ((0, 0), (0, cpad - cout))).astype(jnp.bfloat16),       # (cin, cpad)
      "pw2_w": jnp.pad(jnp.asarray(params["pw2_w"], jnp.float32),
                       ((0, cpad - cout), (0, cpad - cout))).astype(jnp.bfloat16),
      "vec2": jnp.concatenate([row(params["dw2_b"]), row(params["pw1_b"]),
                               row(params["bn1_g"]), row(params["bn1_b"]),
                               row(params["pw2_b"]), row(params["bn2_g"]),
                               row(params["bn2_b"])], axis=0),                 # (7, cpad)
  }


# ---------------------------------- wrapper ----------------------------------

def double_conv_ds(x_nchw, packed):
  """DoubleConv_DS forward. (N, Cin, H, W) f32 -> (N, Cout, H+4, W+4) f32."""
  N, cin, H, W = x_nchw.shape
  cout, cpad = packed["cout"], packed["cpad"]
  Hc, Wc = H + 4, W + 4
  rows = N * Hc * Wc
  rows_pad = _round_up(rows, 16)          # dense bf16/f32 sublane packing
  halo = _round_up(Wc + 1, 8)             # max |row shift| of a 3x3 tap, sublane aligned

  # ---- layout: NCHW -> zero-haloed, flattened (rows, Cin) canvas ----
  # TODO(synk): fold this transpose/pad into the kernel to avoid the HBM round trip.
  x_nhwc = jnp.transpose(x_nchw, (0, 2, 3, 1)).astype(jnp.float32)
  canvas = jnp.pad(x_nhwc, ((0, 0), (2, 2), (2, 2), (0, 0))).reshape(rows, cin)
  canvas = jnp.pad(canvas, ((halo, halo + rows_pad - rows), (0, 0)))

  # ---- tiny (rows, 1) "interior ring depth" column -> in-kernel masks (~3 KiB) ----
  r = np.arange(rows_pad)
  h = (r // Wc) % Hc
  w = r % Wc
  ring = np.minimum(np.minimum(h, Hc - 1 - h), np.minimum(w, Wc - 1 - w))
  ring = np.where(r < rows, ring, -1).astype(np.int32).reshape(rows_pad, 1)
  region = jnp.asarray(ring)

  kernel = functools.partial(
      double_conv_ds_kernel, n_rows=rows_pad, wc=Wc, halo=halo,
      inv_count1=1.0 / float(N * (H + 2) * (W + 2)),
      inv_count2=1.0 / float(N * Hc * Wc))

  vmem = pl.BlockSpec(memory_space=pltpu.MemorySpace.VMEM)
  out2d = pl.pallas_call(
      kernel,
      out_shape=jax.ShapeDtypeStruct((rows_pad, cpad), jnp.float32),
      in_specs=[vmem] * 8,
      out_specs=vmem,
      scratch_shapes=[pltpu.VMEM((rows_pad + 2 * halo, cpad), jnp.float32)],
  )(canvas, region, packed["dw1_w"], packed["dw2_w"], packed["pw1_w"],
    packed["pw2_w"], packed["dw1_b"], packed["vec2"])

  out = out2d[:rows, :cout].reshape(N, Hc, Wc, cout)
  return jnp.transpose(out, (0, 3, 1, 2))  # back to NCHW


# --------------------------- deterministic parameters ---------------------------

def init_params(key, cin, cout):
  ks = jax.random.split(key, 8)
  p = {}
  # depthwise 3x3 weights stored as (9, C): entry [3*di+dj, c] == torch weight[c, 0, di, dj]
  p["dw1_w"] = 0.2 * jax.random.normal(ks[0], (9, cin), jnp.float32)
  p["dw1_b"] = 0.1 * jax.random.normal(ks[1], (1, cin), jnp.float32)
  # pointwise 1x1 weights stored as (cin, cout): entry [c_in, c_out]
  p["pw1_w"] = 0.2 * jax.random.normal(ks[2], (cin, cout), jnp.float32)
  p["pw1_b"] = 0.1 * jax.random.normal(ks[3], (1, cout), jnp.float32)
  p["bn1_g"] = jnp.ones((1, cout), jnp.float32)   # PyTorch BN default weight=1
  p["bn1_b"] = jnp.zeros((1, cout), jnp.float32)  # PyTorch BN default bias=0
  p["dw2_w"] = 0.2 * jax.random.normal(ks[4], (9, cout), jnp.float32)
  p["dw2_b"] = 0.1 * jax.random.normal(ks[5], (1, cout), jnp.float32)
  p["pw2_w"] = 0.2 * jax.random.normal(ks[6], (cout, cout), jnp.float32)
  p["pw2_b"] = 0.1 * jax.random.normal(ks[7], (1, cout), jnp.float32)
  p["bn2_g"] = jnp.ones((1, cout), jnp.float32)
  p["bn2_b"] = jnp.zeros((1, cout), jnp.float32)
  return p


# ------------------------------ plain-JAX reference ------------------------------

def reference(x_nchw, p):
  x = jnp.transpose(x_nchw, (0, 2, 3, 1)).astype(jnp.float32)
  cin = x.shape[-1]
  dn = ("NHWC", "HWIO", "NHWC")

  def dw(x, w9, b, C):
    w = w9.reshape(3, 3, 1, C)
    y = jax.lax.conv_general_dilated(x, w, (1, 1), ((1, 1), (1, 1)),
                                     dimension_numbers=dn, feature_group_count=C)
    return y + b.reshape(1, 1, 1, C)

  def pw(x, w, b):
    ci, co = w.shape
    y = jax.lax.conv_general_dilated(x, w.reshape(1, 1, ci, co), (1, 1),
                                     ((1, 1), (1, 1)), dimension_numbers=dn)
    return y + b.reshape(1, 1, 1, co)

  def bn_relu(z, g, bt):
    m = jnp.mean(z, axis=(0, 1, 2), keepdims=True)
    v = jnp.mean((z - m) ** 2, axis=(0, 1, 2), keepdims=True)
    return jnp.maximum((z - m) * jax.lax.rsqrt(v + EPS) * g.reshape(1, 1, 1, -1)
                       + bt.reshape(1, 1, 1, -1), 0.0)

  y = dw(x, p["dw1_w"], p["dw1_b"], cin)
  y = pw(y, p["pw1_w"], p["pw1_b"])
  y = bn_relu(y, p["bn1_g"], p["bn1_b"])
  cout = p["pw1_w"].shape[1]
  y = dw(y, p["dw2_w"], p["dw2_b"], cout)
  y = pw(y, p["pw2_w"], p["pw2_b"])
  y = bn_relu(y, p["bn2_g"], p["bn2_b"])
  return jnp.transpose(y, (0, 3, 1, 2))


# ----------------------------------- main -----------------------------------

if __name__ == "__main__":
  key = jax.random.PRNGKey(0)
  kx, kp = jax.random.split(key)

  N, Cin, H, W = 2, 4, 16, 16
  Cout = 8

  x = jax.random.normal(kx, (N, Cin, H, W), jnp.float32)
  params = init_params(kp, Cin, Cout)
  packed = pack_params(params)            # host-side packing: once per parameter set

  fwd = jax.jit(lambda xx: double_conv_ds(xx, packed))
  out = jax.block_until_ready(fwd(x))
  assert out.shape == (N, Cout, H + 4, W + 4), out.shape

  ref = reference(x, params)
  max_err = float(jnp.max(jnp.abs(out - ref)))
  # bf16 MXU operands (per perf review) -> looser tolerance than a pure-f32 pipeline.
  if max_err > 5e-2:
    raise AssertionError(f"kernel mismatch vs reference, max abs err = {max_err}")

  print("KERNEL_OK")
</pallas_src>

<mosaic_0001>
module attributes {stable_mosaic.version = 11 : i64} {
  func.func @double_conv_ds_kernel(%arg0: memref<848x4xf32, #tpu.memory_space<vmem>>, %arg1: memref<800x1xi32, #tpu.memory_space<vmem>>, %arg2: memref<9x4xf32, #tpu.memory_space<vmem>>, %arg3: memref<9x128xf32, #tpu.memory_space<vmem>>, %arg4: memref<4x128xbf16, #tpu.memory_space<vmem>>, %arg5: memref<128x128xbf16, #tpu.memory_space<vmem>>, %arg6: memref<1x4xf32, #tpu.memory_space<vmem>>, %arg7: memref<7x128xf32, #tpu.memory_space<vmem>>, %arg8: memref<800x128xf32, #tpu.memory_space<vmem>>, %arg9: memref<848x128xf32, #tpu.memory_space<vmem>>) attributes {dimension_semantics = [], scalar_prefetch = 0 : i64, scratch_operands = 1 : i64, tpu.core_type = #tpu.core_type<tc>} {
    %c0 = arith.constant 0 : index
    %c0_0 = arith.constant 0 : index
    %0 = vector.load %arg1[%c0, %c0_0] : memref<800x1xi32, #tpu.memory_space<vmem>>, vector<800x1xi32>
    %c2_i32 = arith.constant 2 : i32
    %1 = vector.broadcast %c2_i32 : i32 to vector<800x1xi32>
    %2 = arith.cmpi sge, %0, %1 : vector<800x1xi32>
    %c1_i32 = arith.constant 1 : i32
    %3 = vector.broadcast %c1_i32 : i32 to vector<800x1xi32>
    %4 = arith.cmpi sge, %0, %3 : vector<800x1xi32>
    %c0_i32 = arith.constant 0 : i32
    %5 = vector.broadcast %c0_i32 : i32 to vector<800x1xi32>
    %6 = arith.cmpi sge, %0, %5 : vector<800x1xi32>
    %c0_1 = arith.constant 0 : index
    %c0_2 = arith.constant 0 : index
    %7 = vector.load %arg6[%c0_1, %c0_2] : memref<1x4xf32, #tpu.memory_space<vmem>>, vector<1x4xf32>
    %c0_3 = arith.constant 0 : index
    %c0_4 = arith.constant 0 : index
    %8 = vector.load %arg7[%c0_3, %c0_4] : memref<7x128xf32, #tpu.memory_space<vmem>>, vector<7x128xf32>
    %9 = vector.extract_strided_slice %8 {offsets = [0, 0], sizes = [1, 128], strides = [1, 1]} : vector<7x128xf32> to vector<1x128xf32>
    %10 = vector.extract_strided_slice %8 {offsets = [1, 0], sizes = [1, 128], strides = [1, 1]} : vector<7x128xf32> to vector<1x128xf32>
    %11 = vector.extract_strided_slice %8 {offsets = [2, 0], sizes = [1, 128], strides = [1, 1]} : vector<7x128xf32> to vector<1x128xf32>
    %12 = vector.extract_strided_slice %8 {offsets = [3, 0], sizes = [1, 128], strides = [1, 1]} : vector<7x128xf32> to vector<1x128xf32>
    %13 = vector.extract_strided_slice %8 {offsets = [4, 0], sizes = [1, 128], strides = [1, 1]} : vector<7x128xf32> to vector<1x128xf32>
    %14 = vector.extract_strided_slice %8 {offsets = [5, 0], sizes = [1, 128], strides = [1, 1]} : vector<7x128xf32> to vector<1x128xf32>
    %15 = vector.extract_strided_slice %8 {offsets = [6, 0], sizes = [1, 128], strides = [1, 1]} : vector<7x128xf32> to vector<1x128xf32>
    %c3 = arith.constant 3 : index
    %c0_5 = arith.constant 0 : index
    %16 = vector.load %arg0[%c3, %c0_5] : memref<848x4xf32, #tpu.memory_space<vmem>>, vector<800x4xf32>
    %c0_6 = arith.constant 0 : index
    %c0_7 = arith.constant 0 : index
    %17 = vector.load %arg2[%c0_6, %c0_7] : memref<9x4xf32, #tpu.memory_space<vmem>>, vector<1x4xf32>
    %18 = vector.broadcast %17 : vector<1x4xf32> to vector<800x4xf32>
    %19 = arith.mulf %18, %16 : vector<800x4xf32>
    %c4 = arith.constant 4 : index
    %c0_8 = arith.constant 0 : index
    %20 = vector.load %arg0[%c4, %c0_8] : memref<848x4xf32, #tpu.memory_space<vmem>>, vector<800x4xf32>
    %c1 = arith.constant 1 : index
    %c0_9 = arith.constant 0 : index
    %21 = vector.load %arg2[%c1, %c0_9] : memref<9x4xf32, #tpu.memory_space<vmem>>, vector<1x4xf32>
    %22 = vector.broadcast %21 : vector<1x4xf32> to vector<800x4xf32>
    %23 = arith.mulf %22, %20 : vector<800x4xf32>
    %24 = arith.addf %19, %23 : vector<800x4xf32>
    %c5 = arith.constant 5 : index
    %c0_10 = arith.constant 0 : index
    %25 = vector.load %arg0[%c5, %c0_10] : memref<848x4xf32, #tpu.memory_space<vmem>>, vector<800x4xf32>
    %c2 = arith.constant 2 : index
    %c0_11 = arith.constant 0 : index
    %26 = vector.load %arg2[%c2, %c0_11] : memref<9x4xf32, #tpu.memory_space<vmem>>, vector<1x4xf32>
    %27 = vector.broadcast %26 : vector<1x4xf32> to vector<800x4xf32>
    %28 = arith.mulf %27, %25 : vector<800x4xf32>
    %29 = arith.addf %24, %28 : vector<800x4xf32>
    %c23 = arith.constant 23 : index
    %c0_12 = arith.constant 0 : index
    %30 = vector.load %arg0[%c23, %c0_12] : memref<848x4xf32, #tpu.memory_space<vmem>>, vector<800x4xf32>
    %c3_13 = arith.constant 3 : index
    %c0_14 = arith.constant 0 : index
    %31 = vector.load %arg2[%c3_13, %c0_14] : memref<9x4xf32, #tpu.memory_space<vmem>>, vector<1x4xf32>
    %32 = vector.broadcast %31 : vector<1x4xf32> to vector<800x4xf32>
    %33 = arith.mulf %32, %30 : vector<800x4xf32>
    %34 = arith.addf %29, %33 : vector<800x4xf32>
    %c24 = arith.constant 24 : index
    %c0_15 = arith.constant 0 : index
    %35 = vector.load %arg0[%c24, %c0_15] : memref<848x4xf32, #tpu.memory_space<vmem>>, vector<800x4xf32>
    %c4_16 = arith.constant 4 : index
    %c0_17 = arith.constant 0 : index
    %36 = vector.load %arg2[%c4_16, %c0_17] : memref<9x4xf32, #tpu.memory_space<vmem>>, vector<1x4xf32>
    %37 = vector.broadcast %36 : vector<1x4xf32> to vector<800x4xf32>
    %38 = arith.mulf %37, %35 : vector<800x4xf32>
    %39 = arith.addf %34, %38 : vector<800x4xf32>
    %c25 = arith.constant 25 : index
    %c0_18 = arith.constant 0 : index
    %40 = vector.load %arg0[%c25, %c0_18] : memref<848x4xf32, #tpu.memory_space<vmem>>, vector<800x4xf32>
    %c5_19 = arith.constant 5 : index
    %c0_20 = arith.constant 0 : index
    %41 = vector.load %arg2[%c5_19, %c0_20] : memref<9x4xf32, #tpu.memory_space<vmem>>, vector<1x4xf32>
    %42 = vector.broadcast %41 : vector<1x4xf32> to vector<800x4xf32>
    %43 = arith.mulf %42, %40 : vector<800x4xf32>
    %44 = arith.addf %39, %43 : vector<800x4xf32>
    %c43 = arith.constant 43 : index
    %c0_21 = arith.constant 0 : index
    %45 = vector.load %arg0[%c43, %c0_21] : memref<848x4xf32, #tpu.memory_space<vmem>>, vector<800x4xf32>
    %c6 = arith.constant 6 : index
    %c0_22 = arith.constant 0 : index
    %46 = vector.load %arg2[%c6, %c0_22] : memref<9x4xf32, #tpu.memory_space<vmem>>, vector<1x4xf32>
    %47 = vector.broadcast %46 : vector<1x4xf32> to vector<800x4xf32>
    %48 = arith.mulf %47, %45 : vector<800x4xf32>
    %49 = arith.addf %44, %48 : vector<800x4xf32>
    %c44 = arith.constant 44 : index
    %c0_23 = arith.constant 0 : index
    %50 = vector.load %arg0[%c44, %c0_23] : memref<848x4xf32, #tpu.memory_space<vmem>>, vector<800x4xf32>
    %c7 = arith.constant 7 : index
    %c0_24 = arith.constant 0 : index
    %51 = vector.load %arg2[%c7, %c0_24] : memref<9x4xf32, #tpu.memory_space<vmem>>, vector<1x4xf32>
    %52 = vector.broadcast %51 : vector<1x4xf32> to vector<800x4xf32>
    %53 = arith.mulf %52, %50 : vector<800x4xf32>
    %54 = arith.addf %49, %53 : vector<800x4xf32>
    %c45 = arith.constant 45 : index
    %c0_25 = arith.constant 0 : index
    %55 = vector.load %arg0[%c45, %c0_25] : memref<848x4xf32, #tpu.memory_space<vmem>>, vector<800x4xf32>
    %c8 = arith.constant 8 : index
    %c0_26 = arith.constant 0 : index
    %56 = vector.load %arg2[%c8, %c0_26] : memref<9x4xf32, #tpu.memory_space<vmem>>, vector<1x4xf32>
    %57 = vector.broadcast %56 : vector<1x4xf32> to vector<800x4xf32>
    %58 = arith.mulf %57, %55 : vector<800x4xf32>
    %59 = arith.addf %54, %58 : vector<800x4xf32>
    %60 = vector.broadcast %7 : vector<1x4xf32> to vector<800x4xf32>
    %61 = arith.addf %59, %60 : vector<800x4xf32>
    %cst = arith.constant 0.000000e+00 : f32
    %62 = vector.shape_cast %2 : vector<800x1xi1> to vector<800x1xi1>
    %63 = vector.broadcast %62 : vector<800x1xi1> to vector<800x4xi1>
    %64 = vector.broadcast %cst : f32 to vector<800x4xf32>
    %65 = arith.select %63, %61, %64 : vector<800x4xi1>, vector<800x4xf32>
    %66 = arith.truncf %65 : vector<800x4xf32> to vector<800x4xbf16>
    %c0_27 = arith.constant 0 : index
    %c0_28 = arith.constant 0 : index
    %67 = vector.load %arg4[%c0_27, %c0_28] : memref<4x128xbf16, #tpu.memory_space<vmem>>, vector<4x128xbf16>
    %cst_29 = arith.constant dense<0.000000e+00> : vector<800x128xf32>
    %68 = tpu.matmul %66, %67, %cst_29 {dimension_numbers = #tpu.dot_dimension_numbers<[1], [0], [0], [1], [0, 0, 1, 1], [], []>} : vector<800x4xbf16>, vector<4x128xbf16>, vector<800x128xf32> -> vector<800x128xf32>
    %69 = vector.broadcast %10 : vector<1x128xf32> to vector<800x128xf32>
    %70 = arith.addf %68, %69 : vector<800x128xf32>
    %cst_30 = arith.constant 0.000000e+00 : f32
    %71 = vector.shape_cast %4 : vector<800x1xi1> to vector<800x1xi1>
    %72 = vector.broadcast %71 : vector<800x1xi1> to vector<800x128xi1>
    %73 = vector.broadcast %cst_30 : f32 to vector<800x128xf32>
    %74 = arith.select %72, %70, %73 : vector<800x128xi1>, vector<800x128xf32>
    %cst_31 = arith.constant dense<0.000000e+00> : vector<128xf32>
    %75 = vector.multi_reduction <add>, %74, %cst_31 [0] : vector<800x128xf32> to vector<128xf32>
    %76 = vector.shape_cast %75 : vector<128xf32> to vector<1x128xf32>
    %cst_32 = arith.constant 0.00154320989 : f32
    %77 = vector.broadcast %cst_32 : f32 to vector<1x128xf32>
    %78 = arith.mulf %76, %77 : vector<1x128xf32>
    %79 = vector.broadcast %78 : vector<1x128xf32> to vector<800x128xf32>
    %80 = arith.subf %74, %79 : vector<800x128xf32>
    %cst_33 = arith.constant 0.000000e+00 : f32
    %81 = vector.shape_cast %4 : vector<800x1xi1> to vector<800x1xi1>
    %82 = vector.broadcast %81 : vector<800x1xi1> to vector<800x128xi1>
    %83 = vector.broadcast %cst_33 : f32 to vector<800x128xf32>
    %84 = arith.select %82, %80, %83 : vector<800x128xi1>, vector<800x128xf32>
    %85 = arith.mulf %84, %84 : vector<800x128xf32>
    %cst_34 = arith.constant dense<0.000000e+00> : vector<128xf32>
    %86 = vector.multi_reduction <add>, %85, %cst_34 [0] : vector<800x128xf32> to vector<128xf32>
    %87 = vector.shape_cast %86 : vector<128xf32> to vector<1x128xf32>
    %cst_35 = arith.constant 0.00154320989 : f32
    %88 = vector.broadcast %cst_35 : f32 to vector<1x128xf32>
    %89 = arith.mulf %87, %88 : vector<1x128xf32>
    %cst_36 = arith.constant 9.99999974E-6 : f32
    %90 = vector.broadcast %cst_36 : f32 to vector<1x128xf32>
    %91 = arith.addf %89, %90 : vector<1x128xf32>
    %92 = math.rsqrt %91 : vector<1x128xf32>
    %93 = arith.mulf %11, %92 : vector<1x128xf32>
    %94 = arith.mulf %78, %93 : vector<1x128xf32>
    %95 = arith.subf %12, %94 : vector<1x128xf32>
    %96 = vector.broadcast %93 : vector<1x128xf32> to vector<800x128xf32>
    %97 = arith.mulf %74, %96 : vector<800x128xf32>
    %98 = vector.broadcast %95 : vector<1x128xf32> to vector<800x128xf32>
    %99 = arith.addf %97, %98 : vector<800x128xf32>
    %cst_37 = arith.constant 0.000000e+00 : f32
    %100 = vector.broadcast %cst_37 : f32 to vector<800x128xf32>
    %101 = arith.maximumf %99, %100 : vector<800x128xf32>
    %cst_38 = arith.constant 0.000000e+00 : f32
    %102 = vector.shape_cast %4 : vector<800x1xi1> to vector<800x1xi1>
    %103 = vector.broadcast %102 : vector<800x1xi1> to vector<800x128xi1>
    %104 = vector.broadcast %cst_38 : f32 to vector<800x128xf32>
    %105 = arith.select %103, %101, %104 : vector<800x128xi1>, vector<800x128xf32>
    %cst_39 = arith.constant 0.000000e+00 : f32
    %106 = vector.broadcast %cst_39 : f32 to vector<24x128xf32>
    %c0_40 = arith.constant 0 : index
    %c0_41 = arith.constant 0 : index
    %107 = vector.load %arg9[%c0_40, %c0_41] : memref<848x128xf32, #tpu.memory_space<vmem>>, vector<24x128xf32>
    tpu.vector_store %arg9[%c0_40, %c0_41], %106 {strides = array<i32>} : memref<848x128xf32, #tpu.memory_space<vmem>>, vector<24x128xf32>,
    %cst_42 = arith.constant 0.000000e+00 : f32
    %108 = vector.broadcast %cst_42 : f32 to vector<24x128xf32>
    %c824 = arith.constant 824 : index
    %c0_43 = arith.constant 0 : index
    %109 = vector.load %arg9[%c824, %c0_43] : memref<848x128xf32, #tpu.memory_space<vmem>>, vector<24x128xf32>
    tpu.vector_store %arg9[%c824, %c0_43], %108 {strides = array<i32>} : memref<848x128xf32, #tpu.memory_space<vmem>>, vector<24x128xf32>,
    %c24_44 = arith.constant 24 : index
    %c0_45 = arith.constant 0 : index
    %110 = vector.load %arg9[%c24_44, %c0_45] : memref<848x128xf32, #tpu.memory_space<vmem>>, vector<800x128xf32>
    tpu.vector_store %arg9[%c24_44, %c0_45], %105 {strides = array<i32>} : memref<848x128xf32, #tpu.memory_space<vmem>>, vector<800x128xf32>,
    %c3_46 = arith.constant 3 : index
    %c0_47 = arith.constant 0 : index
    %111 = vector.load %arg9[%c3_46, %c0_47] : memref<848x128xf32, #tpu.memory_space<vmem>>, vector<800x128xf32>
    %c0_48 = arith.constant 0 : index
    %c0_49 = arith.constant 0 : index
    %112 = vector.load %arg3[%c0_48, %c0_49] : memref<9x128xf32, #tpu.memory_space<vmem>>, vector<1x128xf32>
    %113 = vector.broadcast %112 : vector<1x128xf32> to vector<800x128xf32>
    %114 = arith.mulf %113, %111 : vector<800x128xf32>
    %c4_50 = arith.constant 4 : index
    %c0_51 = arith.constant 0 : index
    %115 = vector.load %arg9[%c4_50, %c0_51] : memref<848x128xf32, #tpu.memory_space<vmem>>, vector<800x128xf32>
    %c1_52 = arith.constant 1 : index
    %c0_53 = arith.constant 0 : index
    %116 = vector.load %arg3[%c1_52, %c0_53] : memref<9x128xf32, #tpu.memory_space<vmem>>, vector<1x128xf32>
    %117 = vector.broadcast %116 : vector<1x128xf32> to vector<800x128xf32>
    %118 = arith.mulf %117, %115 : vector<800x128xf32>
    %119 = arith.addf %114, %118 : vector<800x128xf32>
    %c5_54 = arith.constant 5 : index
    %c0_55 = arith.constant 0 : index
    %120 = vector.load %arg9[%c5_54, %c0_55] : memref<848x128xf32, #tpu.memory_space<vmem>>, vector<800x128xf32>
    %c2_56 = arith.constant 2 : index
    %c0_57 = arith.constant 0 : index
    %121 = vector.load %arg3[%c2_56, %c0_57] : memref<9x128xf32, #tpu.memory_space<vmem>>, vector<1x128xf32>
    %122 = vector.broadcast %121 : vector<1x128xf32> to vector<800x128xf32>
    %123 = arith.mulf %122, %120 : vector<800x128xf32>
    %124 = arith.addf %119, %123 : vector<800x128xf32>
    %c23_58 = arith.constant 23 : index
    %c0_59 = arith.constant 0 : index
    %125 = vector.load %arg9[%c23_58, %c0_59] : memref<848x128xf32, #tpu.memory_space<vmem>>, vector<800x128xf32>
    %c3_60 = arith.constant 3 : index
    %c0_61 = arith.constant 0 : index
    %126 = vector.load %arg3[%c3_60, %c0_61] : memref<9x128xf32, #tpu.memory_space<vmem>>, vector<1x128xf32>
    %127 = vector.broadcast %126 : vector<1x128xf32> to vector<800x128xf32>
    %128 = arith.mulf %127, %125 : vector<800x128xf32>
    %129 = arith.addf %124, %128 : vector<800x128xf32>
    %c24_62 = arith.constant 24 : index
    %c0_63 = arith.constant 0 : index
    %130 = vector.load %arg9[%c24_62, %c0_63] : memref<848x128xf32, #tpu.memory_space<vmem>>, vector<800x128xf32>
    %c4_64 = arith.constant 4 : index
    %c0_65 = arith.constant 0 : index
    %131 = vector.load %arg3[%c4_64, %c0_65] : memref<9x128xf32, #tpu.memory_space<vmem>>, vector<1x128xf32>
    %132 = vector.broadcast %131 : vector<1x128xf32> to vector<800x128xf32>
    %133 = arith.mulf %132, %130 : vector<800x128xf32>
    %134 = arith.addf %129, %133 : vector<800x128xf32>
    %c25_66 = arith.constant 25 : index
    %c0_67 = arith.constant 0 : index
    %135 = vector.load %arg9[%c25_66, %c0_67] : memref<848x128xf32, #tpu.memory_space<vmem>>, vector<800x128xf32>
    %c5_68 = arith.constant 5 : index
    %c0_69 = arith.constant 0 : index
    %136 = vector.load %arg3[%c5_68, %c0_69] : memref<9x128xf32, #tpu.memory_space<vmem>>, vector<1x128xf32>
    %137 = vector.broadcast %136 : vector<1x128xf32> to vector<800x128xf32>
    %138 = arith.mulf %137, %135 : vector<800x128xf32>
    %139 = arith.addf %134, %138 : vector<800x128xf32>
    %c43_70 = arith.constant 43 : index
    %c0_71 = arith.constant 0 : index
    %140 = vector.load %arg9[%c43_70, %c0_71] : memref<848x128xf32, #tpu.memory_space<vmem>>, vector<800x128xf32>
    %c6_72 = arith.constant 6 : index
    %c0_73 = arith.constant 0 : index
    %141 = vector.load %arg3[%c6_72, %c0_73] : memref<9x128xf32, #tpu.memory_space<vmem>>, vector<1x128xf32>
    %142 = vector.broadcast %141 : vector<1x128xf32> to vector<800x128xf32>
    %143 = arith.mulf %142, %140 : vector<800x128xf32>
    %144 = arith.addf %139, %143 : vector<800x128xf32>
    %c44_74 = arith.constant 44 : index
    %c0_75 = arith.constant 0 : index
    %145 = vector.load %arg9[%c44_74, %c0_75] : memref<848x128xf32, #tpu.memory_space<vmem>>, vector<800x128xf32>
    %c7_76 = arith.constant 7 : index
    %c0_77 = arith.constant 0 : index
    %146 = vector.load %arg3[%c7_76, %c0_77] : memref<9x128xf32, #tpu.memory_space<vmem>>, vector<1x128xf32>
    %147 = vector.broadcast %146 : vector<1x128xf32> to vector<800x128xf32>
    %148 = arith.mulf %147, %145 : vector<800x128xf32>
    %149 = arith.addf %144, %148 : vector<800x128xf32>
    %c45_78 = arith.constant 45 : index
    %c0_79 = arith.constant 0 : index
    %150 = vector.load %arg9[%c45_78, %c0_79] : memref<848x128xf32, #tpu.memory_space<vmem>>, vector<800x128xf32>
    %c8_80 = arith.constant 8 : index
    %c0_81 = arith.constant 0 : index
    %151 = vector.load %arg3[%c8_80, %c0_81] : memref<9x128xf32, #tpu.memory_space<vmem>>, vector<1x128xf32>
    %152 = vector.broadcast %151 : vector<1x128xf32> to vector<800x128xf32>
    %153 = arith.mulf %152, %150 : vector<800x128xf32>
    %154 = arith.addf %149, %153 : vector<800x128xf32>
    %155 = vector.broadcast %9 : vector<1x128xf32> to vector<800x128xf32>
    %156 = arith.addf %154, %155 : vector<800x128xf32>
    %cst_82 = arith.constant 0.000000e+00 : f32
    %157 = vector.shape_cast %4 : vector<800x1xi1> to vector<800x1xi1>
    %158 = vector.broadcast %157 : vector<800x1xi1> to vector<800x128xi1>
    %159 = vector.broadcast %cst_82 : f32 to vector<800x128xf32>
    %160 = arith.select %158, %156, %159 : vector<800x128xi1>, vector<800x128xf32>
    %161 = arith.truncf %160 : vector<800x128xf32> to vector<800x128xbf16>
    %c0_83 = arith.constant 0 : index
    %c0_84 = arith.constant 0 : index
    %162 = vector.load %arg5[%c0_83, %c0_84] : memref<128x128xbf16, #tpu.memory_space<vmem>>, vector<128x128xbf16>
    %cst_85 = arith.constant dense<0.000000e+00> : vector<800x128xf32>
    %163 = tpu.matmul %161, %162, %cst_85 {dimension_numbers = #tpu.dot_dimension_numbers<[1], [0], [0], [1], [0, 0, 1, 1], [], []>} : vector<800x128xbf16>, vector<128x128xbf16>, vector<800x128xf32> -> vector<800x128xf32>
    %164 = vector.broadcast %13 : vector<1x128xf32> to vector<800x128xf32>
    %165 = arith.addf %163, %164 : vector<800x128xf32>
    %cst_86 = arith.constant 0.000000e+00 : f32
    %166 = vector.shape_cast %6 : vector<800x1xi1> to vector<800x1xi1>
    %167 = vector.broadcast %166 : vector<800x1xi1> to vector<800x128xi1>
    %168 = vector.broadcast %cst_86 : f32 to vector<800x128xf32>
    %169 = arith.select %167, %165, %168 : vector<800x128xi1>, vector<800x128xf32>
    %cst_87 = arith.constant dense<0.000000e+00> : vector<128xf32>
    %170 = vector.multi_reduction <add>, %169, %cst_87 [0] : vector<800x128xf32> to vector<128xf32>
    %171 = vector.shape_cast %170 : vector<128xf32> to vector<1x128xf32>
    %cst_88 = arith.constant 1.250000e-03 : f32
    %172 = vector.broadcast %cst_88 : f32 to vector<1x128xf32>
    %173 = arith.mulf %171, %172 : vector<1x128xf32>
    %174 = vector.broadcast %173 : vector<1x128xf32> to vector<800x128xf32>
    %175 = arith.subf %169, %174 : vector<800x128xf32>
    %cst_89 = arith.constant 0.000000e+00 : f32
    %176 = vector.shape_cast %6 : vector<800x1xi1> to vector<800x1xi1>
    %177 = vector.broadcast %176 : vector<800x1xi1> to vector<800x128xi1>
    %178 = vector.broadcast %cst_89 : f32 to vector<800x128xf32>
    %179 = arith.select %177, %175, %178 : vector<800x128xi1>, vector<800x128xf32>
    %180 = arith.mulf %179, %179 : vector<800x128xf32>
    %cst_90 = arith.constant dense<0.000000e+00> : vector<128xf32>
    %181 = vector.multi_reduction <add>, %180, %cst_90 [0] : vector<800x128xf32> to vector<128xf32>
    %182 = vector.shape_cast %181 : vector<128xf32> to vector<1x128xf32>
    %cst_91 = arith.constant 1.250000e-03 : f32
    %183 = vector.broadcast %cst_91 : f32 to vector<1x128xf32>
    %184 = arith.mulf %182, %183 : vector<1x128xf32>
    %cst_92 = arith.constant 9.99999974E-6 : f32
    %185 = vector.broadcast %cst_92 : f32 to vector<1x128xf32>
    %186 = arith.addf %184, %185 : vector<1x128xf32>
    %187 = math.rsqrt %186 : vector<1x128xf32>
    %188 = arith.mulf %14, %187 : vector<1x128xf32>
    %189 = arith.mulf %173, %188 : vector<1x128xf32>
    %190 = arith.subf %15, %189 : vector<1x128xf32>
    %191 = vector.broadcast %188 : vector<1x128xf32> to vector<800x128xf32>
    %192 = arith.mulf %169, %191 : vector<800x128xf32>
    %193 = vector.broadcast %190 : vector<1x128xf32> to vector<800x128xf32>
    %194 = arith.addf %192, %193 : vector<800x128xf32>
    %cst_93 = arith.constant 0.000000e+00 : f32
    %195 = vector.broadcast %cst_93 : f32 to vector<800x128xf32>
    %196 = arith.maximumf %194, %195 : vector<800x128xf32>
    %cst_94 = arith.constant 0.000000e+00 : f32
    %197 = vector.shape_cast %6 : vector<800x1xi1> to vector<800x1xi1>
    %198 = vector.broadcast %197 : vector<800x1xi1> to vector<800x128xi1>
    %199 = vector.broadcast %cst_94 : f32 to vector<800x128xf32>
    %200 = arith.select %198, %196, %199 : vector<800x128xi1>, vector<800x128xf32>
    %c0_95 = arith.constant 0 : index
    %c0_96 = arith.constant 0 : index
    %201 = vector.load %arg8[%c0_95, %c0_96] : memref<800x128xf32, #tpu.memory_space<vmem>>, vector<800x128xf32>
    tpu.vector_store %arg8[%c0_95, %c0_96], %200 {strides = array<i32>} : memref<800x128xf32, #tpu.memory_space<vmem>>, vector<800x128xf32>,
    return
  }
}

</mosaic_0001>

<llo_original>
// kernel: _lambda_.1
$region0: #{_lambda_.1}
  #allocation0 [shape = 'u32[]', space=smem, size = 0x4, offset = 0x4, fixed_abs, tag = 'smem constant byte address 0x4 - core index']
  #allocation1 [shape = 'u32[144,128]{1,0:T(1,128)}', space=vmem, size = 0x12000, scoped, tag = 'internal scratch']
  #allocation2 [shape = 'f32[848,128]{1,0:T(8,128)}', space=vmem, size = 0x6a000, scoped, tag = 'scratch operand']
  %s0 = inlined_call_operand.vmem [shape: f32[848,4], index: 0, kind: input, shape index: {}]
  %s1 = inlined_call_operand.vmem [shape: s32[800,1], index: 1, kind: input, shape index: {}]
  %s2 = inlined_call_operand.vmem [shape: f32[9,4], index: 2, kind: input, shape index: {}]
  %s3 = inlined_call_operand.vmem [shape: f32[9,128], index: 3, kind: input, shape index: {}]
  %s4 = inlined_call_operand.vmem [shape: bf16[4,128], index: 4, kind: input, shape index: {}]
  %s5 = inlined_call_operand.vmem [shape: bf16[128,128], index: 5, kind: input, shape index: {}]
  %s6 = inlined_call_operand.vmem [shape: f32[1,4], index: 6, kind: input, shape index: {}]
  %s7 = inlined_call_operand.vmem [shape: f32[7,128], index: 7, kind: input, shape index: {}]
  %s8 = inlined_call_operand.vmem [shape: f32[800,128], index: 8, kind: output, shape index: {}]
  %s9 = sld [smem:[#allocation0]]
  $region42: #{_lambda_.1} parent=0
    _
  %s11 = ssub.s32 1, %s9
  %s12 = scalar_select 0, %s11, %s9
  // Predicated region
  $region2: #{_lambda_.1} parent=0 // pred_check
    _
  $region3: #{_lambda_.1} parent=0 // pred_check_branch
    %14 = sbr.rel (0) target = $region5
  $region4: #{_lambda_.1} parent=0 // pred_region
    _
  $region5: #{_lambda_.1} parent=0 // pred_fallthru
    _
  // Predicated region
  $region6: #{_lambda_.1} parent=0 // pred_check
    _
  $region7: #{_lambda_.1} parent=0 // pred_check_branch
    %16 = sbr.rel (0) target = $region9
  $region8: #{_lambda_.1} parent=0 // pred_region
    _
  $region9: #{_lambda_.1} parent=0 // pred_fallthru
    _
  // Predicated region
  $region10: #{_lambda_.1} parent=0 // pred_check
    _
  $region11: #{_lambda_.1} parent=0 // pred_check_branch
    %18 = sbr.rel (0) target = $region13
  $region12: #{_lambda_.1} parent=0 // pred_region
    _
  $region13: #{_lambda_.1} parent=0 // pred_fallthru
    _
  // Predicated region
  $region14: #{_lambda_.1} parent=0 // pred_check
    _
  $region15: #{_lambda_.1} parent=0 // pred_check_branch
    %20 = sbr.rel (0) target = $region17
  $region16: #{_lambda_.1} parent=0 // pred_region
    _
  $region17: #{_lambda_.1} parent=0 // pred_fallthru
    _
  // Predicated region
  $region18: #{_lambda_.1} parent=0 // pred_check
    _
  $region19: #{_lambda_.1} parent=0 // pred_check_branch
    %22 = sbr.rel (0) target = $region21
  $region20: #{_lambda_.1} parent=0 // pred_region
    _
  $region21: #{_lambda_.1} parent=0 // pred_fallthru
    _
  // Predicated region
  $region22: #{_lambda_.1} parent=0 // pred_check
    _
  $region23: #{_lambda_.1} parent=0 // pred_check_branch
    %24 = sbr.rel (0) target = $region25
  $region24: #{_lambda_.1} parent=0 // pred_region
    _
  $region25: #{_lambda_.1} parent=0 // pred_fallthru
    _
  // Predicated region
  $region26: #{_lambda_.1} parent=0 // pred_check
    _
  $region27: #{_lambda_.1} parent=0 // pred_check_branch
    %26 = sbr.rel (0) target = $region29
  $region28: #{_lambda_.1} parent=0 // pred_region
    _
  $region29: #{_lambda_.1} parent=0 // pred_fallthru
    _
  // Predicated region
  $region30: #{_lambda_.1} parent=0 // pred_check
    _
  $region31: #{_lambda_.1} parent=0 // pred_check_branch
    %28 = sbr.rel (0) target = $region33
  $region32: #{_lambda_.1} parent=0 // pred_region
    _
  $region33: #{_lambda_.1} parent=0 // pred_fallthru
    _
  %v30 = vld [vmem:[%s1] sm:$0xff]
  %v31 = vld [vmem:[%s1 + $0x8] sm:$0xff]
  %v32 = vld [vmem:[%s1 + $0x10] sm:$0xff]
  %v33 = vld [vmem:[%s1 + $0x18] sm:$0xff]
  %v34 = vld [vmem:[%s1 + $0x20] sm:$0xff]
  %v35 = vld [vmem:[%s1 + $0x28] sm:$0xff]
  %v36 = vld [vmem:[%s1 + $0x30] sm:$0xff]
  %v37 = vld [vmem:[%s1 + $0x38] sm:$0xff]
  %v38 = vld [vmem:[%s1 + $0x40] sm:$0xff]
  %v39 = vld [vmem:[%s1 + $0x48] sm:$0xff]
  %v40 = vld [vmem:[%s1 + $0x50] sm:$0xff]
  %v41 = vld [vmem:[%s1 + $0x58] sm:$0xff]
  %v42 = vld [vmem:[%s1 + $0x60] sm:$0xff]
  %v43 = vld [vmem:[%s1 + $0x68] sm:$0xff]
  %v44 = vld [vmem:[%s1 + $0x70] sm:$0xff]
  %v45 = vld [vmem:[%s1 + $0x78] sm:$0xff]
  %v46 = vld [vmem:[%s1 + $0x80] sm:$0xff]
  %v47 = vld [vmem:[%s1 + $0x88] sm:$0xff]
  %v48 = vld [vmem:[%s1 + $0x90] sm:$0xff]
  %v49 = vld [vmem:[%s1 + $0x98] sm:$0xff]
  %v50 = vld [vmem:[%s1 + $0xa0] sm:$0xff]
  %v51 = vld [vmem:[%s1 + $0xa8] sm:$0xff]
  %v52 = vld [vmem:[%s1 + $0xb0] sm:$0xff]
  %v53 = vld [vmem:[%s1 + $0xb8] sm:$0xff]
  %v54 = vld [vmem:[%s1 + $0xc0] sm:$0xff]
  %v55 = vld [vmem:[%s1 + $0xc8] sm:$0xff]
  %v56 = vld [vmem:[%s1 + $0xd0] sm:$0xff]
  %v57 = vld [vmem:[%s1 + $0xd8] sm:$0xff]
  %v58 = vld [vmem:[%s1 + $0xe0] sm:$0xff]
  %v59 = vld [vmem:[%s1 + $0xe8] sm:$0xff]
  %v60 = vld [vmem:[%s1 + $0xf0] sm:$0xff]
  %v61 = vld [vmem:[%s1 + $0xf8] sm:$0xff]
  %v62 = vld [vmem:[%s1 + $0x100] sm:$0xff]
  %v63 = vld [vmem:[%s1 + $0x108] sm:$0xff]
  %v64 = vld [vmem:[%s1 + $0x110] sm:$0xff]
  %v65 = vld [vmem:[%s1 + $0x118] sm:$0xff]
  %v66 = vld [vmem:[%s1 + $0x120] sm:$0xff]
  %v67 = vld [vmem:[%s1 + $0x128] sm:$0xff]
  %v68 = vld [vmem:[%s1 + $0x130] sm:$0xff]
  %v69 = vld [vmem:[%s1 + $0x138] sm:$0xff]
  %v70 = vld [vmem:[%s1 + $0x140] sm:$0xff]
  %v71 = vld [vmem:[%s1 + $0x148] sm:$0xff]
  %v72 = vld [vmem:[%s1 + $0x150] sm:$0xff]
  %v73 = vld [vmem:[%s1 + $0x158] sm:$0xff]
  %v74 = vld [vmem:[%s1 + $0x160] sm:$0xff]
  %v75 = vld [vmem:[%s1 + $0x168] sm:$0xff]
  %v76 = vld [vmem:[%s1 + $0x170] sm:$0xff]
  %v77 = vld [vmem:[%s1 + $0x178] sm:$0xff]
  %v78 = vld [vmem:[%s1 + $0x180] sm:$0xff]
  %v79 = vld [vmem:[%s1 + $0x188] sm:$0xff]
  %v80 = vld [vmem:[%s1 + $0x190] sm:$0xff]
  %v81 = vld [vmem:[%s1 + $0x198] sm:$0xff]
  %v82 = vld [vmem:[%s1 + $0x1a0] sm:$0xff]
  %v83 = vld [vmem:[%s1 + $0x1a8] sm:$0xff]
  %v84 = vld [vmem:[%s1 + $0x1b0] sm:$0xff]
  %v85 = vld [vmem:[%s1 + $0x1b8] sm:$0xff]
  %v86 = vld [vmem:[%s1 + $0x1c0] sm:$0xff]
  %v87 = vld [vmem:[%s1 + $0x1c8] sm:$0xff]
  %v88 = vld [vmem:[%s1 + $0x1d0] sm:$0xff]
  %v89 = vld [vmem:[%s1 + $0x1d8] sm:$0xff]
  %v90 = vld [vmem:[%s1 + $0x1e0] sm:$0xff]
  %v91 = vld [vmem:[%s1 + $0x1e8] sm:$0xff]
  %v92 = vld [vmem:[%s1 + $0x1f0] sm:$0xff]
  %v93 = vld [vmem:[%s1 + $0x1f8] sm:$0xff]
  %v94 = vld [vmem:[%s1 + $0x200] sm:$0xff]
  %v95 = vld [vmem:[%s1 + $0x208] sm:$0xff]
  %v96 = vld [vmem:[%s1 + $0x210] sm:$0xff]
  %v97 = vld [vmem:[%s1 + $0x218] sm:$0xff]
  %v98 = vld [vmem:[%s1 + $0x220] sm:$0xff]
  %v99 = vld [vmem:[%s1 + $0x228] sm:$0xff]
  %v100 = vld [vmem:[%s1 + $0x230] sm:$0xff]
  %v101 = vld [vmem:[%s1 + $0x238] sm:$0xff]
  %v102 = vld [vmem:[%s1 + $0x240] sm:$0xff]
  %v103 = vld [vmem:[%s1 + $0x248] sm:$0xff]
  %v104 = vld [vmem:[%s1 + $0x250] sm:$0xff]
  %v105 = vld [vmem:[%s1 + $0x258] sm:$0xff]
  %v106 = vld [vmem:[%s1 + $0x260] sm:$0xff]
  %v107 = vld [vmem:[%s1 + $0x268] sm:$0xff]
  %v108 = vld [vmem:[%s1 + $0x270] sm:$0xff]
  %v109 = vld [vmem:[%s1 + $0x278] sm:$0xff]
  %v110 = vld [vmem:[%s1 + $0x280] sm:$0xff]
  %v111 = vld [vmem:[%s1 + $0x288] sm:$0xff]
  %v112 = vld [vmem:[%s1 + $0x290] sm:$0xff]
  %v113 = vld [vmem:[%s1 + $0x298] sm:$0xff]
  %v114 = vld [vmem:[%s1 + $0x2a0] sm:$0xff]
  %v115 = vld [vmem:[%s1 + $0x2a8] sm:$0xff]
  %v116 = vld [vmem:[%s1 + $0x2b0] sm:$0xff]
  %v117 = vld [vmem:[%s1 + $0x2b8] sm:$0xff]
  %v118 = vld [vmem:[%s1 + $0x2c0] sm:$0xff]
  %v119 = vld [vmem:[%s1 + $0x2c8] sm:$0xff]
  %v120 = vld [vmem:[%s1 + $0x2d0] sm:$0xff]
  %v121 = vld [vmem:[%s1 + $0x2d8] sm:$0xff]
  %v122 = vld [vmem:[%s1 + $0x2e0] sm:$0xff]
  %v123 = vld [vmem:[%s1 + $0x2e8] sm:$0xff]
  %v124 = vld [vmem:[%s1 + $0x2f0] sm:$0xff]
  %v125 = vld [vmem:[%s1 + $0x2f8] sm:$0xff]
  %v126 = vld [vmem:[%s1 + $0x300] sm:$0xff]
  %v127 = vld [vmem:[%s1 + $0x308] sm:$0xff]
  %v128 = vld [vmem:[%s1 + $0x310] sm:$0xff]
  %v129 = vld [vmem:[%s1 + $0x318] sm:$0xff]
  %vm130 = vcmp.ge.s32.totalorder %v30, 2
  %vm131 = vcmp.ge.s32.totalorder %v31, 2
  %vm132 = vcmp.ge.s32.totalorder %v32, 2
  %vm133 = vcmp.ge.s32.totalorder %v33, 2
  %vm134 = vcmp.ge.s32.totalorder %v34, 2
  %vm135 = vcmp.ge.s32.totalorder %v35, 2
  %vm136 = vcmp.ge.s32.totalorder %v36, 2
  %vm137 = vcmp.ge.s32.totalorder %v37, 2
  %vm138 = vcmp.ge.s32.totalorder %v38, 2
  %vm139 = vcmp.ge.s32.totalorder %v39, 2
  %vm140 = vcmp.ge.s32.totalorder %v40, 2
  %vm141 = vcmp.ge.s32.totalorder %v41, 2
  %vm142 = vcmp.ge.s32.totalorder %v42, 2
  %vm143 = vcmp.ge.s32.totalorder %v43, 2
  %vm144 = vcmp.ge.s32.totalorder %v44, 2
  %vm145 = vcmp.ge.s32.totalorder %v45, 2
  %vm146 = vcmp.ge.s32.totalorder %v46, 2
  %vm147 = vcmp.ge.s32.totalorder %v47, 2
  %vm148 = vcmp.ge.s32.totalorder %v48, 2
  %vm149 = vcmp.ge.s32.totalorder %v49, 2
  %vm150 = vcmp.ge.s32.totalorder %v50, 2
  %vm151 = vcmp.ge.s32.totalorder %v51, 2
  %vm152 = vcmp.ge.s32.totalorder %v52, 2
  %vm153 = vcmp.ge.s32.totalorder %v53, 2
  %vm154 = vcmp.ge.s32.totalorder %v54, 2
  %vm155 = vcmp.ge.s32.totalorder %v55, 2
  %vm156 = vcmp.ge.s32.totalorder %v56, 2
  %vm157 = vcmp.ge.s32.totalorder %v57, 2
  %vm158 = vcmp.ge.s32.totalorder %v58, 2
  %vm159 = vcmp.ge.s32.totalorder %v59, 2
  %vm160 = vcmp.ge.s32.totalorder %v60, 2
  %vm161 = vcmp.ge.s32.totalorder %v61, 2
  %vm162 = vcmp.ge.s32.totalorder %v62, 2
  %vm163 = vcmp.ge.s32.totalorder %v63, 2
  %vm164 = vcmp.ge.s32.totalorder %v64, 2
  %vm165 = vcmp.ge.s32.totalorder %v65, 2
  %vm166 = vcmp.ge.s32.totalorder %v66, 2
  %vm167 = vcmp.ge.s32.totalorder %v67, 2
  %vm168 = vcmp.ge.s32.totalorder %v68, 2
  %vm169 = vcmp.ge.s32.totalorder %v69, 2
  %vm170 = vcmp.ge.s32.totalorder %v70, 2
  %vm171 = vcmp.ge.s32.totalorder %v71, 2
  %vm172 = vcmp.ge.s32.totalorder %v72, 2
  %vm173 = vcmp.ge.s32.totalorder %v73, 2
  %vm174 = vcmp.ge.s32.totalorder %v74, 2
  %vm175 = vcmp.ge.s32.totalorder %v75, 2
  %vm176 = vcmp.ge.s32.totalorder %v76, 2
  %vm177 = vcmp.ge.s32.totalorder %v77, 2
  %vm178 = vcmp.ge.s32.totalorder %v78, 2
  %vm179 = vcmp.ge.s32.totalorder %v79, 2
  %vm180 = vcmp.ge.s32.totalorder %v80, 2
  %vm181 = vcmp.ge.s32.totalorder %v81, 2
  %vm182 = vcmp.ge.s32.totalorder %v82, 2
  %vm183 = vcmp.ge.s32.totalorder %v83, 2
  %vm184 = vcmp.ge.s32.totalorder %v84, 2
  %vm185 = vcmp.ge.s32.totalorder %v85, 2
  %vm186 = vcmp.ge.s32.totalorder %v86, 2
  %vm187 = vcmp.ge.s32.totalorder %v87, 2
  %vm188 = vcmp.ge.s32.totalorder %v88, 2
  %vm189 = vcmp.ge.s32.totalorder %v89, 2
  %vm190 = vcmp.ge.s32.totalorder %v90, 2
  %vm191 = vcmp.ge.s32.totalorder %v91, 2
  %vm192 = vcmp.ge.s32.totalorder %v92, 2
  %vm193 = vcmp.ge.s32.totalorder %v93, 2
  %vm194 = vcmp.ge.s32.totalorder %v94, 2
  %vm195 = vcmp.ge.s32.totalorder %v95, 2
  %vm196 = vcmp.ge.s32.totalorder %v96, 2
  %vm197 = vcmp.ge.s32.totalorder %v97, 2
  %vm198 = vcmp.ge.s32.totalorder %v98, 2
  %vm199 = vcmp.ge.s32.totalorder %v99, 2
  %vm200 = vcmp.ge.s32.totalorder %v100, 2
  %vm201 = vcmp.ge.s32.totalorder %v101, 2
  %vm202 = vcmp.ge.s32.totalorder %v102, 2
  %vm203 = vcmp.ge.s32.totalorder %v103, 2
  %vm204 = vcmp.ge.s32.totalorder %v104, 2
  %vm205 = vcmp.ge.s32.totalorder %v105, 2
  %vm206 = vcmp.ge.s32.totalorder %v106, 2
  %vm207 = vcmp.ge.s32.totalorder %v107, 2
  %vm208 = vcmp.ge.s32.totalorder %v108, 2
  %vm209 = vcmp.ge.s32.totalorder %v109, 2
  %vm210 = vcmp.ge.s32.totalorder %v110, 2
  %vm211 = vcmp.ge.s32.totalorder %v111, 2
  %vm212 = vcmp.ge.s32.totalorder %v112, 2
  %vm213 = vcmp.ge.s32.totalorder %v113, 2
  %vm214 = vcmp.ge.s32.totalorder %v114, 2
  %vm215 = vcmp.ge.s32.totalorder %v115, 2
  %vm216 = vcmp.ge.s32.totalorder %v116, 2
  %vm217 = vcmp.ge.s32.totalorder %v117, 2
  %vm218 = vcmp.ge.s32.totalorder %v118, 2
  %vm219 = vcmp.ge.s32.totalorder %v119, 2
  %vm220 = vcmp.ge.s32.totalorder %v120, 2
  %vm221 = vcmp.ge.s32.totalorder %v121, 2
  %vm222 = vcmp.ge.s32.totalorder %v122, 2
  %vm223 = vcmp.ge.s32.totalorder %v123, 2
  %vm224 = vcmp.ge.s32.totalorder %v124, 2
  %vm225 = vcmp.ge.s32.totalorder %v125, 2
  %vm226 = vcmp.ge.s32.totalorder %v126, 2
  %vm227 = vcmp.ge.s32.totalorder %v127, 2
  %vm228 = vcmp.ge.s32.totalorder %v128, 2
  %vm229 = vcmp.ge.s32.totalorder %v129, 2
  %vm230 = vcmp.ge.s32.totalorder %v30, 1
  %vm231 = vcmp.ge.s32.totalorder %v31, 1
  %vm232 = vcmp.ge.s32.totalorder %v32, 1
  %vm233 = vcmp.ge.s32.totalorder %v33, 1
  %vm234 = vcmp.ge.s32.totalorder %v34, 1
  %vm235 = vcmp.ge.s32.totalorder %v35, 1
  %vm236 = vcmp.ge.s32.totalorder %v36, 1
  %vm237 = vcmp.ge.s32.totalorder %v37, 1
  %vm238 = vcmp.ge.s32.totalorder %v38, 1
  %vm239 = vcmp.ge.s32.totalorder %v39, 1
  %vm240 = vcmp.ge.s32.totalorder %v40, 1
  %vm241 = vcmp.ge.s32.totalorder %v41, 1
  %vm242 = vcmp.ge.s32.totalorder %v42, 1
  %vm243 = vcmp.ge.s32.totalorder %v43, 1
  %vm244 = vcmp.ge.s32.totalorder %v44, 1
  %vm245 = vcmp.ge.s32.totalorder %v45, 1
  %vm246 = vcmp.ge.s32.totalorder %v46, 1
  %vm247 = vcmp.ge.s32.totalorder %v47, 1
  %vm248 = vcmp.ge.s32.totalorder %v48, 1
  %vm249 = vcmp.ge.s32.totalorder %v49, 1
  %vm250 = vcmp.ge.s32.totalorder %v50, 1
  %vm251 = vcmp.ge.s32.totalorder %v51, 1
  %vm252 = vcmp.ge.s32.totalorder %v52, 1
  %vm253 = vcmp.ge.s32.totalorder %v53, 1
  %vm254 = vcmp.ge.s32.totalorder %v54, 1
  %vm255 = vcmp.ge.s32.totalorder %v55, 1
  %vm256 = vcmp.ge.s32.totalorder %v56, 1
  %vm257 = vcmp.ge.s32.totalorder %v57, 1
  %vm258 = vcmp.ge.s32.totalorder %v58, 1
  %vm259 = vcmp.ge.s32.totalorder %v59, 1
  %vm260 = vcmp.ge.s32.totalorder %v60, 1
  %vm261 = vcmp.ge.s32.totalorder %v61, 1
  %vm262 = vcmp.ge.s32.totalorder %v62, 1
  %vm263 = vcmp.ge.s32.totalorder %v63, 1
  %vm264 = vcmp.ge.s32.totalorder %v64, 1
  %vm265 = vcmp.ge.s32.totalorder %v65, 1
  %vm266 = vcmp.ge.s32.totalorder %v66, 1
  %vm267 = vcmp.ge.s32.totalorder %v67, 1
  %vm268 = vcmp.ge.s32.totalorder %v68, 1
  %vm269 = vcmp.ge.s32.totalorder %v69, 1
  %vm270 = vcmp.ge.s32.totalorder %v70, 1
  %vm271 = vcmp.ge.s32.totalorder %v71, 1
  %vm272 = vcmp.ge.s32.totalorder %v72, 1
  %vm273 = vcmp.ge.s32.totalorder %v73, 1
  %vm274 = vcmp.ge.s32.totalorder %v74, 1
  %vm275 = vcmp.ge.s32.totalorder %v75, 1
  %vm276 = vcmp.ge.s32.totalorder %v76, 1
  %vm277 = vcmp.ge.s32.totalorder %v77, 1
  %vm278 = vcmp.ge.s32.totalorder %v78, 1
  %vm279 = vcmp.ge.s32.totalorder %v79, 1
  %vm280 = vcmp.ge.s32.totalorder %v80, 1
  %vm281 = vcmp.ge.s32.totalorder %v81, 1
  %vm282 = vcmp.ge.s32.totalorder %v82, 1
  %vm283 = vcmp.ge.s32.totalorder %v83, 1
  %vm284 = vcmp.ge.s32.totalorder %v84, 1
  %vm285 = vcmp.ge.s32.totalorder %v85, 1
  %vm286 = vcmp.ge.s32.totalorder %v86, 1
  %vm287 = vcmp.ge.s32.totalorder %v87, 1
  %vm288 = vcmp.ge.s32.totalorder %v88, 1
  %vm289 = vcmp.ge.s32.totalorder %v89, 1
  %vm290 = vcmp.ge.s32.totalorder %v90, 1
  %vm291 = vcmp.ge.s32.totalorder %v91, 1
  %vm292 = vcmp.ge.s32.totalorder %v92, 1
  %vm293 = vcmp.ge.s32.totalorder %v93, 1
  %vm294 = vcmp.ge.s32.totalorder %v94, 1
  %vm295 = vcmp.ge.s32.totalorder %v95, 1
  %vm296 = vcmp.ge.s32.totalorder %v96, 1
  %vm297 = vcmp.ge.s32.totalorder %v97, 1
  %vm298 = vcmp.ge.s32.totalorder %v98, 1
  %vm299 = vcmp.ge.s32.totalorder %v99, 1
  %vm300 = vcmp.ge.s32.totalorder %v100, 1
  %vm301 = vcmp.ge.s32.totalorder %v101, 1
  %vm302 = vcmp.ge.s32.totalorder %v102, 1
  %vm303 = vcmp.ge.s32.totalorder %v103, 1
  %vm304 = vcmp.ge.s32.totalorder %v104, 1
  %vm305 = vcmp.ge.s32.totalorder %v105, 1
  %vm306 = vcmp.ge.s32.totalorder %v106, 1
  %vm307 = vcmp.ge.s32.totalorder %v107, 1
  %vm308 = vcmp.ge.s32.totalorder %v108, 1
  %vm309 = vcmp.ge.s32.totalorder %v109, 1
  %vm310 = vcmp.ge.s32.totalorder %v110, 1
  %vm311 = vcmp.ge.s32.totalorder %v111, 1
  %vm312 = vcmp.ge.s32.totalorder %v112, 1
  %vm313 = vcmp.ge.s32.totalorder %v113, 1
  %vm314 = vcmp.ge.s32.totalorder %v114, 1
  %vm315 = vcmp.ge.s32.totalorder %v115, 1
  %vm316 = vcmp.ge.s32.totalorder %v116, 1
  %vm317 = vcmp.ge.s32.totalorder %v117, 1
  %vm318 = vcmp.ge.s32.totalorder %v118, 1
  %vm319 = vcmp.ge.s32.totalorder %v119, 1
  %vm320 = vcmp.ge.s32.totalorder %v120, 1
  %vm321 = vcmp.ge.s32.totalorder %v121, 1
  %vm322 = vcmp.ge.s32.totalorder %v122, 1
  %vm323 = vcmp.ge.s32.totalorder %v123, 1
  %vm324 = vcmp.ge.s32.totalorder %v124, 1
  %vm325 = vcmp.ge.s32.totalorder %v125, 1
  %vm326 = vcmp.ge.s32.totalorder %v126, 1
  %vm327 = vcmp.ge.s32.totalorder %v127, 1
  %vm328 = vcmp.ge.s32.totalorder %v128, 1
  %vm329 = vcmp.ge.s32.totalorder %v129, 1
  %vm330 = vcmp.ge.s32.totalorder %v30, 0
  %vm331 = vcmp.ge.s32.totalorder %v31, 0
  %vm332 = vcmp.ge.s32.totalorder %v32, 0
  %vm333 = vcmp.ge.s32.totalorder %v33, 0
  %vm334 = vcmp.ge.s32.totalorder %v34, 0
  %vm335 = vcmp.ge.s32.totalorder %v35, 0
  %vm336 = vcmp.ge.s32.totalorder %v36, 0
  %vm337 = vcmp.ge.s32.totalorder %v37, 0
  %vm338 = vcmp.ge.s32.totalorder %v38, 0
  %vm339 = vcmp.ge.s32.totalorder %v39, 0
  %vm340 = vcmp.ge.s32.totalorder %v40, 0
  %vm341 = vcmp.ge.s32.totalorder %v41, 0
  %vm342 = vcmp.ge.s32.totalorder %v42, 0
  %vm343 = vcmp.ge.s32.totalorder %v43, 0
  %vm344 = vcmp.ge.s32.totalorder %v44, 0
  %vm345 = vcmp.ge.s32.totalorder %v45, 0
  %vm346 = vcmp.ge.s32.totalorder %v46, 0
  %vm347 = vcmp.ge.s32.totalorder %v47, 0
  %vm348 = vcmp.ge.s32.totalorder %v48, 0
  %vm349 = vcmp.ge.s32.totalorder %v49, 0
  %vm350 = vcmp.ge.s32.totalorder %v50, 0
  %vm351 = vcmp.ge.s32.totalorder %v51, 0
  %vm352 = vcmp.ge.s32.totalorder %v52, 0
  %vm353 = vcmp.ge.s32.totalorder %v53, 0
  %vm354 = vcmp.ge.s32.totalorder %v54, 0
  %vm355 = vcmp.ge.s32.totalorder %v55, 0
  %vm356 = vcmp.ge.s32.totalorder %v56, 0
  %vm357 = vcmp.ge.s32.totalorder %v57, 0
  %vm358 = vcmp.ge.s32.totalorder %v58, 0
  %vm359 = vcmp.ge.s32.totalorder %v59, 0
  %vm360 = vcmp.ge.s32.totalorder %v60, 0
  %vm361 = vcmp.ge.s32.totalorder %v61, 0
  %vm362 = vcmp.ge.s32.totalorder %v62, 0
  %vm363 = vcmp.ge.s32.totalorder %v63, 0
  %vm364 = vcmp.ge.s32.totalorder %v64, 0
  %vm365 = vcmp.ge.s32.totalorder %v65, 0
  %vm366 = vcmp.ge.s32.totalorder %v66, 0
  %vm367 = vcmp.ge.s32.totalorder %v67, 0
  %vm368 = vcmp.ge.s32.totalorder %v68, 0
  %vm369 = vcmp.ge.s32.totalorder %v69, 0
  %vm370 = vcmp.ge.s32.totalorder %v70, 0
  %vm371 = vcmp.ge.s32.totalorder %v71, 0
  %vm372 = vcmp.ge.s32.totalorder %v72, 0
  %vm373 = vcmp.ge.s32.totalorder %v73, 0
  %vm374 = vcmp.ge.s32.totalorder %v74, 0
  %vm375 = vcmp.ge.s32.totalorder %v75, 0
  %vm376 = vcmp.ge.s32.totalorder %v76, 0
  %vm377 = vcmp.ge.s32.totalorder %v77, 0
  %vm378 = vcmp.ge.s32.totalorder %v78, 0
  %vm379 = vcmp.ge.s32.totalorder %v79, 0
  %vm380 = vcmp.ge.s32.totalorder %v80, 0
  %vm381 = vcmp.ge.s32.totalorder %v81, 0
  %vm382 = vcmp.ge.s32.totalorder %v82, 0
  %vm383 = vcmp.ge.s32.totalorder %v83, 0
  %vm384 = vcmp.ge.s32.totalorder %v84, 0
  %vm385 = vcmp.ge.s32.totalorder %v85, 0
  %vm386 = vcmp.ge.s32.totalorder %v86, 0
  %vm387 = vcmp.ge.s32.totalorder %v87, 0
  %vm388 = vcmp.ge.s32.totalorder %v88, 0
  %vm389 = vcmp.ge.s32.totalorder %v89, 0
  %vm390 = vcmp.ge.s32.totalorder %v90, 0
  %vm391 = vcmp.ge.s32.totalorder %v91, 0
  %vm392 = vcmp.ge.s32.totalorder %v92, 0
  %vm393 = vcmp.ge.s32.totalorder %v93, 0
  %vm394 = vcmp.ge.s32.totalorder %v94, 0
  %vm395 = vcmp.ge.s32.totalorder %v95, 0
  %vm396 = vcmp.ge.s32.totalorder %v96, 0
  %vm397 = vcmp.ge.s32.totalorder %v97, 0
  %vm398 = vcmp.ge.s32.totalorder %v98, 0
  %vm399 = vcmp.ge.s32.totalorder %v99, 0
  %vm400 = vcmp.ge.s32.totalorder %v100, 0
  %vm401 = vcmp.ge.s32.totalorder %v101, 0
  %vm402 = vcmp.ge.s32.totalorder %v102, 0
  %vm403 = vcmp.ge.s32.totalorder %v103, 0
  %vm404 = vcmp.ge.s32.totalorder %v104, 0
  %vm405 = vcmp.ge.s32.totalorder %v105, 0
  %vm406 = vcmp.ge.s32.totalorder %v106, 0
  %vm407 = vcmp.ge.s32.totalorder %v107, 0
  %vm408 = vcmp.ge.s32.totalorder %v108, 0
  %vm409 = vcmp.ge.s32.totalorder %v109, 0
  %vm410 = vcmp.ge.s32.totalorder %v110, 0
  %vm411 = vcmp.ge.s32.totalorder %v111, 0
  %vm412 = vcmp.ge.s32.totalorder %v112, 0
  %vm413 = vcmp.ge.s32.totalorder %v113, 0
  %vm414 = vcmp.ge.s32.totalorder %v114, 0
  %vm415 = vcmp.ge.s32.totalorder %v115, 0
  %vm416 = vcmp.ge.s32.totalorder %v116, 0
  %vm417 = vcmp.ge.s32.totalorder %v117, 0
  %vm418 = vcmp.ge.s32.totalorder %v118, 0
  %vm419 = vcmp.ge.s32.totalorder %v119, 0
  %vm420 = vcmp.ge.s32.totalorder %v120, 0
  %vm421 = vcmp.ge.s32.totalorder %v121, 0
  %vm422 = vcmp.ge.s32.totalorder %v122, 0
  %vm423 = vcmp.ge.s32.totalorder %v123, 0
  %vm424 = vcmp.ge.s32.totalorder %v124, 0
  %vm425 = vcmp.ge.s32.totalorder %v125, 0
  %vm426 = vcmp.ge.s32.totalorder %v126, 0
  %vm427 = vcmp.ge.s32.totalorder %v127, 0
  %vm428 = vcmp.ge.s32.totalorder %v128, 0
  %vm429 = vcmp.ge.s32.totalorder %v129, 0
  %v430 = vld [vmem:[%s6] sm:$0x1]
  %v431 = vld [vmem:[%s7] sm:$0x7f]
  %v432 = vld [vmem:[%s0 + $0x3] sm:$0xff]
  %v433 = vld [vmem:[%s0 + $0xb] sm:$0xff]
  %v434 = vld [vmem:[%s0 + $0x13] sm:$0xff]
  %v435 = vld [vmem:[%s0 + $0x1b] sm:$0xff]
  %v436 = vld [vmem:[%s0 + $0x23] sm:$0xff]
  %v437 = vld [vmem:[%s0 + $0x2b] sm:$0xff]
  %v438 = vld [vmem:[%s0 + $0x33] sm:$0xff]
  %v439 = vld [vmem:[%s0 + $0x3b] sm:$0xff]
  %v440 = vld [vmem:[%s0 + $0x43] sm:$0xff]
  %v441 = vld [vmem:[%s0 + $0x4b] sm:$0xff]
  %v442 = vld [vmem:[%s0 + $0x53] sm:$0xff]
  %v443 = vld [vmem:[%s0 + $0x5b] sm:$0xff]
  %v444 = vld [vmem:[%s0 + $0x63] sm:$0xff]
  %v445 = vld [vmem:[%s0 + $0x6b] sm:$0xff]
  %v446 = vld [vmem:[%s0 + $0x73] sm:$0xff]
  %v447 = vld [vmem:[%s0 + $0x7b] sm:$0xff]
  %v448 = vld [vmem:[%s0 + $0x83] sm:$0xff]
  %v449 = vld [vmem:[%s0 + $0x8b] sm:$0xff]
  %v450 = vld [vmem:[%s0 + $0x93] sm:$0xff]
  %v451 = vld [vmem:[%s0 + $0x9b] sm:$0xff]
  %v452 = vld [vmem:[%s0 + $0xa3] sm:$0xff]
  %v453 = vld [vmem:[%s0 + $0xab] sm:$0xff]
  %v454 = vld [vmem:[%s0 + $0xb3] sm:$0xff]
  %v455 = vld [vmem:[%s0 + $0xbb] sm:$0xff]
  %v456 = vld [vmem:[%s0 + $0xc3] sm:$0xff]
  %v457 = vld [vmem:[%s0 + $0xcb] sm:$0xff]
  %v458 = vld [vmem:[%s0 + $0xd3] sm:$0xff]
  %v459 = vld [vmem:[%s0 + $0xdb] sm:$0xff]
  %v460 = vld [vmem:[%s0 + $0xe3] sm:$0xff]
  %v461 = vld [vmem:[%s0 + $0xeb] sm:$0xff]
  %v462 = vld [vmem:[%s0 + $0xf3] sm:$0xff]
  %v463 = vld [vmem:[%s0 + $0xfb] sm:$0xff]
  %v464 = vld [vmem:[%s0 + $0x103] sm:$0xff]
  %v465 = vld [vmem:[%s0 + $0x10b] sm:$0xff]
  %v466 = vld [vmem:[%s0 + $0x113] sm:$0xff]
  %v467 = vld [vmem:[%s0 + $0x11b] sm:$0xff]
  %v468 = vld [vmem:[%s0 + $0x123] sm:$0xff]
  %v469 = vld [vmem:[%s0 + $0x12b] sm:$0xff]
  %v470 = vld [vmem:[%s0 + $0x133] sm:$0xff]
  %v471 = vld [vmem:[%s0 + $0x13b] sm:$0xff]
  %v472 = vld [vmem:[%s0 + $0x143] sm:$0xff]
  %v473 = vld [vmem:[%s0 + $0x14b] sm:$0xff]
  %v474 = vld [vmem:[%s0 + $0x153] sm:$0xff]
  %v475 = vld [vmem:[%s0 + $0x15b] sm:$0xff]
  %v476 = vld [vmem:[%s0 + $0x163] sm:$0xff]
  %v477 = vld [vmem:[%s0 + $0x16b] sm:$0xff]
  %v478 = vld [vmem:[%s0 + $0x173] sm:$0xff]
  %v479 = vld [vmem:[%s0 + $0x17b] sm:$0xff]
  %v480 = vld [vmem:[%s0 + $0x183] sm:$0xff]
  %v481 = vld [vmem:[%s0 + $0x18b] sm:$0xff]
  %v482 = vld [vmem:[%s0 + $0x193] sm:$0xff]
  %v483 = vld [vmem:[%s0 + $0x19b] sm:$0xff]
  %v484 = vld [vmem:[%s0 + $0x1a3] sm:$0xff]
  %v485 = vld [vmem:[%s0 + $0x1ab] sm:$0xff]
  %v486 = vld [vmem:[%s0 + $0x1b3] sm:$0xff]
  %v487 = vld [vmem:[%s0 + $0x1bb] sm:$0xff]
  %v488 = vld [vmem:[%s0 + $0x1c3] sm:$0xff]
  %v489 = vld [vmem:[%s0 + $0x1cb] sm:$0xff]
  %v490 = vld [vmem:[%s0 + $0x1d3] sm:$0xff]
  %v491 = vld [vmem:[%s0 + $0x1db] sm:$0xff]
  %v492 = vld [vmem:[%s0 + $0x1e3] sm:$0xff]
  %v493 = vld [vmem:[%s0 + $0x1eb] sm:$0xff]
  %v494 = vld [vmem:[%s0 + $0x1f3] sm:$0xff]
  %v495 = vld [vmem:[%s0 + $0x1fb] sm:$0xff]
  %v496 = vld [vmem:[%s0 + $0x203] sm:$0xff]
  %v497 = vld [vmem:[%s0 + $0x20b] sm:$0xff]
  %v498 = vld [vmem:[%s0 + $0x213] sm:$0xff]
  %v499 = vld [vmem:[%s0 + $0x21b] sm:$0xff]
  %v500 = vld [vmem:[%s0 + $0x223] sm:$0xff]
  %v501 = vld [vmem:[%s0 + $0x22b] sm:$0xff]
  %v502 = vld [vmem:[%s0 + $0x233] sm:$0xff]
  %v503 = vld [vmem:[%s0 + $0x23b] sm:$0xff]
  %v504 = vld [vmem:[%s0 + $0x243] sm:$0xff]
  %v505 = vld [vmem:[%s0 + $0x24b] sm:$0xff]
  %v506 = vld [vmem:[%s0 + $0x253] sm:$0xff]
  %v507 = vld [vmem:[%s0 + $0x25b] sm:$0xff]
  %v508 = vld [vmem:[%s0 + $0x263] sm:$0xff]
  %v509 = vld [vmem:[%s0 + $0x26b] sm:$0xff]
  %v510 = vld [vmem:[%s0 + $0x273] sm:$0xff]
  %v511 = vld [vmem:[%s0 + $0x27b] sm:$0xff]
  %v512 = vld [vmem:[%s0 + $0x283] sm:$0xff]
  %v513 = vld [vmem:[%s0 + $0x28b] sm:$0xff]
  %v514 = vld [vmem:[%s0 + $0x293] sm:$0xff]
  %v515 = vld [vmem:[%s0 + $0x29b] sm:$0xff]
  %v516 = vld [vmem:[%s0 + $0x2a3] sm:$0xff]
  %v517 = vld [vmem:[%s0 + $0x2ab] sm:$0xff]
  %v518 = vld [vmem:[%s0 + $0x2b3] sm:$0xff]
  %v519 = vld [vmem:[%s0 + $0x2bb] sm:$0xff]
  %v520 = vld [vmem:[%s0 + $0x2c3] sm:$0xff]
  %v521 = vld [vmem:[%s0 + $0x2cb] sm:$0xff]
  %v522 = vld [vmem:[%s0 + $0x2d3] sm:$0xff]
  %v523 = vld [vmem:[%s0 + $0x2db] sm:$0xff]
  %v524 = vld [vmem:[%s0 + $0x2e3] sm:$0xff]
  %v525 = vld [vmem:[%s0 + $0x2eb] sm:$0xff]
  %v526 = vld [vmem:[%s0 + $0x2f3] sm:$0xff]
  %v527 = vld [vmem:[%s0 + $0x2fb] sm:$0xff]
  %v528 = vld [vmem:[%s0 + $0x303] sm:$0xff]
  %v529 = vld [vmem:[%s0 + $0x30b] sm:$0xff]
  %v530 = vld [vmem:[%s0 + $0x313] sm:$0xff]
  %v531 = vld [vmem:[%s0 + $0x31b] sm:$0xff]
  %v532 = vld [vmem:[%s2] sm:$0x1]
  %v533 = vlaneseq
  %v534 = vshrl.u32 %v533, 7
  %v535 = vsub.s32 0, %v534
  %v536 = vrot.slane %v532, %v535
  %v537 = vmul.f32 %v536, %v432
  %v538 = vmul.f32 %v536, %v433
  %v539 = vmul.f32 %v536, %v434
  %v540 = vmul.f32 %v536, %v435
  %v541 = vmul.f32 %v536, %v436
  %v542 = vmul.f32 %v536, %v437
  %v543 = vmul.f32 %v536, %v438
  %v544 = vmul.f32 %v536, %v439
  %v545 = vmul.f32 %v536, %v440
  %v546 = vmul.f32 %v536, %v441
  %v547 = vmul.f32 %v536, %v442
  %v548 = vmul.f32 %v536, %v443
  %v549 = vmul.f32 %v536, %v444
  %v550 = vmul.f32 %v536, %v445
  %v551 = vmul.f32 %v536, %v446
  %v552 = vmul.f32 %v536, %v447
  %v553 = vmul.f32 %v536, %v448
  %v554 = vmul.f32 %v536, %v449
  %v555 = vmul.f32 %v536, %v450
  %v556 = vmul.f32 %v536, %v451
  %v557 = vmul.f32 %v536, %v452
  %v558 = vmul.f32 %v536, %v453
  %v559 = vmul.f32 %v536, %v454
  %v560 = vmul.f32 %v536, %v455
  %v561 = vmul.f32 %v536, %v456
  %v562 = vmul.f32 %v536, %v457
  %v563 = vmul.f32 %v536, %v458
  %v564 = vmul.f32 %v536, %v459
  %v565 = vmul.f32 %v536, %v460
  %v566 = vmul.f32 %v536, %v461
  %v567 = vmul.f32 %v536, %v462
  %v568 = vmul.f32 %v536, %v463
  %v569 = vmul.f32 %v536, %v464
  %v570 = vmul.f32 %v536, %v465
  %v571 = vmul.f32 %v536, %v466
  %v572 = vmul.f32 %v536, %v467
  %v573 = vmul.f32 %v536, %v468
  %v574 = vmul.f32 %v536, %v469
  %v575 = vmul.f32 %v536, %v470
  %v576 = vmul.f32 %v536, %v471
  %v577 = vmul.f32 %v536, %v472
  %v578 = vmul.f32 %v536, %v473
  %v579 = vmul.f32 %v536, %v474
  %v580 = vmul.f32 %v536, %v475
  %v581 = vmul.f32 %v536, %v476
  %v582 = vmul.f32 %v536, %v477
  %v583 = vmul.f32 %v536, %v478
  %v584 = vmul.f32 %v536, %v479
  %v585 = vmul.f32 %v536, %v480
  %v586 = vmul.f32 %v536, %v481
  %v587 = vmul.f32 %v536, %v482
  %v588 = vmul.f32 %v536, %v483
  %v589 = vmul.f32 %v536, %v484
  %v590 = vmul.f32 %v536, %v485
  %v591 = vmul.f32 %v536, %v486
  %v592 = vmul.f32 %v536, %v487
  %v593 = vmul.f32 %v536, %v488
  %v594 = vmul.f32 %v536, %v489
  %v595 = vmul.f32 %v536, %v490
  %v596 = vmul.f32 %v536, %v491
  %v597 = vmul.f32 %v536, %v492
  %v598 = vmul.f32 %v536, %v493
  %v599 = vmul.f32 %v536, %v494
  %v600 = vmul.f32 %v536, %v495
  %v601 = vmul.f32 %v536, %v496
  %v602 = vmul.f32 %v536, %v497
  %v603 = vmul.f32 %v536, %v498
  %v604 = vmul.f32 %v536, %v499
  %v605 = vmul.f32 %v536, %v500
  %v606 = vmul.f32 %v536, %v501
  %v607 = vmul.f32 %v536, %v502
  %v608 = vmul.f32 %v536, %v503
  %v609 = vmul.f32 %v536, %v504
  %v610 = vmul.f32 %v536, %v505
  %v611 = vmul.f32 %v536, %v506
  %v612 = vmul.f32 %v536, %v507
  %v613 = vmul.f32 %v536, %v508
  %v614 = vmul.f32 %v536, %v509
  %v615 = vmul.f32 %v536, %v510
  %v616 = vmul.f32 %v536, %v511
  %v617 = vmul.f32 %v536, %v512
  %v618 = vmul.f32 %v536, %v513
  %v619 = vmul.f32 %v536, %v514
  %v620 = vmul.f32 %v536, %v515
  %v621 = vmul.f32 %v536, %v516
  %v622 = vmul.f32 %v536, %v517
  %v623 = vmul.f32 %v536, %v518
  %v624 = vmul.f32 %v536, %v519
  %v625 = vmul.f32 %v536, %v520
  %v626 = vmul.f32 %v536, %v521
  %v627 = vmul.f32 %v536, %v522
  %v628 = vmul.f32 %v536, %v523
  %v629 = vmul.f32 %v536, %v524
  %v630 = vmul.f32 %v536, %v525
  %v631 = vmul.f32 %v536, %v526
  %v632 = vmul.f32 %v536, %v527
  %v633 = vmul.f32 %v536, %v528
  %v634 = vmul.f32 %v536, %v529
  %v635 = vmul.f32 %v536, %v530
  %v636 = vmul.f32 %v536, %v531
  %v637 = vld [vmem:[%s0 + $0x4] sm:$0xff]
  %v638 = vld [vmem:[%s0 + $0xc] sm:$0xff]
  %v639 = vld [vmem:[%s0 + $0x14] sm:$0xff]
  %v640 = vld [vmem:[%s0 + $0x1c] sm:$0xff]
  %v641 = vld [vmem:[%s0 + $0x24] sm:$0xff]
  %v642 = vld [vmem:[%s0 + $0x2c] sm:$0xff]
  %v643 = vld [vmem:[%s0 + $0x34] sm:$0xff]
  %v644 = vld [vmem:[%s0 + $0x3c] sm:$0xff]
  %v645 = vld [vmem:[%s0 + $0x44] sm:$0xff]
  %v646 = vld [vmem:[%s0 + $0x4c] sm:$0xff]
  %v647 = vld [vmem:[%s0 + $0x54] sm:$0xff]
  %v648 = vld [vmem:[%s0 + $0x5c] sm:$0xff]
  %v649 = vld [vmem:[%s0 + $0x64] sm:$0xff]
  %v650 = vld [vmem:[%s0 + $0x6c] sm:$0xff]
  %v651 = vld [vmem:[%s0 + $0x74] sm:$0xff]
  %v652 = vld [vmem:[%s0 + $0x7c] sm:$0xff]
  %v653 = vld [vmem:[%s0 + $0x84] sm:$0xff]
  %v654 = vld [vmem:[%s0 + $0x8c] sm:$0xff]
  %v655 = vld [vmem:[%s0 + $0x94] sm:$0xff]
  %v656 = vld [vmem:[%s0 + $0x9c] sm:$0xff]
  %v657 = vld [vmem:[%s0 + $0xa4] sm:$0xff]
  %v658 = vld [vmem:[%s0 + $0xac] sm:$0xff]
  %v659 = vld [vmem:[%s0 + $0xb4] sm:$0xff]
  %v660 = vld [vmem:[%s0 + $0xbc] sm:$0xff]
  %v661 = vld [vmem:[%s0 + $0xc4] sm:$0xff]
  %v662 = vld [vmem:[%s0 + $0xcc] sm:$0xff]
  %v663 = vld [vmem:[%s0 + $0xd4] sm:$0xff]
  %v664 = vld [vmem:[%s0 + $0xdc] sm:$0xff]
  %v665 = vld [vmem:[%s0 + $0xe4] sm:$0xff]
  %v666 = vld [vmem:[%s0 + $0xec] sm:$0xff]
  %v667 = vld [vmem:[%s0 + $0xf4] sm:$0xff]
  %v668 = vld [vmem:[%s0 + $0xfc] sm:$0xff]
  %v669 = vld [vmem:[%s0 + $0x104] sm:$0xff]
  %v670 = vld [vmem:[%s0 + $0x10c] sm:$0xff]
  %v671 = vld [vmem:[%s0 + $0x114] sm:$0xff]
  %v672 = vld [vmem:[%s0 + $0x11c] sm:$0xff]
  %v673 = vld [vmem:[%s0 + $0x124] sm:$0xff]
  %v674 = vld [vmem:[%s0 + $0x12c] sm:$0xff]
  %v675 = vld [vmem:[%s0 + $0x134] sm:$0xff]
  %v676 = vld [vmem:[%s0 + $0x13c] sm:$0xff]
  %v677 = vld [vmem:[%s0 + $0x144] sm:$0xff]
  %v678 = vld [vmem:[%s0 + $0x14c] sm:$0xff]
  %v679 = vld [vmem:[%s0 + $0x154] sm:$0xff]
  %v680 = vld [vmem:[%s0 + $0x15c] sm:$0xff]
  %v681 = vld [vmem:[%s0 + $0x164] sm:$0xff]
  %v682 = vld [vmem:[%s0 + $0x16c] sm:$0xff]
  %v683 = vld [vmem:[%s0 + $0x174] sm:$0xff]
  %v684 = vld [vmem:[%s0 + $0x17c] sm:$0xff]
  %v685 = vld [vmem:[%s0 + $0x184] sm:$0xff]
  %v686 = vld [vmem:[%s0 + $0x18c] sm:$0xff]
  %v687 = vld [vmem:[%s0 + $0x194] sm:$0xff]
  %v688 = vld [vmem:[%s0 + $0x19c] sm:$0xff]
  %v689 = vld [vmem:[%s0 + $0x1a4] sm:$0xff]
  %v690 = vld [vmem:[%s0 + $0x1ac] sm:$0xff]
  %v691 = vld [vmem:[%s0 + $0x1b4] sm:$0xff]
  %v692 = vld [vmem:[%s0 + $0x1bc] sm:$0xff]
  %v693 = vld [vmem:[%s0 + $0x1c4] sm:$0xff]
  %v694 = vld [vmem:[%s0 + $0x1cc] sm:$0xff]
  %v695 = vld [vmem:[%s0 + $0x1d4] sm:$0xff]
  %v696 = vld [vmem:[%s0 + $0x1dc] sm:$0xff]
  %v697 = vld [vmem:[%s0 + $0x1e4] sm:$0xff]
  %v698 = vld [vmem:[%s0 + $0x1ec] sm:$0xff]
  %v699 = vld [vmem:[%s0 + $0x1f4] sm:$0xff]
  %v700 = vld [vmem:[%s0 + $0x1fc] sm:$0xff]
  %v701 = vld [vmem:[%s0 + $0x204] sm:$0xff]
  %v702 = vld [vmem:[%s0 + $0x20c] sm:$0xff]
  %v703 = vld [vmem:[%s0 + $0x214] sm:$0xff]
  %v704 = vld [vmem:[%s0 + $0x21c] sm:$0xff]
  %v705 = vld [vmem:[%s0 + $0x224] sm:$0xff]
  %v706 = vld [vmem:[%s0 + $0x22c] sm:$0xff]
  %v707 = vld [vmem:[%s0 + $0x234] sm:$0xff]
  %v708 = vld [vmem:[%s0 + $0x23c] sm:$0xff]
  %v709 = vld [vmem:[%s0 + $0x244] sm:$0xff]
  %v710 = vld [vmem:[%s0 + $0x24c] sm:$0xff]
  %v711 = vld [vmem:[%s0 + $0x254] sm:$0xff]
  %v712 = vld [vmem:[%s0 + $0x25c] sm:$0xff]
  %v713 = vld [vmem:[%s0 + $0x264] sm:$0xff]
  %v714 = vld [vmem:[%s0 + $0x26c] sm:$0xff]
  %v715 = vld [vmem:[%s0 + $0x274] sm:$0xff]
  %v716 = vld [vmem:[%s0 + $0x27c] sm:$0xff]
  %v717 = vld [vmem:[%s0 + $0x284] sm:$0xff]
  %v718 = vld [vmem:[%s0 + $0x28c] sm:$0xff]
  %v719 = vld [vmem:[%s0 + $0x294] sm:$0xff]
  %v720 = vld [vmem:[%s0 + $0x29c] sm:$0xff]
  %v721 = vld [vmem:[%s0 + $0x2a4] sm:$0xff]
  %v722 = vld [vmem:[%s0 + $0x2ac] sm:$0xff]
  %v723 = vld [vmem:[%s0 + $0x2b4] sm:$0xff]
  %v724 = vld [vmem:[%s0 + $0x2bc] sm:$0xff]
  %v725 = vld [vmem:[%s0 + $0x2c4] sm:$0xff]
  %v726 = vld [vmem:[%s0 + $0x2cc] sm:$0xff]
  %v727 = vld [vmem:[%s0 + $0x2d4] sm:$0xff]
  %v728 = vld [vmem:[%s0 + $0x2dc] sm:$0xff]
  %v729 = vld [vmem:[%s0 + $0x2e4] sm:$0xff]
  %v730 = vld [vmem:[%s0 + $0x2ec] sm:$0xff]
  %v731 = vld [vmem:[%s0 + $0x2f4] sm:$0xff]
  %v732 = vld [vmem:[%s0 + $0x2fc] sm:$0xff]
  %v733 = vld [vmem:[%s0 + $0x304] sm:$0xff]
  %v734 = vld [vmem:[%s0 + $0x30c] sm:$0xff]
  %v735 = vld [vmem:[%s0 + $0x314] sm:$0xff]
  %v736 = vld [vmem:[%s0 + $0x31c] sm:$0xff]
  %v737 = vld [vmem:[%s2 + $0x1] sm:$0x1]
  %v738 = vlaneseq
  %v739 = vshrl.u32 %v738, 7
  %v740 = vsub.s32 0, %v739
  %v741 = vrot.slane %v737, %v740
  %v742 = vmul.f32 %v741, %v637
  %v743 = vmul.f32 %v741, %v638
  %v744 = vmul.f32 %v741, %v639
  %v745 = vmul.f32 %v741, %v640
  %v746 = vmul.f32 %v741, %v641
  %v747 = vmul.f32 %v741, %v642
  %v748 = vmul.f32 %v741, %v643
  %v749 = vmul.f32 %v741, %v644
  %v750 = vmul.f32 %v741, %v645
  %v751 = vmul.f32 %v741, %v646
  %v752 = vmul.f32 %v741, %v647
  %v753 = vmul.f32 %v741, %v648
  %v754 = vmul.f32 %v741, %v649
  %v755 = vmul.f32 %v741, %v650
  %v756 = vmul.f32 %v741, %v651
  %v757 = vmul.f32 %v741, %v652
  %v758 = vmul.f32 %v741, %v653
  %v759 = vmul.f32 %v741, %v654
  %v760 = vmul.f32 %v741, %v655
  %v761 = vmul.f32 %v741, %v656
  %v762 = vmul.f32 %v741, %v657
  %v763 = vmul.f32 %v741, %v658
  %v764 = vmul.f32 %v741, %v659
  %v765 = vmul.f32 %v741, %v660
  %v766 = vmul.f32 %v741, %v661
  %v767 = vmul.f32 %v741, %v662
  %v768 = vmul.f32 %v741, %v663
  %v769 = vmul.f32 %v741, %v664
  %v770 = vmul.f32 %v741, %v665
  %v771 = vmul.f32 %v741, %v666
  %v772 = vmul.f32 %v741, %v667
  %v773 = vmul.f32 %v741, %v668
  %v774 = vmul.f32 %v741, %v669
  %v775 = vmul.f32 %v741, %v670
  %v776 = vmul.f32 %v741, %v671
  %v777 = vmul.f32 %v741, %v672
  %v778 = vmul.f32 %v741, %v673
  %v779 = vmul.f32 %v741, %v674
  %v780 = vmul.f32 %v741, %v675
  %v781 = vmul.f32 %v741, %v676
  %v782 = vmul.f32 %v741, %v677
  %v783 = vmul.f32 %v741, %v678
  %v784 = vmul.f32 %v741, %v679
  %v785 = vmul.f32 %v741, %v680
  %v786 = vmul.f32 %v741, %v681
  %v787 = vmul.f32 %v741, %v682
  %v788 = vmul.f32 %v741, %v683
  %v789 = vmul.f32 %v741, %v684
  %v790 = vmul.f32 %v741, %v685
  %v791 = vmul.f32 %v741, %v686
  %v792 = vmul.f32 %v741, %v687
  %v793 = vmul.f32 %v741, %v688
  %v794 = vmul.f32 %v741, %v689
  %v795 = vmul.f32 %v741, %v690
  %v796 = vmul.f32 %v741, %v691
  %v797 = vmul.f32 %v741, %v692
  %v798 = vmul.f32 %v741, %v693
  %v799 = vmul.f32 %v741, %v694
  %v800 = vmul.f32 %v741, %v695
  %v801 = vmul.f32 %v741, %v696
  %v802 = vmul.f32 %v741, %v697
  %v803 = vmul.f32 %v741, %v698
  %v804 = vmul.f32 %v741, %v699
  %v805 = vmul.f32 %v741, %v700
  %v806 = vmul.f32 %v741, %v701
  %v807 = vmul.f32 %v741, %v702
  %v808 = vmul.f32 %v741, %v703
  %v809 = vmul.f32 %v741, %v704
  %v810 = vmul.f32 %v741, %v705
  %v811 = vmul.f32 %v741, %v706
  %v812 = vmul.f32 %v741, %v707
  %v813 = vmul.f32 %v741, %v708
  %v814 = vmul.f32 %v741, %v709
  %v815 = vmul.f32 %v741, %v710
  %v816 = vmul.f32 %v741, %v711
  %v817 = vmul.f32 %v741, %v712
  %v818 = vmul.f32 %v741, %v713
  %v819 = vmul.f32 %v741, %v714
  %v820 = vmul.f32 %v741, %v715
  %v821 = vmul.f32 %v741, %v716
  %v822 = vmul.f32 %v741, %v717
  %v823 = vmul.f32 %v741, %v718
  %v824 = vmul.f32 %v741, %v719
  %v825 = vmul.f32 %v741, %v720
  %v826 = vmul.f32 %v741, %v721
  %v827 = vmul.f32 %v741, %v722
  %v828 = vmul.f32 %v741, %v723
  %v829 = vmul.f32 %v741, %v724
  %v830 = vmul.f32 %v741, %v725
  %v831 = vmul.f32 %v741, %v726
  %v832 = vmul.f32 %v741, %v727
  %v833 = vmul.f32 %v741, %v728
  %v834 = vmul.f32 %v741, %v729
  %v835 = vmul.f32 %v741, %v730
  %v836 = vmul.f32 %v741, %v731
  %v837 = vmul.f32 %v741, %v732
  %v838 = vmul.f32 %v741, %v733
  %v839 = vmul.f32 %v741, %v734
  %v840 = vmul.f32 %v741, %v735
  %v841 = vmul.f32 %v741, %v736
  %v842 = vadd.f32 %v537, %v742
  %v843 = vadd.f32 %v538, %v743
  %v844 = vadd.f32 %v539, %v744
  %v845 = vadd.f32 %v540, %v745
  %v846 = vadd.f32 %v541, %v746
  %v847 = vadd.f32 %v542, %v747
  %v848 = vadd.f32 %v543, %v748
  %v849 = vadd.f32 %v544, %v749
  %v850 = vadd.f32 %v545, %v750
  %v851 = vadd.f32 %v546, %v751
  %v852 = vadd.f32 %v547, %v752
  %v853 = vadd.f32 %v548, %v753
  %v854 = vadd.f32 %v549, %v754
  %v855 = vadd.f32 %v550, %v755
  %v856 = vadd.f32 %v551, %v756
  %v857 = vadd.f32 %v552, %v757
  %v858 = vadd.f32 %v553, %v758
  %v859 = vadd.f32 %v554, %v759
  %v860 = vadd.f32 %v555, %v760
  %v861 = vadd.f32 %v556, %v761
  %v862 = vadd.f32 %v557, %v762
  %v863 = vadd.f32 %v558, %v763
  %v864 = vadd.f32 %v559, %v764
  %v865 = vadd.f32 %v560, %v765
  %v866 = vadd.f32 %v561, %v766
  %v867 = vadd.f32 %v562, %v767
  %v868 = vadd.f32 %v563, %v768
  %v869 = vadd.f32 %v564, %v769
  %v870 = vadd.f32 %v565, %v770
  %v871 = vadd.f32 %v566, %v771
  %v872 = vadd.f32 %v567, %v772
  %v873 = vadd.f32 %v568, %v773
  %v874 = vadd.f32 %v569, %v774
  %v875 = vadd.f32 %v570, %v775
  %v876 = vadd.f32 %v571, %v776
  %v877 = vadd.f32 %v572, %v777
  %v878 = vadd.f32 %v573, %v778
  %v879 = vadd.f32 %v574, %v779
  %v880 = vadd.f32 %v575, %v780
  %v881 = vadd.f32 %v576, %v781
  %v882 = vadd.f32 %v577, %v782
  %v883 = vadd.f32 %v578, %v783
  %v884 = vadd.f32 %v579, %v784
  %v885 = vadd.f32 %v580, %v785
  %v886 = vadd.f32 %v581, %v786
  %v887 = vadd.f32 %v582, %v787
  %v888 = vadd.f32 %v583, %v788
  %v889 = vadd.f32 %v584, %v789
  %v890 = vadd.f32 %v585, %v790
  %v891 = vadd.f32 %v586, %v791
  %v892 = vadd.f32 %v587, %v792
  %v893 = vadd.f32 %v588, %v793
  %v894 = vadd.f32 %v589, %v794
  %v895 = vadd.f32 %v590, %v795
  %v896 = vadd.f32 %v591, %v796
  %v897 = vadd.f32 %v592, %v797
  %v898 = vadd.f32 %v593, %v798
  %v899 = vadd.f32 %v594, %v799
  %v900 = vadd.f32 %v595, %v800
  %v901 = vadd.f32 %v596, %v801
  %v902 = vadd.f32 %v597, %v802
  %v903 = vadd.f32 %v598, %v803
  %v904 = vadd.f32 %v599, %v804
  %v905 = vadd.f32 %v600, %v805
  %v906 = vadd.f32 %v601, %v806
  %v907 = vadd.f32 %v602, %v807
  %v908 = vadd.f32 %v603, %v808
  %v909 = vadd.f32 %v604, %v809
  %v910 = vadd.f32 %v605, %v810
  %v911 = vadd.f32 %v606, %v811
  %v912 = vadd.f32 %v607, %v812
  %v913 = vadd.f32 %v608, %v813
  %v914 = vadd.f32 %v609, %v814
  %v915 = vadd.f32 %v610, %v815
  %v916 = vadd.f32 %v611, %v816
  %v917 = vadd.f32 %v612, %v817
  %v918 = vadd.f32 %v613, %v818
  %v919 = vadd.f32 %v614, %v819
  %v920 = vadd.f32 %v615, %v820
  %v921 = vadd.f32 %v616, %v821
  %v922 = vadd.f32 %v617, %v822
  %v923 = vadd.f32 %v618, %v823
  %v924 = vadd.f32 %v619, %v824
  %v925 = vadd.f32 %v620, %v825
  %v926 = vadd.f32 %v621, %v826
  %v927 = vadd.f32 %v622, %v827
  %v928 = vadd.f32 %v623, %v828
  %v929 = vadd.f32 %v624, %v829
  %v930 = vadd.f32 %v625, %v830
  %v931 = vadd.f32 %v626, %v831
  %v932 = vadd.f32 %v627, %v832
  %v933 = vadd.f32 %v628, %v833
  %v934 = vadd.f32 %v629, %v834
  %v935 = vadd.f32 %v630, %v835
  %v936 = vadd.f32 %v631, %v836
  %v937 = vadd.f32 %v632, %v837
  %v938 = vadd.f32 %v633, %v838
  %v939 = vadd.f32 %v634, %v839
  %v940 = vadd.f32 %v635, %v840
  %v941 = vadd.f32 %v636, %v841
  %v942 = vld [vmem:[%s0 + $0x5] sm:$0xff]
  %v943 = vld [vmem:[%s0 + $0xd] sm:$0xff]
  %v944 = vld [vmem:[%s0 + $0x15] sm:$0xff]
  %v945 = vld [vmem:[%s0 + $0x1d] sm:$0xff]
  %v946 = vld [vmem:[%s0 + $0x25] sm:$0xff]
  %v947 = vld [vmem:[%s0 + $0x2d] sm:$0xff]
  %v948 = vld [vmem:[%s0 + $0x35] sm:$0xff]
  %v949 = vld [vmem:[%s0 + $0x3d] sm:$0xff]
  %v950 = vld [vmem:[%s0 + $0x45] sm:$0xff]
  %v951 = vld [vmem:[%s0 + $0x4d] sm:$0xff]
  %v952 = vld [vmem:[%s0 + $0x55] sm:$0xff]
  %v953 = vld [vmem:[%s0 + $0x5d] sm:$0xff]
  %v954 = vld [vmem:[%s0 + $0x65] sm:$0xff]
  %v955 = vld [vmem:[%s0 + $0x6d] sm:$0xff]
  %v956 = vld [vmem:[%s0 + $0x75] sm:$0xff]
  %v957 = vld [vmem:[%s0 + $0x7d] sm:$0xff]
  %v958 = vld [vmem:[%s0 + $0x85] sm:$0xff]
  %v959 = vld [vmem:[%s0 + $0x8d] sm:$0xff]
  %v960 = vld [vmem:[%s0 + $0x95] sm:$0xff]
  %v961 = vld [vmem:[%s0 + $0x9d] sm:$0xff]
  %v962 = vld [vmem:[%s0 + $0xa5] sm:$0xff]
  %v963 = vld [vmem:[%s0 + $0xad] sm:$0xff]
  %v964 = vld [vmem:[%s0 + $0xb5] sm:$0xff]
  %v965 = vld [vmem:[%s0 + $0xbd] sm:$0xff]
  %v966 = vld [vmem:[%s0 + $0xc5] sm:$0xff]
  %v967 = vld [vmem:[%s0 + $0xcd] sm:$0xff]
  %v968 = vld [vmem:[%s0 + $0xd5] sm:$0xff]
  %v969 = vld [vmem:[%s0 + $0xdd] sm:$0xff]
  %v970 = vld [vmem:[%s0 + $0xe5] sm:$0xff]
  %v971 = vld [vmem:[%s0 + $0xed] sm:$0xff]
  %v972 = vld [vmem:[%s0 + $0xf5] sm:$0xff]
  %v973 = vld [vmem:[%s0 + $0xfd] sm:$0xff]
  %v974 = vld [vmem:[%s0 + $0x105] sm:$0xff]
  %v975 = vld [vmem:[%s0 + $0x10d] sm:$0xff]
  %v976 = vld [vmem:[%s0 + $0x115] sm:$0xff]
  %v977 = vld [vmem:[%s0 + $0x11d] sm:$0xff]
  %v978 = vld [vmem:[%s0 + $0x125] sm:$0xff]
  %v979 = vld [vmem:[%s0 + $0x12d] sm:$0xff]
  %v980 = vld [vmem:[%s0 + $0x135] sm:$0xff]
  %v981 = vld [vmem:[%s0 + $0x13d] sm:$0xff]
  %v982 = vld [vmem:[%s0 + $0x145] sm:$0xff]
  %v983 = vld [vmem:[%s0 + $0x14d] sm:$0xff]
  %v984 = vld [vmem:[%s0 + $0x155] sm:$0xff]
  %v985 = vld [vmem:[%s0 + $0x15d] sm:$0xff]
  %v986 = vld [vmem:[%s0 + $0x165] sm:$0xff]
  %v987 = vld [vmem:[%s0 + $0x16d] sm:$0xff]
  %v988 = vld [vmem:[%s0 + $0x175] sm:$0xff]
  %v989 = vld [vmem:[%s0 + $0x17d] sm:$0xff]
  %v990 = vld [vmem:[%s0 + $0x185] sm:$0xff]
  %v991 = vld [vmem:[%s0 + $0x18d] sm:$0xff]
  %v992 = vld [vmem:[%s0 + $0x195] sm:$0xff]
  %v993 = vld [vmem:[%s0 + $0x19d] sm:$0xff]
  %v994 = vld [vmem:[%s0 + $0x1a5] sm:$0xff]
  %v995 = vld [vmem:[%s0 + $0x1ad] sm:$0xff]
  %v996 = vld [vmem:[%s0 + $0x1b5] sm:$0xff]
  %v997 = vld [vmem:[%s0 + $0x1bd] sm:$0xff]
  %v998 = vld [vmem:[%s0 + $0x1c5] sm:$0xff]
  %v999 = vld [vmem:[%s0 + $0x1cd] sm:$0xff]
  %v1000 = vld [vmem:[%s0 + $0x1d5] sm:$0xff]
  %v1001 = vld [vmem:[%s0 + $0x1dd] sm:$0xff]
  %v1002 = vld [vmem:[%s0 + $0x1e5] sm:$0xff]
  %v1003 = vld [vmem:[%s0 + $0x1ed] sm:$0xff]
  %v1004 = vld [vmem:[%s0 + $0x1f5] sm:$0xff]
  %v1005 = vld [vmem:[%s0 + $0x1fd] sm:$0xff]
  %v1006 = vld [vmem:[%s0 + $0x205] sm:$0xff]
  %v1007 = vld [vmem:[%s0 + $0x20d] sm:$0xff]
  %v1008 = vld [vmem:[%s0 + $0x215] sm:$0xff]
  %v1009 = vld [vmem:[%s0 + $0x21d] sm:$0xff]
  %v1010 = vld [vmem:[%s0 + $0x225] sm:$0xff]
  %v1011 = vld [vmem:[%s0 + $0x22d] sm:$0xff]
  %v1012 = vld [vmem:[%s0 + $0x235] sm:$0xff]
  %v1013 = vld [vmem:[%s0 + $0x23d] sm:$0xff]
  %v1014 = vld [vmem:[%s0 + $0x245] sm:$0xff]
  %v1015 = vld [vmem:[%s0 + $0x24d] sm:$0xff]
  %v1016 = vld [vmem:[%s0 + $0x255] sm:$0xff]
  %v1017 = vld [vmem:[%s0 + $0x25d] sm:$0xff]
  %v1018 = vld [vmem:[%s0 + $0x265] sm:$0xff]
  %v1019 = vld [vmem:[%s0 + $0x26d] sm:$0xff]
  %v1020 = vld [vmem:[%s0 + $0x275] sm:$0xff]
  %v1021 = vld [vmem:[%s0 + $0x27d] sm:$0xff]
  %v1022 = vld [vmem:[%s0 + $0x285] sm:$0xff]
  %v1023 = vld [vmem:[%s0 + $0x28d] sm:$0xff]
  %v1024 = vld [vmem:[%s0 + $0x295] sm:$0xff]
  %v1025 = vld [vmem:[%s0 + $0x29d] sm:$0xff]
  %v1026 = vld [vmem:[%s0 + $0x2a5] sm:$0xff]
  %v1027 = vld [vmem:[%s0 + $0x2ad] sm:$0xff]
  %v1028 = vld [vmem:[%s0 + $0x2b5] sm:$0xff]
  %v1029 = vld [vmem:[%s0 + $0x2bd] sm:$0xff]
  %v1030 = vld [vmem:[%s0 + $0x2c5] sm:$0xff]
  %v1031 = vld [vmem:[%s0 + $0x2cd] sm:$0xff]
  %v1032 = vld [vmem:[%s0 + $0x2d5] sm:$0xff]
  %v1033 = vld [vmem:[%s0 + $0x2dd] sm:$0xff]
  %v1034 = vld [vmem:[%s0 + $0x2e5] sm:$0xff]
  %v1035 = vld [vmem:[%s0 + $0x2ed] sm:$0xff]
  %v1036 = vld [vmem:[%s0 + $0x2f5] sm:$0xff]
  %v1037 = vld [vmem:[%s0 + $0x2fd] sm:$0xff]
  %v1038 = vld [vmem:[%s0 + $0x305] sm:$0xff]
  %v1039 = vld [vmem:[%s0 + $0x30d] sm:$0xff]
  %v1040 = vld [vmem:[%s0 + $0x315] sm:$0xff]
  %v1041 = vld [vmem:[%s0 + $0x31d] sm:$0xff]
  %v1042 = vld [vmem:[%s2 + $0x2] sm:$0x1]
  %v1043 = vlaneseq
  %v1044 = vshrl.u32 %v1043, 7
  %v1045 = vsub.s32 0, %v1044
  %v1046 = vrot.slane %v1042, %v1045
  %v1047 = vmul.f32 %v1046, %v942
  %v1048 = vmul.f32 %v1046, %v943
  %v1049 = vmul.f32 %v1046, %v944
  %v1050 = vmul.f32 %v1046, %v945
  %v1051 = vmul.f32 %v1046, %v946
  %v1052 = vmul.f32 %v1046, %v947
  %v1053 = vmul.f32 %v1046, %v948
  %v1054 = vmul.f32 %v1046, %v949
  %v1055 = vmul.f32 %v1046, %v950
  %v1056 = vmul.f32 %v1046, %v951
  %v1057 = vmul.f32 %v1046, %v952
  %v1058 = vmul.f32 %v1046, %v953
  %v1059 = vmul.f32 %v1046, %v954
  %v1060 = vmul.f32 %v1046, %v955
  %v1061 = vmul.f32 %v1046, %v956
  %v1062 = vmul.f32 %v1046, %v957
  %v1063 = vmul.f32 %v1046, %v958
  %v1064 = vmul.f32 %v1046, %v959
  %v1065 = vmul.f32 %v1046, %v960
  %v1066 = vmul.f32 %v1046, %v961
  %v1067 = vmul.f32 %v1046, %v962
  %v1068 = vmul.f32 %v1046, %v963
  %v1069 = vmul.f32 %v1046, %v964
  %v1070 = vmul.f32 %v1046, %v965
  %v1071 = vmul.f32 %v1046, %v966
  %v1072 = vmul.f32 %v1046, %v967
  %v1073 = vmul.f32 %v1046, %v968
  %v1074 = vmul.f32 %v1046, %v969
  %v1075 = vmul.f32 %v1046, %v970
  %v1076 = vmul.f32 %v1046, %v971
  %v1077 = vmul.f32 %v1046, %v972
  %v1078 = vmul.f32 %v1046, %v973
  %v1079 = vmul.f32 %v1046, %v974
  %v1080 = vmul.f32 %v1046, %v975
  %v1081 = vmul.f32 %v1046, %v976
  %v1082 = vmul.f32 %v1046, %v977
  %v1083 = vmul.f32 %v1046, %v978
  %v1084 = vmul.f32 %v1046, %v979
  %v1085 = vmul.f32 %v1046, %v980
  %v1086 = vmul.f32 %v1046, %v981
  %v1087 = vmul.f32 %v1046, %v982
  %v1088 = vmul.f32 %v1046, %v983
  %v1089 = vmul.f32 %v1046, %v984
  %v1090 = vmul.f32 %v1046, %v985
  %v1091 = vmul.f32 %v1046, %v986
  %v1092 = vmul.f32 %v1046, %v987
  %v1093 = vmul.f32 %v1046, %v988
  %v1094 = vmul.f32 %v1046, %v989
  %v1095 = vmul.f32 %v1046, %v990
  %v1096 = vmul.f32 %v1046, %v991
  %v1097 = vmul.f32 %v1046, %v992
  %v1098 = vmul.f32 %v1046, %v993
  %v1099 = vmul.f32 %v1046, %v994
  %v1100 = vmul.f32 %v1046, %v995
  %v1101 = vmul.f32 %v1046, %v996
  %v1102 = vmul.f32 %v1046, %v997
  %v1103 = vmul.f32 %v1046, %v998
  %v1104 = vmul.f32 %v1046, %v999
  %v1105 = vmul.f32 %v1046, %v1000
  %v1106 = vmul.f32 %v1046, %v1001
  %v1107 = vmul.f32 %v1046, %v1002
  %v1108 = vmul.f32 %v1046, %v1003
  %v1109 = vmul.f32 %v1046, %v1004
  %v1110 = vmul.f32 %v1046, %v1005
  %v1111 = vmul.f32 %v1046, %v1006
  %v1112 = vmul.f32 %v1046, %v1007
  %v1113 = vmul.f32 %v1046, %v1008
  %v1114 = vmul.f32 %v1046, %v1009
  %v1115 = vmul.f32 %v1046, %v1010
  %v1116 = vmul.f32 %v1046, %v1011
  %v1117 = vmul.f32 %v1046, %v1012
  %v1118 = vmul.f32 %v1046, %v1013
  %v1119 = vmul.f32 %v1046, %v1014
  %v1120 = vmul.f32 %v1046, %v1015
  %v1121 = vmul.f32 %v1046, %v1016
  %v1122 = vmul.f32 %v1046, %v1017
  %v1123 = vmul.f32 %v1046, %v1018
  %v1124 = vmul.f32 %v1046, %v1019
  %v1125 = vmul.f32 %v1046, %v1020
  %v1126 = vmul.f32 %v1046, %v1021
  %v1127 = vmul.f32 %v1046, %v1022
  %v1128 = vmul.f32 %v1046, %v1023
  %v1129 = vmul.f32 %v1046, %v1024
  %v1130 = vmul.f32 %v1046, %v1025
  %v1131 = vmul.f32 %v1046, %v1026
  %v1132 = vmul.f32 %v1046, %v1027
  %v1133 = vmul.f32 %v1046, %v1028
  %v1134 = vmul.f32 %v1046, %v1029
  %v1135 = vmul.f32 %v1046, %v1030
  %v1136 = vmul.f32 %v1046, %v1031
  %v1137 = vmul.f32 %v1046, %v1032
  %v1138 = vmul.f32 %v1046, %v1033
  %v1139 = vmul.f32 %v1046, %v1034
  %v1140 = vmul.f32 %v1046, %v1035
  %v1141 = vmul.f32 %v1046, %v1036
  %v1142 = vmul.f32 %v1046, %v1037
  %v1143 = vmul.f32 %v1046, %v1038
  %v1144 = vmul.f32 %v1046, %v1039
  %v1145 = vmul.f32 %v1046, %v1040
  %v1146 = vmul.f32 %v1046, %v1041
  %v1147 = vadd.f32 %v842, %v1047
  %v1148 = vadd.f32 %v843, %v1048
  %v1149 = vadd.f32 %v844, %v1049
  %v1150 = vadd.f32 %v845, %v1050
  %v1151 = vadd.f32 %v846, %v1051
  %v1152 = vadd.f32 %v847, %v1052
  %v1153 = vadd.f32 %v848, %v1053
  %v1154 = vadd.f32 %v849, %v1054
  %v1155 = vadd.f32 %v850, %v1055
  %v1156 = vadd.f32 %v851, %v1056
  %v1157 = vadd.f32 %v852, %v1057
  %v1158 = vadd.f32 %v853, %v1058
  %v1159 = vadd.f32 %v854, %v1059
  %v1160 = vadd.f32 %v855, %v1060
  %v1161 = vadd.f32 %v856, %v1061
  %v1162 = vadd.f32 %v857, %v1062
  %v1163 = vadd.f32 %v858, %v1063
  %v1164 = vadd.f32 %v859, %v1064
  %v1165 = vadd.f32 %v860, %v1065
  %v1166 = vadd.f32 %v861, %v1066
  %v1167 = vadd.f32 %v862, %v1067
  %v1168 = vadd.f32 %v863, %v1068
  %v1169 = vadd.f32 %v864, %v1069
  %v1170 = vadd.f32 %v865, %v1070
  %v1171 = vadd.f32 %v866, %v1071
  %v1172 = vadd.f32 %v867, %v1072
  %v1173 = vadd.f32 %v868, %v1073
  %v1174 = vadd.f32 %v869, %v1074
  %v1175 = vadd.f32 %v870, %v1075
  %v1176 = vadd.f32 %v871, %v1076
  %v1177 = vadd.f32 %v872, %v1077
  %v1178 = vadd.f32 %v873, %v1078
  %v1179 = vadd.f32 %v874, %v1079
  %v1180 = vadd.f32 %v875, %v1080
  %v1181 = vadd.f32 %v876, %v1081
  %v1182 = vadd.f32 %v877, %v1082
  %v1183 = vadd.f32 %v878, %v1083
  %v1184 = vadd.f32 %v879, %v1084
  %v1185 = vadd.f32 %v880, %v1085
  %v1186 = vadd.f32 %v881, %v1086
  %v1187 = vadd.f32 %v882, %v1087
  %v1188 = vadd.f32 %v883, %v1088
  %v1189 = vadd.f32 %v884, %v1089
  %v1190 = vadd.f32 %v885, %v1090
  %v1191 = vadd.f32 %v886, %v1091
  %v1192 = vadd.f32 %v887, %v1092
  %v1193 = vadd.f32 %v888, %v1093
  %v1194 = vadd.f32 %v889, %v1094
  %v1195 = vadd.f32 %v890, %v1095
  %v1196 = vadd.f32 %v891, %v1096
  %v1197 = vadd.f32 %v892, %v1097
  %v1198 = vadd.f32 %v893, %v1098
  %v1199 = vadd.f32 %v894, %v1099
  %v1200 = vadd.f32 %v895, %v1100
  %v1201 = vadd.f32 %v896, %v1101
  %v1202 = vadd.f32 %v897, %v1102
  %v1203 = vadd.f32 %v898, %v1103
  %v1204 = vadd.f32 %v899, %v1104
  %v1205 = vadd.f32 %v900, %v1105
  %v1206 = vadd.f32 %v901, %v1106
  %v1207 = vadd.f32 %v902, %v1107
  %v1208 = vadd.f32 %v903, %v1108
  %v1209 = vadd.f32 %v904, %v1109
  %v1210 = vadd.f32 %v905, %v1110
  %v1211 = vadd.f32 %v906, %v1111
  %v1212 = vadd.f32 %v907, %v1112
  %v1213 = vadd.f32 %v908, %v1113
  %v1214 = vadd.f32 %v909, %v1114
  %v1215 = vadd.f32 %v910, %v1115
  %v1216 = vadd.f32 %v911, %v1116
  %v1217 = vadd.f32 %v912, %v1117
  %v1218 = vadd.f32 %v913, %v1118
  %v1219 = vadd.f32 %v914, %v1119
  %v1220 = vadd.f32 %v915, %v1120
  %v1221 = vadd.f32 %v916, %v1121
  %v1222 = vadd.f32 %v917, %v1122
  %v1223 = vadd.f32 %v918, %v1123
  %v1224 = vadd.f32 %v919, %v1124
  %v1225 = vadd.f32 %v920, %v1125
  %v1226 = vadd.f32 %v921, %v1126
  %v1227 = vadd.f32 %v922, %v1127
  %v1228 = vadd.f32 %v923, %v1128
  %v1229 = vadd.f32 %v924, %v1129
  %v1230 = vadd.f32 %v925, %v1130
  %v1231 = vadd.f32 %v926, %v1131
  %v1232 = vadd.f32 %v927, %v1132
  %v1233 = vadd.f32 %v928, %v1133
  %v1234 = vadd.f32 %v929, %v1134
  %v1235 = vadd.f32 %v930, %v1135
  %v1236 = vadd.f32 %v931, %v1136
  %v1237 = vadd.f32 %v932, %v1137
  %v1238 = vadd.f32 %v933, %v1138
  %v1239 = vadd.f32 %v934, %v1139
  %v1240 = vadd.f32 %v935, %v1140
  %v1241 = vadd.f32 %v936, %v1141
  %v1242 = vadd.f32 %v937, %v1142
  %v1243 = vadd.f32 %v938, %v1143
  %v1244 = vadd.f32 %v939, %v1144
  %v1245 = vadd.f32 %v940, %v1145
  %v1246 = vadd.f32 %v941, %v1146
  %v1247 = vld [vmem:[%s0 + $0x17] sm:$0xff]
  %v1248 = vld [vmem:[%s0 + $0x1f] sm:$0xff]
  %v1249 = vld [vmem:[%s0 + $0x27] sm:$0xff]
  %v1250 = vld [vmem:[%s0 + $0x2f] sm:$0xff]
  %v1251 = vld [vmem:[%s0 + $0x37] sm:$0xff]
  %v1252 = vld [vmem:[%s0 + $0x3f] sm:$0xff]
  %v1253 = vld [vmem:[%s0 + $0x47] sm:$0xff]
  %v1254 = vld [vmem:[%s0 + $0x4f] sm:$0xff]
  %v1255 = vld [vmem:[%s0 + $0x57] sm:$0xff]
  %v1256 = vld [vmem:[%s0 + $0x5f] sm:$0xff]
  %v1257 = vld [vmem:[%s0 + $0x67] sm:$0xff]
  %v1258 = vld [vmem:[%s0 + $0x6f] sm:$0xff]
  %v1259 = vld [vmem:[%s0 + $0x77] sm:$0xff]
  %v1260 = vld [vmem:[%s0 + $0x7f] sm:$0xff]
  %v1261 = vld [vmem:[%s0 + $0x87] sm:$0xff]
  %v1262 = vld [vmem:[%s0 + $0x8f] sm:$0xff]
  %v1263 = vld [vmem:[%s0 + $0x97] sm:$0xff]
  %v1264 = vld [vmem:[%s0 + $0x9f] sm:$0xff]
  %v1265 = vld [vmem:[%s0 + $0xa7] sm:$0xff]
  %v1266 = vld [vmem:[%s0 + $0xaf] sm:$0xff]
  %v1267 = vld [vmem:[%s0 + $0xb7] sm:$0xff]
  %v1268 = vld [vmem:[%s0 + $0xbf] sm:$0xff]
  %v1269 = vld [vmem:[%s0 + $0xc7] sm:$0xff]
  %v1270 = vld [vmem:[%s0 + $0xcf] sm:$0xff]
  %v1271 = vld [vmem:[%s0 + $0xd7] sm:$0xff]
  %v1272 = vld [vmem:[%s0 + $0xdf] sm:$0xff]
  %v1273 = vld [vmem:[%s0 + $0xe7] sm:$0xff]
  %v1274 = vld [vmem:[%s0 + $0xef] sm:$0xff]
  %v1275 = vld [vmem:[%s0 + $0xf7] sm:$0xff]
  %v1276 = vld [vmem:[%s0 + $0xff] sm:$0xff]
  %v1277 = vld [vmem:[%s0 + $0x107] sm:$0xff]
  %v1278 = vld [vmem:[%s0 + $0x10f] sm:$0xff]
  %v1279 = vld [vmem:[%s0 + $0x117] sm:$0xff]
  %v1280 = vld [vmem:[%s0 + $0x11f] sm:$0xff]
  %v1281 = vld [vmem:[%s0 + $0x127] sm:$0xff]
  %v1282 = vld [vmem:[%s0 + $0x12f] sm:$0xff]
  %v1283 = vld [vmem:[%s0 + $0x137] sm:$0xff]
  %v1284 = vld [vmem:[%s0 + $0x13f] sm:$0xff]
  %v1285 = vld [vmem:[%s0 + $0x147] sm:$0xff]
  %v1286 = vld [vmem:[%s0 + $0x14f] sm:$0xff]
  %v1287 = vld [vmem:[%s0 + $0x157] sm:$0xff]
  %v1288 = vld [vmem:[%s0 + $0x15f] sm:$0xff]
  %v1289 = vld [vmem:[%s0 + $0x167] sm:$0xff]
  %v1290 = vld [vmem:[%s0 + $0x16f] sm:$0xff]
  %v1291 = vld [vmem:[%s0 + $0x177] sm:$0xff]
  %v1292 = vld [vmem:[%s0 + $0x17f] sm:$0xff]
  %v1293 = vld [vmem:[%s0 + $0x187] sm:$0xff]
  %v1294 = vld [vmem:[%s0 + $0x18f] sm:$0xff]
  %v1295 = vld [vmem:[%s0 + $0x197] sm:$0xff]
  %v1296 = vld [vmem:[%s0 + $0x19f] sm:$0xff]
  %v1297 = vld [vmem:[%s0 + $0x1a7] sm:$0xff]
  %v1298 = vld [vmem:[%s0 + $0x1af] sm:$0xff]
  %v1299 = vld [vmem:[%s0 + $0x1b7] sm:$0xff]
  %v1300 = vld [vmem:[%s0 + $0x1bf] sm:$0xff]
  %v1301 = vld [vmem:[%s0 + $0x1c7] sm:$0xff]
  %v1302 = vld [vmem:[%s0 + $0x1cf] sm:$0xff]
  %v1303 = vld [vmem:[%s0 + $0x1d7] sm:$0xff]
  %v1304 = vld [vmem:[%s0 + $0x1df] sm:$0xff]
  %v1305 = vld [vmem:[%s0 + $0x1e7] sm:$0xff]
  %v1306 = vld [vmem:[%s0 + $0x1ef] sm:$0xff]
  %v1307 = vld [vmem:[%s0 + $0x1f7] sm:$0xff]
  %v1308 = vld [vmem:[%s0 + $0x1ff] sm:$0xff]
  %v1309 = vld [vmem:[%s0 + $0x207] sm:$0xff]
  %v1310 = vld [vmem:[%s0 + $0x20f] sm:$0xff]
  %v1311 = vld [vmem:[%s0 + $0x217] sm:$0xff]
  %v1312 = vld [vmem:[%s0 + $0x21f] sm:$0xff]
  %v1313 = vld [vmem:[%s0 + $0x227] sm:$0xff]
  %v1314 = vld [vmem:[%s0 + $0x22f] sm:$0xff]
  %v1315 = vld [vmem:[%s0 + $0x237] sm:$0xff]
  %v1316 = vld [vmem:[%s0 + $0x23f] sm:$0xff]
  %v1317 = vld [vmem:[%s0 + $0x247] sm:$0xff]
  %v1318 = vld [vmem:[%s0 + $0x24f] sm:$0xff]
  %v1319 = vld [vmem:[%s0 + $0x257] sm:$0xff]
  %v1320 = vld [vmem:[%s0 + $0x25f] sm:$0xff]
  %v1321 = vld [vmem:[%s0 + $0x267] sm:$0xff]
  %v1322 = vld [vmem:[%s0 + $0x26f] sm:$0xff]
  %v1323 = vld [vmem:[%s0 + $0x277] sm:$0xff]
  %v1324 = vld [vmem:[%s0 + $0x27f] sm:$0xff]
  %v1325 = vld [vmem:[%s0 + $0x287] sm:$0xff]
  %v1326 = vld [vmem:[%s0 + $0x28f] sm:$0xff]
  %v1327 = vld [vmem:[%s0 + $0x297] sm:$0xff]
  %v1328 = vld [vmem:[%s0 + $0x29f] sm:$0xff]
  %v1329 = vld [vmem:[%s0 + $0x2a7] sm:$0xff]
  %v1330 = vld [vmem:[%s0 + $0x2af] sm:$0xff]
  %v1331 = vld [vmem:[%s0 + $0x2b7] sm:$0xff]
  %v1332 = vld [vmem:[%s0 + $0x2bf] sm:$0xff]
  %v1333 = vld [vmem:[%s0 + $0x2c7] sm:$0xff]
  %v1334 = vld [vmem:[%s0 + $0x2cf] sm:$0xff]
  %v1335 = vld [vmem:[%s0 + $0x2d7] sm:$0xff]
  %v1336 = vld [vmem:[%s0 + $0x2df] sm:$0xff]
  %v1337 = vld [vmem:[%s0 + $0x2e7] sm:$0xff]
  %v1338 = vld [vmem:[%s0 + $0x2ef] sm:$0xff]
  %v1339 = vld [vmem:[%s0 + $0x2f7] sm:$0xff]
  %v1340 = vld [vmem:[%s0 + $0x2ff] sm:$0xff]
  %v1341 = vld [vmem:[%s0 + $0x307] sm:$0xff]
  %v1342 = vld [vmem:[%s0 + $0x30f] sm:$0xff]
  %v1343 = vld [vmem:[%s0 + $0x317] sm:$0xff]
  %v1344 = vld [vmem:[%s0 + $0x31f] sm:$0xff]
  %v1345 = vld [vmem:[%s0 + $0x327] sm:$0xff]
  %v1346 = vld [vmem:[%s0 + $0x32f] sm:$0xff]
  %v1347 = vld [vmem:[%s2 + $0x3] sm:$0x1]
  %v1348 = vlaneseq
  %v1349 = vshrl.u32 %v1348, 7
  %v1350 = vsub.s32 0, %v1349
  %v1351 = vrot.slane %v1347, %v1350
  %v1352 = vmul.f32 %v1351, %v1247
  %v1353 = vmul.f32 %v1351, %v1248
  %v1354 = vmul.f32 %v1351, %v1249
  %v1355 = vmul.f32 %v1351, %v1250
  %v1356 = vmul.f32 %v1351, %v1251
  %v1357 = vmul.f32 %v1351, %v1252
  %v1358 = vmul.f32 %v1351, %v1253
  %v1359 = vmul.f32 %v1351, %v1254
  %v1360 = vmul.f32 %v1351, %v1255
  %v1361 = vmul.f32 %v1351, %v1256
  %v1362 = vmul.f32 %v1351, %v1257
  %v1363 = vmul.f32 %v1351, %v1258
  %v1364 = vmul.f32 %v1351, %v1259
  %v1365 = vmul.f32 %v1351, %v1260
  %v1366 = vmul.f32 %v1351, %v1261
  %v1367 = vmul.f32 %v1351, %v1262
  %v1368 = vmul.f32 %v1351, %v1263
  %v1369 = vmul.f32 %v1351, %v1264
  %v1370 = vmul.f32 %v1351, %v1265
  %v1371 = vmul.f32 %v1351, %v1266
  %v1372 = vmul.f32 %v1351, %v1267
  %v1373 = vmul.f32 %v1351, %v1268
  %v1374 = vmul.f32 %v1351, %v1269
  %v1375 = vmul.f32 %v1351, %v1270
  %v1376 = vmul.f32 %v1351, %v1271
  %v1377 = vmul.f32 %v1351, %v1272
  %v1378 = vmul.f32 %v1351, %v1273
  %v1379 = vmul.f32 %v1351, %v1274
  %v1380 = vmul.f32 %v1351, %v1275
  %v1381 = vmul.f32 %v1351, %v1276
  %v1382 = vmul.f32 %v1351, %v1277
  %v1383 = vmul.f32 %v1351, %v1278
  %v1384 = vmul.f32 %v1351, %v1279
  %v1385 = vmul.f32 %v1351, %v1280
  %v1386 = vmul.f32 %v1351, %v1281
  %v1387 = vmul.f32 %v1351, %v1282
  %v1388 = vmul.f32 %v1351, %v1283
  %v1389 = vmul.f32 %v1351, %v1284
  %v1390 = vmul.f32 %v1351, %v1285
  %v1391 = vmul.f32 %v1351, %v1286
  %v1392 = vmul.f32 %v1351, %v1287
  %v1393 = vmul.f32 %v1351, %v1288
  %v1394 = vmul.f32 %v1351, %v1289
  %v1395 = vmul.f32 %v1351, %v1290
  %v1396 = vmul.f32 %v1351, %v1291
  %v1397 = vmul.f32 %v1351, %v1292
  %v1398 = vmul.f32 %v1351, %v1293
  %v1399 = vmul.f32 %v1351, %v1294
  %v1400 = vmul.f32 %v1351, %v1295
  %v1401 = vmul.f32 %v1351, %v1296
  %v1402 = vmul.f32 %v1351, %v1297
  %v1403 = vmul.f32 %v1351, %v1298
  %v1404 = vmul.f32 %v1351, %v1299
  %v1405 = vmul.f32 %v1351, %v1300
  %v1406 = vmul.f32 %v1351, %v1301
  %v1407 = vmul.f32 %v1351, %v1302
  %v1408 = vmul.f32 %v1351, %v1303
  %v1409 = vmul.f32 %v1351, %v1304
  %v1410 = vmul.f32 %v1351, %v1305
  %v1411 = vmul.f32 %v1351, %v1306
  %v1412 = vmul.f32 %v1351, %v1307
  %v1413 = vmul.f32 %v1351, %v1308
  %v1414 = vmul.f32 %v1351, %v1309
  %v1415 = vmul.f32 %v1351, %v1310
  %v1416 = vmul.f32 %v1351, %v1311
  %v1417 = vmul.f32 %v1351, %v1312
  %v1418 = vmul.f32 %v1351, %v1313
  %v1419 = vmul.f32 %v1351, %v1314
  %v1420 = vmul.f32 %v1351, %v1315
  %v1421 = vmul.f32 %v1351, %v1316
  %v1422 = vmul.f32 %v1351, %v1317
  %v1423 = vmul.f32 %v1351, %v1318
  %v1424 = vmul.f32 %v1351, %v1319
  %v1425 = vmul.f32 %v1351, %v1320
  %v1426 = vmul.f32 %v1351, %v1321
  %v1427 = vmul.f32 %v1351, %v1322
  %v1428 = vmul.f32 %v1351, %v1323
  %v1429 = vmul.f32 %v1351, %v1324
  %v1430 = vmul.f32 %v1351, %v1325
  %v1431 = vmul.f32 %v1351, %v1326
  %v1432 = vmul.f32 %v1351, %v1327
  %v1433 = vmul.f32 %v1351, %v1328
  %v1434 = vmul.f32 %v1351, %v1329
  %v1435 = vmul.f32 %v1351, %v1330
  %v1436 = vmul.f32 %v1351, %v1331
  %v1437 = vmul.f32 %v1351, %v1332
  %v1438 = vmul.f32 %v1351, %v1333
  %v1439 = vmul.f32 %v1351, %v1334
  %v1440 = vmul.f32 %v1351, %v1335
  %v1441 = vmul.f32 %v1351, %v1336
  %v1442 = vmul.f32 %v1351, %v1337
  %v1443 = vmul.f32 %v1351, %v1338
  %v1444 = vmul.f32 %v1351, %v1339
  %v1445 = vmul.f32 %v1351, %v1340
  %v1446 = vmul.f32 %v1351, %v1341
  %v1447 = vmul.f32 %v1351, %v1342
  %v1448 = vmul.f32 %v1351, %v1343
  %v1449 = vmul.f32 %v1351, %v1344
  %v1450 = vmul.f32 %v1351, %v1345
  %v1451 = vmul.f32 %v1351, %v1346
  %v1452 = vadd.f32 %v1147, %v1352
  %v1453 = vadd.f32 %v1148, %v1353
  %v1454 = vadd.f32 %v1149, %v1354
  %v1455 = vadd.f32 %v1150, %v1355
  %v1456 = vadd.f32 %v1151, %v1356
  %v1457 = vadd.f32 %v1152, %v1357
  %v1458 = vadd.f32 %v1153, %v1358
  %v1459 = vadd.f32 %v1154, %v1359
  %v1460 = vadd.f32 %v1155, %v1360
  %v1461 = vadd.f32 %v1156, %v1361
  %v1462 = vadd.f32 %v1157, %v1362
  %v1463 = vadd.f32 %v1158, %v1363
  %v1464 = vadd.f32 %v1159, %v1364
  %v1465 = vadd.f32 %v1160, %v1365
  %v1466 = vadd.f32 %v1161, %v1366
  %v1467 = vadd.f32 %v1162, %v1367
  %v1468 = vadd.f32 %v1163, %v1368
  %v1469 = vadd.f32 %v1164, %v1369
  %v1470 = vadd.f32 %v1165, %v1370
  %v1471 = vadd.f32 %v1166, %v1371
  %v1472 = vadd.f32 %v1167, %v1372
  %v1473 = vadd.f32 %v1168, %v1373
  %v1474 = vadd.f32 %v1169, %v1374
  %v1475 = vadd.f32 %v1170, %v1375
  %v1476 = vadd.f32 %v1171, %v1376
  %v1477 = vadd.f32 %v1172, %v1377
  %v1478 = vadd.f32 %v1173, %v1378
  %v1479 = vadd.f32 %v1174, %v1379
  %v1480 = vadd.f32 %v1175, %v1380
  %v1481 = vadd.f32 %v1176, %v1381
  %v1482 = vadd.f32 %v1177, %v1382
  %v1483 = vadd.f32 %v1178, %v1383
  %v1484 = vadd.f32 %v1179, %v1384
  %v1485 = vadd.f32 %v1180, %v1385
  %v1486 = vadd.f32 %v1181, %v1386
  %v1487 = vadd.f32 %v1182, %v1387
  %v1488 = vadd.f32 %v1183, %v1388
  %v1489 = vadd.f32 %v1184, %v1389
  %v1490 = vadd.f32 %v1185, %v1390
  %v1491 = vadd.f32 %v1186, %v1391
  %v1492 = vadd.f32 %v1187, %v1392
  %v1493 = vadd.f32 %v1188, %v1393
  %v1494 = vadd.f32 %v1189, %v1394
  %v1495 = vadd.f32 %v1190, %v1395
  %v1496 = vadd.f32 %v1191, %v1396
  %v1497 = vadd.f32 %v1192, %v1397
  %v1498 = vadd.f32 %v1193, %v1398
  %v1499 = vadd.f32 %v1194, %v1399
  %v1500 = vadd.f32 %v1195, %v1400
  %v1501 = vadd.f32 %v1196, %v1401
  %v1502 = vadd.f32 %v1197, %v1402
  %v1503 = vadd.f32 %v1198, %v1403
  %v1504 = vadd.f32 %v1199, %v1404
  %v1505 = vadd.f32 %v1200, %v1405
  %v1506 = vadd.f32 %v1201, %v1406
  %v1507 = vadd.f32 %v1202, %v1407
  %v1508 = vadd.f32 %v1203, %v1408
  %v1509 = vadd.f32 %v1204, %v1409
  %v1510 = vadd.f32 %v1205, %v1410
  %v1511 = vadd.f32 %v1206, %v1411
  %v1512 = vadd.f32 %v1207, %v1412
  %v1513 = vadd.f32 %v1208, %v1413
  %v1514 = vadd.f32 %v1209, %v1414
  %v1515 = vadd.f32 %v1210, %v1415
  %v1516 = vadd.f32 %v1211, %v1416
  %v1517 = vadd.f32 %v1212, %v1417
  %v1518 = vadd.f32 %v1213, %v1418
  %v1519 = vadd.f32 %v1214, %v1419
  %v1520 = vadd.f32 %v1215, %v1420
  %v1521 = vadd.f32 %v1216, %v1421
  %v1522 = vadd.f32 %v1217, %v1422
  %v1523 = vadd.f32 %v1218, %v1423
  %v1524 = vadd.f32 %v1219, %v1424
  %v1525 = vadd.f32 %v1220, %v1425
  %v1526 = vadd.f32 %v1221, %v1426
  %v1527 = vadd.f32 %v1222, %v1427
  %v1528 = vadd.f32 %v1223, %v1428
  %v1529 = vadd.f32 %v1224, %v1429
  %v1530 = vadd.f32 %v1225, %v1430
  %v1531 = vadd.f32 %v1226, %v1431
  %v1532 = vadd.f32 %v1227, %v1432
  %v1533 = vadd.f32 %v1228, %v1433
  %v1534 = vadd.f32 %v1229, %v1434
  %v1535 = vadd.f32 %v1230, %v1435
  %v1536 = vadd.f32 %v1231, %v1436
  %v1537 = vadd.f32 %v1232, %v1437
  %v1538 = vadd.f32 %v1233, %v1438
  %v1539 = vadd.f32 %v1234, %v1439
  %v1540 = vadd.f32 %v1235, %v1440
  %v1541 = vadd.f32 %v1236, %v1441
  %v1542 = vadd.f32 %v1237, %v1442
  %v1543 = vadd.f32 %v1238, %v1443
  %v1544 = vadd.f32 %v1239, %v1444
  %v1545 = vadd.f32 %v1240, %v1445
  %v1546 = vadd.f32 %v1241, %v1446
  %v1547 = vadd.f32 %v1242, %v1447
  %v1548 = vadd.f32 %v1243, %v1448
  %v1549 = vadd.f32 %v1244, %v1449
  %v1550 = vadd.f32 %v1245, %v1450
  %v1551 = vadd.f32 %v1246, %v1451
  %v1552 = vld [vmem:[%s0 + $0x18] sm:$0xff]
  %v1553 = vld [vmem:[%s0 + $0x20] sm:$0xff]
  %v1554 = vld [vmem:[%s0 + $0x28] sm:$0xff]
  %v1555 = vld [vmem:[%s0 + $0x30] sm:$0xff]
  %v1556 = vld [vmem:[%s0 + $0x38] sm:$0xff]
  %v1557 = vld [vmem:[%s0 + $0x40] sm:$0xff]
  %v1558 = vld [vmem:[%s0 + $0x48] sm:$0xff]
  %v1559 = vld [vmem:[%s0 + $0x50] sm:$0xff]
  %v1560 = vld [vmem:[%s0 + $0x58] sm:$0xff]
  %v1561 = vld [vmem:[%s0 + $0x60] sm:$0xff]
  %v1562 = vld [vmem:[%s0 + $0x68] sm:$0xff]
  %v1563 = vld [vmem:[%s0 + $0x70] sm:$0xff]
  %v1564 = vld [vmem:[%s0 + $0x78] sm:$0xff]
  %v1565 = vld [vmem:[%s0 + $0x80] sm:$0xff]
  %v1566 = vld [vmem:[%s0 + $0x88] sm:$0xff]
  %v1567 = vld [vmem:[%s0 + $0x90] sm:$0xff]
  %v1568 = vld [vmem:[%s0 + $0x98] sm:$0xff]
  %v1569 = vld [vmem:[%s0 + $0xa0] sm:$0xff]
  %v1570 = vld [vmem:[%s0 + $0xa8] sm:$0xff]
  %v1571 = vld [vmem:[%s0 + $0xb0] sm:$0xff]
  %v1572 = vld [vmem:[%s0 + $0xb8] sm:$0xff]
  %v1573 = vld [vmem:[%s0 + $0xc0] sm:$0xff]
  %v1574 = vld [vmem:[%s0 + $0xc8] sm:$0xff]
  %v1575 = vld [vmem:[%s0 + $0xd0] sm:$0xff]
  %v1576 = vld [vmem:[%s0 + $0xd8] sm:$0xff]
  %v1577 = vld [vmem:[%s0 + $0xe0] sm:$0xff]
  %v1578 = vld [vmem:[%s0 + $0xe8] sm:$0xff]
  %v1579 = vld [vmem:[%s0 + $0xf0] sm:$0xff]
  %v1580 = vld [vmem:[%s0 + $0xf8] sm:$0xff]
  %v1581 = vld [vmem:[%s0 + $0x100] sm:$0xff]
  %v1582 = vld [vmem:[%s0 + $0x108] sm:$0xff]
  %v1583 = vld [vmem:[%s0 + $0x110] sm:$0xff]
  %v1584 = vld [vmem:[%s0 + $0x118] sm:$0xff]
  %v1585 = vld [vmem:[%s0 + $0x120] sm:$0xff]
  %v1586 = vld [vmem:[%s0 + $0x128] sm:$0xff]
  %v1587 = vld [vmem:[%s0 + $0x130] sm:$0xff]
  %v1588 = vld [vmem:[%s0 + $0x138] sm:$0xff]
  %v1589 = vld [vmem:[%s0 + $0x140] sm:$0xff]
  %v1590 = vld [vmem:[%s0 + $0x148] sm:$0xff]
  %v1591 = vld [vmem:[%s0 + $0x150] sm:$0xff]
  %v1592 = vld [vmem:[%s0 + $0x158] sm:$0xff]
  %v1593 = vld [vmem:[%s0 + $0x160] sm:$0xff]
  %v1594 = vld [vmem:[%s0 + $0x168] sm:$0xff]
  %v1595 = vld [vmem:[%s0 + $0x170] sm:$0xff]
  %v1596 = vld [vmem:[%s0 + $0x178] sm:$0xff]
  %v1597 = vld [vmem:[%s0 + $0x180] sm:$0xff]
  %v1598 = vld [vmem:[%s0 + $0x188] sm:$0xff]
  %v1599 = vld [vmem:[%s0 + $0x190] sm:$0xff]
  %v1600 = vld [vmem:[%s0 + $0x198] sm:$0xff]
  %v1601 = vld [vmem:[%s0 + $0x1a0] sm:$0xff]
  %v1602 = vld [vmem:[%s0 + $0x1a8] sm:$0xff]
  %v1603 = vld [vmem:[%s0 + $0x1b0] sm:$0xff]
  %v1604 = vld [vmem:[%s0 + $0x1b8] sm:$0xff]
  %v1605 = vld [vmem:[%s0 + $0x1c0] sm:$0xff]
  %v1606 = vld [vmem:[%s0 + $0x1c8] sm:$0xff]
  %v1607 = vld [vmem:[%s0 + $0x1d0] sm:$0xff]
  %v1608 = vld [vmem:[%s0 + $0x1d8] sm:$0xff]
  %v1609 = vld [vmem:[%s0 + $0x1e0] sm:$0xff]
  %v1610 = vld [vmem:[%s0 + $0x1e8] sm:$0xff]
  %v1611 = vld [vmem:[%s0 + $0x1f0] sm:$0xff]
  %v1612 = vld [vmem:[%s0 + $0x1f8] sm:$0xff]
  %v1613 = vld [vmem:[%s0 + $0x200] sm:$0xff]
  %v1614 = vld [vmem:[%s0 + $0x208] sm:$0xff]
  %v1615 = vld [vmem:[%s0 + $0x210] sm:$0xff]
  %v1616 = vld [vmem:[%s0 + $0x218] sm:$0xff]
  %v1617 = vld [vmem:[%s0 + $0x220] sm:$0xff]
  %v1618 = vld [vmem:[%s0 + $0x228] sm:$0xff]
  %v1619 = vld [vmem:[%s0 + $0x230] sm:$0xff]
  %v1620 = vld [vmem:[%s0 + $0x238] sm:$0xff]
  %v1621 = vld [vmem:[%s0 + $0x240] sm:$0xff]
  %v1622 = vld [vmem:[%s0 + $0x248] sm:$0xff]
  %v1623 = vld [vmem:[%s0 + $0x250] sm:$0xff]
  %v1624 = vld [vmem:[%s0 + $0x258] sm:$0xff]
  %v1625 = vld [vmem:[%s0 + $0x260] sm:$0xff]
  %v1626 = vld [vmem:[%s0 + $0x268] sm:$0xff]
  %v1627 = vld [vmem:[%s0 + $0x270] sm:$0xff]
  %v1628 = vld [vmem:[%s0 + $0x278] sm:$0xff]
  %v1629 = vld [vmem:[%s0 + $0x280] sm:$0xff]
  %v1630 = vld [vmem:[%s0 + $0x288] sm:$0xff]
  %v1631 = vld [vmem:[%s0 + $0x290] sm:$0xff]
  %v1632 = vld [vmem:[%s0 + $0x298] sm:$0xff]
  %v1633 = vld [vmem:[%s0 + $0x2a0] sm:$0xff]
  %v1634 = vld [vmem:[%s0 + $0x2a8] sm:$0xff]
  %v1635 = vld [vmem:[%s0 + $0x2b0] sm:$0xff]
  %v1636 = vld [vmem:[%s0 + $0x2b8] sm:$0xff]
  %v1637 = vld [vmem:[%s0 + $0x2c0] sm:$0xff]
  %v1638 = vld [vmem:[%s0 + $0x2c8] sm:$0xff]
  %v1639 = vld [vmem:[%s0 + $0x2d0] sm:$0xff]
  %v1640 = vld [vmem:[%s0 + $0x2d8] sm:$0xff]
  %v1641 = vld [vmem:[%s0 + $0x2e0] sm:$0xff]
  %v1642 = vld [vmem:[%s0 + $0x2e8] sm:$0xff]
  %v1643 = vld [vmem:[%s0 + $0x2f0] sm:$0xff]
  %v1644 = vld [vmem:[%s0 + $0x2f8] sm:$0xff]
  %v1645 = vld [vmem:[%s0 + $0x300] sm:$0xff]
  %v1646 = vld [vmem:[%s0 + $0x308] sm:$0xff]
  %v1647 = vld [vmem:[%s0 + $0x310] sm:$0xff]
  %v1648 = vld [vmem:[%s0 + $0x318] sm:$0xff]
  %v1649 = vld [vmem:[%s0 + $0x320] sm:$0xff]
  %v1650 = vld [vmem:[%s0 + $0x328] sm:$0xff]
  %v1651 = vld [vmem:[%s0 + $0x330] sm:$0xff]
  %v1652 = vld [vmem:[%s2 + $0x4] sm:$0x1]
  %v1653 = vlaneseq
  %v1654 = vshrl.u32 %v1653, 7
  %v1655 = vsub.s32 0, %v1654
  %v1656 = vrot.slane %v1652, %v1655
  %v1657 = vmul.f32 %v1656, %v1552
  %v1658 = vmul.f32 %v1656, %v1553
  %v1659 = vmul.f32 %v1656, %v1554
  %v1660 = vmul.f32 %v1656, %v1555
  %v1661 = vmul.f32 %v1656, %v1556
  %v1662 = vmul.f32 %v1656, %v1557
  %v1663 = vmul.f32 %v1656, %v1558
  %v1664 = vmul.f32 %v1656, %v1559
  %v1665 = vmul.f32 %v1656, %v1560
  %v1666 = vmul.f32 %v1656, %v1561
  %v1667 = vmul.f32 %v1656, %v1562
  %v1668 = vmul.f32 %v1656, %v1563
  %v1669 = vmul.f32 %v1656, %v1564
  %v1670 = vmul.f32 %v1656, %v1565
  %v1671 = vmul.f32 %v1656, %v1566
  %v1672 = vmul.f32 %v1656, %v1567
  %v1673 = vmul.f32 %v1656, %v1568
  %v1674 = vmul.f32 %v1656, %v1569
  %v1675 = vmul.f32 %v1656, %v1570
  %v1676 = vmul.f32 %v1656, %v1571
  %v1677 = vmul.f32 %v1656, %v1572
  %v1678 = vmul.f32 %v1656, %v1573
  %v1679 = vmul.f32 %v1656, %v1574
  %v1680 = vmul.f32 %v1656, %v1575
  %v1681 = vmul.f32 %v1656, %v1576
  %v1682 = vmul.f32 %v1656, %v1577
  %v1683 = vmul.f32 %v1656, %v1578
  %v1684 = vmul.f32 %v1656, %v1579
  %v1685 = vmul.f32 %v1656, %v1580
  %v1686 = vmul.f32 %v1656, %v1581
  %v1687 = vmul.f32 %v1656, %v1582
  %v1688 = vmul.f32 %v1656, %v1583
  %v1689 = vmul.f32 %v1656, %v1584
  %v1690 = vmul.f32 %v1656, %v1585
  %v1691 = vmul.f32 %v1656, %v1586
  %v1692 = vmul.f32 %v1656, %v1587
  %v1693 = vmul.f32 %v1656, %v1588
  %v1694 = vmul.f32 %v1656, %v1589
  %v1695 = vmul.f32 %v1656, %v1590
  %v1696 = vmul.f32 %v1656, %v1591
  %v1697 = vmul.f32 %v1656, %v1592
  %v1698 = vmul.f32 %v1656, %v1593
  %v1699 = vmul.f32 %v1656, %v1594
  %v1700 = vmul.f32 %v1656, %v1595
  %v1701 = vmul.f32 %v1656, %v1596
  %v1702 = vmul.f32 %v1656, %v1597
  %v1703 = vmul.f32 %v1656, %v1598
  %v1704 = vmul.f32 %v1656, %v1599
  %v1705 = vmul.f32 %v1656, %v1600
  %v1706 = vmul.f32 %v1656, %v1601
  %v1707 = vmul.f32 %v1656, %v1602
  %v1708 = vmul.f32 %v1656, %v1603
  %v1709 = vmul.f32 %v1656, %v1604
  %v1710 = vmul.f32 %v1656, %v1605
  %v1711 = vmul.f32 %v1656, %v1606
  %v1712 = vmul.f32 %v1656, %v1607
  %v1713 = vmul.f32 %v1656, %v1608
  %v1714 = vmul.f32 %v1656, %v1609
  %v1715 = vmul.f32 %v1656, %v1610
  %v1716 = vmul.f32 %v1656, %v1611
  %v1717 = vmul.f32 %v1656, %v1612
  %v1718 = vmul.f32 %v1656, %v1613
  %v1719 = vmul.f32 %v1656, %v1614
  %v1720 = vmul.f32 %v1656, %v1615
  %v1721 = vmul.f32 %v1656, %v1616
  %v1722 = vmul.f32 %v1656, %v1617
  %v1723 = vmul.f32 %v1656, %v1618
  %v1724 = vmul.f32 %v1656, %v1619
  %v1725 = vmul.f32 %v1656, %v1620
  %v1726 = vmul.f32 %v1656, %v1621
  %v1727 = vmul.f32 %v1656, %v1622
  %v1728 = vmul.f32 %v1656, %v1623
  %v1729 = vmul.f32 %v1656, %v1624
  %v1730 = vmul.f32 %v1656, %v1625
  %v1731 = vmul.f32 %v1656, %v1626
  %v1732 = vmul.f32 %v1656, %v1627
  %v1733 = vmul.f32 %v1656, %v1628
  %v1734 = vmul.f32 %v1656, %v1629
  %v1735 = vmul.f32 %v1656, %v1630
  %v1736 = vmul.f32 %v1656, %v1631
  %v1737 = vmul.f32 %v1656, %v1632
  %v1738 = vmul.f32 %v1656, %v1633
  %v1739 = vmul.f32 %v1656, %v1634
  %v1740 = vmul.f32 %v1656, %v1635
  %v1741 = vmul.f32 %v1656, %v1636
  %v1742 = vmul.f32 %v1656, %v1637
  %v1743 = vmul.f32 %v1656, %v1638
  %v1744 = vmul.f32 %v1656, %v1639
  %v1745 = vmul.f32 %v1656, %v1640
  %v1746 = vmul.f32 %v1656, %v1641
  %v1747 = vmul.f32 %v1656, %v1642
  %v1748 = vmul.f32 %v1656, %v1643
  %v1749 = vmul.f32 %v1656, %v1644
  %v1750 = vmul.f32 %v1656, %v1645
  %v1751 = vmul.f32 %v1656, %v1646
  %v1752 = vmul.f32 %v1656, %v1647
  %v1753 = vmul.f32 %v1656, %v1648
  %v1754 = vmul.f32 %v1656, %v1649
  %v1755 = vmul.f32 %v1656, %v1650
  %v1756 = vmul.f32 %v1656, %v1651
  %v1757 = vadd.f32 %v1452, %v1657
  %v1758 = vadd.f32 %v1453, %v1658
  %v1759 = vadd.f32 %v1454, %v1659
  %v1760 = vadd.f32 %v1455, %v1660
  %v1761 = vadd.f32 %v1456, %v1661
  %v1762 = vadd.f32 %v1457, %v1662
  %v1763 = vadd.f32 %v1458, %v1663
  %v1764 = vadd.f32 %v1459, %v1664
  %v1765 = vadd.f32 %v1460, %v1665
  %v1766 = vadd.f32 %v1461, %v1666
  %v1767 = vadd.f32 %v1462, %v1667
  %v1768 = vadd.f32 %v1463, %v1668
  %v1769 = vadd.f32 %v1464, %v1669
  %v1770 = vadd.f32 %v1465, %v1670
  %v1771 = vadd.f32 %v1466, %v1671
  %v1772 = vadd.f32 %v1467, %v1672
  %v1773 = vadd.f32 %v1468, %v1673
  %v1774 = vadd.f32 %v1469, %v1674
  %v1775 = vadd.f32 %v1470, %v1675
  %v1776 = vadd.f32 %v1471, %v1676
  %v1777 = vadd.f32 %v1472, %v1677
  %v1778 = vadd.f32 %v1473, %v1678
  %v1779 = vadd.f32 %v1474, %v1679
  %v1780 = vadd.f32 %v1475, %v1680
  %v1781 = vadd.f32 %v1476, %v1681
  %v1782 = vadd.f32 %v1477, %v1682
  %v1783 = vadd.f32 %v1478, %v1683
  %v1784 = vadd.f32 %v1479, %v1684
  %v1785 = vadd.f32 %v1480, %v1685
  %v1786 = vadd.f32 %v1481, %v1686
  %v1787 = vadd.f32 %v1482, %v1687
  %v1788 = vadd.f32 %v1483, %v1688
  %v1789 = vadd.f32 %v1484, %v1689
  %v1790 = vadd.f32 %v1485, %v1690
  %v1791 = vadd.f32 %v1486, %v1691
  %v1792 = vadd.f32 %v1487, %v1692
  %v1793 = vadd.f32 %v1488, %v1693
  %v1794 = vadd.f32 %v1489, %v1694
  %v1795 = vadd.f32 %v1490, %v1695
  %v1796 = vadd.f32 %v1491, %v1696
  %v1797 = vadd.f32 %v1492, %v1697
  %v1798 = vadd.f32 %v1493, %v1698
  %v1799 = vadd.f32 %v1494, %v1699
  %v1800 = vadd.f32 %v1495, %v1700
  %v1801 = vadd.f32 %v1496, %v1701
  %v1802 = vadd.f32 %v1497, %v1702
  %v1803 = vadd.f32 %v1498, %v1703
  %v1804 = vadd.f32 %v1499, %v1704
  %v1805 = vadd.f32 %v1500, %v1705
  %v1806 = vadd.f32 %v1501, %v1706
  %v1807 = vadd.f32 %v1502, %v1707
  %v1808 = vadd.f32 %v1503, %v1708
  %v1809 = vadd.f32 %v1504, %v1709
  %v1810 = vadd.f32 %v1505, %v1710
  %v1811 = vadd.f32 %v1506, %v1711
  %v1812 = vadd.f32 %v1507, %v1712
  %v1813 = vadd.f32 %v1508, %v1713
  %v1814 = vadd.f32 %v1509, %v1714
  %v1815 = vadd.f32 %v1510, %v1715
  %v1816 = vadd.f32 %v1511, %v1716
  %v1817 = vadd.f32 %v1512, %v1717
  %v1818 = vadd.f32 %v1513, %v1718
  %v1819 = vadd.f32 %v1514, %v1719
  %v1820 = vadd.f32 %v1515, %v1720
  %v1821 = vadd.f32 %v1516, %v1721
  %v1822 = vadd.f32 %v1517, %v1722
  %v1823 = vadd.f32 %v1518, %v1723
  %v1824 = vadd.f32 %v1519, %v1724
  %v1825 = vadd.f32 %v1520, %v1725
  %v1826 = vadd.f32 %v1521, %v1726
  %v1827 = vadd.f32 %v1522, %v1727
  %v1828 = vadd.f32 %v1523, %v1728
  %v1829 = vadd.f32 %v1524, %v1729
  %v1830 = vadd.f32 %v1525, %v1730
  %v1831 = vadd.f32 %v1526, %v1731
  %v1832 = vadd.f32 %v1527, %v1732
  %v1833 = vadd.f32 %v1528, %v1733
  %v1834 = vadd.f32 %v1529, %v1734
  %v1835 = vadd.f32 %v1530, %v1735
  %v1836 = vadd.f32 %v1531, %v1736
  %v1837 = vadd.f32 %v1532, %v1737
  %v1838 = vadd.f32 %v1533, %v1738
  %v1839 = vadd.f32 %v1534, %v1739
  %v1840 = vadd.f32 %v1535, %v1740
  %v1841 = vadd.f32 %v1536, %v1741
  %v1842 = vadd.f32 %v1537, %v1742
  %v1843 = vadd.f32 %v1538, %v1743
  %v1844 = vadd.f32 %v1539, %v1744
  %v1845 = vadd.f32 %v1540, %v1745
  %v1846 = vadd.f32 %v1541, %v1746
  %v1847 = vadd.f32 %v1542, %v1747
  %v1848 = vadd.f32 %v1543, %v1748
  %v1849 = vadd.f32 %v1544, %v1749
  %v1850 = vadd.f32 %v1545, %v1750
  %v1851 = vadd.f32 %v1546, %v1751
  %v1852 = vadd.f32 %v1547, %v1752
  %v1853 = vadd.f32 %v1548, %v1753
  %v1854 = vadd.f32 %v1549, %v1754
  %v1855 = vadd.f32 %v1550, %v1755
  %v1856 = vadd.f32 %v1551, %v1756
  %v1857 = vld [vmem:[%s0 + $0x19] sm:$0xff]
  %v1858 = vld [vmem:[%s0 + $0x21] sm:$0xff]
  %v1859 = vld [vmem:[%s0 + $0x29] sm:$0xff]
  %v1860 = vld [vmem:[%s0 + $0x31] sm:$0xff]
  %v1861 = vld [vmem:[%s0 + $0x39] sm:$0xff]
  %v1862 = vld [vmem:[%s0 + $0x41] sm:$0xff]
  %v1863 = vld [vmem:[%s0 + $0x49] sm:$0xff]
  %v1864 = vld [vmem:[%s0 + $0x51] sm:$0xff]
  %v1865 = vld [vmem:[%s0 + $0x59] sm:$0xff]
  %v1866 = vld [vmem:[%s0 + $0x61] sm:$0xff]
  %v1867 = vld [vmem:[%s0 + $0x69] sm:$0xff]
  %v1868 = vld [vmem:[%s0 + $0x71] sm:$0xff]
  %v1869 = vld [vmem:[%s0 + $0x79] sm:$0xff]
  %v1870 = vld [vmem:[%s0 + $0x81] sm:$0xff]
  %v1871 = vld [vmem:[%s0 + $0x89] sm:$0xff]
  %v1872 = vld [vmem:[%s0 + $0x91] sm:$0xff]
  %v1873 = vld [vmem:[%s0 + $0x99] sm:$0xff]
  %v1874 = vld [vmem:[%s0 + $0xa1] sm:$0xff]
  %v1875 = vld [vmem:[%s0 + $0xa9] sm:$0xff]
  %v1876 = vld [vmem:[%s0 + $0xb1] sm:$0xff]
  %v1877 = vld [vmem:[%s0 + $0xb9] sm:$0xff]
  %v1878 = vld [vmem:[%s0 + $0xc1] sm:$0xff]
  %v1879 = vld [vmem:[%s0 + $0xc9] sm:$0xff]
  %v1880 = vld [vmem:[%s0 + $0xd1] sm:$0xff]
  %v1881 = vld [vmem:[%s0 + $0xd9] sm:$0xff]
  %v1882 = vld [vmem:[%s0 + $0xe1] sm:$0xff]
  %v1883 = vld [vmem:[%s0 + $0xe9] sm:$0xff]
  %v1884 = vld [vmem:[%s0 + $0xf1] sm:$0xff]
  %v1885 = vld [vmem:[%s0 + $0xf9] sm:$0xff]
  %v1886 = vld [vmem:[%s0 + $0x101] sm:$0xff]
  %v1887 = vld [vmem:[%s0 + $0x109] sm:$0xff]
  %v1888 = vld [vmem:[%s0 + $0x111] sm:$0xff]
  %v1889 = vld [vmem:[%s0 + $0x119] sm:$0xff]
  %v1890 = vld [vmem:[%s0 + $0x121] sm:$0xff]
  %v1891 = vld [vmem:[%s0 + $0x129] sm:$0xff]
  %v1892 = vld [vmem:[%s0 + $0x131] sm:$0xff]
  %v1893 = vld [vmem:[%s0 + $0x139] sm:$0xff]
  %v1894 = vld [vmem:[%s0 + $0x141] sm:$0xff]
  %v1895 = vld [vmem:[%s0 + $0x149] sm:$0xff]
  %v1896 = vld [vmem:[%s0 + $0x151] sm:$0xff]
  %v1897 = vld [vmem:[%s0 + $0x159] sm:$0xff]
  %v1898 = vld [vmem:[%s0 + $0x161] sm:$0xff]
  %v1899 = vld [vmem:[%s0 + $0x169] sm:$0xff]
  %v1900 = vld [vmem:[%s0 + $0x171] sm:$0xff]
  %v1901 = vld [vmem:[%s0 + $0x179] sm:$0xff]
  %v1902 = vld [vmem:[%s0 + $0x181] sm:$0xff]
  %v1903 = vld [vmem:[%s0 + $0x189] sm:$0xff]
  %v1904 = vld [vmem:[%s0 + $0x191] sm:$0xff]
  %v1905 = vld [vmem:[%s0 + $0x199] sm:$0xff]
  %v1906 = vld [vmem:[%s0 + $0x1a1] sm:$0xff]
  %v1907 = vld [vmem:[%s0 + $0x1a9] sm:$0xff]
  %v1908 = vld [vmem:[%s0 + $0x1b1] sm:$0xff]
  %v1909 = vld [vmem:[%s0 + $0x1b9] sm:$0xff]
  %v1910 = vld [vmem:[%s0 + $0x1c1] sm:$0xff]
  %v1911 = vld [vmem:[%s0 + $0x1c9] sm:$0xff]
  %v1912 = vld [vmem:[%s0 + $0x1d1] sm:$0xff]
  %v1913 = vld [vmem:[%s0 + $0x1d9] sm:$0xff]
  %v1914 = vld [vmem:[%s0 + $0x1e1] sm:$0xff]
  %v1915 = vld [vmem:[%s0 + $0x1e9] sm:$0xff]
  %v1916 = vld [vmem:[%s0 + $0x1f1] sm:$0xff]
  %v1917 = vld [vmem:[%s0 + $0x1f9] sm:$0xff]
  %v1918 = vld [vmem:[%s0 + $0x201] sm:$0xff]
  %v1919 = vld [vmem:[%s0 + $0x209] sm:$0xff]
  %v1920 = vld [vmem:[%s0 + $0x211] sm:$0xff]
  %v1921 = vld [vmem:[%s0 + $0x219] sm:$0xff]
  %v1922 = vld [vmem:[%s0 + $0x221] sm:$0xff]
  %v1923 = vld [vmem:[%s0 + $0x229] sm:$0xff]
  %v1924 = vld [vmem:[%s0 + $0x231] sm:$0xff]
  %v1925 = vld [vmem:[%s0 + $0x239] sm:$0xff]
  %v1926 = vld [vmem:[%s0 + $0x241] sm:$0xff]
  %v1927 = vld [vmem:[%s0 + $0x249] sm:$0xff]
  %v1928 = vld [vmem:[%s0 + $0x251] sm:$0xff]
  %v1929 = vld [vmem:[%s0 + $0x259] sm:$0xff]
  %v1930 = vld [vmem:[%s0 + $0x261] sm:$0xff]
  %v1931 = vld [vmem:[%s0 + $0x269] sm:$0xff]
  %v1932 = vld [vmem:[%s0 + $0x271] sm:$0xff]
  %v1933 = vld [vmem:[%s0 + $0x279] sm:$0xff]
  %v1934 = vld [vmem:[%s0 + $0x281] sm:$0xff]
  %v1935 = vld [vmem:[%s0 + $0x289] sm:$0xff]
  %v1936 = vld [vmem:[%s0 + $0x291] sm:$0xff]
  %v1937 = vld [vmem:[%s0 + $0x299] sm:$0xff]
  %v1938 = vld [vmem:[%s0 + $0x2a1] sm:$0xff]
  %v1939 = vld [vmem:[%s0 + $0x2a9] sm:$0xff]
  %v1940 = vld [vmem:[%s0 + $0x2b1] sm:$0xff]
  %v1941 = vld [vmem:[%s0 + $0x2b9] sm:$0xff]
  %v1942 = vld [vmem:[%s0 + $0x2c1] sm:$0xff]
  %v1943 = vld [vmem:[%s0 + $0x2c9] sm:$0xff]
  %v1944 = vld [vmem:[%s0 + $0x2d1] sm:$0xff]
  %v1945 = vld [vmem:[%s0 + $0x2d9] sm:$0xff]
  %v1946 = vld [vmem:[%s0 + $0x2e1] sm:$0xff]
  %v1947 = vld [vmem:[%s0 + $0x2e9] sm:$0xff]
  %v1948 = vld [vmem:[%s0 + $0x2f1] sm:$0xff]
  %v1949 = vld [vmem:[%s0 + $0x2f9] sm:$0xff]
  %v1950 = vld [vmem:[%s0 + $0x301] sm:$0xff]
  %v1951 = vld [vmem:[%s0 + $0x309] sm:$0xff]
  %v1952 = vld [vmem:[%s0 + $0x311] sm:$0xff]
  %v1953 = vld [vmem:[%s0 + $0x319] sm:$0xff]
  %v1954 = vld [vmem:[%s0 + $0x321] sm:$0xff]
  %v1955 = vld [vmem:[%s0 + $0x329] sm:$0xff]
  %v1956 = vld [vmem:[%s0 + $0x331] sm:$0xff]
  %v1957 = vld [vmem:[%s2 + $0x5] sm:$0x1]
  %v1958 = vlaneseq
  %v1959 = vshrl.u32 %v1958, 7
  %v1960 = vsub.s32 0, %v1959
  %v1961 = vrot.slane %v1957, %v1960
  %v1962 = vmul.f32 %v1961, %v1857
  %v1963 = vmul.f32 %v1961, %v1858
  %v1964 = vmul.f32 %v1961, %v1859
  %v1965 = vmul.f32 %v1961, %v1860
  %v1966 = vmul.f32 %v1961, %v1861
  %v1967 = vmul.f32 %v1961, %v1862
  %v1968 = vmul.f32 %v1961, %v1863
  %v1969 = vmul.f32 %v1961, %v1864
  %v1970 = vmul.f32 %v1961, %v1865
  %v1971 = vmul.f32 %v1961, %v1866
  %v1972 = vmul.f32 %v1961, %v1867
  %v1973 = vmul.f32 %v1961, %v1868
  %v1974 = vmul.f32 %v1961, %v1869
  %v1975 = vmul.f32 %v1961, %v1870
  %v1976 = vmul.f32 %v1961, %v1871
  %v1977 = vmul.f32 %v1961, %v1872
  %v1978 = vmul.f32 %v1961, %v1873
  %v1979 = vmul.f32 %v1961, %v1874
  %v1980 = vmul.f32 %v1961, %v1875
  %v1981 = vmul.f32 %v1961, %v1876
  %v1982 = vmul.f32 %v1961, %v1877
  %v1983 = vmul.f32 %v1961, %v1878
  %v1984 = vmul.f32 %v1961, %v1879
  %v1985 = vmul.f32 %v1961, %v1880
  %v1986 = vmul.f32 %v1961, %v1881
  %v1987 = vmul.f32 %v1961, %v1882
  %v1988 = vmul.f32 %v1961, %v1883
  %v1989 = vmul.f32 %v1961, %v1884
  %v1990 = vmul.f32 %v1961, %v1885
  %v1991 = vmul.f32 %v1961, %v1886
  %v1992 = vmul.f32 %v1961, %v1887
  %v1993 = vmul.f32 %v1961, %v1888
  %v1994 = vmul.f32 %v1961, %v1889
  %v1995 = vmul.f32 %v1961, %v1890
  %v1996 = vmul.f32 %v1961, %v1891
  %v1997 = vmul.f32 %v1961, %v1892
  %v1998 = vmul.f32 %v1961, %v1893
  %v1999 = vmul.f32 %v1961, %v1894
  %v2000 = vmul.f32 %v1961, %v1895
  %v2001 = vmul.f32 %v1961, %v1896
  %v2002 = vmul.f32 %v1961, %v1897
  %v2003 = vmul.f32 %v1961, %v1898
  %v2004 = vmul.f32 %v1961, %v1899
  %v2005 = vmul.f32 %v1961, %v1900
  %v2006 = vmul.f32 %v1961, %v1901
  %v2007 = vmul.f32 %v1961, %v1902
  %v2008 = vmul.f32 %v1961, %v1903
  %v2009 = vmul.f32 %v1961, %v1904
  %v2010 = vmul.f32 %v1961, %v1905
  %v2011 = vmul.f32 %v1961, %v1906
  %v2012 = vmul.f32 %v1961, %v1907
  %v2013 = vmul.f32 %v1961, %v1908
  %v2014 = vmul.f32 %v1961, %v1909
  %v2015 = vmul.f32 %v1961, %v1910
  %v2016 = vmul.f32 %v1961, %v1911
  %v2017 = vmul.f32 %v1961, %v1912
  %v2018 = vmul.f32 %v1961, %v1913
  %v2019 = vmul.f32 %v1961, %v1914
  %v2020 = vmul.f32 %v1961, %v1915
  %v2021 = vmul.f32 %v1961, %v1916
  %v2022 = vmul.f32 %v1961, %v1917
  %v2023 = vmul.f32 %v1961, %v1918
  %v2024 = vmul.f32 %v1961, %v1919
  %v2025 = vmul.f32 %v1961, %v1920
  %v2026 = vmul.f32 %v1961, %v1921
  %v2027 = vmul.f32 %v1961, %v1922
  %v2028 = vmul.f32 %v1961, %v1923
  %v2029 = vmul.f32 %v1961, %v1924
  %v2030 = vmul.f32 %v1961, %v1925
  %v2031 = vmul.f32 %v1961, %v1926
  %v2032 = vmul.f32 %v1961, %v1927
  %v2033 = vmul.f32 %v1961, %v1928
  %v2034 = vmul.f32 %v1961, %v1929
  %v2035 = vmul.f32 %v1961, %v1930
  %v2036 = vmul.f32 %v1961, %v1931
  %v2037 = vmul.f32 %v1961, %v1932
  %v2038 = vmul.f32 %v1961, %v1933
  %v2039 = vmul.f32 %v1961, %v1934
  %v2040 = vmul.f32 %v1961, %v1935
  %v2041 = vmul.f32 %v1961, %v1936
  %v2042 = vmul.f32 %v1961, %v1937
  %v2043 = vmul.f32 %v1961, %v1938
  %v2044 = vmul.f32 %v1961, %v1939
  %v2045 = vmul.f32 %v1961, %v1940
  %v2046 = vmul.f32 %v1961, %v1941
  %v2047 = vmul.f32 %v1961, %v1942
  %v2048 = vmul.f32 %v1961, %v1943
  %v2049 = vmul.f32 %v1961, %v1944
  %v2050 = vmul.f32 %v1961, %v1945
  %v2051 = vmul.f32 %v1961, %v1946
  %v2052 = vmul.f32 %v1961, %v1947
  %v2053 = vmul.f32 %v1961, %v1948
  %v2054 = vmul.f32 %v1961, %v1949
  %v2055 = vmul.f32 %v1961, %v1950
  %v2056 = vmul.f32 %v1961, %v1951
  %v2057 = vmul.f32 %v1961, %v1952
  %v2058 = vmul.f32 %v1961, %v1953
  %v2059 = vmul.f32 %v1961, %v1954
  %v2060 = vmul.f32 %v1961, %v1955
  %v2061 = vmul.f32 %v1961, %v1956
  %v2062 = vadd.f32 %v1757, %v1962
  %v2063 = vadd.f32 %v1758, %v1963
  %v2064 = vadd.f32 %v1759, %v1964
  %v2065 = vadd.f32 %v1760, %v1965
  %v2066 = vadd.f32 %v1761, %v1966
  %v2067 = vadd.f32 %v1762, %v1967
  %v2068 = vadd.f32 %v1763, %v1968
  %v2069 = vadd.f32 %v1764, %v1969
  %v2070 = vadd.f32 %v1765, %v1970
  %v2071 = vadd.f32 %v1766, %v1971
  %v2072 = vadd.f32 %v1767, %v1972
  %v2073 = vadd.f32 %v1768, %v1973
  %v2074 = vadd.f32 %v1769, %v1974
  %v2075 = vadd.f32 %v1770, %v1975
  %v2076 = vadd.f32 %v1771, %v1976
  %v2077 = vadd.f32 %v1772, %v1977
  %v2078 = vadd.f32 %v1773, %v1978
  %v2079 = vadd.f32 %v1774, %v1979
  %v2080 = vadd.f32 %v1775, %v1980
  %v2081 = vadd.f32 %v1776, %v1981
  %v2082 = vadd.f32 %v1777, %v1982
  %v2083 = vadd.f32 %v1778, %v1983
  %v2084 = vadd.f32 %v1779, %v1984
  %v2085 = vadd.f32 %v1780, %v1985
  %v2086 = vadd.f32 %v1781, %v1986
  %v2087 = vadd.f32 %v1782, %v1987
  %v2088 = vadd.f32 %v1783, %v1988
  %v2089 = vadd.f32 %v1784, %v1989
  %v2090 = vadd.f32 %v1785, %v1990
  %v2091 = vadd.f32 %v1786, %v1991
  %v2092 = vadd.f32 %v1787, %v1992
  %v2093 = vadd.f32 %v1788, %v1993
  %v2094 = vadd.f32 %v1789, %v1994
  %v2095 = vadd.f32 %v1790, %v1995
  %v2096 = vadd.f32 %v1791, %v1996
  %v2097 = vadd.f32 %v1792, %v1997
  %v2098 = vadd.f32 %v1793, %v1998
  %v2099 = vadd.f32 %v1794, %v1999
  %v2100 = vadd.f32 %v1795, %v2000
  %v2101 = vadd.f32 %v1796, %v2001
  %v2102 = vadd.f32 %v1797, %v2002
  %v2103 = vadd.f32 %v1798, %v2003
  %v2104 = vadd.f32 %v1799, %v2004
  %v2105 = vadd.f32 %v1800, %v2005
  %v2106 = vadd.f32 %v1801, %v2006
  %v2107 = vadd.f32 %v1802, %v2007
  %v2108 = vadd.f32 %v1803, %v2008
  %v2109 = vadd.f32 %v1804, %v2009
  %v2110 = vadd.f32 %v1805, %v2010
  %v2111 = vadd.f32 %v1806, %v2011
  %v2112 = vadd.f32 %v1807, %v2012
  %v2113 = vadd.f32 %v1808, %v2013
  %v2114 = vadd.f32 %v1809, %v2014
  %v2115 = vadd.f32 %v1810, %v2015
  %v2116 = vadd.f32 %v1811, %v2016
  %v2117 = vadd.f32 %v1812, %v2017
  %v2118 = vadd.f32 %v1813, %v2018
  %v2119 = vadd.f32 %v1814, %v2019
  %v2120 = vadd.f32 %v1815, %v2020
  %v2121 = vadd.f32 %v1816, %v2021
  %v2122 = vadd.f32 %v1817, %v2022
  %v2123 = vadd.f32 %v1818, %v2023
  %v2124 = vadd.f32 %v1819, %v2024
  %v2125 = vadd.f32 %v1820, %v2025
  %v2126 = vadd.f32 %v1821, %v2026
  %v2127 = vadd.f32 %v1822, %v2027
  %v2128 = vadd.f32 %v1823, %v2028
  %v2129 = vadd.f32 %v1824, %v2029
  %v2130 = vadd.f32 %v1825, %v2030
  %v2131 = vadd.f32 %v1826, %v2031
  %v2132 = vadd.f32 %v1827, %v2032
  %v2133 = vadd.f32 %v1828, %v2033
  %v2134 = vadd.f32 %v1829, %v2034
  %v2135 = vadd.f32 %v1830, %v2035
  %v2136 = vadd.f32 %v1831, %v2036
  %v2137 = vadd.f32 %v1832, %v2037
  %v2138 = vadd.f32 %v1833, %v2038
  %v2139 = vadd.f32 %v1834, %v2039
  %v2140 = vadd.f32 %v1835, %v2040
  %v2141 = vadd.f32 %v1836, %v2041
  %v2142 = vadd.f32 %v1837, %v2042
  %v2143 = vadd.f32 %v1838, %v2043
  %v2144 = vadd.f32 %v1839, %v2044
  %v2145 = vadd.f32 %v1840, %v2045
  %v2146 = vadd.f32 %v1841, %v2046
  %v2147 = vadd.f32 %v1842, %v2047
  %v2148 = vadd.f32 %v1843, %v2048
  %v2149 = vadd.f32 %v1844, %v2049
  %v2150 = vadd.f32 %v1845, %v2050
  %v2151 = vadd.f32 %v1846, %v2051
  %v2152 = vadd.f32 %v1847, %v2052
  %v2153 = vadd.f32 %v1848, %v2053
  %v2154 = vadd.f32 %v1849, %v2054
  %v2155 = vadd.f32 %v1850, %v2055
  %v2156 = vadd.f32 %v1851, %v2056
  %v2157 = vadd.f32 %v1852, %v2057
  %v2158 = vadd.f32 %v1853, %v2058
  %v2159 = vadd.f32 %v1854, %v2059
  %v2160 = vadd.f32 %v1855, %v2060
  %v2161 = vadd.f32 %v1856, %v2061
  %v2162 = vld [vmem:[%s0 + $0x323] sm:$0xff]
  %v2163 = vld [vmem:[%s0 + $0x32b] sm:$0xff]
  %v2164 = vld [vmem:[%s0 + $0x333] sm:$0xff]
  %v2165 = vld [vmem:[%s0 + $0x33b] sm:$0xff]
  %v2166 = vld [vmem:[%s0 + $0x343] sm:$0xff]
  %v2167 = vld [vmem:[%s2 + $0x6] sm:$0x1]
  %v2168 = vlaneseq
  %v2169 = vshrl.u32 %v2168, 7
  %v2170 = vsub.s32 0, %v2169
  %v2171 = vrot.slane %v2167, %v2170
  %v2172 = vmul.f32 %v2171, %v437
  %v2173 = vmul.f32 %v2171, %v438
  %v2174 = vmul.f32 %v2171, %v439
  %v2175 = vmul.f32 %v2171, %v440
  %v2176 = vmul.f32 %v2171, %v441
  %v2177 = vmul.f32 %v2171, %v442
  %v2178 = vmul.f32 %v2171, %v443
  %v2179 = vmul.f32 %v2171, %v444
  %v2180 = vmul.f32 %v2171, %v445
  %v2181 = vmul.f32 %v2171, %v446
  %v2182 = vmul.f32 %v2171, %v447
  %v2183 = vmul.f32 %v2171, %v448
  %v2184 = vmul.f32 %v2171, %v449
  %v2185 = vmul.f32 %v2171, %v450
  %v2186 = vmul.f32 %v2171, %v451
  %v2187 = vmul.f32 %v2171, %v452
  %v2188 = vmul.f32 %v2171, %v453
  %v2189 = vmul.f32 %v2171, %v454
  %v2190 = vmul.f32 %v2171, %v455
  %v2191 = vmul.f32 %v2171, %v456
  %v2192 = vmul.f32 %v2171, %v457
  %v2193 = vmul.f32 %v2171, %v458
  %v2194 = vmul.f32 %v2171, %v459
  %v2195 = vmul.f32 %v2171, %v460
  %v2196 = vmul.f32 %v2171, %v461
  %v2197 = vmul.f32 %v2171, %v462
  %v2198 = vmul.f32 %v2171, %v463
  %v2199 = vmul.f32 %v2171, %v464
  %v2200 = vmul.f32 %v2171, %v465
  %v2201 = vmul.f32 %v2171, %v466
  %v2202 = vmul.f32 %v2171, %v467
  %v2203 = vmul.f32 %v2171, %v468
  %v2204 = vmul.f32 %v2171, %v469
  %v2205 = vmul.f32 %v2171, %v470
  %v2206 = vmul.f32 %v2171, %v471
  %v2207 = vmul.f32 %v2171, %v472
  %v2208 = vmul.f32 %v2171, %v473
  %v2209 = vmul.f32 %v2171, %v474
  %v2210 = vmul.f32 %v2171, %v475
  %v2211 = vmul.f32 %v2171, %v476
  %v2212 = vmul.f32 %v2171, %v477
  %v2213 = vmul.f32 %v2171, %v478
  %v2214 = vmul.f32 %v2171, %v479
  %v2215 = vmul.f32 %v2171, %v480
  %v2216 = vmul.f32 %v2171, %v481
  %v2217 = vmul.f32 %v2171, %v482
  %v2218 = vmul.f32 %v2171, %v483
  %v2219 = vmul.f32 %v2171, %v484
  %v2220 = vmul.f32 %v2171, %v485
  %v2221 = vmul.f32 %v2171, %v486
  %v2222 = vmul.f32 %v2171, %v487
  %v2223 = vmul.f32 %v2171, %v488
  %v2224 = vmul.f32 %v2171, %v489
  %v2225 = vmul.f32 %v2171, %v490
  %v2226 = vmul.f32 %v2171, %v491
  %v2227 = vmul.f32 %v2171, %v492
  %v2228 = vmul.f32 %v2171, %v493
  %v2229 = vmul.f32 %v2171, %v494
  %v2230 = vmul.f32 %v2171, %v495
  %v2231 = vmul.f32 %v2171, %v496
  %v2232 = vmul.f32 %v2171, %v497
  %v2233 = vmul.f32 %v2171, %v498
  %v2234 = vmul.f32 %v2171, %v499
  %v2235 = vmul.f32 %v2171, %v500
  %v2236 = vmul.f32 %v2171, %v501
  %v2237 = vmul.f32 %v2171, %v502
  %v2238 = vmul.f32 %v2171, %v503
  %v2239 = vmul.f32 %v2171, %v504
  %v2240 = vmul.f32 %v2171, %v505
  %v2241 = vmul.f32 %v2171, %v506
  %v2242 = vmul.f32 %v2171, %v507
  %v2243 = vmul.f32 %v2171, %v508
  %v2244 = vmul.f32 %v2171, %v509
  %v2245 = vmul.f32 %v2171, %v510
  %v2246 = vmul.f32 %v2171, %v511
  %v2247 = vmul.f32 %v2171, %v512
  %v2248 = vmul.f32 %v2171, %v513
  %v2249 = vmul.f32 %v2171, %v514
  %v2250 = vmul.f32 %v2171, %v515
  %v2251 = vmul.f32 %v2171, %v516
  %v2252 = vmul.f32 %v2171, %v517
  %v2253 = vmul.f32 %v2171, %v518
  %v2254 = vmul.f32 %v2171, %v519
  %v2255 = vmul.f32 %v2171, %v520
  %v2256 = vmul.f32 %v2171, %v521
  %v2257 = vmul.f32 %v2171, %v522
  %v2258 = vmul.f32 %v2171, %v523
  %v2259 = vmul.f32 %v2171, %v524
  %v2260 = vmul.f32 %v2171, %v525
  %v2261 = vmul.f32 %v2171, %v526
  %v2262 = vmul.f32 %v2171, %v527
  %v2263 = vmul.f32 %v2171, %v528
  %v2264 = vmul.f32 %v2171, %v529
  %v2265 = vmul.f32 %v2171, %v530
  %v2266 = vmul.f32 %v2171, %v531
  %v2267 = vmul.f32 %v2171, %v2162
  %v2268 = vmul.f32 %v2171, %v2163
  %v2269 = vmul.f32 %v2171, %v2164
  %v2270 = vmul.f32 %v2171, %v2165
  %v2271 = vmul.f32 %v2171, %v2166
  %v2272 = vadd.f32 %v2062, %v2172
  %v2273 = vadd.f32 %v2063, %v2173
  %v2274 = vadd.f32 %v2064, %v2174
  %v2275 = vadd.f32 %v2065, %v2175
  %v2276 = vadd.f32 %v2066, %v2176
  %v2277 = vadd.f32 %v2067, %v2177
  %v2278 = vadd.f32 %v2068, %v2178
  %v2279 = vadd.f32 %v2069, %v2179
  %v2280 = vadd.f32 %v2070, %v2180
  %v2281 = vadd.f32 %v2071, %v2181
  %v2282 = vadd.f32 %v2072, %v2182
  %v2283 = vadd.f32 %v2073, %v2183
  %v2284 = vadd.f32 %v2074, %v2184
  %v2285 = vadd.f32 %v2075, %v2185
  %v2286 = vadd.f32 %v2076, %v2186
  %v2287 = vadd.f32 %v2077, %v2187
  %v2288 = vadd.f32 %v2078, %v2188
  %v2289 = vadd.f32 %v2079, %v2189
  %v2290 = vadd.f32 %v2080, %v2190
  %v2291 = vadd.f32 %v2081, %v2191
  %v2292 = vadd.f32 %v2082, %v2192
  %v2293 = vadd.f32 %v2083, %v2193
  %v2294 = vadd.f32 %v2084, %v2194
  %v2295 = vadd.f32 %v2085, %v2195
  %v2296 = vadd.f32 %v2086, %v2196
  %v2297 = vadd.f32 %v2087, %v2197
  %v2298 = vadd.f32 %v2088, %v2198
  %v2299 = vadd.f32 %v2089, %v2199
  %v2300 = vadd.f32 %v2090, %v2200
  %v2301 = vadd.f32 %v2091, %v2201
  %v2302 = vadd.f32 %v2092, %v2202
  %v2303 = vadd.f32 %v2093, %v2203
  %v2304 = vadd.f32 %v2094, %v2204
  %v2305 = vadd.f32 %v2095, %v2205
  %v2306 = vadd.f32 %v2096, %v2206
  %v2307 = vadd.f32 %v2097, %v2207
  %v2308 = vadd.f32 %v2098, %v2208
  %v2309 = vadd.f32 %v2099, %v2209
  %v2310 = vadd.f32 %v2100, %v2210
  %v2311 = vadd.f32 %v2101, %v2211
  %v2312 = vadd.f32 %v2102, %v2212
  %v2313 = vadd.f32 %v2103, %v2213
  %v2314 = vadd.f32 %v2104, %v2214
  %v2315 = vadd.f32 %v2105, %v2215
  %v2316 = vadd.f32 %v2106, %v2216
  %v2317 = vadd.f32 %v2107, %v2217
  %v2318 = vadd.f32 %v2108, %v2218
  %v2319 = vadd.f32 %v2109, %v2219
  %v2320 = vadd.f32 %v2110, %v2220
  %v2321 = vadd.f32 %v2111, %v2221
  %v2322 = vadd.f32 %v2112, %v2222
  %v2323 = vadd.f32 %v2113, %v2223
  %v2324 = vadd.f32 %v2114, %v2224
  %v2325 = vadd.f32 %v2115, %v2225
  %v2326 = vadd.f32 %v2116, %v2226
  %v2327 = vadd.f32 %v2117, %v2227
  %v2328 = vadd.f32 %v2118, %v2228
  %v2329 = vadd.f32 %v2119, %v2229
  %v2330 = vadd.f32 %v2120, %v2230
  %v2331 = vadd.f32 %v2121, %v2231
  %v2332 = vadd.f32 %v2122, %v2232
  %v2333 = vadd.f32 %v2123, %v2233
  %v2334 = vadd.f32 %v2124, %v2234
  %v2335 = vadd.f32 %v2125, %v2235
  %v2336 = vadd.f32 %v2126, %v2236
  %v2337 = vadd.f32 %v2127, %v2237
  %v2338 = vadd.f32 %v2128, %v2238
  %v2339 = vadd.f32 %v2129, %v2239
  %v2340 = vadd.f32 %v2130, %v2240
  %v2341 = vadd.f32 %v2131, %v2241
  %v2342 = vadd.f32 %v2132, %v2242
  %v2343 = vadd.f32 %v2133, %v2243
  %v2344 = vadd.f32 %v2134, %v2244
  %v2345 = vadd.f32 %v2135, %v2245
  %v2346 = vadd.f32 %v2136, %v2246
  %v2347 = vadd.f32 %v2137, %v2247
  %v2348 = vadd.f32 %v2138, %v2248
  %v2349 = vadd.f32 %v2139, %v2249
  %v2350 = vadd.f32 %v2140, %v2250
  %v2351 = vadd.f32 %v2141, %v2251
  %v2352 = vadd.f32 %v2142, %v2252
  %v2353 = vadd.f32 %v2143, %v2253
  %v2354 = vadd.f32 %v2144, %v2254
  %v2355 = vadd.f32 %v2145, %v2255
  %v2356 = vadd.f32 %v2146, %v2256
  %v2357 = vadd.f32 %v2147, %v2257
  %v2358 = vadd.f32 %v2148, %v2258
  %v2359 = vadd.f32 %v2149, %v2259
  %v2360 = vadd.f32 %v2150, %v2260
  %v2361 = vadd.f32 %v2151, %v2261
  %v2362 = vadd.f32 %v2152, %v2262
  %v2363 = vadd.f32 %v2153, %v2263
  %v2364 = vadd.f32 %v2154, %v2264
  %v2365 = vadd.f32 %v2155, %v2265
  %v2366 = vadd.f32 %v2156, %v2266
  %v2367 = vadd.f32 %v2157, %v2267
  %v2368 = vadd.f32 %v2158, %v2268
  %v2369 = vadd.f32 %v2159, %v2269
  %v2370 = vadd.f32 %v2160, %v2270
  %v2371 = vadd.f32 %v2161, %v2271
  %v2372 = vld [vmem:[%s0 + $0x324] sm:$0xff]
  %v2373 = vld [vmem:[%s0 + $0x32c] sm:$0xff]
  %v2374 = vld [vmem:[%s0 + $0x334] sm:$0xff]
  %v2375 = vld [vmem:[%s0 + $0x33c] sm:$0xff]
  %v2376 = vld [vmem:[%s0 + $0x344] sm:$0xff]
  %v2377 = vld [vmem:[%s2 + $0x7] sm:$0x1]
  %v2378 = vlaneseq
  %v2379 = vshrl.u32 %v2378, 7
  %v2380 = vsub.s32 0, %v2379
  %v2381 = vrot.slane %v2377, %v2380
  %v2382 = vmul.f32 %v2381, %v642
  %v2383 = vmul.f32 %v2381, %v643
  %v2384 = vmul.f32 %v2381, %v644
  %v2385 = vmul.f32 %v2381, %v645
  %v2386 = vmul.f32 %v2381, %v646
  %v2387 = vmul.f32 %v2381, %v647
  %v2388 = vmul.f32 %v2381, %v648
  %v2389 = vmul.f32 %v2381, %v649
  %v2390 = vmul.f32 %v2381, %v650
  %v2391 = vmul.f32 %v2381, %v651
  %v2392 = vmul.f32 %v2381, %v652
  %v2393 = vmul.f32 %v2381, %v653
  %v2394 = vmul.f32 %v2381, %v654
  %v2395 = vmul.f32 %v2381, %v655
  %v2396 = vmul.f32 %v2381, %v656
  %v2397 = vmul.f32 %v2381, %v657
  %v2398 = vmul.f32 %v2381, %v658
  %v2399 = vmul.f32 %v2381, %v659
  %v2400 = vmul.f32 %v2381, %v660
  %v2401 = vmul.f32 %v2381, %v661
  %v2402 = vmul.f32 %v2381, %v662
  %v2403 = vmul.f32 %v2381, %v663
  %v2404 = vmul.f32 %v2381, %v664
  %v2405 = vmul.f32 %v2381, %v665
  %v2406 = vmul.f32 %v2381, %v666
  %v2407 = vmul.f32 %v2381, %v667
  %v2408 = vmul.f32 %v2381, %v668
  %v2409 = vmul.f32 %v2381, %v669
  %v2410 = vmul.f32 %v2381, %v670
  %v2411 = vmul.f32 %v2381, %v671
  %v2412 = vmul.f32 %v2381, %v672
  %v2413 = vmul.f32 %v2381, %v673
  %v2414 = vmul.f32 %v2381, %v674
  %v2415 = vmul.f32 %v2381, %v675
  %v2416 = vmul.f32 %v2381, %v676
  %v2417 = vmul.f32 %v2381, %v677
  %v2418 = vmul.f32 %v2381, %v678
  %v2419 = vmul.f32 %v2381, %v679
  %v2420 = vmul.f32 %v2381, %v680
  %v2421 = vmul.f32 %v2381, %v681
  %v2422 = vmul.f32 %v2381, %v682
  %v2423 = vmul.f32 %v2381, %v683
  %v2424 = vmul.f32 %v2381, %v684
  %v2425 = vmul.f32 %v2381, %v685
  %v2426 = vmul.f32 %v2381, %v686
  %v2427 = vmul.f32 %v2381, %v687
  %v2428 = vmul.f32 %v2381, %v688
  %v2429 = vmul.f32 %v2381, %v689
  %v2430 = vmul.f32 %v2381, %v690
  %v2431 = vmul.f32 %v2381, %v691
  %v2432 = vmul.f32 %v2381, %v692
  %v2433 = vmul.f32 %v2381, %v693
  %v2434 = vmul.f32 %v2381, %v694
  %v2435 = vmul.f32 %v2381, %v695
  %v2436 = vmul.f32 %v2381, %v696
  %v2437 = vmul.f32 %v2381, %v697
  %v2438 = vmul.f32 %v2381, %v698
  %v2439 = vmul.f32 %v2381, %v699
  %v2440 = vmul.f32 %v2381, %v700
  %v2441 = vmul.f32 %v2381, %v701
  %v2442 = vmul.f32 %v2381, %v702
  %v2443 = vmul.f32 %v2381, %v703
  %v2444 = vmul.f32 %v2381, %v704
  %v2445 = vmul.f32 %v2381, %v705
  %v2446 = vmul.f32 %v2381, %v706
  %v2447 = vmul.f32 %v2381, %v707
  %v2448 = vmul.f32 %v2381, %v708
  %v2449 = vmul.f32 %v2381, %v709
  %v2450 = vmul.f32 %v2381, %v710
  %v2451 = vmul.f32 %v2381, %v711
  %v2452 = vmul.f32 %v2381, %v712
  %v2453 = vmul.f32 %v2381, %v713
  %v2454 = vmul.f32 %v2381, %v714
  %v2455 = vmul.f32 %v2381, %v715
  %v2456 = vmul.f32 %v2381, %v716
  %v2457 = vmul.f32 %v2381, %v717
  %v2458 = vmul.f32 %v2381, %v718
  %v2459 = vmul.f32 %v2381, %v719
  %v2460 = vmul.f32 %v2381, %v720
  %v2461 = vmul.f32 %v2381, %v721
  %v2462 = vmul.f32 %v2381, %v722
  %v2463 = vmul.f32 %v2381, %v723
  %v2464 = vmul.f32 %v2381, %v724
  %v2465 = vmul.f32 %v2381, %v725
  %v2466 = vmul.f32 %v2381, %v726
  %v2467 = vmul.f32 %v2381, %v727
  %v2468 = vmul.f32 %v2381, %v728
  %v2469 = vmul.f32 %v2381, %v729
  %v2470 = vmul.f32 %v2381, %v730
  %v2471 = vmul.f32 %v2381, %v731
  %v2472 = vmul.f32 %v2381, %v732
  %v2473 = vmul.f32 %v2381, %v733
  %v2474 = vmul.f32 %v2381, %v734
  %v2475 = vmul.f32 %v2381, %v735
  %v2476 = vmul.f32 %v2381, %v736
  %v2477 = vmul.f32 %v2381, %v2372
  %v2478 = vmul.f32 %v2381, %v2373
  %v2479 = vmul.f32 %v2381, %v2374
  %v2480 = vmul.f32 %v2381, %v2375
  %v2481 = vmul.f32 %v2381, %v2376
  %v2482 = vadd.f32 %v2272, %v2382
  %v2483 = vadd.f32 %v2273, %v2383
  %v2484 = vadd.f32 %v2274, %v2384
  %v2485 = vadd.f32 %v2275, %v2385
  %v2486 = vadd.f32 %v2276, %v2386
  %v2487 = vadd.f32 %v2277, %v2387
  %v2488 = vadd.f32 %v2278, %v2388
  %v2489 = vadd.f32 %v2279, %v2389
  %v2490 = vadd.f32 %v2280, %v2390
  %v2491 = vadd.f32 %v2281, %v2391
  %v2492 = vadd.f32 %v2282, %v2392
  %v2493 = vadd.f32 %v2283, %v2393
  %v2494 = vadd.f32 %v2284, %v2394
  %v2495 = vadd.f32 %v2285, %v2395
  %v2496 = vadd.f32 %v2286, %v2396
  %v2497 = vadd.f32 %v2287, %v2397
  %v2498 = vadd.f32 %v2288, %v2398
  %v2499 = vadd.f32 %v2289, %v2399
  %v2500 = vadd.f32 %v2290, %v2400
  %v2501 = vadd.f32 %v2291, %v2401
  %v2502 = vadd.f32 %v2292, %v2402
  %v2503 = vadd.f32 %v2293, %v2403
  %v2504 = vadd.f32 %v2294, %v2404
  %v2505 = vadd.f32 %v2295, %v2405
  %v2506 = vadd.f32 %v2296, %v2406
  %v2507 = vadd.f32 %v2297, %v2407
  %v2508 = vadd.f32 %v2298, %v2408
  %v2509 = vadd.f32 %v2299, %v2409
  %v2510 = vadd.f32 %v2300, %v2410
  %v2511 = vadd.f32 %v2301, %v2411
  %v2512 = vadd.f32 %v2302, %v2412
  %v2513 = vadd.f32 %v2303, %v2413
  %v2514 = vadd.f32 %v2304, %v2414
  %v2515 = vadd.f32 %v2305, %v2415
  %v2516 = vadd.f32 %v2306, %v2416
  %v2517 = vadd.f32 %v2307, %v2417
  %v2518 = vadd.f32 %v2308, %v2418
  %v2519 = vadd.f32 %v2309, %v2419
  %v2520 = vadd.f32 %v2310, %v2420
  %v2521 = vadd.f32 %v2311, %v2421
  %v2522 = vadd.f32 %v2312, %v2422
  %v2523 = vadd.f32 %v2313, %v2423
  %v2524 = vadd.f32 %v2314, %v2424
  %v2525 = vadd.f32 %v2315, %v2425
  %v2526 = vadd.f32 %v2316, %v2426
  %v2527 = vadd.f32 %v2317, %v2427
  %v2528 = vadd.f32 %v2318, %v2428
  %v2529 = vadd.f32 %v2319, %v2429
  %v2530 = vadd.f32 %v2320, %v2430
  %v2531 = vadd.f32 %v2321, %v2431
  %v2532 = vadd.f32 %v2322, %v2432
  %v2533 = vadd.f32 %v2323, %v2433
  %v2534 = vadd.f32 %v2324, %v2434
  %v2535 = vadd.f32 %v2325, %v2435
  %v2536 = vadd.f32 %v2326, %v2436
  %v2537 = vadd.f32 %v2327, %v2437
  %v2538 = vadd.f32 %v2328, %v2438
  %v2539 = vadd.f32 %v2329, %v2439
  %v2540 = vadd.f32 %v2330, %v2440
  %v2541 = vadd.f32 %v2331, %v2441
  %v2542 = vadd.f32 %v2332, %v2442
  %v2543 = vadd.f32 %v2333, %v2443
  %v2544 = vadd.f32 %v2334, %v2444
  %v2545 = vadd.f32 %v2335, %v2445
  %v2546 = vadd.f32 %v2336, %v2446
  %v2547 = vadd.f32 %v2337, %v2447
  %v2548 = vadd.f32 %v2338, %v2448
  %v2549 = vadd.f32 %v2339, %v2449
  %v2550 = vadd.f32 %v2340, %v2450
  %v2551 = vadd.f32 %v2341, %v2451
  %v2552 = vadd.f32 %v2342, %v2452
  %v2553 = vadd.f32 %v2343, %v2453
  %v2554 = vadd.f32 %v2344, %v2454
  %v2555 = vadd.f32 %v2345, %v2455
  %v2556 = vadd.f32 %v2346, %v2456
  %v2557 = vadd.f32 %v2347, %v2457
  %v2558 = vadd.f32 %v2348, %v2458
  %v2559 = vadd.f32 %v2349, %v2459
  %v2560 = vadd.f32 %v2350, %v2460
  %v2561 = vadd.f32 %v2351, %v2461
  %v2562 = vadd.f32 %v2352, %v2462
  %v2563 = vadd.f32 %v2353, %v2463
  %v2564 = vadd.f32 %v2354, %v2464
  %v2565 = vadd.f32 %v2355, %v2465
  %v2566 = vadd.f32 %v2356, %v2466
  %v2567 = vadd.f32 %v2357, %v2467
  %v2568 = vadd.f32 %v2358, %v2468
  %v2569 = vadd.f32 %v2359, %v2469
  %v2570 = vadd.f32 %v2360, %v2470
  %v2571 = vadd.f32 %v2361, %v2471
  %v2572 = vadd.f32 %v2362, %v2472
  %v2573 = vadd.f32 %v2363, %v2473
  %v2574 = vadd.f32 %v2364, %v2474
  %v2575 = vadd.f32 %v2365, %v2475
  %v2576 = vadd.f32 %v2366, %v2476
  %v2577 = vadd.f32 %v2367, %v2477
  %v2578 = vadd.f32 %v2368, %v2478
  %v2579 = vadd.f32 %v2369, %v2479
  %v2580 = vadd.f32 %v2370, %v2480
  %v2581 = vadd.f32 %v2371, %v2481
  %v2582 = vld [vmem:[%s0 + $0x325] sm:$0xff]
  %v2583 = vld [vmem:[%s0 + $0x32d] sm:$0xff]
  %v2584 = vld [vmem:[%s0 + $0x335] sm:$0xff]
  %v2585 = vld [vmem:[%s0 + $0x33d] sm:$0xff]
  %v2586 = vld [vmem:[%s0 + $0x345] sm:$0xff]
  %v2587 = vld [vmem:[%s2 + $0x8] sm:$0x1]
  %v2588 = vlaneseq
  %v2589 = vshrl.u32 %v2588, 7
  %v2590 = vsub.s32 0, %v2589
  %v2591 = vrot.slane %v2587, %v2590
  %v2592 = vmul.f32 %v2591, %v947
  %v2593 = vmul.f32 %v2591, %v948
  %v2594 = vmul.f32 %v2591, %v949
  %v2595 = vmul.f32 %v2591, %v950
  %v2596 = vmul.f32 %v2591, %v951
  %v2597 = vmul.f32 %v2591, %v952
  %v2598 = vmul.f32 %v2591, %v953
  %v2599 = vmul.f32 %v2591, %v954
  %v2600 = vmul.f32 %v2591, %v955
  %v2601 = vmul.f32 %v2591, %v956
  %v2602 = vmul.f32 %v2591, %v957
  %v2603 = vmul.f32 %v2591, %v958
  %v2604 = vmul.f32 %v2591, %v959
  %v2605 = vmul.f32 %v2591, %v960
  %v2606 = vmul.f32 %v2591, %v961
  %v2607 = vmul.f32 %v2591, %v962
  %v2608 = vmul.f32 %v2591, %v963
  %v2609 = vmul.f32 %v2591, %v964
  %v2610 = vmul.f32 %v2591, %v965
  %v2611 = vmul.f32 %v2591, %v966
  %v2612 = vmul.f32 %v2591, %v967
  %v2613 = vmul.f32 %v2591, %v968
  %v2614 = vmul.f32 %v2591, %v969
  %v2615 = vmul.f32 %v2591, %v970
  %v2616 = vmul.f32 %v2591, %v971
  %v2617 = vmul.f32 %v2591, %v972
  %v2618 = vmul.f32 %v2591, %v973
  %v2619 = vmul.f32 %v2591, %v974
  %v2620 = vmul.f32 %v2591, %v975
  %v2621 = vmul.f32 %v2591, %v976
  %v2622 = vmul.f32 %v2591, %v977
  %v2623 = vmul.f32 %v2591, %v978
  %v2624 = vmul.f32 %v2591, %v979
  %v2625 = vmul.f32 %v2591, %v980
  %v2626 = vmul.f32 %v2591, %v981
  %v2627 = vmul.f32 %v2591, %v982
  %v2628 = vmul.f32 %v2591, %v983
  %v2629 = vmul.f32 %v2591, %v984
  %v2630 = vmul.f32 %v2591, %v985
  %v2631 = vmul.f32 %v2591, %v986
  %v2632 = vmul.f32 %v2591, %v987
  %v2633 = vmul.f32 %v2591, %v988
  %v2634 = vmul.f32 %v2591, %v989
  %v2635 = vmul.f32 %v2591, %v990
  %v2636 = vmul.f32 %v2591, %v991
  %v2637 = vmul.f32 %v2591, %v992
  %v2638 = vmul.f32 %v2591, %v993
  %v2639 = vmul.f32 %v2591, %v994
  %v2640 = vmul.f32 %v2591, %v995
  %v2641 = vmul.f32 %v2591, %v996
  %v2642 = vmul.f32 %v2591, %v997
  %v2643 = vmul.f32 %v2591, %v998
  %v2644 = vmul.f32 %v2591, %v999
  %v2645 = vmul.f32 %v2591, %v1000
  %v2646 = vmul.f32 %v2591, %v1001
  %v2647 = vmul.f32 %v2591, %v1002
  %v2648 = vmul.f32 %v2591, %v1003
  %v2649 = vmul.f32 %v2591, %v1004
  %v2650 = vmul.f32 %v2591, %v1005
  %v2651 = vmul.f32 %v2591, %v1006
  %v2652 = vmul.f32 %v2591, %v1007
  %v2653 = vmul.f32 %v2591, %v1008
  %v2654 = vmul.f32 %v2591, %v1009
  %v2655 = vmul.f32 %v2591, %v1010
  %v2656 = vmul.f32 %v2591, %v1011
  %v2657 = vmul.f32 %v2591, %v1012
  %v2658 = vmul.f32 %v2591, %v1013
  %v2659 = vmul.f32 %v2591, %v1014
  %v2660 = vmul.f32 %v2591, %v1015
  %v2661 = vmul.f32 %v2591, %v1016
  %v2662 = vmul.f32 %v2591, %v1017
  %v2663 = vmul.f32 %v2591, %v1018
  %v2664 = vmul.f32 %v2591, %v1019
  %v2665 = vmul.f32 %v2591, %v1020
  %v2666 = vmul.f32 %v2591, %v1021
  %v2667 = vmul.f32 %v2591, %v1022
  %v2668 = vmul.f32 %v2591, %v1023
  %v2669 = vmul.f32 %v2591, %v1024
  %v2670 = vmul.f32 %v2591, %v1025
  %v2671 = vmul.f32 %v2591, %v1026
  %v2672 = vmul.f32 %v2591, %v1027
  %v2673 = vmul.f32 %v2591, %v1028
  %v2674 = vmul.f32 %v2591, %v1029
  %v2675 = vmul.f32 %v2591, %v1030
  %v2676 = vmul.f32 %v2591, %v1031
  %v2677 = vmul.f32 %v2591, %v1032
  %v2678 = vmul.f32 %v2591, %v1033
  %v2679 = vmul.f32 %v2591, %v1034
  %v2680 = vmul.f32 %v2591, %v1035
  %v2681 = vmul.f32 %v2591, %v1036
  %v2682 = vmul.f32 %v2591, %v1037
  %v2683 = vmul.f32 %v2591, %v1038
  %v2684 = vmul.f32 %v2591, %v1039
  %v2685 = vmul.f32 %v2591, %v1040
  %v2686 = vmul.f32 %v2591, %v1041
  %v2687 = vmul.f32 %v2591, %v2582
  %v2688 = vmul.f32 %v2591, %v2583
  %v2689 = vmul.f32 %v2591, %v2584
  %v2690 = vmul.f32 %v2591, %v2585
  %v2691 = vmul.f32 %v2591, %v2586
  %v2692 = vadd.f32 %v2482, %v2592
  %v2693 = vadd.f32 %v2483, %v2593
  %v2694 = vadd.f32 %v2484, %v2594
  %v2695 = vadd.f32 %v2485, %v2595
  %v2696 = vadd.f32 %v2486, %v2596
  %v2697 = vadd.f32 %v2487, %v2597
  %v2698 = vadd.f32 %v2488, %v2598
  %v2699 = vadd.f32 %v2489, %v2599
  %v2700 = vadd.f32 %v2490, %v2600
  %v2701 = vadd.f32 %v2491, %v2601
  %v2702 = vadd.f32 %v2492, %v2602
  %v2703 = vadd.f32 %v2493, %v2603
  %v2704 = vadd.f32 %v2494, %v2604
  %v2705 = vadd.f32 %v2495, %v2605
  %v2706 = vadd.f32 %v2496, %v2606
  %v2707 = vadd.f32 %v2497, %v2607
  %v2708 = vadd.f32 %v2498, %v2608
  %v2709 = vadd.f32 %v2499, %v2609
  %v2710 = vadd.f32 %v2500, %v2610
  %v2711 = vadd.f32 %v2501, %v2611
  %v2712 = vadd.f32 %v2502, %v2612
  %v2713 = vadd.f32 %v2503, %v2613
  %v2714 = vadd.f32 %v2504, %v2614
  %v2715 = vadd.f32 %v2505, %v2615
  %v2716 = vadd.f32 %v2506, %v2616
  %v2717 = vadd.f32 %v2507, %v2617
  %v2718 = vadd.f32 %v2508, %v2618
  %v2719 = vadd.f32 %v2509, %v2619
  %v2720 = vadd.f32 %v2510, %v2620
  %v2721 = vadd.f32 %v2511, %v2621
  %v2722 = vadd.f32 %v2512, %v2622
  %v2723 = vadd.f32 %v2513, %v2623
  %v2724 = vadd.f32 %v2514, %v2624
  %v2725 = vadd.f32 %v2515, %v2625
  %v2726 = vadd.f32 %v2516, %v2626
  %v2727 = vadd.f32 %v2517, %v2627
  %v2728 = vadd.f32 %v2518, %v2628
  %v2729 = vadd.f32 %v2519, %v2629
  %v2730 = vadd.f32 %v2520, %v2630
  %v2731 = vadd.f32 %v2521, %v2631
  %v2732 = vadd.f32 %v2522, %v2632
  %v2733 = vadd.f32 %v2523, %v2633
  %v2734 = vadd.f32 %v2524, %v2634
  %v2735 = vadd.f32 %v2525, %v2635
  %v2736 = vadd.f32 %v2526, %v2636
  %v2737 = vadd.f32 %v2527, %v2637
  %v2738 = vadd.f32 %v2528, %v2638
  %v2739 = vadd.f32 %v2529, %v2639
  %v2740 = vadd.f32 %v2530, %v2640
  %v2741 = vadd.f32 %v2531, %v2641
  %v2742 = vadd.f32 %v2532, %v2642
  %v2743 = vadd.f32 %v2533, %v2643
  %v2744 = vadd.f32 %v2534, %v2644
  %v2745 = vadd.f32 %v2535, %v2645
  %v2746 = vadd.f32 %v2536, %v2646
  %v2747 = vadd.f32 %v2537, %v2647
  %v2748 = vadd.f32 %v2538, %v2648
  %v2749 = vadd.f32 %v2539, %v2649
  %v2750 = vadd.f32 %v2540, %v2650
  %v2751 = vadd.f32 %v2541, %v2651
  %v2752 = vadd.f32 %v2542, %v2652
  %v2753 = vadd.f32 %v2543, %v2653
  %v2754 = vadd.f32 %v2544, %v2654
  %v2755 = vadd.f32 %v2545, %v2655
  %v2756 = vadd.f32 %v2546, %v2656
  %v2757 = vadd.f32 %v2547, %v2657
  %v2758 = vadd.f32 %v2548, %v2658
  %v2759 = vadd.f32 %v2549, %v2659
  %v2760 = vadd.f32 %v2550, %v2660
  %v2761 = vadd.f32 %v2551, %v2661
  %v2762 = vadd.f32 %v2552, %v2662
  %v2763 = vadd.f32 %v2553, %v2663
  %v2764 = vadd.f32 %v2554, %v2664
  %v2765 = vadd.f32 %v2555, %v2665
  %v2766 = vadd.f32 %v2556, %v2666
  %v2767 = vadd.f32 %v2557, %v2667
  %v2768 = vadd.f32 %v2558, %v2668
  %v2769 = vadd.f32 %v2559, %v2669
  %v2770 = vadd.f32 %v2560, %v2670
  %v2771 = vadd.f32 %v2561, %v2671
  %v2772 = vadd.f32 %v2562, %v2672
  %v2773 = vadd.f32 %v2563, %v2673
  %v2774 = vadd.f32 %v2564, %v2674
  %v2775 = vadd.f32 %v2565, %v2675
  %v2776 = vadd.f32 %v2566, %v2676
  %v2777 = vadd.f32 %v2567, %v2677
  %v2778 = vadd.f32 %v2568, %v2678
  %v2779 = vadd.f32 %v2569, %v2679
  %v2780 = vadd.f32 %v2570, %v2680
  %v2781 = vadd.f32 %v2571, %v2681
  %v2782 = vadd.f32 %v2572, %v2682
  %v2783 = vadd.f32 %v2573, %v2683
  %v2784 = vadd.f32 %v2574, %v2684
  %v2785 = vadd.f32 %v2575, %v2685
  %v2786 = vadd.f32 %v2576, %v2686
  %v2787 = vadd.f32 %v2577, %v2687
  %v2788 = vadd.f32 %v2578, %v2688
  %v2789 = vadd.f32 %v2579, %v2689
  %v2790 = vadd.f32 %v2580, %v2690
  %v2791 = vadd.f32 %v2581, %v2691
  %v2793 = vlaneseq
  %v2794 = vshrl.u32 %v2793, 7
  %v2795 = vsub.s32 0, %v2794
  %v2796 = vrot.slane %v430, %v2795
  %v2798 = vadd.f32 %v2692, %v2796
  %v2799 = vadd.f32 %v2693, %v2796
  %v2800 = vadd.f32 %v2694, %v2796
  %v2801 = vadd.f32 %v2695, %v2796
  %v2802 = vadd.f32 %v2696, %v2796
  %v2803 = vadd.f32 %v2697, %v2796
  %v2804 = vadd.f32 %v2698, %v2796
  %v2805 = vadd.f32 %v2699, %v2796
  %v2806 = vadd.f32 %v2700, %v2796
  %v2807 = vadd.f32 %v2701, %v2796
  %v2808 = vadd.f32 %v2702, %v2796
  %v2809 = vadd.f32 %v2703, %v2796
  %v2810 = vadd.f32 %v2704, %v2796
  %v2811 = vadd.f32 %v2705, %v2796
  %v2812 = vadd.f32 %v2706, %v2796
  %v2813 = vadd.f32 %v2707, %v2796
  %v2814 = vadd.f32 %v2708, %v2796
  %v2815 = vadd.f32 %v2709, %v2796
  %v2816 = vadd.f32 %v2710, %v2796
  %v2817 = vadd.f32 %v2711, %v2796
  %v2818 = vadd.f32 %v2712, %v2796
  %v2819 = vadd.f32 %v2713, %v2796
  %v2820 = vadd.f32 %v2714, %v2796
  %v2821 = vadd.f32 %v2715, %v2796
  %v2822 = vadd.f32 %v2716, %v2796
  %v2823 = vadd.f32 %v2717, %v2796
  %v2824 = vadd.f32 %v2718, %v2796
  %v2825 = vadd.f32 %v2719, %v2796
  %v2826 = vadd.f32 %v2720, %v2796
  %v2827 = vadd.f32 %v2721, %v2796
  %v2828 = vadd.f32 %v2722, %v2796
  %v2829 = vadd.f32 %v2723, %v2796
  %v2830 = vadd.f32 %v2724, %v2796
  %v2831 = vadd.f32 %v2725, %v2796
  %v2832 = vadd.f32 %v2726, %v2796
  %v2833 = vadd.f32 %v2727, %v2796
  %v2834 = vadd.f32 %v2728, %v2796
  %v2835 = vadd.f32 %v2729, %v2796
  %v2836 = vadd.f32 %v2730, %v2796
  %v2837 = vadd.f32 %v2731, %v2796
  %v2838 = vadd.f32 %v2732, %v2796
  %v2839 = vadd.f32 %v2733, %v2796
  %v2840 = vadd.f32 %v2734, %v2796
  %v2841 = vadd.f32 %v2735, %v2796
  %v2842 = vadd.f32 %v2736, %v2796
  %v2843 = vadd.f32 %v2737, %v2796
  %v2844 = vadd.f32 %v2738, %v2796
  %v2845 = vadd.f32 %v2739, %v2796
  %v2846 = vadd.f32 %v2740, %v2796
  %v2847 = vadd.f32 %v2741, %v2796
  %v2848 = vadd.f32 %v2742, %v2796
  %v2849 = vadd.f32 %v2743, %v2796
  %v2850 = vadd.f32 %v2744, %v2796
  %v2851 = vadd.f32 %v2745, %v2796
  %v2852 = vadd.f32 %v2746, %v2796
  %v2853 = vadd.f32 %v2747, %v2796
  %v2854 = vadd.f32 %v2748, %v2796
  %v2855 = vadd.f32 %v2749, %v2796
  %v2856 = vadd.f32 %v2750, %v2796
  %v2857 = vadd.f32 %v2751, %v2796
  %v2858 = vadd.f32 %v2752, %v2796
  %v2859 = vadd.f32 %v2753, %v2796
  %v2860 = vadd.f32 %v2754, %v2796
  %v2861 = vadd.f32 %v2755, %v2796
  %v2862 = vadd.f32 %v2756, %v2796
  %v2863 = vadd.f32 %v2757, %v2796
  %v2864 = vadd.f32 %v2758, %v2796
  %v2865 = vadd.f32 %v2759, %v2796
  %v2866 = vadd.f32 %v2760, %v2796
  %v2867 = vadd.f32 %v2761, %v2796
  %v2868 = vadd.f32 %v2762, %v2796
  %v2869 = vadd.f32 %v2763, %v2796
  %v2870 = vadd.f32 %v2764, %v2796
  %v2871 = vadd.f32 %v2765, %v2796
  %v2872 = vadd.f32 %v2766, %v2796
  %v2873 = vadd.f32 %v2767, %v2796
  %v2874 = vadd.f32 %v2768, %v2796
  %v2875 = vadd.f32 %v2769, %v2796
  %v2876 = vadd.f32 %v2770, %v2796
  %v2877 = vadd.f32 %v2771, %v2796
  %v2878 = vadd.f32 %v2772, %v2796
  %v2879 = vadd.f32 %v2773, %v2796
  %v2880 = vadd.f32 %v2774, %v2796
  %v2881 = vadd.f32 %v2775, %v2796
  %v2882 = vadd.f32 %v2776, %v2796
  %v2883 = vadd.f32 %v2777, %v2796
  %v2884 = vadd.f32 %v2778, %v2796
  %v2885 = vadd.f32 %v2779, %v2796
  %v2886 = vadd.f32 %v2780, %v2796
  %v2887 = vadd.f32 %v2781, %v2796
  %v2888 = vadd.f32 %v2782, %v2796
  %v2889 = vadd.f32 %v2783, %v2796
  %v2890 = vadd.f32 %v2784, %v2796
  %v2891 = vadd.f32 %v2785, %v2796
  %v2892 = vadd.f32 %v2786, %v2796
  %v2893 = vadd.f32 %v2787, %v2796
  %v2894 = vadd.f32 %v2788, %v2796
  %v2895 = vadd.f32 %v2789, %v2796
  %v2896 = vadd.f32 %v2790, %v2796
  %v2897 = vadd.f32 %v2791, %v2796
  %v2898 = vsel %vm130, 1, 0
  %v2899 = vsel %vm131, 1, 0
  %v2900 = vsel %vm132, 1, 0
  %v2901 = vsel %vm133, 1, 0
  %v2902 = vsel %vm134, 1, 0
  %v2903 = vsel %vm135, 1, 0
  %v2904 = vsel %vm136, 1, 0
  %v2905 = vsel %vm137, 1, 0
  %v2906 = vsel %vm138, 1, 0
  %v2907 = vsel %vm139, 1, 0
  %v2908 = vsel %vm140, 1, 0
  %v2909 = vsel %vm141, 1, 0
  %v2910 = vsel %vm142, 1, 0
  %v2911 = vsel %vm143, 1, 0
  %v2912 = vsel %vm144, 1, 0
  %v2913 = vsel %vm145, 1, 0
  %v2914 = vsel %vm146, 1, 0
  %v2915 = vsel %vm147, 1, 0
  %v2916 = vsel %vm148, 1, 0
  %v2917 = vsel %vm149, 1, 0
  %v2918 = vsel %vm150, 1, 0
  %v2919 = vsel %vm151, 1, 0
  %v2920 = vsel %vm152, 1, 0
  %v2921 = vsel %vm153, 1, 0
  %v2922 = vsel %vm154, 1, 0
  %v2923 = vsel %vm155, 1, 0
  %v2924 = vsel %vm156, 1, 0
  %v2925 = vsel %vm157, 1, 0
  %v2926 = vsel %vm158, 1, 0
  %v2927 = vsel %vm159, 1, 0
  %v2928 = vsel %vm160, 1, 0
  %v2929 = vsel %vm161, 1, 0
  %v2930 = vsel %vm162, 1, 0
  %v2931 = vsel %vm163, 1, 0
  %v2932 = vsel %vm164, 1, 0
  %v2933 = vsel %vm165, 1, 0
  %v2934 = vsel %vm166, 1, 0
  %v2935 = vsel %vm167, 1, 0
  %v2936 = vsel %vm168, 1, 0
  %v2937 = vsel %vm169, 1, 0
  %v2938 = vsel %vm170, 1, 0
  %v2939 = vsel %vm171, 1, 0
  %v2940 = vsel %vm172, 1, 0
  %v2941 = vsel %vm173, 1, 0
  %v2942 = vsel %vm174, 1, 0
  %v2943 = vsel %vm175, 1, 0
  %v2944 = vsel %vm176, 1, 0
  %v2945 = vsel %vm177, 1, 0
  %v2946 = vsel %vm178, 1, 0
  %v2947 = vsel %vm179, 1, 0
  %v2948 = vsel %vm180, 1, 0
  %v2949 = vsel %vm181, 1, 0
  %v2950 = vsel %vm182, 1, 0
  %v2951 = vsel %vm183, 1, 0
  %v2952 = vsel %vm184, 1, 0
  %v2953 = vsel %vm185, 1, 0
  %v2954 = vsel %vm186, 1, 0
  %v2955 = vsel %vm187, 1, 0
  %v2956 = vsel %vm188, 1, 0
  %v2957 = vsel %vm189, 1, 0
  %v2958 = vsel %vm190, 1, 0
  %v2959 = vsel %vm191, 1, 0
  %v2960 = vsel %vm192, 1, 0
  %v2961 = vsel %vm193, 1, 0
  %v2962 = vsel %vm194, 1, 0
  %v2963 = vsel %vm195, 1, 0
  %v2964 = vsel %vm196, 1, 0
  %v2965 = vsel %vm197, 1, 0
  %v2966 = vsel %vm198, 1, 0
  %v2967 = vsel %vm199, 1, 0
  %v2968 = vsel %vm200, 1, 0
  %v2969 = vsel %vm201, 1, 0
  %v2970 = vsel %vm202, 1, 0
  %v2971 = vsel %vm203, 1, 0
  %v2972 = vsel %vm204, 1, 0
  %v2973 = vsel %vm205, 1, 0
  %v2974 = vsel %vm206, 1, 0
  %v2975 = vsel %vm207, 1, 0
  %v2976 = vsel %vm208, 1, 0
  %v2977 = vsel %vm209, 1, 0
  %v2978 = vsel %vm210, 1, 0
  %v2979 = vsel %vm211, 1, 0
  %v2980 = vsel %vm212, 1, 0
  %v2981 = vsel %vm213, 1, 0
  %v2982 = vsel %vm214, 1, 0
  %v2983 = vsel %vm215, 1, 0
  %v2984 = vsel %vm216, 1, 0
  %v2985 = vsel %vm217, 1, 0
  %v2986 = vsel %vm218, 1, 0
  %v2987 = vsel %vm219, 1, 0
  %v2988 = vsel %vm220, 1, 0
  %v2989 = vsel %vm221, 1, 0
  %v2990 = vsel %vm222, 1, 0
  %v2991 = vsel %vm223, 1, 0
  %v2992 = vsel %vm224, 1, 0
  %v2993 = vsel %vm225, 1, 0
  %v2994 = vsel %vm226, 1, 0
  %v2995 = vsel %vm227, 1, 0
  %v2996 = vsel %vm228, 1, 0
  %v2997 = vsel %vm229, 1, 0
  %2998 = vset.pattern.permute.xlu0 0
  %2999 = vperm.xlu0 %2998, %v2898
  %v3000 = vpop.permute.xlu0 %2999
  %3001 = vset.pattern.permute.xlu0 0
  %3002 = vperm.xlu0 %3001, %v2899
  %v3003 = vpop.permute.xlu0 %3002
  %3004 = vset.pattern.permute.xlu0 0
  %3005 = vperm.xlu0 %3004, %v2900
  %v3006 = vpop.permute.xlu0 %3005
  %3007 = vset.pattern.permute.xlu0 0
  %3008 = vperm.xlu0 %3007, %v2901
  %v3009 = vpop.permute.xlu0 %3008
  %3010 = vset.pattern.permute.xlu0 0
  %3011 = vperm.xlu0 %3010, %v2902
  %v3012 = vpop.permute.xlu0 %3011
  %3013 = vset.pattern.permute.xlu0 0
  %3014 = vperm.xlu0 %3013, %v2903
  %v3015 = vpop.permute.xlu0 %3014
  %3016 = vset.pattern.permute.xlu0 0
  %3017 = vperm.xlu0 %3016, %v2904
  %v3018 = vpop.permute.xlu0 %3017
  %3019 = vset.pattern.permute.xlu0 0
  %3020 = vperm.xlu0 %3019, %v2905
  %v3021 = vpop.permute.xlu0 %3020
  %3022 = vset.pattern.permute.xlu0 0
  %3023 = vperm.xlu0 %3022, %v2906
  %v3024 = vpop.permute.xlu0 %3023
  %3025 = vset.pattern.permute.xlu0 0
  %3026 = vperm.xlu0 %3025, %v2907
  %v3027 = vpop.permute.xlu0 %3026
  %3028 = vset.pattern.permute.xlu0 0
  %3029 = vperm.xlu0 %3028, %v2908
  %v3030 = vpop.permute.xlu0 %3029
  %3031 = vset.pattern.permute.xlu0 0
  %3032 = vperm.xlu0 %3031, %v2909
  %v3033 = vpop.permute.xlu0 %3032
  %3034 = vset.pattern.permute.xlu0 0
  %3035 = vperm.xlu0 %3034, %v2910
  %v3036 = vpop.permute.xlu0 %3035
  %3037 = vset.pattern.permute.xlu0 0
  %3038 = vperm.xlu0 %3037, %v2911
  %v3039 = vpop.permute.xlu0 %3038
  %3040 = vset.pattern.permute.xlu0 0
  %3041 = vperm.xlu0 %3040, %v2912
  %v3042 = vpop.permute.xlu0 %3041
  %3043 = vset.pattern.permute.xlu0 0
  %3044 = vperm.xlu0 %3043, %v2913
  %v3045 = vpop.permute.xlu0 %3044
  %3046 = vset.pattern.permute.xlu0 0
  %3047 = vperm.xlu0 %3046, %v2914
  %v3048 = vpop.permute.xlu0 %3047
  %3049 = vset.pattern.permute.xlu0 0
  %3050 = vperm.xlu0 %3049, %v2915
  %v3051 = vpop.permute.xlu0 %3050
  %3052 = vset.pattern.permute.xlu0 0
  %3053 = vperm.xlu0 %3052, %v2916
  %v3054 = vpop.permute.xlu0 %3053
  %3055 = vset.pattern.permute.xlu0 0
  %3056 = vperm.xlu0 %3055, %v2917
  %v3057 = vpop.permute.xlu0 %3056
  %3058 = vset.pattern.permute.xlu0 0
  %3059 = vperm.xlu0 %3058, %v2918
  %v3060 = vpop.permute.xlu0 %3059
  %3061 = vset.pattern.permute.xlu0 0
  %3062 = vperm.xlu0 %3061, %v2919
  %v3063 = vpop.permute.xlu0 %3062
  %3064 = vset.pattern.permute.xlu0 0
  %3065 = vperm.xlu0 %3064, %v2920
  %v3066 = vpop.permute.xlu0 %3065
  %3067 = vset.pattern.permute.xlu0 0
  %3068 = vperm.xlu0 %3067, %v2921
  %v3069 = vpop.permute.xlu0 %3068
  %3070 = vset.pattern.permute.xlu0 0
  %3071 = vperm.xlu0 %3070, %v2922
  %v3072 = vpop.permute.xlu0 %3071
  %3073 = vset.pattern.permute.xlu0 0
  %3074 = vperm.xlu0 %3073, %v2923
  %v3075 = vpop.permute.xlu0 %3074
  %3076 = vset.pattern.permute.xlu0 0
  %3077 = vperm.xlu0 %3076, %v2924
  %v3078 = vpop.permute.xlu0 %3077
  %3079 = vset.pattern.permute.xlu0 0
  %3080 = vperm.xlu0 %3079, %v2925
  %v3081 = vpop.permute.xlu0 %3080
  %3082 = vset.pattern.permute.xlu0 0
  %3083 = vperm.xlu0 %3082, %v2926
  %v3084 = vpop.permute.xlu0 %3083
  %3085 = vset.pattern.permute.xlu0 0
  %3086 = vperm.xlu0 %3085, %v2927
  %v3087 = vpop.permute.xlu0 %3086
  %3088 = vset.pattern.permute.xlu0 0
  %3089 = vperm.xlu0 %3088, %v2928
  %v3090 = vpop.permute.xlu0 %3089
  %3091 = vset.pattern.permute.xlu0 0
  %3092 = vperm.xlu0 %3091, %v2929
  %v3093 = vpop.permute.xlu0 %3092
  %3094 = vset.pattern.permute.xlu0 0
  %3095 = vperm.xlu0 %3094, %v2930
  %v3096 = vpop.permute.xlu0 %3095
  %3097 = vset.pattern.permute.xlu0 0
  %3098 = vperm.xlu0 %3097, %v2931
  %v3099 = vpop.permute.xlu0 %3098
  %3100 = vset.pattern.permute.xlu0 0
  %3101 = vperm.xlu0 %3100, %v2932
  %v3102 = vpop.permute.xlu0 %3101
  %3103 = vset.pattern.permute.xlu0 0
  %3104 = vperm.xlu0 %3103, %v2933
  %v3105 = vpop.permute.xlu0 %3104
  %3106 = vset.pattern.permute.xlu0 0
  %3107 = vperm.xlu0 %3106, %v2934
  %v3108 = vpop.permute.xlu0 %3107
  %3109 = vset.pattern.permute.xlu0 0
  %3110 = vperm.xlu0 %3109, %v2935
  %v3111 = vpop.permute.xlu0 %3110
  %3112 = vset.pattern.permute.xlu0 0
  %3113 = vperm.xlu0 %3112, %v2936
  %v3114 = vpop.permute.xlu0 %3113
  %3115 = vset.pattern.permute.xlu0 0
  %3116 = vperm.xlu0 %3115, %v2937
  %v3117 = vpop.permute.xlu0 %3116
  %3118 = vset.pattern.permute.xlu0 0
  %3119 = vperm.xlu0 %3118, %v2938
  %v3120 = vpop.permute.xlu0 %3119
  %3121 = vset.pattern.permute.xlu0 0
  %3122 = vperm.xlu0 %3121, %v2939
  %v3123 = vpop.permute.xlu0 %3122
  %3124 = vset.pattern.permute.xlu0 0
  %3125 = vperm.xlu0 %3124, %v2940
  %v3126 = vpop.permute.xlu0 %3125
  %3127 = vset.pattern.permute.xlu0 0
  %3128 = vperm.xlu0 %3127, %v2941
  %v3129 = vpop.permute.xlu0 %3128
  %3130 = vset.pattern.permute.xlu0 0
  %3131 = vperm.xlu0 %3130, %v2942
  %v3132 = vpop.permute.xlu0 %3131
  %3133 = vset.pattern.permute.xlu0 0
  %3134 = vperm.xlu0 %3133, %v2943
  %v3135 = vpop.permute.xlu0 %3134
  %3136 = vset.pattern.permute.xlu0 0
  %3137 = vperm.xlu0 %3136, %v2944
  %v3138 = vpop.permute.xlu0 %3137
  %3139 = vset.pattern.permute.xlu0 0
  %3140 = vperm.xlu0 %3139, %v2945
  %v3141 = vpop.permute.xlu0 %3140
  %3142 = vset.pattern.permute.xlu0 0
  %3143 = vperm.xlu0 %3142, %v2946
  %v3144 = vpop.permute.xlu0 %3143
  %3145 = vset.pattern.permute.xlu0 0
  %3146 = vperm.xlu0 %3145, %v2947
  %v3147 = vpop.permute.xlu0 %3146
  %3148 = vset.pattern.permute.xlu0 0
  %3149 = vperm.xlu0 %3148, %v2948
  %v3150 = vpop.permute.xlu0 %3149
  %3151 = vset.pattern.permute.xlu0 0
  %3152 = vperm.xlu0 %3151, %v2949
  %v3153 = vpop.permute.xlu0 %3152
  %3154 = vset.pattern.permute.xlu0 0
  %3155 = vperm.xlu0 %3154, %v2950
  %v3156 = vpop.permute.xlu0 %3155
  %3157 = vset.pattern.permute.xlu0 0
  %3158 = vperm.xlu0 %3157, %v2951
  %v3159 = vpop.permute.xlu0 %3158
  %3160 = vset.pattern.permute.xlu0 0
  %3161 = vperm.xlu0 %3160, %v2952
  %v3162 = vpop.permute.xlu0 %3161
  %3163 = vset.pattern.permute.xlu0 0
  %3164 = vperm.xlu0 %3163, %v2953
  %v3165 = vpop.permute.xlu0 %3164
  %3166 = vset.pattern.permute.xlu0 0
  %3167 = vperm.xlu0 %3166, %v2954
  %v3168 = vpop.permute.xlu0 %3167
  %3169 = vset.pattern.permute.xlu0 0
  %3170 = vperm.xlu0 %3169, %v2955
  %v3171 = vpop.permute.xlu0 %3170
  %3172 = vset.pattern.permute.xlu0 0
  %3173 = vperm.xlu0 %3172, %v2956
  %v3174 = vpop.permute.xlu0 %3173
  %3175 = vset.pattern.permute.xlu0 0
  %3176 = vperm.xlu0 %3175, %v2957
  %v3177 = vpop.permute.xlu0 %3176
  %3178 = vset.pattern.permute.xlu0 0
  %3179 = vperm.xlu0 %3178, %v2958
  %v3180 = vpop.permute.xlu0 %3179
  %3181 = vset.pattern.permute.xlu0 0
  %3182 = vperm.xlu0 %3181, %v2959
  %v3183 = vpop.permute.xlu0 %3182
  %3184 = vset.pattern.permute.xlu0 0
  %3185 = vperm.xlu0 %3184, %v2960
  %v3186 = vpop.permute.xlu0 %3185
  %3187 = vset.pattern.permute.xlu0 0
  %3188 = vperm.xlu0 %3187, %v2961
  %v3189 = vpop.permute.xlu0 %3188
  %3190 = vset.pattern.permute.xlu0 0
  %3191 = vperm.xlu0 %3190, %v2962
  %v3192 = vpop.permute.xlu0 %3191
  %3193 = vset.pattern.permute.xlu0 0
  %3194 = vperm.xlu0 %3193, %v2963
  %v3195 = vpop.permute.xlu0 %3194
  %3196 = vset.pattern.permute.xlu0 0
  %3197 = vperm.xlu0 %3196, %v2964
  %v3198 = vpop.permute.xlu0 %3197
  %3199 = vset.pattern.permute.xlu0 0
  %3200 = vperm.xlu0 %3199, %v2965
  %v3201 = vpop.permute.xlu0 %3200
  %3202 = vset.pattern.permute.xlu0 0
  %3203 = vperm.xlu0 %3202, %v2966
  %v3204 = vpop.permute.xlu0 %3203
  %3205 = vset.pattern.permute.xlu0 0
  %3206 = vperm.xlu0 %3205, %v2967
  %v3207 = vpop.permute.xlu0 %3206
  %3208 = vset.pattern.permute.xlu0 0
  %3209 = vperm.xlu0 %3208, %v2968
  %v3210 = vpop.permute.xlu0 %3209
  %3211 = vset.pattern.permute.xlu0 0
  %3212 = vperm.xlu0 %3211, %v2969
  %v3213 = vpop.permute.xlu0 %3212
  %3214 = vset.pattern.permute.xlu0 0
  %3215 = vperm.xlu0 %3214, %v2970
  %v3216 = vpop.permute.xlu0 %3215
  %3217 = vset.pattern.permute.xlu0 0
  %3218 = vperm.xlu0 %3217, %v2971
  %v3219 = vpop.permute.xlu0 %3218
  %3220 = vset.pattern.permute.xlu0 0
  %3221 = vperm.xlu0 %3220, %v2972
  %v3222 = vpop.permute.xlu0 %3221
  %3223 = vset.pattern.permute.xlu0 0
  %3224 = vperm.xlu0 %3223, %v2973
  %v3225 = vpop.permute.xlu0 %3224
  %3226 = vset.pattern.permute.xlu0 0
  %3227 = vperm.xlu0 %3226, %v2974
  %v3228 = vpop.permute.xlu0 %3227
  %3229 = vset.pattern.permute.xlu0 0
  %3230 = vperm.xlu0 %3229, %v2975
  %v3231 = vpop.permute.xlu0 %3230
  %3232 = vset.pattern.permute.xlu0 0
  %3233 = vperm.xlu0 %3232, %v2976
  %v3234 = vpop.permute.xlu0 %3233
  %3235 = vset.pattern.permute.xlu0 0
  %3236 = vperm.xlu0 %3235, %v2977
  %v3237 = vpop.permute.xlu0 %3236
  %3238 = vset.pattern.permute.xlu0 0
  %3239 = vperm.xlu0 %3238, %v2978
  %v3240 = vpop.permute.xlu0 %3239
  %3241 = vset.pattern.permute.xlu0 0
  %3242 = vperm.xlu0 %3241, %v2979
  %v3243 = vpop.permute.xlu0 %3242
  %3244 = vset.pattern.permute.xlu0 0
  %3245 = vperm.xlu0 %3244, %v2980
  %v3246 = vpop.permute.xlu0 %3245
  %3247 = vset.pattern.permute.xlu0 0
  %3248 = vperm.xlu0 %3247, %v2981
  %v3249 = vpop.permute.xlu0 %3248
  %3250 = vset.pattern.permute.xlu0 0
  %3251 = vperm.xlu0 %3250, %v2982
  %v3252 = vpop.permute.xlu0 %3251
  %3253 = vset.pattern.permute.xlu0 0
  %3254 = vperm.xlu0 %3253, %v2983
  %v3255 = vpop.permute.xlu0 %3254
  %3256 = vset.pattern.permute.xlu0 0
  %3257 = vperm.xlu0 %3256, %v2984
  %v3258 = vpop.permute.xlu0 %3257
  %3259 = vset.pattern.permute.xlu0 0
  %3260 = vperm.xlu0 %3259, %v2985
  %v3261 = vpop.permute.xlu0 %3260
  %3262 = vset.pattern.permute.xlu0 0
  %3263 = vperm.xlu0 %3262, %v2986
  %v3264 = vpop.permute.xlu0 %3263
  %3265 = vset.pattern.permute.xlu0 0
  %3266 = vperm.xlu0 %3265, %v2987
  %v3267 = vpop.permute.xlu0 %3266
  %3268 = vset.pattern.permute.xlu0 0
  %3269 = vperm.xlu0 %3268, %v2988
  %v3270 = vpop.permute.xlu0 %3269
  %3271 = vset.pattern.permute.xlu0 0
  %3272 = vperm.xlu0 %3271, %v2989
  %v3273 = vpop.permute.xlu0 %3272
  %3274 = vset.pattern.permute.xlu0 0
  %3275 = vperm.xlu0 %3274, %v2990
  %v3276 = vpop.permute.xlu0 %3275
  %3277 = vset.pattern.permute.xlu0 0
  %3278 = vperm.xlu0 %3277, %v2991
  %v3279 = vpop.permute.xlu0 %3278
  %3280 = vset.pattern.permute.xlu0 0
  %3281 = vperm.xlu0 %3280, %v2992
  %v3282 = vpop.permute.xlu0 %3281
  %3283 = vset.pattern.permute.xlu0 0
  %3284 = vperm.xlu0 %3283, %v2993
  %v3285 = vpop.permute.xlu0 %3284
  %3286 = vset.pattern.permute.xlu0 0
  %3287 = vperm.xlu0 %3286, %v2994
  %v3288 = vpop.permute.xlu0 %3287
  %3289 = vset.pattern.permute.xlu0 0
  %3290 = vperm.xlu0 %3289, %v2995
  %v3291 = vpop.permute.xlu0 %3290
  %3292 = vset.pattern.permute.xlu0 0
  %3293 = vperm.xlu0 %3292, %v2996
  %v3294 = vpop.permute.xlu0 %3293
  %3295 = vset.pattern.permute.xlu0 0
  %3296 = vperm.xlu0 %3295, %v2997
  %v3297 = vpop.permute.xlu0 %3296
  %vm3298 = vcmp.eq.s32.totalorder %v3000, 1
  %vm3299 = vcmp.eq.s32.totalorder %v3003, 1
  %vm3300 = vcmp.eq.s32.totalorder %v3006, 1
  %vm3301 = vcmp.eq.s32.totalorder %v3009, 1
  %vm3302 = vcmp.eq.s32.totalorder %v3012, 1
  %vm3303 = vcmp.eq.s32.totalorder %v3015, 1
  %vm3304 = vcmp.eq.s32.totalorder %v3018, 1
  %vm3305 = vcmp.eq.s32.totalorder %v3021, 1
  %vm3306 = vcmp.eq.s32.totalorder %v3024, 1
  %vm3307 = vcmp.eq.s32.totalorder %v3027, 1
  %vm3308 = vcmp.eq.s32.totalorder %v3030, 1
  %vm3309 = vcmp.eq.s32.totalorder %v3033, 1
  %vm3310 = vcmp.eq.s32.totalorder %v3036, 1
  %vm3311 = vcmp.eq.s32.totalorder %v3039, 1
  %vm3312 = vcmp.eq.s32.totalorder %v3042, 1
  %vm3313 = vcmp.eq.s32.totalorder %v3045, 1
  %vm3314 = vcmp.eq.s32.totalorder %v3048, 1
  %vm3315 = vcmp.eq.s32.totalorder %v3051, 1
  %vm3316 = vcmp.eq.s32.totalorder %v3054, 1
  %vm3317 = vcmp.eq.s32.totalorder %v3057, 1
  %vm3318 = vcmp.eq.s32.totalorder %v3060, 1
  %vm3319 = vcmp.eq.s32.totalorder %v3063, 1
  %vm3320 = vcmp.eq.s32.totalorder %v3066, 1
  %vm3321 = vcmp.eq.s32.totalorder %v3069, 1
  %vm3322 = vcmp.eq.s32.totalorder %v3072, 1
  %vm3323 = vcmp.eq.s32.totalorder %v3075, 1
  %vm3324 = vcmp.eq.s32.totalorder %v3078, 1
  %vm3325 = vcmp.eq.s32.totalorder %v3081, 1
  %vm3326 = vcmp.eq.s32.totalorder %v3084, 1
  %vm3327 = vcmp.eq.s32.totalorder %v3087, 1
  %vm3328 = vcmp.eq.s32.totalorder %v3090, 1
  %vm3329 = vcmp.eq.s32.totalorder %v3093, 1
  %vm3330 = vcmp.eq.s32.totalorder %v3096, 1
  %vm3331 = vcmp.eq.s32.totalorder %v3099, 1
  %vm3332 = vcmp.eq.s32.totalorder %v3102, 1
  %vm3333 = vcmp.eq.s32.totalorder %v3105, 1
  %vm3334 = vcmp.eq.s32.totalorder %v3108, 1
  %vm3335 = vcmp.eq.s32.totalorder %v3111, 1
  %vm3336 = vcmp.eq.s32.totalorder %v3114, 1
  %vm3337 = vcmp.eq.s32.totalorder %v3117, 1
  %vm3338 = vcmp.eq.s32.totalorder %v3120, 1
  %vm3339 = vcmp.eq.s32.totalorder %v3123, 1
  %vm3340 = vcmp.eq.s32.totalorder %v3126, 1
  %vm3341 = vcmp.eq.s32.totalorder %v3129, 1
  %vm3342 = vcmp.eq.s32.totalorder %v3132, 1
  %vm3343 = vcmp.eq.s32.totalorder %v3135, 1
  %vm3344 = vcmp.eq.s32.totalorder %v3138, 1
  %vm3345 = vcmp.eq.s32.totalorder %v3141, 1
  %vm3346 = vcmp.eq.s32.totalorder %v3144, 1
  %vm3347 = vcmp.eq.s32.totalorder %v3147, 1
  %vm3348 = vcmp.eq.s32.totalorder %v3150, 1
  %vm3349 = vcmp.eq.s32.totalorder %v3153, 1
  %vm3350 = vcmp.eq.s32.totalorder %v3156, 1
  %vm3351 = vcmp.eq.s32.totalorder %v3159, 1
  %vm3352 = vcmp.eq.s32.totalorder %v3162, 1
  %vm3353 = vcmp.eq.s32.totalorder %v3165, 1
  %vm3354 = vcmp.eq.s32.totalorder %v3168, 1
  %vm3355 = vcmp.eq.s32.totalorder %v3171, 1
  %vm3356 = vcmp.eq.s32.totalorder %v3174, 1
  %vm3357 = vcmp.eq.s32.totalorder %v3177, 1
  %vm3358 = vcmp.eq.s32.totalorder %v3180, 1
  %vm3359 = vcmp.eq.s32.totalorder %v3183, 1
  %vm3360 = vcmp.eq.s32.totalorder %v3186, 1
  %vm3361 = vcmp.eq.s32.totalorder %v3189, 1
  %vm3362 = vcmp.eq.s32.totalorder %v3192, 1
  %vm3363 = vcmp.eq.s32.totalorder %v3195, 1
  %vm3364 = vcmp.eq.s32.totalorder %v3198, 1
  %vm3365 = vcmp.eq.s32.totalorder %v3201, 1
  %vm3366 = vcmp.eq.s32.totalorder %v3204, 1
  %vm3367 = vcmp.eq.s32.totalorder %v3207, 1
  %vm3368 = vcmp.eq.s32.totalorder %v3210, 1
  %vm3369 = vcmp.eq.s32.totalorder %v3213, 1
  %vm3370 = vcmp.eq.s32.totalorder %v3216, 1
  %vm3371 = vcmp.eq.s32.totalorder %v3219, 1
  %vm3372 = vcmp.eq.s32.totalorder %v3222, 1
  %vm3373 = vcmp.eq.s32.totalorder %v3225, 1
  %vm3374 = vcmp.eq.s32.totalorder %v3228, 1
  %vm3375 = vcmp.eq.s32.totalorder %v3231, 1
  %vm3376 = vcmp.eq.s32.totalorder %v3234, 1
  %vm3377 = vcmp.eq.s32.totalorder %v3237, 1
  %vm3378 = vcmp.eq.s32.totalorder %v3240, 1
  %vm3379 = vcmp.eq.s32.totalorder %v3243, 1
  %vm3380 = vcmp.eq.s32.totalorder %v3246, 1
  %vm3381 = vcmp.eq.s32.totalorder %v3249, 1
  %vm3382 = vcmp.eq.s32.totalorder %v3252, 1
  %vm3383 = vcmp.eq.s32.totalorder %v3255, 1
  %vm3384 = vcmp.eq.s32.totalorder %v3258, 1
  %vm3385 = vcmp.eq.s32.totalorder %v3261, 1
  %vm3386 = vcmp.eq.s32.totalorder %v3264, 1
  %vm3387 = vcmp.eq.s32.totalorder %v3267, 1
  %vm3388 = vcmp.eq.s32.totalorder %v3270, 1
  %vm3389 = vcmp.eq.s32.totalorder %v3273, 1
  %vm3390 = vcmp.eq.s32.totalorder %v3276, 1
  %vm3391 = vcmp.eq.s32.totalorder %v3279, 1
  %vm3392 = vcmp.eq.s32.totalorder %v3282, 1
  %vm3393 = vcmp.eq.s32.totalorder %v3285, 1
  %vm3394 = vcmp.eq.s32.totalorder %v3288, 1
  %vm3395 = vcmp.eq.s32.totalorder %v3291, 1
  %vm3396 = vcmp.eq.s32.totalorder %v3294, 1
  %vm3397 = vcmp.eq.s32.totalorder %v3297, 1
  %v3398 = vsel %vm3298, %v2798, 0.0
  %v3399 = vsel %vm3299, %v2799, 0.0
  %v3400 = vsel %vm3300, %v2800, 0.0
  %v3401 = vsel %vm3301, %v2801, 0.0
  %v3402 = vsel %vm3302, %v2802, 0.0
  %v3403 = vsel %vm3303, %v2803, 0.0
  %v3404 = vsel %vm3304, %v2804, 0.0
  %v3405 = vsel %vm3305, %v2805, 0.0
  %v3406 = vsel %vm3306, %v2806, 0.0
  %v3407 = vsel %vm3307, %v2807, 0.0
  %v3408 = vsel %vm3308, %v2808, 0.0
  %v3409 = vsel %vm3309, %v2809, 0.0
  %v3410 = vsel %vm3310, %v2810, 0.0
  %v3411 = vsel %vm3311, %v2811, 0.0
  %v3412 = vsel %vm3312, %v2812, 0.0
  %v3413 = vsel %vm3313, %v2813, 0.0
  %v3414 = vsel %vm3314, %v2814, 0.0
  %v3415 = vsel %vm3315, %v2815, 0.0
  %v3416 = vsel %vm3316, %v2816, 0.0
  %v3417 = vsel %vm3317, %v2817, 0.0
  %v3418 = vsel %vm3318, %v2818, 0.0
  %v3419 = vsel %vm3319, %v2819, 0.0
  %v3420 = vsel %vm3320, %v2820, 0.0
  %v3421 = vsel %vm3321, %v2821, 0.0
  %v3422 = vsel %vm3322, %v2822, 0.0
  %v3423 = vsel %vm3323, %v2823, 0.0
  %v3424 = vsel %vm3324, %v2824, 0.0
  %v3425 = vsel %vm3325, %v2825, 0.0
  %v3426 = vsel %vm3326, %v2826, 0.0
  %v3427 = vsel %vm3327, %v2827, 0.0
  %v3428 = vsel %vm3328, %v2828, 0.0
  %v3429 = vsel %vm3329, %v2829, 0.0
  %v3430 = vsel %vm3330, %v2830, 0.0
  %v3431 = vsel %vm3331, %v2831, 0.0
  %v3432 = vsel %vm3332, %v2832, 0.0
  %v3433 = vsel %vm3333, %v2833, 0.0
  %v3434 = vsel %vm3334, %v2834, 0.0
  %v3435 = vsel %vm3335, %v2835, 0.0
  %v3436 = vsel %vm3336, %v2836, 0.0
  %v3437 = vsel %vm3337, %v2837, 0.0
  %v3438 = vsel %vm3338, %v2838, 0.0
  %v3439 = vsel %vm3339, %v2839, 0.0
  %v3440 = vsel %vm3340, %v2840, 0.0
  %v3441 = vsel %vm3341, %v2841, 0.0
  %v3442 = vsel %vm3342, %v2842, 0.0
  %v3443 = vsel %vm3343, %v2843, 0.0
  %v3444 = vsel %vm3344, %v2844, 0.0
  %v3445 = vsel %vm3345, %v2845, 0.0
  %v3446 = vsel %vm3346, %v2846, 0.0
  %v3447 = vsel %vm3347, %v2847, 0.0
  %v3448 = vsel %vm3348, %v2848, 0.0
  %v3449 = vsel %vm3349, %v2849, 0.0
  %v3450 = vsel %vm3350, %v2850, 0.0
  %v3451 = vsel %vm3351, %v2851, 0.0
  %v3452 = vsel %vm3352, %v2852, 0.0
  %v3453 = vsel %vm3353, %v2853, 0.0
  %v3454 = vsel %vm3354, %v2854, 0.0
  %v3455 = vsel %vm3355, %v2855, 0.0
  %v3456 = vsel %vm3356, %v2856, 0.0
  %v3457 = vsel %vm3357, %v2857, 0.0
  %v3458 = vsel %vm3358, %v2858, 0.0
  %v3459 = vsel %vm3359, %v2859, 0.0
  %v3460 = vsel %vm3360, %v2860, 0.0
  %v3461 = vsel %vm3361, %v2861, 0.0
  %v3462 = vsel %vm3362, %v2862, 0.0
  %v3463 = vsel %vm3363, %v2863, 0.0
  %v3464 = vsel %vm3364, %v2864, 0.0
  %v3465 = vsel %vm3365, %v2865, 0.0
  %v3466 = vsel %vm3366, %v2866, 0.0
  %v3467 = vsel %vm3367, %v2867, 0.0
  %v3468 = vsel %vm3368, %v2868, 0.0
  %v3469 = vsel %vm3369, %v2869, 0.0
  %v3470 = vsel %vm3370, %v2870, 0.0
  %v3471 = vsel %vm3371, %v2871, 0.0
  %v3472 = vsel %vm3372, %v2872, 0.0
  %v3473 = vsel %vm3373, %v2873, 0.0
  %v3474 = vsel %vm3374, %v2874, 0.0
  %v3475 = vsel %vm3375, %v2875, 0.0
  %v3476 = vsel %vm3376, %v2876, 0.0
  %v3477 = vsel %vm3377, %v2877, 0.0
  %v3478 = vsel %vm3378, %v2878, 0.0
  %v3479 = vsel %vm3379, %v2879, 0.0
  %v3480 = vsel %vm3380, %v2880, 0.0
  %v3481 = vsel %vm3381, %v2881, 0.0
  %v3482 = vsel %vm3382, %v2882, 0.0
  %v3483 = vsel %vm3383, %v2883, 0.0
  %v3484 = vsel %vm3384, %v2884, 0.0
  %v3485 = vsel %vm3385, %v2885, 0.0
  %v3486 = vsel %vm3386, %v2886, 0.0
  %v3487 = vsel %vm3387, %v2887, 0.0
  %v3488 = vsel %vm3388, %v2888, 0.0
  %v3489 = vsel %vm3389, %v2889, 0.0
  %v3490 = vsel %vm3390, %v2890, 0.0
  %v3491 = vsel %vm3391, %v2891, 0.0
  %v3492 = vsel %vm3392, %v2892, 0.0
  %v3493 = vsel %vm3393, %v2893, 0.0
  %v3494 = vsel %vm3394, %v2894, 0.0
  %v3495 = vsel %vm3395, %v2895, 0.0
  %v3496 = vsel %vm3396, %v2896, 0.0
  %v3497 = vsel %vm3397, %v2897, 0.0
  %v3498 = vpack.c.bf16 %v3399, %v3398
  %v3499 = vpack.c.bf16 %v3401, %v3400
  %v3500 = vpack.c.bf16 %v3403, %v3402
  %v3501 = vpack.c.bf16 %v3405, %v3404
  %v3502 = vpack.c.bf16 %v3407, %v3406
  %v3503 = vpack.c.bf16 %v3409, %v3408
  %v3504 = vpack.c.bf16 %v3411, %v3410
  %v3505 = vpack.c.bf16 %v3413, %v3412
  %v3506 = vpack.c.bf16 %v3415, %v3414
  %v3507 = vpack.c.bf16 %v3417, %v3416
  %v3508 = vpack.c.bf16 %v3419, %v3418
  %v3509 = vpack.c.bf16 %v3421, %v3420
  %v3510 = vpack.c.bf16 %v3423, %v3422
  %v3511 = vpack.c.bf16 %v3425, %v3424
  %v3512 = vpack.c.bf16 %v3427, %v3426
  %v3513 = vpack.c.bf16 %v3429, %v3428
  %v3514 = vpack.c.bf16 %v3431, %v3430
  %v3515 = vpack.c.bf16 %v3433, %v3432
  %v3516 = vpack.c.bf16 %v3435, %v3434
  %v3517 = vpack.c.bf16 %v3437, %v3436
  %v3518 = vpack.c.bf16 %v3439, %v3438
  %v3519 = vpack.c.bf16 %v3441, %v3440
  %v3520 = vpack.c.bf16 %v3443, %v3442
  %v3521 = vpack.c.bf16 %v3445, %v3444
  %v3522 = vpack.c.bf16 %v3447, %v3446
  %v3523 = vpack.c.bf16 %v3449, %v3448
  %v3524 = vpack.c.bf16 %v3451, %v3450
  %v3525 = vpack.c.bf16 %v3453, %v3452
  %v3526 = vpack.c.bf16 %v3455, %v3454
  %v3527 = vpack.c.bf16 %v3457, %v3456
  %v3528 = vpack.c.bf16 %v3459, %v3458
  %v3529 = vpack.c.bf16 %v3461, %v3460
  %v3530 = vpack.c.bf16 %v3463, %v3462
  %v3531 = vpack.c.bf16 %v3465, %v3464
  %v3532 = vpack.c.bf16 %v3467, %v3466
  %v3533 = vpack.c.bf16 %v3469, %v3468
  %v3534 = vpack.c.bf16 %v3471, %v3470
  %v3535 = vpack.c.bf16 %v3473, %v3472
  %v3536 = vpack.c.bf16 %v3475, %v3474
  %v3537 = vpack.c.bf16 %v3477, %v3476
  %v3538 = vpack.c.bf16 %v3479, %v3478
  %v3539 = vpack.c.bf16 %v3481, %v3480
  %v3540 = vpack.c.bf16 %v3483, %v3482
  %v3541 = vpack.c.bf16 %v3485, %v3484
  %v3542 = vpack.c.bf16 %v3487, %v3486
  %v3543 = vpack.c.bf16 %v3489, %v3488
  %v3544 = vpack.c.bf16 %v3491, %v3490
  %v3545 = vpack.c.bf16 %v3493, %v3492
  %v3546 = vpack.c.bf16 %v3495, %v3494
  %v3547 = vpack.c.bf16 %v3497, %v3496
  %v3548 = vld [vmem:[%s4] sm:$0x3]
  %v3549 = vlaneseq
  %v3550 = vshrl.u32 %v3549, 7
  %v3551 = vsub.s32 1, %v3550
  %v3552 = vrot.slane %v431, %v3551
  %vm3553 = vcmask 31744
  %v3555 = vsel %vm3553, %v3498, 0
  %v3558 = vsel %vm3553, %v3499, 0
  %v3561 = vsel %vm3553, %v3500, 0
  %v3564 = vsel %vm3553, %v3501, 0
  %v3567 = vsel %vm3553, %v3502, 0
  %v3570 = vsel %vm3553, %v3503, 0
  %v3573 = vsel %vm3553, %v3504, 0
  %v3576 = vsel %vm3553, %v3505, 0
  %v3579 = vsel %vm3553, %v3506, 0
  %v3582 = vsel %vm3553, %v3507, 0
  %v3585 = vsel %vm3553, %v3508, 0
  %v3588 = vsel %vm3553, %v3509, 0
  %v3591 = vsel %vm3553, %v3510, 0
  %v3594 = vsel %vm3553, %v3511, 0
  %v3597 = vsel %vm3553, %v3512, 0
  %v3600 = vsel %vm3553, %v3513, 0
  %v3603 = vsel %vm3553, %v3514, 0
  %v3606 = vsel %vm3553, %v3515, 0
  %v3609 = vsel %vm3553, %v3516, 0
  %v3612 = vsel %vm3553, %v3517, 0
  %v3615 = vsel %vm3553, %v3518, 0
  %v3618 = vsel %vm3553, %v3519, 0
  %v3621 = vsel %vm3553, %v3520, 0
  %v3624 = vsel %vm3553, %v3521, 0
  %v3627 = vsel %vm3553, %v3522, 0
  %v3630 = vsel %vm3553, %v3523, 0
  %v3633 = vsel %vm3553, %v3524, 0
  %v3636 = vsel %vm3553, %v3525, 0
  %v3639 = vsel %vm3553, %v3526, 0
  %v3642 = vsel %vm3553, %v3527, 0
  %v3645 = vsel %vm3553, %v3528, 0
  %v3648 = vsel %vm3553, %v3529, 0
  %v3651 = vsel %vm3553, %v3530, 0
  %v3654 = vsel %vm3553, %v3531, 0
  %v3657 = vsel %vm3553, %v3532, 0
  %v3660 = vsel %vm3553, %v3533, 0
  %v3663 = vsel %vm3553, %v3534, 0
  %v3666 = vsel %vm3553, %v3535, 0
  %v3669 = vsel %vm3553, %v3536, 0
  %v3672 = vsel %vm3553, %v3537, 0
  %v3675 = vsel %vm3553, %v3538, 0
  %v3678 = vsel %vm3553, %v3539, 0
  %v3681 = vsel %vm3553, %v3540, 0
  %v3684 = vsel %vm3553, %v3541, 0
  %v3687 = vsel %vm3553, %v3542, 0
  %v3690 = vsel %vm3553, %v3543, 0
  %v3693 = vsel %vm3553, %v3544, 0
  %v3696 = vsel %vm3553, %v3545, 0
  %v3699 = vsel %vm3553, %v3546, 0
  %v3702 = vsel %vm3553, %v3547, 0
  %vm3704 = vcmask 1041408
  %v3706 = vsel %vm3704, %v3548, 0
  %3708 = vmatprep.subr.bf16.mxu0 0
  %3709 = vmatpush1.bf16.msra.mxu0 0
  %3710 = vmatprep.subr.bf16.mxu0 0
  %3711 = vmatpush1.bf16.msra.mxu0 0
  %3712 = vmatprep.subr.bf16.mxu0 0
  %3713 = vmatpush1.bf16.msra.mxu0 0
  %3714 = vmatprep.subr.bf16.mxu0 0
  %3715 = vmatpush1.bf16.msra.mxu0 0
  %3716 = vmatprep.subr.bf16.mxu0 0
  %3717 = vmatpush1.bf16.msra.mxu0 0
  %3718 = vmatprep.subr.bf16.mxu0 0
  %3719 = vmatpush1.bf16.msra.mxu0 0
  %3720 = vmatprep.subr.bf16.mxu0 0
  %3721 = vmatpush1.bf16.msra.mxu0 0
  %3722 = vmatprep.subr.bf16.mxu0 0
  %3723 = vmatpush1.bf16.msra.mxu0 %v3706
  %3724 = vmatprep.subr.bf16.mxu0 0
  %3725 = vmatpush2.bf16.msra.mxu0 0
  %3726 = vmatprep.subr.bf16.mxu0 0
  %3727 = vmatpush2.bf16.msra.mxu0 0
  %3728 = vmatprep.subr.bf16.mxu0 0
  %3729 = vmatpush2.bf16.msra.mxu0 0
  %3730 = vmatprep.subr.bf16.mxu0 0
  %3731 = vmatpush2.bf16.msra.mxu0 0
  %3732 = vmatprep.subr.bf16.mxu0 0
  %3733 = vmatpush2.bf16.msra.mxu0 0
  %3734 = vmatprep.subr.bf16.mxu0 0
  %3735 = vmatpush2.bf16.msra.mxu0 0
  %3736 = vmatprep.subr.bf16.mxu0 0
  %3737 = vmatpush2.bf16.msra.mxu0 0
  %3738 = vmatprep.subr.bf16.mxu0 0
  %3739 = vmatpush2.bf16.msra.mxu0 0
  %3740 = vmatprep.mubr.bf16.mxu0 0
  %3741 = vmatmul.mubr.bf16.gmra.mxu0 %v3555
  %v3742 = vpop.f32.mrf.mxu0
  %v3743 = vadd.f32 %v3552, %v3742
  %v3744 = vpop.f32.mrf.mxu0
  %v3745 = vpop.f32.mrf.mxu0
  %v3746 = vadd.f32 %v3552, %v3745
  %v3747 = vpop.f32.mrf.mxu0
  %3748 = vmatprep.mubr.bf16.mxu0 0
  %3749 = vmatmul.mubr.bf16.gmra.mxu0 %v3558
  %v3750 = vpop.f32.mrf.mxu0
  %v3751 = vadd.f32 %v3552, %v3750
  %v3752 = vpop.f32.mrf.mxu0
  %v3753 = vpop.f32.mrf.mxu0
  %v3754 = vadd.f32 %v3552, %v3753
  %v3755 = vpop.f32.mrf.mxu0
  %3756 = vmatprep.mubr.bf16.mxu0 0
  %3757 = vmatmul.mubr.bf16.gmra.mxu0 %v3561
  %v3758 = vpop.f32.mrf.mxu0
  %v3759 = vadd.f32 %v3552, %v3758
  %v3760 = vpop.f32.mrf.mxu0
  %v3761 = vpop.f32.mrf.mxu0
  %v3762 = vadd.f32 %v3552, %v3761
  %v3763 = vpop.f32.mrf.mxu0
  %3764 = vmatprep.mubr.bf16.mxu0 0
  %3765 = vmatmul.mubr.bf16.gmra.mxu0 %v3564
  %v3766 = vpop.f32.mrf.mxu0
  %v3767 = vadd.f32 %v3552, %v3766
  %v3768 = vpop.f32.mrf.mxu0
  %v3769 = vpop.f32.mrf.mxu0
  %v3770 = vadd.f32 %v3552, %v3769
  %v3771 = vpop.f32.mrf.mxu0
  %3772 = vmatprep.mubr.bf16.mxu0 0
  %3773 = vmatmul.mubr.bf16.gmra.mxu0 %v3567
  %v3774 = vpop.f32.mrf.mxu0
  %v3775 = vadd.f32 %v3552, %v3774
  %v3776 = vpop.f32.mrf.mxu0
  %v3777 = vpop.f32.mrf.mxu0
  %v3778 = vadd.f32 %v3552, %v3777
  %v3779 = vpop.f32.mrf.mxu0
  %3780 = vmatprep.mubr.bf16.mxu0 0
  %3781 = vmatmul.mubr.bf16.gmra.mxu0 %v3570
  %v3782 = vpop.f32.mrf.mxu0
  %v3783 = vadd.f32 %v3552, %v3782
  %v3784 = vpop.f32.mrf.mxu0
  %v3785 = vpop.f32.mrf.mxu0
  %v3786 = vadd.f32 %v3552, %v3785
  %v3787 = vpop.f32.mrf.mxu0
  %3788 = vmatprep.mubr.bf16.mxu0 0
  %3789 = vmatmul.mubr.bf16.gmra.mxu0 %v3573
  %v3790 = vpop.f32.mrf.mxu0
  %v3791 = vadd.f32 %v3552, %v3790
  %v3792 = vpop.f32.mrf.mxu0
  %v3793 = vpop.f32.mrf.mxu0
  %v3794 = vadd.f32 %v3552, %v3793
  %v3795 = vpop.f32.mrf.mxu0
  %3796 = vmatprep.mubr.bf16.mxu0 0
  %3797 = vmatmul.mubr.bf16.gmra.mxu0 %v3576
  %v3798 = vpop.f32.mrf.mxu0
  %v3799 = vadd.f32 %v3552, %v3798
  %v3800 = vpop.f32.mrf.mxu0
  %v3801 = vpop.f32.mrf.mxu0
  %v3802 = vadd.f32 %v3552, %v3801
  %v3803 = vpop.f32.mrf.mxu0
  %3804 = vmatprep.mubr.bf16.mxu0 0
  %3805 = vmatmul.mubr.bf16.gmra.mxu0 %v3579
  %v3806 = vpop.f32.mrf.mxu0
  %v3807 = vadd.f32 %v3552, %v3806
  %v3808 = vpop.f32.mrf.mxu0
  %v3809 = vpop.f32.mrf.mxu0
  %v3810 = vadd.f32 %v3552, %v3809
  %v3811 = vpop.f32.mrf.mxu0
  %3812 = vmatprep.mubr.bf16.mxu0 0
  %3813 = vmatmul.mubr.bf16.gmra.mxu0 %v3582
  %v3814 = vpop.f32.mrf.mxu0
  %v3815 = vadd.f32 %v3552, %v3814
  %v3816 = vpop.f32.mrf.mxu0
  %v3817 = vpop.f32.mrf.mxu0
  %v3818 = vadd.f32 %v3552, %v3817
  %v3819 = vpop.f32.mrf.mxu0
  %3820 = vmatprep.mubr.bf16.mxu0 0
  %3821 = vmatmul.mubr.bf16.gmra.mxu0 %v3585
  %v3822 = vpop.f32.mrf.mxu0
  %v3823 = vadd.f32 %v3552, %v3822
  %v3824 = vpop.f32.mrf.mxu0
  %v3825 = vpop.f32.mrf.mxu0
  %v3826 = vadd.f32 %v3552, %v3825
  %v3827 = vpop.f32.mrf.mxu0
  %3828 = vmatprep.mubr.bf16.mxu0 0
  %3829 = vmatmul.mubr.bf16.gmra.mxu0 %v3588
  %v3830 = vpop.f32.mrf.mxu0
  %v3831 = vadd.f32 %v3552, %v3830
  %v3832 = vpop.f32.mrf.mxu0
  %v3833 = vpop.f32.mrf.mxu0
  %v3834 = vadd.f32 %v3552, %v3833
  %v3835 = vpop.f32.mrf.mxu0
  %3836 = vmatprep.mubr.bf16.mxu0 0
  %3837 = vmatmul.mubr.bf16.gmra.mxu0 %v3591
  %v3838 = vpop.f32.mrf.mxu0
  %v3839 = vadd.f32 %v3552, %v3838
  %v3840 = vpop.f32.mrf.mxu0
  %v3841 = vpop.f32.mrf.mxu0
  %v3842 = vadd.f32 %v3552, %v3841
  %v3843 = vpop.f32.mrf.mxu0
  %3844 = vmatprep.mubr.bf16.mxu0 0
  %3845 = vmatmul.mubr.bf16.gmra.mxu0 %v3594
  %v3846 = vpop.f32.mrf.mxu0
  %v3847 = vadd.f32 %v3552, %v3846
  %v3848 = vpop.f32.mrf.mxu0
  %v3849 = vpop.f32.mrf.mxu0
  %v3850 = vadd.f32 %v3552, %v3849
  %v3851 = vpop.f32.mrf.mxu0
  %3852 = vmatprep.mubr.bf16.mxu0 0
  %3853 = vmatmul.mubr.bf16.gmra.mxu0 %v3597
  %v3854 = vpop.f32.mrf.mxu0
  %v3855 = vadd.f32 %v3552, %v3854
  %v3856 = vpop.f32.mrf.mxu0
  %v3857 = vpop.f32.mrf.mxu0
  %v3858 = vadd.f32 %v3552, %v3857
  %v3859 = vpop.f32.mrf.mxu0
  %3860 = vmatprep.mubr.bf16.mxu0 0
  %3861 = vmatmul.mubr.bf16.gmra.mxu0 %v3600
  %v3862 = vpop.f32.mrf.mxu0
  %v3863 = vadd.f32 %v3552, %v3862
  %v3864 = vpop.f32.mrf.mxu0
  %v3865 = vpop.f32.mrf.mxu0
  %v3866 = vadd.f32 %v3552, %v3865
  %v3867 = vpop.f32.mrf.mxu0
  %3868 = vmatprep.mubr.bf16.mxu0 0
  %3869 = vmatmul.mubr.bf16.gmra.mxu0 %v3603
  %v3870 = vpop.f32.mrf.mxu0
  %v3871 = vadd.f32 %v3552, %v3870
  %v3872 = vpop.f32.mrf.mxu0
  %v3873 = vpop.f32.mrf.mxu0
  %v3874 = vadd.f32 %v3552, %v3873
  %v3875 = vpop.f32.mrf.mxu0
  %3876 = vmatprep.mubr.bf16.mxu0 0
  %3877 = vmatmul.mubr.bf16.gmra.mxu0 %v3606
  %v3878 = vpop.f32.mrf.mxu0
  %v3879 = vadd.f32 %v3552, %v3878
  %v3880 = vpop.f32.mrf.mxu0
  %v3881 = vpop.f32.mrf.mxu0
  %v3882 = vadd.f32 %v3552, %v3881
  %v3883 = vpop.f32.mrf.mxu0
  %3884 = vmatprep.mubr.bf16.mxu0 0
  %3885 = vmatmul.mubr.bf16.gmra.mxu0 %v3609
  %v3886 = vpop.f32.mrf.mxu0
  %v3887 = vadd.f32 %v3552, %v3886
  %v3888 = vpop.f32.mrf.mxu0
  %v3889 = vpop.f32.mrf.mxu0
  %v3890 = vadd.f32 %v3552, %v3889
  %v3891 = vpop.f32.mrf.mxu0
  %3892 = vmatprep.mubr.bf16.mxu0 0
  %3893 = vmatmul.mubr.bf16.gmra.mxu0 %v3612
  %v3894 = vpop.f32.mrf.mxu0
  %v3895 = vadd.f32 %v3552, %v3894
  %v3896 = vpop.f32.mrf.mxu0
  %v3897 = vpop.f32.mrf.mxu0
  %v3898 = vadd.f32 %v3552, %v3897
  %v3899 = vpop.f32.mrf.mxu0
  %3900 = vmatprep.mubr.bf16.mxu0 0
  %3901 = vmatmul.mubr.bf16.gmra.mxu0 %v3615
  %v3902 = vpop.f32.mrf.mxu0
  %v3903 = vadd.f32 %v3552, %v3902
  %v3904 = vpop.f32.mrf.mxu0
  %v3905 = vpop.f32.mrf.mxu0
  %v3906 = vadd.f32 %v3552, %v3905
  %v3907 = vpop.f32.mrf.mxu0
  %3908 = vmatprep.mubr.bf16.mxu0 0
  %3909 = vmatmul.mubr.bf16.gmra.mxu0 %v3618
  %v3910 = vpop.f32.mrf.mxu0
  %v3911 = vadd.f32 %v3552, %v3910
  %v3912 = vpop.f32.mrf.mxu0
  %v3913 = vpop.f32.mrf.mxu0
  %v3914 = vadd.f32 %v3552, %v3913
  %v3915 = vpop.f32.mrf.mxu0
  %3916 = vmatprep.mubr.bf16.mxu0 0
  %3917 = vmatmul.mubr.bf16.gmra.mxu0 %v3621
  %v3918 = vpop.f32.mrf.mxu0
  %v3919 = vadd.f32 %v3552, %v3918
  %v3920 = vpop.f32.mrf.mxu0
  %v3921 = vpop.f32.mrf.mxu0
  %v3922 = vadd.f32 %v3552, %v3921
  %v3923 = vpop.f32.mrf.mxu0
  %3924 = vmatprep.mubr.bf16.mxu0 0
  %3925 = vmatmul.mubr.bf16.gmra.mxu0 %v3624
  %v3926 = vpop.f32.mrf.mxu0
  %v3927 = vadd.f32 %v3552, %v3926
  %v3928 = vpop.f32.mrf.mxu0
  %v3929 = vpop.f32.mrf.mxu0
  %v3930 = vadd.f32 %v3552, %v3929
  %v3931 = vpop.f32.mrf.mxu0
  %3932 = vmatprep.mubr.bf16.mxu0 0
  %3933 = vmatmul.mubr.bf16.gmra.mxu0 %v3627
  %v3934 = vpop.f32.mrf.mxu0
  %v3935 = vadd.f32 %v3552, %v3934
  %v3936 = vpop.f32.mrf.mxu0
  %v3937 = vpop.f32.mrf.mxu0
  %v3938 = vadd.f32 %v3552, %v3937
  %v3939 = vpop.f32.mrf.mxu0
  %3940 = vmatprep.mubr.bf16.mxu0 0
  %3941 = vmatmul.mubr.bf16.gmra.mxu0 %v3630
  %v3942 = vpop.f32.mrf.mxu0
  %v3943 = vadd.f32 %v3552, %v3942
  %v3944 = vpop.f32.mrf.mxu0
  %v3945 = vpop.f32.mrf.mxu0
  %v3946 = vadd.f32 %v3552, %v3945
  %v3947 = vpop.f32.mrf.mxu0
  %3948 = vmatprep.mubr.bf16.mxu0 0
  %3949 = vmatmul.mubr.bf16.gmra.mxu0 %v3633
  %v3950 = vpop.f32.mrf.mxu0
  %v3951 = vadd.f32 %v3552, %v3950
  %v3952 = vpop.f32.mrf.mxu0
  %v3953 = vpop.f32.mrf.mxu0
  %v3954 = vadd.f32 %v3552, %v3953
  %v3955 = vpop.f32.mrf.mxu0
  %3956 = vmatprep.mubr.bf16.mxu0 0
  %3957 = vmatmul.mubr.bf16.gmra.mxu0 %v3636
  %v3958 = vpop.f32.mrf.mxu0
  %v3959 = vadd.f32 %v3552, %v3958
  %v3960 = vpop.f32.mrf.mxu0
  %v3961 = vpop.f32.mrf.mxu0
  %v3962 = vadd.f32 %v3552, %v3961
  %v3963 = vpop.f32.mrf.mxu0
  %3964 = vmatprep.mubr.bf16.mxu0 0
  %3965 = vmatmul.mubr.bf16.gmra.mxu0 %v3639
  %v3966 = vpop.f32.mrf.mxu0
  %v3967 = vadd.f32 %v3552, %v3966
  %v3968 = vpop.f32.mrf.mxu0
  %v3969 = vpop.f32.mrf.mxu0
  %v3970 = vadd.f32 %v3552, %v3969
  %v3971 = vpop.f32.mrf.mxu0
  %3972 = vmatprep.mubr.bf16.mxu0 0
  %3973 = vmatmul.mubr.bf16.gmra.mxu0 %v3642
  %v3974 = vpop.f32.mrf.mxu0
  %v3975 = vadd.f32 %v3552, %v3974
  %v3976 = vpop.f32.mrf.mxu0
  %v3977 = vpop.f32.mrf.mxu0
  %v3978 = vadd.f32 %v3552, %v3977
  %v3979 = vpop.f32.mrf.mxu0
  %3980 = vmatprep.mubr.bf16.mxu0 0
  %3981 = vmatmul.mubr.bf16.gmra.mxu0 %v3645
  %v3982 = vpop.f32.mrf.mxu0
  %v3983 = vadd.f32 %v3552, %v3982
  %v3984 = vpop.f32.mrf.mxu0
  %v3985 = vpop.f32.mrf.mxu0
  %v3986 = vadd.f32 %v3552, %v3985
  %v3987 = vpop.f32.mrf.mxu0
  %3988 = vmatprep.mubr.bf16.mxu0 0
  %3989 = vmatmul.mubr.bf16.gmra.mxu0 %v3648
  %v3990 = vpop.f32.mrf.mxu0
  %v3991 = vadd.f32 %v3552, %v3990
  %v3992 = vpop.f32.mrf.mxu0
  %v3993 = vpop.f32.mrf.mxu0
  %v3994 = vadd.f32 %v3552, %v3993
  %v3995 = vpop.f32.mrf.mxu0
  %3996 = vmatprep.mubr.bf16.mxu0 0
  %3997 = vmatmul.mubr.bf16.gmra.mxu0 %v3651
  %v3998 = vpop.f32.mrf.mxu0
  %v3999 = vadd.f32 %v3552, %v3998
  %v4000 = vpop.f32.mrf.mxu0
  %v4001 = vpop.f32.mrf.mxu0
  %v4002 = vadd.f32 %v3552, %v4001
  %v4003 = vpop.f32.mrf.mxu0
  %4004 = vmatprep.mubr.bf16.mxu0 0
  %4005 = vmatmul.mubr.bf16.gmra.mxu0 %v3654
  %v4006 = vpop.f32.mrf.mxu0
  %v4007 = vadd.f32 %v3552, %v4006
  %v4008 = vpop.f32.mrf.mxu0
  %v4009 = vpop.f32.mrf.mxu0
  %v4010 = vadd.f32 %v3552, %v4009
  %v4011 = vpop.f32.mrf.mxu0
  %4012 = vmatprep.mubr.bf16.mxu0 0
  %4013 = vmatmul.mubr.bf16.gmra.mxu0 %v3657
  %v4014 = vpop.f32.mrf.mxu0
  %v4015 = vadd.f32 %v3552, %v4014
  %v4016 = vpop.f32.mrf.mxu0
  %v4017 = vpop.f32.mrf.mxu0
  %v4018 = vadd.f32 %v3552, %v4017
  %v4019 = vpop.f32.mrf.mxu0
  %4020 = vmatprep.mubr.bf16.mxu0 0
  %4021 = vmatmul.mubr.bf16.gmra.mxu0 %v3660
  %v4022 = vpop.f32.mrf.mxu0
  %v4023 = vadd.f32 %v3552, %v4022
  %v4024 = vpop.f32.mrf.mxu0
  %v4025 = vpop.f32.mrf.mxu0
  %v4026 = vadd.f32 %v3552, %v4025
  %v4027 = vpop.f32.mrf.mxu0
  %4028 = vmatprep.mubr.bf16.mxu0 0
  %4029 = vmatmul.mubr.bf16.gmra.mxu0 %v3663
  %v4030 = vpop.f32.mrf.mxu0
  %v4031 = vadd.f32 %v3552, %v4030
  %v4032 = vpop.f32.mrf.mxu0
  %v4033 = vpop.f32.mrf.mxu0
  %v4034 = vadd.f32 %v3552, %v4033
  %v4035 = vpop.f32.mrf.mxu0
  %4036 = vmatprep.mubr.bf16.mxu0 0
  %4037 = vmatmul.mubr.bf16.gmra.mxu0 %v3666
  %v4038 = vpop.f32.mrf.mxu0
  %v4039 = vadd.f32 %v3552, %v4038
  %v4040 = vpop.f32.mrf.mxu0
  %v4041 = vpop.f32.mrf.mxu0
  %v4042 = vadd.f32 %v3552, %v4041
  %v4043 = vpop.f32.mrf.mxu0
  %4044 = vmatprep.mubr.bf16.mxu0 0
  %4045 = vmatmul.mubr.bf16.gmra.mxu0 %v3669
  %v4046 = vpop.f32.mrf.mxu0
  %v4047 = vadd.f32 %v3552, %v4046
  %v4048 = vpop.f32.mrf.mxu0
  %v4049 = vpop.f32.mrf.mxu0
  %v4050 = vadd.f32 %v3552, %v4049
  %v4051 = vpop.f32.mrf.mxu0
  %4052 = vmatprep.mubr.bf16.mxu0 0
  %4053 = vmatmul.mubr.bf16.gmra.mxu0 %v3672
  %v4054 = vpop.f32.mrf.mxu0
  %v4055 = vadd.f32 %v3552, %v4054
  %v4056 = vpop.f32.mrf.mxu0
  %v4057 = vpop.f32.mrf.mxu0
  %v4058 = vadd.f32 %v3552, %v4057
  %v4059 = vpop.f32.mrf.mxu0
  %4060 = vmatprep.mubr.bf16.mxu0 0
  %4061 = vmatmul.mubr.bf16.gmra.mxu0 %v3675
  %v4062 = vpop.f32.mrf.mxu0
  %v4063 = vadd.f32 %v3552, %v4062
  %v4064 = vpop.f32.mrf.mxu0
  %v4065 = vpop.f32.mrf.mxu0
  %v4066 = vadd.f32 %v3552, %v4065
  %v4067 = vpop.f32.mrf.mxu0
  %4068 = vmatprep.mubr.bf16.mxu0 0
  %4069 = vmatmul.mubr.bf16.gmra.mxu0 %v3678
  %v4070 = vpop.f32.mrf.mxu0
  %v4071 = vadd.f32 %v3552, %v4070
  %v4072 = vpop.f32.mrf.mxu0
  %v4073 = vpop.f32.mrf.mxu0
  %v4074 = vadd.f32 %v3552, %v4073
  %v4075 = vpop.f32.mrf.mxu0
  %4076 = vmatprep.mubr.bf16.mxu0 0
  %4077 = vmatmul.mubr.bf16.gmra.mxu0 %v3681
  %v4078 = vpop.f32.mrf.mxu0
  %v4079 = vadd.f32 %v3552, %v4078
  %v4080 = vpop.f32.mrf.mxu0
  %v4081 = vpop.f32.mrf.mxu0
  %v4082 = vadd.f32 %v3552, %v4081
  %v4083 = vpop.f32.mrf.mxu0
  %4084 = vmatprep.mubr.bf16.mxu0 0
  %4085 = vmatmul.mubr.bf16.gmra.mxu0 %v3684
  %v4086 = vpop.f32.mrf.mxu0
  %v4087 = vadd.f32 %v3552, %v4086
  %v4088 = vpop.f32.mrf.mxu0
  %v4089 = vpop.f32.mrf.mxu0
  %v4090 = vadd.f32 %v3552, %v4089
  %v4091 = vpop.f32.mrf.mxu0
  %4092 = vmatprep.mubr.bf16.mxu0 0
  %4093 = vmatmul.mubr.bf16.gmra.mxu0 %v3687
  %v4094 = vpop.f32.mrf.mxu0
  %v4095 = vadd.f32 %v3552, %v4094
  %v4096 = vpop.f32.mrf.mxu0
  %v4097 = vpop.f32.mrf.mxu0
  %v4098 = vadd.f32 %v3552, %v4097
  %v4099 = vpop.f32.mrf.mxu0
  %4100 = vmatprep.mubr.bf16.mxu0 0
  %4101 = vmatmul.mubr.bf16.gmra.mxu0 %v3690
  %v4102 = vpop.f32.mrf.mxu0
  %v4103 = vadd.f32 %v3552, %v4102
  %v4104 = vpop.f32.mrf.mxu0
  %v4105 = vpop.f32.mrf.mxu0
  %v4106 = vadd.f32 %v3552, %v4105
  %v4107 = vpop.f32.mrf.mxu0
  %4108 = vmatprep.mubr.bf16.mxu0 0
  %4109 = vmatmul.mubr.bf16.gmra.mxu0 %v3693
  %v4110 = vpop.f32.mrf.mxu0
  %v4111 = vadd.f32 %v3552, %v4110
  %v4112 = vpop.f32.mrf.mxu0
  %v4113 = vpop.f32.mrf.mxu0
  %v4114 = vadd.f32 %v3552, %v4113
  %v4115 = vpop.f32.mrf.mxu0
  %4116 = vmatprep.mubr.bf16.mxu0 0
  %4117 = vmatmul.mubr.bf16.gmra.mxu0 %v3696
  %v4118 = vpop.f32.mrf.mxu0
  %v4119 = vadd.f32 %v3552, %v4118
  %v4120 = vpop.f32.mrf.mxu0
  %v4121 = vpop.f32.mrf.mxu0
  %v4122 = vadd.f32 %v3552, %v4121
  %v4123 = vpop.f32.mrf.mxu0
  %4124 = vmatprep.mubr.bf16.mxu0 0
  %4125 = vmatmul.mubr.bf16.gmra.mxu0 %v3699
  %v4126 = vpop.f32.mrf.mxu0
  %v4127 = vadd.f32 %v3552, %v4126
  %v4128 = vpop.f32.mrf.mxu0
  %v4129 = vpop.f32.mrf.mxu0
  %v4130 = vadd.f32 %v3552, %v4129
  %v4131 = vpop.f32.mrf.mxu0
  %4132 = vmatprep.mubr.bf16.mxu0 0
  %4133 = vmatmul.mubr.bf16.gmra.mxu0 %v3702
  %v4134 = vpop.f32.mrf.mxu0
  %v4135 = vadd.f32 %v3552, %v4134
  %v4136 = vpop.f32.mrf.mxu0
  %v4137 = vpop.f32.mrf.mxu0
  %v4138 = vadd.f32 %v3552, %v4137
  %v4139 = vpop.f32.mrf.mxu0
  %4140 = vdwg.mxu0
  %v4141 = vsel %vm230, 1, 0
  %v4142 = vsel %vm231, 1, 0
  %v4143 = vsel %vm232, 1, 0
  %v4144 = vsel %vm233, 1, 0
  %v4145 = vsel %vm234, 1, 0
  %v4146 = vsel %vm235, 1, 0
  %v4147 = vsel %vm236, 1, 0
  %v4148 = vsel %vm237, 1, 0
  %v4149 = vsel %vm238, 1, 0
  %v4150 = vsel %vm239, 1, 0
  %v4151 = vsel %vm240, 1, 0
  %v4152 = vsel %vm241, 1, 0
  %v4153 = vsel %vm242, 1, 0
  %v4154 = vsel %vm243, 1, 0
  %v4155 = vsel %vm244, 1, 0
  %v4156 = vsel %vm245, 1, 0
  %v4157 = vsel %vm246, 1, 0
  %v4158 = vsel %vm247, 1, 0
  %v4159 = vsel %vm248, 1, 0
  %v4160 = vsel %vm249, 1, 0
  %v4161 = vsel %vm250, 1, 0
  %v4162 = vsel %vm251, 1, 0
  %v4163 = vsel %vm252, 1, 0
  %v4164 = vsel %vm253, 1, 0
  %v4165 = vsel %vm254, 1, 0
  %v4166 = vsel %vm255, 1, 0
  %v4167 = vsel %vm256, 1, 0
  %v4168 = vsel %vm257, 1, 0
  %v4169 = vsel %vm258, 1, 0
  %v4170 = vsel %vm259, 1, 0
  %v4171 = vsel %vm260, 1, 0
  %v4172 = vsel %vm261, 1, 0
  %v4173 = vsel %vm262, 1, 0
  %v4174 = vsel %vm263, 1, 0
  %v4175 = vsel %vm264, 1, 0
  %v4176 = vsel %vm265, 1, 0
  %v4177 = vsel %vm266, 1, 0
  %v4178 = vsel %vm267, 1, 0
  %v4179 = vsel %vm268, 1, 0
  %v4180 = vsel %vm269, 1, 0
  %v4181 = vsel %vm270, 1, 0
  %v4182 = vsel %vm271, 1, 0
  %v4183 = vsel %vm272, 1, 0
  %v4184 = vsel %vm273, 1, 0
  %v4185 = vsel %vm274, 1, 0
  %v4186 = vsel %vm275, 1, 0
  %v4187 = vsel %vm276, 1, 0
  %v4188 = vsel %vm277, 1, 0
  %v4189 = vsel %vm278, 1, 0
  %v4190 = vsel %vm279, 1, 0
  %v4191 = vsel %vm280, 1, 0
  %v4192 = vsel %vm281, 1, 0
  %v4193 = vsel %vm282, 1, 0
  %v4194 = vsel %vm283, 1, 0
  %v4195 = vsel %vm284, 1, 0
  %v4196 = vsel %vm285, 1, 0
  %v4197 = vsel %vm286, 1, 0
  %v4198 = vsel %vm287, 1, 0
  %v4199 = vsel %vm288, 1, 0
  %v4200 = vsel %vm289, 1, 0
  %v4201 = vsel %vm290, 1, 0
  %v4202 = vsel %vm291, 1, 0
  %v4203 = vsel %vm292, 1, 0
  %v4204 = vsel %vm293, 1, 0
  %v4205 = vsel %vm294, 1, 0
  %v4206 = vsel %vm295, 1, 0
  %v4207 = vsel %vm296, 1, 0
  %v4208 = vsel %vm297, 1, 0
  %v4209 = vsel %vm298, 1, 0
  %v4210 = vsel %vm299, 1, 0
  %v4211 = vsel %vm300, 1, 0
  %v4212 = vsel %vm301, 1, 0
  %v4213 = vsel %vm302, 1, 0
  %v4214 = vsel %vm303, 1, 0
  %v4215 = vsel %vm304, 1, 0
  %v4216 = vsel %vm305, 1, 0
  %v4217 = vsel %vm306, 1, 0
  %v4218 = vsel %vm307, 1, 0
  %v4219 = vsel %vm308, 1, 0
  %v4220 = vsel %vm309, 1, 0
  %v4221 = vsel %vm310, 1, 0
  %v4222 = vsel %vm311, 1, 0
  %v4223 = vsel %vm312, 1, 0
  %v4224 = vsel %vm313, 1, 0
  %v4225 = vsel %vm314, 1, 0
  %v4226 = vsel %vm315, 1, 0
  %v4227 = vsel %vm316, 1, 0
  %v4228 = vsel %vm317, 1, 0
  %v4229 = vsel %vm318, 1, 0
  %v4230 = vsel %vm319, 1, 0
  %v4231 = vsel %vm320, 1, 0
  %v4232 = vsel %vm321, 1, 0
  %v4233 = vsel %vm322, 1, 0
  %v4234 = vsel %vm323, 1, 0
  %v4235 = vsel %vm324, 1, 0
  %v4236 = vsel %vm325, 1, 0
  %v4237 = vsel %vm326, 1, 0
  %v4238 = vsel %vm327, 1, 0
  %v4239 = vsel %vm328, 1, 0
  %v4240 = vsel %vm329, 1, 0
  %4241 = vset.pattern.permute.xlu0 0
  %4242 = vperm.xlu0 %4241, %v4141
  %v4243 = vpop.permute.xlu0 %4242
  %4244 = vset.pattern.permute.xlu0 0
  %4245 = vperm.xlu0 %4244, %v4142
  %v4246 = vpop.permute.xlu0 %4245
  %4247 = vset.pattern.permute.xlu0 0
  %4248 = vperm.xlu0 %4247, %v4143
  %v4249 = vpop.permute.xlu0 %4248
  %4250 = vset.pattern.permute.xlu0 0
  %4251 = vperm.xlu0 %4250, %v4144
  %v4252 = vpop.permute.xlu0 %4251
  %4253 = vset.pattern.permute.xlu0 0
  %4254 = vperm.xlu0 %4253, %v4145
  %v4255 = vpop.permute.xlu0 %4254
  %4256 = vset.pattern.permute.xlu0 0
  %4257 = vperm.xlu0 %4256, %v4146
  %v4258 = vpop.permute.xlu0 %4257
  %4259 = vset.pattern.permute.xlu0 0
  %4260 = vperm.xlu0 %4259, %v4147
  %v4261 = vpop.permute.xlu0 %4260
  %4262 = vset.pattern.permute.xlu0 0
  %4263 = vperm.xlu0 %4262, %v4148
  %v4264 = vpop.permute.xlu0 %4263
  %4265 = vset.pattern.permute.xlu0 0
  %4266 = vperm.xlu0 %4265, %v4149
  %v4267 = vpop.permute.xlu0 %4266
  %4268 = vset.pattern.permute.xlu0 0
  %4269 = vperm.xlu0 %4268, %v4150
  %v4270 = vpop.permute.xlu0 %4269
  %4271 = vset.pattern.permute.xlu0 0
  %4272 = vperm.xlu0 %4271, %v4151
  %v4273 = vpop.permute.xlu0 %4272
  %4274 = vset.pattern.permute.xlu0 0
  %4275 = vperm.xlu0 %4274, %v4152
  %v4276 = vpop.permute.xlu0 %4275
  %4277 = vset.pattern.permute.xlu0 0
  %4278 = vperm.xlu0 %4277, %v4153
  %v4279 = vpop.permute.xlu0 %4278
  %4280 = vset.pattern.permute.xlu0 0
  %4281 = vperm.xlu0 %4280, %v4154
  %v4282 = vpop.permute.xlu0 %4281
  %4283 = vset.pattern.permute.xlu0 0
  %4284 = vperm.xlu0 %4283, %v4155
  %v4285 = vpop.permute.xlu0 %4284
  %4286 = vset.pattern.permute.xlu0 0
  %4287 = vperm.xlu0 %4286, %v4156
  %v4288 = vpop.permute.xlu0 %4287
  %4289 = vset.pattern.permute.xlu0 0
  %4290 = vperm.xlu0 %4289, %v4157
  %v4291 = vpop.permute.xlu0 %4290
  %4292 = vset.pattern.permute.xlu0 0
  %4293 = vperm.xlu0 %4292, %v4158
  %v4294 = vpop.permute.xlu0 %4293
  %4295 = vset.pattern.permute.xlu0 0
  %4296 = vperm.xlu0 %4295, %v4159
  %v4297 = vpop.permute.xlu0 %4296
  %4298 = vset.pattern.permute.xlu0 0
  %4299 = vperm.xlu0 %4298, %v4160
  %v4300 = vpop.permute.xlu0 %4299
  %4301 = vset.pattern.permute.xlu0 0
  %4302 = vperm.xlu0 %4301, %v4161
  %v4303 = vpop.permute.xlu0 %4302
  %4304 = vset.pattern.permute.xlu0 0
  %4305 = vperm.xlu0 %4304, %v4162
  %v4306 = vpop.permute.xlu0 %4305
  %4307 = vset.pattern.permute.xlu0 0
  %4308 = vperm.xlu0 %4307, %v4163
  %v4309 = vpop.permute.xlu0 %4308
  %4310 = vset.pattern.permute.xlu0 0
  %4311 = vperm.xlu0 %4310, %v4164
  %v4312 = vpop.permute.xlu0 %4311
  %4313 = vset.pattern.permute.xlu0 0
  %4314 = vperm.xlu0 %4313, %v4165
  %v4315 = vpop.permute.xlu0 %4314
  %4316 = vset.pattern.permute.xlu0 0
  %4317 = vperm.xlu0 %4316, %v4166
  %v4318 = vpop.permute.xlu0 %4317
  %4319 = vset.pattern.permute.xlu0 0
  %4320 = vperm.xlu0 %4319, %v4167
  %v4321 = vpop.permute.xlu0 %4320
  %4322 = vset.pattern.permute.xlu0 0
  %4323 = vperm.xlu0 %4322, %v4168
  %v4324 = vpop.permute.xlu0 %4323
  %4325 = vset.pattern.permute.xlu0 0
  %4326 = vperm.xlu0 %4325, %v4169
  %v4327 = vpop.permute.xlu0 %4326
  %4328 = vset.pattern.permute.xlu0 0
  %4329 = vperm.xlu0 %4328, %v4170
  %v4330 = vpop.permute.xlu0 %4329
  %4331 = vset.pattern.permute.xlu0 0
  %4332 = vperm.xlu0 %4331, %v4171
  %v4333 = vpop.permute.xlu0 %4332
  %4334 = vset.pattern.permute.xlu0 0
  %4335 = vperm.xlu0 %4334, %v4172
  %v4336 = vpop.permute.xlu0 %4335
  %4337 = vset.pattern.permute.xlu0 0
  %4338 = vperm.xlu0 %4337, %v4173
  %v4339 = vpop.permute.xlu0 %4338
  %4340 = vset.pattern.permute.xlu0 0
  %4341 = vperm.xlu0 %4340, %v4174
  %v4342 = vpop.permute.xlu0 %4341
  %4343 = vset.pattern.permute.xlu0 0
  %4344 = vperm.xlu0 %4343, %v4175
  %v4345 = vpop.permute.xlu0 %4344
  %4346 = vset.pattern.permute.xlu0 0
  %4347 = vperm.xlu0 %4346, %v4176
  %v4348 = vpop.permute.xlu0 %4347
  %4349 = vset.pattern.permute.xlu0 0
  %4350 = vperm.xlu0 %4349, %v4177
  %v4351 = vpop.permute.xlu0 %4350
  %4352 = vset.pattern.permute.xlu0 0
  %4353 = vperm.xlu0 %4352, %v4178
  %v4354 = vpop.permute.xlu0 %4353
  %4355 = vset.pattern.permute.xlu0 0
  %4356 = vperm.xlu0 %4355, %v4179
  %v4357 = vpop.permute.xlu0 %4356
  %4358 = vset.pattern.permute.xlu0 0
  %4359 = vperm.xlu0 %4358, %v4180
  %v4360 = vpop.permute.xlu0 %4359
  %4361 = vset.pattern.permute.xlu0 0
  %4362 = vperm.xlu0 %4361, %v4181
  %v4363 = vpop.permute.xlu0 %4362
  %4364 = vset.pattern.permute.xlu0 0
  %4365 = vperm.xlu0 %4364, %v4182
  %v4366 = vpop.permute.xlu0 %4365
  %4367 = vset.pattern.permute.xlu0 0
  %4368 = vperm.xlu0 %4367, %v4183
  %v4369 = vpop.permute.xlu0 %4368
  %4370 = vset.pattern.permute.xlu0 0
  %4371 = vperm.xlu0 %4370, %v4184
  %v4372 = vpop.permute.xlu0 %4371
  %4373 = vset.pattern.permute.xlu0 0
  %4374 = vperm.xlu0 %4373, %v4185
  %v4375 = vpop.permute.xlu0 %4374
  %4376 = vset.pattern.permute.xlu0 0
  %4377 = vperm.xlu0 %4376, %v4186
  %v4378 = vpop.permute.xlu0 %4377
  %4379 = vset.pattern.permute.xlu0 0
  %4380 = vperm.xlu0 %4379, %v4187
  %v4381 = vpop.permute.xlu0 %4380
  %4382 = vset.pattern.permute.xlu0 0
  %4383 = vperm.xlu0 %4382, %v4188
  %v4384 = vpop.permute.xlu0 %4383
  %4385 = vset.pattern.permute.xlu0 0
  %4386 = vperm.xlu0 %4385, %v4189
  %v4387 = vpop.permute.xlu0 %4386
  %4388 = vset.pattern.permute.xlu0 0
  %4389 = vperm.xlu0 %4388, %v4190
  %v4390 = vpop.permute.xlu0 %4389
  %4391 = vset.pattern.permute.xlu0 0
  %4392 = vperm.xlu0 %4391, %v4191
  %v4393 = vpop.permute.xlu0 %4392
  %4394 = vset.pattern.permute.xlu0 0
  %4395 = vperm.xlu0 %4394, %v4192
  %v4396 = vpop.permute.xlu0 %4395
  %4397 = vset.pattern.permute.xlu0 0
  %4398 = vperm.xlu0 %4397, %v4193
  %v4399 = vpop.permute.xlu0 %4398
  %4400 = vset.pattern.permute.xlu0 0
  %4401 = vperm.xlu0 %4400, %v4194
  %v4402 = vpop.permute.xlu0 %4401
  %4403 = vset.pattern.permute.xlu0 0
  %4404 = vperm.xlu0 %4403, %v4195
  %v4405 = vpop.permute.xlu0 %4404
  %4406 = vset.pattern.permute.xlu0 0
  %4407 = vperm.xlu0 %4406, %v4196
  %v4408 = vpop.permute.xlu0 %4407
  %4409 = vset.pattern.permute.xlu0 0
  %4410 = vperm.xlu0 %4409, %v4197
  %v4411 = vpop.permute.xlu0 %4410
  %4412 = vset.pattern.permute.xlu0 0
  %4413 = vperm.xlu0 %4412, %v4198
  %v4414 = vpop.permute.xlu0 %4413
  %4415 = vset.pattern.permute.xlu0 0
  %4416 = vperm.xlu0 %4415, %v4199
  %v4417 = vpop.permute.xlu0 %4416
  %4418 = vset.pattern.permute.xlu0 0
  %4419 = vperm.xlu0 %4418, %v4200
  %v4420 = vpop.permute.xlu0 %4419
  %4421 = vset.pattern.permute.xlu0 0
  %4422 = vperm.xlu0 %4421, %v4201
  %v4423 = vpop.permute.xlu0 %4422
  %4424 = vset.pattern.permute.xlu0 0
  %4425 = vperm.xlu0 %4424, %v4202
  %v4426 = vpop.permute.xlu0 %4425
  %4427 = vset.pattern.permute.xlu0 0
  %4428 = vperm.xlu0 %4427, %v4203
  %v4429 = vpop.permute.xlu0 %4428
  %4430 = vset.pattern.permute.xlu0 0
  %4431 = vperm.xlu0 %4430, %v4204
  %v4432 = vpop.permute.xlu0 %4431
  %4433 = vset.pattern.permute.xlu0 0
  %4434 = vperm.xlu0 %4433, %v4205
  %v4435 = vpop.permute.xlu0 %4434
  %4436 = vset.pattern.permute.xlu0 0
  %4437 = vperm.xlu0 %4436, %v4206
  %v4438 = vpop.permute.xlu0 %4437
  %4439 = vset.pattern.permute.xlu0 0
  %4440 = vperm.xlu0 %4439, %v4207
  %v4441 = vpop.permute.xlu0 %4440
  %4442 = vset.pattern.permute.xlu0 0
  %4443 = vperm.xlu0 %4442, %v4208
  %v4444 = vpop.permute.xlu0 %4443
  %4445 = vset.pattern.permute.xlu0 0
  %4446 = vperm.xlu0 %4445, %v4209
  %v4447 = vpop.permute.xlu0 %4446
  %4448 = vset.pattern.permute.xlu0 0
  %4449 = vperm.xlu0 %4448, %v4210
  %v4450 = vpop.permute.xlu0 %4449
  %4451 = vset.pattern.permute.xlu0 0
  %4452 = vperm.xlu0 %4451, %v4211
  %v4453 = vpop.permute.xlu0 %4452
  %4454 = vset.pattern.permute.xlu0 0
  %4455 = vperm.xlu0 %4454, %v4212
  %v4456 = vpop.permute.xlu0 %4455
  %4457 = vset.pattern.permute.xlu0 0
  %4458 = vperm.xlu0 %4457, %v4213
  %v4459 = vpop.permute.xlu0 %4458
  %4460 = vset.pattern.permute.xlu0 0
  %4461 = vperm.xlu0 %4460, %v4214
  %v4462 = vpop.permute.xlu0 %4461
  %4463 = vset.pattern.permute.xlu0 0
  %4464 = vperm.xlu0 %4463, %v4215
  %v4465 = vpop.permute.xlu0 %4464
  %4466 = vset.pattern.permute.xlu0 0
  %4467 = vperm.xlu0 %4466, %v4216
  %v4468 = vpop.permute.xlu0 %4467
  %4469 = vset.pattern.permute.xlu0 0
  %4470 = vperm.xlu0 %4469, %v4217
  %v4471 = vpop.permute.xlu0 %4470
  %4472 = vset.pattern.permute.xlu0 0
  %4473 = vperm.xlu0 %4472, %v4218
  %v4474 = vpop.permute.xlu0 %4473
  %4475 = vset.pattern.permute.xlu0 0
  %4476 = vperm.xlu0 %4475, %v4219
  %v4477 = vpop.permute.xlu0 %4476
  %4478 = vset.pattern.permute.xlu0 0
  %4479 = vperm.xlu0 %4478, %v4220
  %v4480 = vpop.permute.xlu0 %4479
  %4481 = vset.pattern.permute.xlu0 0
  %4482 = vperm.xlu0 %4481, %v4221
  %v4483 = vpop.permute.xlu0 %4482
  %4484 = vset.pattern.permute.xlu0 0
  %4485 = vperm.xlu0 %4484, %v4222
  %v4486 = vpop.permute.xlu0 %4485
  %4487 = vset.pattern.permute.xlu0 0
  %4488 = vperm.xlu0 %4487, %v4223
  %v4489 = vpop.permute.xlu0 %4488
  %4490 = vset.pattern.permute.xlu0 0
  %4491 = vperm.xlu0 %4490, %v4224
  %v4492 = vpop.permute.xlu0 %4491
  %4493 = vset.pattern.permute.xlu0 0
  %4494 = vperm.xlu0 %4493, %v4225
  %v4495 = vpop.permute.xlu0 %4494
  %4496 = vset.pattern.permute.xlu0 0
  %4497 = vperm.xlu0 %4496, %v4226
  %v4498 = vpop.permute.xlu0 %4497
  %4499 = vset.pattern.permute.xlu0 0
  %4500 = vperm.xlu0 %4499, %v4227
  %v4501 = vpop.permute.xlu0 %4500
  %4502 = vset.pattern.permute.xlu0 0
  %4503 = vperm.xlu0 %4502, %v4228
  %v4504 = vpop.permute.xlu0 %4503
  %4505 = vset.pattern.permute.xlu0 0
  %4506 = vperm.xlu0 %4505, %v4229
  %v4507 = vpop.permute.xlu0 %4506
  %4508 = vset.pattern.permute.xlu0 0
  %4509 = vperm.xlu0 %4508, %v4230
  %v4510 = vpop.permute.xlu0 %4509
  %4511 = vset.pattern.permute.xlu0 0
  %4512 = vperm.xlu0 %4511, %v4231
  %v4513 = vpop.permute.xlu0 %4512
  %4514 = vset.pattern.permute.xlu0 0
  %4515 = vperm.xlu0 %4514, %v4232
  %v4516 = vpop.permute.xlu0 %4515
  %4517 = vset.pattern.permute.xlu0 0
  %4518 = vperm.xlu0 %4517, %v4233
  %v4519 = vpop.permute.xlu0 %4518
  %4520 = vset.pattern.permute.xlu0 0
  %4521 = vperm.xlu0 %4520, %v4234
  %v4522 = vpop.permute.xlu0 %4521
  %4523 = vset.pattern.permute.xlu0 0
  %4524 = vperm.xlu0 %4523, %v4235
  %v4525 = vpop.permute.xlu0 %4524
  %4526 = vset.pattern.permute.xlu0 0
  %4527 = vperm.xlu0 %4526, %v4236
  %v4528 = vpop.permute.xlu0 %4527
  %4529 = vset.pattern.permute.xlu0 0
  %4530 = vperm.xlu0 %4529, %v4237
  %v4531 = vpop.permute.xlu0 %4530
  %4532 = vset.pattern.permute.xlu0 0
  %4533 = vperm.xlu0 %4532, %v4238
  %v4534 = vpop.permute.xlu0 %4533
  %4535 = vset.pattern.permute.xlu0 0
  %4536 = vperm.xlu0 %4535, %v4239
  %v4537 = vpop.permute.xlu0 %4536
  %4538 = vset.pattern.permute.xlu0 0
  %4539 = vperm.xlu0 %4538, %v4240
  %v4540 = vpop.permute.xlu0 %4539
  %vm4541 = vcmp.eq.s32.totalorder %v4243, 1
  %vm4542 = vcmp.eq.s32.totalorder %v4246, 1
  %vm4543 = vcmp.eq.s32.totalorder %v4249, 1
  %vm4544 = vcmp.eq.s32.totalorder %v4252, 1
  %vm4545 = vcmp.eq.s32.totalorder %v4255, 1
  %vm4546 = vcmp.eq.s32.totalorder %v4258, 1
  %vm4547 = vcmp.eq.s32.totalorder %v4261, 1
  %vm4548 = vcmp.eq.s32.totalorder %v4264, 1
  %vm4549 = vcmp.eq.s32.totalorder %v4267, 1
  %vm4550 = vcmp.eq.s32.totalorder %v4270, 1
  %vm4551 = vcmp.eq.s32.totalorder %v4273, 1
  %vm4552 = vcmp.eq.s32.totalorder %v4276, 1
  %vm4553 = vcmp.eq.s32.totalorder %v4279, 1
  %vm4554 = vcmp.eq.s32.totalorder %v4282, 1
  %vm4555 = vcmp.eq.s32.totalorder %v4285, 1
  %vm4556 = vcmp.eq.s32.totalorder %v4288, 1
  %vm4557 = vcmp.eq.s32.totalorder %v4291, 1
  %vm4558 = vcmp.eq.s32.totalorder %v4294, 1
  %vm4559 = vcmp.eq.s32.totalorder %v4297, 1
  %vm4560 = vcmp.eq.s32.totalorder %v4300, 1
  %vm4561 = vcmp.eq.s32.totalorder %v4303, 1
  %vm4562 = vcmp.eq.s32.totalorder %v4306, 1
  %vm4563 = vcmp.eq.s32.totalorder %v4309, 1
  %vm4564 = vcmp.eq.s32.totalorder %v4312, 1
  %vm4565 = vcmp.eq.s32.totalorder %v4315, 1
  %vm4566 = vcmp.eq.s32.totalorder %v4318, 1
  %vm4567 = vcmp.eq.s32.totalorder %v4321, 1
  %vm4568 = vcmp.eq.s32.totalorder %v4324, 1
  %vm4569 = vcmp.eq.s32.totalorder %v4327, 1
  %vm4570 = vcmp.eq.s32.totalorder %v4330, 1
  %vm4571 = vcmp.eq.s32.totalorder %v4333, 1
  %vm4572 = vcmp.eq.s32.totalorder %v4336, 1
  %vm4573 = vcmp.eq.s32.totalorder %v4339, 1
  %vm4574 = vcmp.eq.s32.totalorder %v4342, 1
  %vm4575 = vcmp.eq.s32.totalorder %v4345, 1
  %vm4576 = vcmp.eq.s32.totalorder %v4348, 1
  %vm4577 = vcmp.eq.s32.totalorder %v4351, 1
  %vm4578 = vcmp.eq.s32.totalorder %v4354, 1
  %vm4579 = vcmp.eq.s32.totalorder %v4357, 1
  %vm4580 = vcmp.eq.s32.totalorder %v4360, 1
  %vm4581 = vcmp.eq.s32.totalorder %v4363, 1
  %vm4582 = vcmp.eq.s32.totalorder %v4366, 1
  %vm4583 = vcmp.eq.s32.totalorder %v4369, 1
  %vm4584 = vcmp.eq.s32.totalorder %v4372, 1
  %vm4585 = vcmp.eq.s32.totalorder %v4375, 1
  %vm4586 = vcmp.eq.s32.totalorder %v4378, 1
  %vm4587 = vcmp.eq.s32.totalorder %v4381, 1
  %vm4588 = vcmp.eq.s32.totalorder %v4384, 1
  %vm4589 = vcmp.eq.s32.totalorder %v4387, 1
  %vm4590 = vcmp.eq.s32.totalorder %v4390, 1
  %vm4591 = vcmp.eq.s32.totalorder %v4393, 1
  %vm4592 = vcmp.eq.s32.totalorder %v4396, 1
  %vm4593 = vcmp.eq.s32.totalorder %v4399, 1
  %vm4594 = vcmp.eq.s32.totalorder %v4402, 1
  %vm4595 = vcmp.eq.s32.totalorder %v4405, 1
  %vm4596 = vcmp.eq.s32.totalorder %v4408, 1
  %vm4597 = vcmp.eq.s32.totalorder %v4411, 1
  %vm4598 = vcmp.eq.s32.totalorder %v4414, 1
  %vm4599 = vcmp.eq.s32.totalorder %v4417, 1
  %vm4600 = vcmp.eq.s32.totalorder %v4420, 1
  %vm4601 = vcmp.eq.s32.totalorder %v4423, 1
  %vm4602 = vcmp.eq.s32.totalorder %v4426, 1
  %vm4603 = vcmp.eq.s32.totalorder %v4429, 1
  %vm4604 = vcmp.eq.s32.totalorder %v4432, 1
  %vm4605 = vcmp.eq.s32.totalorder %v4435, 1
  %vm4606 = vcmp.eq.s32.totalorder %v4438, 1
  %vm4607 = vcmp.eq.s32.totalorder %v4441, 1
  %vm4608 = vcmp.eq.s32.totalorder %v4444, 1
  %vm4609 = vcmp.eq.s32.totalorder %v4447, 1
  %vm4610 = vcmp.eq.s32.totalorder %v4450, 1
  %vm4611 = vcmp.eq.s32.totalorder %v4453, 1
  %vm4612 = vcmp.eq.s32.totalorder %v4456, 1
  %vm4613 = vcmp.eq.s32.totalorder %v4459, 1
  %vm4614 = vcmp.eq.s32.totalorder %v4462, 1
  %vm4615 = vcmp.eq.s32.totalorder %v4465, 1
  %vm4616 = vcmp.eq.s32.totalorder %v4468, 1
  %vm4617 = vcmp.eq.s32.totalorder %v4471, 1
  %vm4618 = vcmp.eq.s32.totalorder %v4474, 1
  %vm4619 = vcmp.eq.s32.totalorder %v4477, 1
  %vm4620 = vcmp.eq.s32.totalorder %v4480, 1
  %vm4621 = vcmp.eq.s32.totalorder %v4483, 1
  %vm4622 = vcmp.eq.s32.totalorder %v4486, 1
  %vm4623 = vcmp.eq.s32.totalorder %v4489, 1
  %vm4624 = vcmp.eq.s32.totalorder %v4492, 1
  %vm4625 = vcmp.eq.s32.totalorder %v4495, 1
  %vm4626 = vcmp.eq.s32.totalorder %v4498, 1
  %vm4627 = vcmp.eq.s32.totalorder %v4501, 1
  %vm4628 = vcmp.eq.s32.totalorder %v4504, 1
  %vm4629 = vcmp.eq.s32.totalorder %v4507, 1
  %vm4630 = vcmp.eq.s32.totalorder %v4510, 1
  %vm4631 = vcmp.eq.s32.totalorder %v4513, 1
  %vm4632 = vcmp.eq.s32.totalorder %v4516, 1
  %vm4633 = vcmp.eq.s32.totalorder %v4519, 1
  %vm4634 = vcmp.eq.s32.totalorder %v4522, 1
  %vm4635 = vcmp.eq.s32.totalorder %v4525, 1
  %vm4636 = vcmp.eq.s32.totalorder %v4528, 1
  %vm4637 = vcmp.eq.s32.totalorder %v4531, 1
  %vm4638 = vcmp.eq.s32.totalorder %v4534, 1
  %vm4639 = vcmp.eq.s32.totalorder %v4537, 1
  %vm4640 = vcmp.eq.s32.totalorder %v4540, 1
  %v4641 = vsel %vm4541, %v3743, 0.0
  %v4642 = vsel %vm4542, %v3746, 0.0
  %v4643 = vsel %vm4543, %v3751, 0.0
  %v4644 = vsel %vm4544, %v3754, 0.0
  %v4645 = vsel %vm4545, %v3759, 0.0
  %v4646 = vsel %vm4546, %v3762, 0.0
  %v4647 = vsel %vm4547, %v3767, 0.0
  %v4648 = vsel %vm4548, %v3770, 0.0
  %v4649 = vsel %vm4549, %v3775, 0.0
  %v4650 = vsel %vm4550, %v3778, 0.0
  %v4651 = vsel %vm4551, %v3783, 0.0
  %v4652 = vsel %vm4552, %v3786, 0.0
  %v4653 = vsel %vm4553, %v3791, 0.0
  %v4654 = vsel %vm4554, %v3794, 0.0
  %v4655 = vsel %vm4555, %v3799, 0.0
  %v4656 = vsel %vm4556, %v3802, 0.0
  %v4657 = vsel %vm4557, %v3807, 0.0
  %v4658 = vsel %vm4558, %v3810, 0.0
  %v4659 = vsel %vm4559, %v3815, 0.0
  %v4660 = vsel %vm4560, %v3818, 0.0
  %v4661 = vsel %vm4561, %v3823, 0.0
  %v4662 = vsel %vm4562, %v3826, 0.0
  %v4663 = vsel %vm4563, %v3831, 0.0
  %v4664 = vsel %vm4564, %v3834, 0.0
  %v4665 = vsel %vm4565, %v3839, 0.0
  %v4666 = vsel %vm4566, %v3842, 0.0
  %v4667 = vsel %vm4567, %v3847, 0.0
  %v4668 = vsel %vm4568, %v3850, 0.0
  %v4669 = vsel %vm4569, %v3855, 0.0
  %v4670 = vsel %vm4570, %v3858, 0.0
  %v4671 = vsel %vm4571, %v3863, 0.0
  %v4672 = vsel %vm4572, %v3866, 0.0
  %v4673 = vsel %vm4573, %v3871, 0.0
  %v4674 = vsel %vm4574, %v3874, 0.0
  %v4675 = vsel %vm4575, %v3879, 0.0
  %v4676 = vsel %vm4576, %v3882, 0.0
  %v4677 = vsel %vm4577, %v3887, 0.0
  %v4678 = vsel %vm4578, %v3890, 0.0
  %v4679 = vsel %vm4579, %v3895, 0.0
  %v4680 = vsel %vm4580, %v3898, 0.0
  %v4681 = vsel %vm4581, %v3903, 0.0
  %v4682 = vsel %vm4582, %v3906, 0.0
  %v4683 = vsel %vm4583, %v3911, 0.0
  %v4684 = vsel %vm4584, %v3914, 0.0
  %v4685 = vsel %vm4585, %v3919, 0.0
  %v4686 = vsel %vm4586, %v3922, 0.0
  %v4687 = vsel %vm4587, %v3927, 0.0
  %v4688 = vsel %vm4588, %v3930, 0.0
  %v4689 = vsel %vm4589, %v3935, 0.0
  %v4690 = vsel %vm4590, %v3938, 0.0
  %v4691 = vsel %vm4591, %v3943, 0.0
  %v4692 = vsel %vm4592, %v3946, 0.0
  %v4693 = vsel %vm4593, %v3951, 0.0
  %v4694 = vsel %vm4594, %v3954, 0.0
  %v4695 = vsel %vm4595, %v3959, 0.0
  %v4696 = vsel %vm4596, %v3962, 0.0
  %v4697 = vsel %vm4597, %v3967, 0.0
  %v4698 = vsel %vm4598, %v3970, 0.0
  %v4699 = vsel %vm4599, %v3975, 0.0
  %v4700 = vsel %vm4600, %v3978, 0.0
  %v4701 = vsel %vm4601, %v3983, 0.0
  %v4702 = vsel %vm4602, %v3986, 0.0
  %v4703 = vsel %vm4603, %v3991, 0.0
  %v4704 = vsel %vm4604, %v3994, 0.0
  %v4705 = vsel %vm4605, %v3999, 0.0
  %v4706 = vsel %vm4606, %v4002, 0.0
  %v4707 = vsel %vm4607, %v4007, 0.0
  %v4708 = vsel %vm4608, %v4010, 0.0
  %v4709 = vsel %vm4609, %v4015, 0.0
  %v4710 = vsel %vm4610, %v4018, 0.0
  %v4711 = vsel %vm4611, %v4023, 0.0
  %v4712 = vsel %vm4612, %v4026, 0.0
  %v4713 = vsel %vm4613, %v4031, 0.0
  %v4714 = vsel %vm4614, %v4034, 0.0
  %v4715 = vsel %vm4615, %v4039, 0.0
  %v4716 = vsel %vm4616, %v4042, 0.0
  %v4717 = vsel %vm4617, %v4047, 0.0
  %v4718 = vsel %vm4618, %v4050, 0.0
  %v4719 = vsel %vm4619, %v4055, 0.0
  %v4720 = vsel %vm4620, %v4058, 0.0
  %v4721 = vsel %vm4621, %v4063, 0.0
  %v4722 = vsel %vm4622, %v4066, 0.0
  %v4723 = vsel %vm4623, %v4071, 0.0
  %v4724 = vsel %vm4624, %v4074, 0.0
  %v4725 = vsel %vm4625, %v4079, 0.0
  %v4726 = vsel %vm4626, %v4082, 0.0
  %v4727 = vsel %vm4627, %v4087, 0.0
  %v4728 = vsel %vm4628, %v4090, 0.0
  %v4729 = vsel %vm4629, %v4095, 0.0
  %v4730 = vsel %vm4630, %v4098, 0.0
  %v4731 = vsel %vm4631, %v4103, 0.0
  %v4732 = vsel %vm4632, %v4106, 0.0
  %v4733 = vsel %vm4633, %v4111, 0.0
  %v4734 = vsel %vm4634, %v4114, 0.0
  %v4735 = vsel %vm4635, %v4119, 0.0
  %v4736 = vsel %vm4636, %v4122, 0.0
  %v4737 = vsel %vm4637, %v4127, 0.0
  %v4738 = vsel %vm4638, %v4130, 0.0
  %v4739 = vsel %vm4639, %v4135, 0.0
  %v4740 = vsel %vm4640, %v4138, 0.0
  %v4741 = vadd.f32 %v4641, %v4642
  %v4742 = vadd.f32 %v4741, %v4643
  %v4743 = vadd.f32 %v4742, %v4644
  %v4744 = vadd.f32 %v4743, %v4645
  %v4745 = vadd.f32 %v4744, %v4646
  %v4746 = vadd.f32 %v4745, %v4647
  %v4747 = vadd.f32 %v4746, %v4648
  %v4748 = vadd.f32 %v4747, %v4649
  %v4749 = vadd.f32 %v4748, %v4650
  %v4750 = vadd.f32 %v4749, %v4651
  %v4751 = vadd.f32 %v4750, %v4652
  %v4752 = vadd.f32 %v4751, %v4653
  %v4753 = vadd.f32 %v4752, %v4654
  %v4754 = vadd.f32 %v4753, %v4655
  %v4755 = vadd.f32 %v4754, %v4656
  %v4756 = vadd.f32 %v4755, %v4657
  %v4757 = vadd.f32 %v4756, %v4658
  %v4758 = vadd.f32 %v4757, %v4659
  %v4759 = vadd.f32 %v4758, %v4660
  %v4760 = vadd.f32 %v4759, %v4661
  %v4761 = vadd.f32 %v4760, %v4662
  %v4762 = vadd.f32 %v4761, %v4663
  %v4763 = vadd.f32 %v4762, %v4664
  %v4764 = vadd.f32 %v4763, %v4665
  %v4765 = vadd.f32 %v4764, %v4666
  %v4766 = vadd.f32 %v4765, %v4667
  %v4767 = vadd.f32 %v4766, %v4668
  %v4768 = vadd.f32 %v4767, %v4669
  %v4769 = vadd.f32 %v4768, %v4670
  %v4770 = vadd.f32 %v4769, %v4671
  %v4771 = vadd.f32 %v4770, %v4672
  %v4772 = vadd.f32 %v4771, %v4673
  %v4773 = vadd.f32 %v4772, %v4674
  %v4774 = vadd.f32 %v4773, %v4675
  %v4775 = vadd.f32 %v4774, %v4676
  %v4776 = vadd.f32 %v4775, %v4677
  %v4777 = vadd.f32 %v4776, %v4678
  %v4778 = vadd.f32 %v4777, %v4679
  %v4779 = vadd.f32 %v4778, %v4680
  %v4780 = vadd.f32 %v4779, %v4681
  %v4781 = vadd.f32 %v4780, %v4682
  %v4782 = vadd.f32 %v4781, %v4683
  %v4783 = vadd.f32 %v4782, %v4684
  %v4784 = vadd.f32 %v4783, %v4685
  %v4785 = vadd.f32 %v4784, %v4686
  %v4786 = vadd.f32 %v4785, %v4687
  %v4787 = vadd.f32 %v4786, %v4688
  %v4788 = vadd.f32 %v4787, %v4689
  %v4789 = vadd.f32 %v4788, %v4690
  %v4790 = vadd.f32 %v4789, %v4691
  %v4791 = vadd.f32 %v4790, %v4692
  %v4792 = vadd.f32 %v4791, %v4693
  %v4793 = vadd.f32 %v4792, %v4694
  %v4794 = vadd.f32 %v4793, %v4695
  %v4795 = vadd.f32 %v4794, %v4696
  %v4796 = vadd.f32 %v4795, %v4697
  %v4797 = vadd.f32 %v4796, %v4698
  %v4798 = vadd.f32 %v4797, %v4699
  %v4799 = vadd.f32 %v4798, %v4700
  %v4800 = vadd.f32 %v4799, %v4701
  %v4801 = vadd.f32 %v4800, %v4702
  %v4802 = vadd.f32 %v4801, %v4703
  %v4803 = vadd.f32 %v4802, %v4704
  %v4804 = vadd.f32 %v4803, %v4705
  %v4805 = vadd.f32 %v4804, %v4706
  %v4806 = vadd.f32 %v4805, %v4707
  %v4807 = vadd.f32 %v4806, %v4708
  %v4808 = vadd.f32 %v4807, %v4709
  %v4809 = vadd.f32 %v4808, %v4710
  %v4810 = vadd.f32 %v4809, %v4711
  %v4811 = vadd.f32 %v4810, %v4712
  %v4812 = vadd.f32 %v4811, %v4713
  %v4813 = vadd.f32 %v4812, %v4714
  %v4814 = vadd.f32 %v4813, %v4715
  %v4815 = vadd.f32 %v4814, %v4716
  %v4816 = vadd.f32 %v4815, %v4717
  %v4817 = vadd.f32 %v4816, %v4718
  %v4818 = vadd.f32 %v4817, %v4719
  %v4819 = vadd.f32 %v4818, %v4720
  %v4820 = vadd.f32 %v4819, %v4721
  %v4821 = vadd.f32 %v4820, %v4722
  %v4822 = vadd.f32 %v4821, %v4723
  %v4823 = vadd.f32 %v4822, %v4724
  %v4824 = vadd.f32 %v4823, %v4725
  %v4825 = vadd.f32 %v4824, %v4726
  %v4826 = vadd.f32 %v4825, %v4727
  %v4827 = vadd.f32 %v4826, %v4728
  %v4828 = vadd.f32 %v4827, %v4729
  %v4829 = vadd.f32 %v4828, %v4730
  %v4830 = vadd.f32 %v4829, %v4731
  %v4831 = vadd.f32 %v4830, %v4732
  %v4832 = vadd.f32 %v4831, %v4733
  %v4833 = vadd.f32 %v4832, %v4734
  %v4834 = vadd.f32 %v4833, %v4735
  %v4835 = vadd.f32 %v4834, %v4736
  %v4836 = vadd.f32 %v4835, %v4737
  %v4837 = vadd.f32 %v4836, %v4738
  %v4838 = vadd.f32 %v4837, %v4739
  %v4839 = vadd.f32 %v4838, %v4740
  %v4840 = vrot.slane %v4839, 4
  %v4841 = vadd.f32 %v4839, %v4840
  %v4842 = vrot.slane %v4841, 2
  %v4843 = vadd.f32 %v4841, %v4842
  %v4844 = vrot.slane %v4843, 1
  %v4845 = vadd.f32 %v4843, %v4844
  %v4846 = vmul.f32 %v4845, 0.0015432099
  %v4847 = vsub.f32 %v4641, %v4846
  %v4848 = vsub.f32 %v4642, %v4846
  %v4849 = vsub.f32 %v4643, %v4846
  %v4850 = vsub.f32 %v4644, %v4846
  %v4851 = vsub.f32 %v4645, %v4846
  %v4852 = vsub.f32 %v4646, %v4846
  %v4853 = vsub.f32 %v4647, %v4846
  %v4854 = vsub.f32 %v4648, %v4846
  %v4855 = vsub.f32 %v4649, %v4846
  %v4856 = vsub.f32 %v4650, %v4846
  %v4857 = vsub.f32 %v4651, %v4846
  %v4858 = vsub.f32 %v4652, %v4846
  %v4859 = vsub.f32 %v4653, %v4846
  %v4860 = vsub.f32 %v4654, %v4846
  %v4861 = vsub.f32 %v4655, %v4846
  %v4862 = vsub.f32 %v4656, %v4846
  %v4863 = vsub.f32 %v4657, %v4846
  %v4864 = vsub.f32 %v4658, %v4846
  %v4865 = vsub.f32 %v4659, %v4846
  %v4866 = vsub.f32 %v4660, %v4846
  %v4867 = vsub.f32 %v4661, %v4846
  %v4868 = vsub.f32 %v4662, %v4846
  %v4869 = vsub.f32 %v4663, %v4846
  %v4870 = vsub.f32 %v4664, %v4846
  %v4871 = vsub.f32 %v4665, %v4846
  %v4872 = vsub.f32 %v4666, %v4846
  %v4873 = vsub.f32 %v4667, %v4846
  %v4874 = vsub.f32 %v4668, %v4846
  %v4875 = vsub.f32 %v4669, %v4846
  %v4876 = vsub.f32 %v4670, %v4846
  %v4877 = vsub.f32 %v4671, %v4846
  %v4878 = vsub.f32 %v4672, %v4846
  %v4879 = vsub.f32 %v4673, %v4846
  %v4880 = vsub.f32 %v4674, %v4846
  %v4881 = vsub.f32 %v4675, %v4846
  %v4882 = vsub.f32 %v4676, %v4846
  %v4883 = vsub.f32 %v4677, %v4846
  %v4884 = vsub.f32 %v4678, %v4846
  %v4885 = vsub.f32 %v4679, %v4846
  %v4886 = vsub.f32 %v4680, %v4846
  %v4887 = vsub.f32 %v4681, %v4846
  %v4888 = vsub.f32 %v4682, %v4846
  %v4889 = vsub.f32 %v4683, %v4846
  %v4890 = vsub.f32 %v4684, %v4846
  %v4891 = vsub.f32 %v4685, %v4846
  %v4892 = vsub.f32 %v4686, %v4846
  %v4893 = vsub.f32 %v4687, %v4846
  %v4894 = vsub.f32 %v4688, %v4846
  %v4895 = vsub.f32 %v4689, %v4846
  %v4896 = vsub.f32 %v4690, %v4846
  %v4897 = vsub.f32 %v4691, %v4846
  %v4898 = vsub.f32 %v4692, %v4846
  %v4899 = vsub.f32 %v4693, %v4846
  %v4900 = vsub.f32 %v4694, %v4846
  %v4901 = vsub.f32 %v4695, %v4846
  %v4902 = vsub.f32 %v4696, %v4846
  %v4903 = vsub.f32 %v4697, %v4846
  %v4904 = vsub.f32 %v4698, %v4846
  %v4905 = vsub.f32 %v4699, %v4846
  %v4906 = vsub.f32 %v4700, %v4846
  %v4907 = vsub.f32 %v4701, %v4846
  %v4908 = vsub.f32 %v4702, %v4846
  %v4909 = vsub.f32 %v4703, %v4846
  %v4910 = vsub.f32 %v4704, %v4846
  %v4911 = vsub.f32 %v4705, %v4846
  %v4912 = vsub.f32 %v4706, %v4846
  %v4913 = vsub.f32 %v4707, %v4846
  %v4914 = vsub.f32 %v4708, %v4846
  %v4915 = vsub.f32 %v4709, %v4846
  %v4916 = vsub.f32 %v4710, %v4846
  %v4917 = vsub.f32 %v4711, %v4846
  %v4918 = vsub.f32 %v4712, %v4846
  %v4919 = vsub.f32 %v4713, %v4846
  %v4920 = vsub.f32 %v4714, %v4846
  %v4921 = vsub.f32 %v4715, %v4846
  %v4922 = vsub.f32 %v4716, %v4846
  %v4923 = vsub.f32 %v4717, %v4846
  %v4924 = vsub.f32 %v4718, %v4846
  %v4925 = vsub.f32 %v4719, %v4846
  %v4926 = vsub.f32 %v4720, %v4846
  %v4927 = vsub.f32 %v4721, %v4846
  %v4928 = vsub.f32 %v4722, %v4846
  %v4929 = vsub.f32 %v4723, %v4846
  %v4930 = vsub.f32 %v4724, %v4846
  %v4931 = vsub.f32 %v4725, %v4846
  %v4932 = vsub.f32 %v4726, %v4846
  %v4933 = vsub.f32 %v4727, %v4846
  %v4934 = vsub.f32 %v4728, %v4846
  %v4935 = vsub.f32 %v4729, %v4846
  %v4936 = vsub.f32 %v4730, %v4846
  %v4937 = vsub.f32 %v4731, %v4846
  %v4938 = vsub.f32 %v4732, %v4846
  %v4939 = vsub.f32 %v4733, %v4846
  %v4940 = vsub.f32 %v4734, %v4846
  %v4941 = vsub.f32 %v4735, %v4846
  %v4942 = vsub.f32 %v4736, %v4846
  %v4943 = vsub.f32 %v4737, %v4846
  %v4944 = vsub.f32 %v4738, %v4846
  %v4945 = vsub.f32 %v4739, %v4846
  %v4946 = vsub.f32 %v4740, %v4846
  %v4947 = vsel %vm4541, %v4847, 0.0
  %v4948 = vsel %vm4542, %v4848, 0.0
  %v4949 = vsel %vm4543, %v4849, 0.0
  %v4950 = vsel %vm4544, %v4850, 0.0
  %v4951 = vsel %vm4545, %v4851, 0.0
  %v4952 = vsel %vm4546, %v4852, 0.0
  %v4953 = vsel %vm4547, %v4853, 0.0
  %v4954 = vsel %vm4548, %v4854, 0.0
  %v4955 = vsel %vm4549, %v4855, 0.0
  %v4956 = vsel %vm4550, %v4856, 0.0
  %v4957 = vsel %vm4551, %v4857, 0.0
  %v4958 = vsel %vm4552, %v4858, 0.0
  %v4959 = vsel %vm4553, %v4859, 0.0
  %v4960 = vsel %vm4554, %v4860, 0.0
  %v4961 = vsel %vm4555, %v4861, 0.0
  %v4962 = vsel %vm4556, %v4862, 0.0
  %v4963 = vsel %vm4557, %v4863, 0.0
  %v4964 = vsel %vm4558, %v4864, 0.0
  %v4965 = vsel %vm4559, %v4865, 0.0
  %v4966 = vsel %vm4560, %v4866, 0.0
  %v4967 = vsel %vm4561, %v4867, 0.0
  %v4968 = vsel %vm4562, %v4868, 0.0
  %v4969 = vsel %vm4563, %v4869, 0.0
  %v4970 = vsel %vm4564, %v4870, 0.0
  %v4971 = vsel %vm4565, %v4871, 0.0
  %v4972 = vsel %vm4566, %v4872, 0.0
  %v4973 = vsel %vm4567, %v4873, 0.0
  %v4974 = vsel %vm4568, %v4874, 0.0
  %v4975 = vsel %vm4569, %v4875, 0.0
  %v4976 = vsel %vm4570, %v4876, 0.0
  %v4977 = vsel %vm4571, %v4877, 0.0
  %v4978 = vsel %vm4572, %v4878, 0.0
  %v4979 = vsel %vm4573, %v4879, 0.0
  %v4980 = vsel %vm4574, %v4880, 0.0
  %v4981 = vsel %vm4575, %v4881, 0.0
  %v4982 = vsel %vm4576, %v4882, 0.0
  %v4983 = vsel %vm4577, %v4883, 0.0
  %v4984 = vsel %vm4578, %v4884, 0.0
  %v4985 = vsel %vm4579, %v4885, 0.0
  %v4986 = vsel %vm4580, %v4886, 0.0
  %v4987 = vsel %vm4581, %v4887, 0.0
  %v4988 = vsel %vm4582, %v4888, 0.0
  %v4989 = vsel %vm4583, %v4889, 0.0
  %v4990 = vsel %vm4584, %v4890, 0.0
  %v4991 = vsel %vm4585, %v4891, 0.0
  %v4992 = vsel %vm4586, %v4892, 0.0
  %v4993 = vsel %vm4587, %v4893, 0.0
  %v4994 = vsel %vm4588, %v4894, 0.0
  %v4995 = vsel %vm4589, %v4895, 0.0
  %v4996 = vsel %vm4590, %v4896, 0.0
  %v4997 = vsel %vm4591, %v4897, 0.0
  %v4998 = vsel %vm4592, %v4898, 0.0
  %v4999 = vsel %vm4593, %v4899, 0.0
  %v5000 = vsel %vm4594, %v4900, 0.0
  %v5001 = vsel %vm4595, %v4901, 0.0
  %v5002 = vsel %vm4596, %v4902, 0.0
  %v5003 = vsel %vm4597, %v4903, 0.0
  %v5004 = vsel %vm4598, %v4904, 0.0
  %v5005 = vsel %vm4599, %v4905, 0.0
  %v5006 = vsel %vm4600, %v4906, 0.0
  %v5007 = vsel %vm4601, %v4907, 0.0
  %v5008 = vsel %vm4602, %v4908, 0.0
  %v5009 = vsel %vm4603, %v4909, 0.0
  %v5010 = vsel %vm4604, %v4910, 0.0
  %v5011 = vsel %vm4605, %v4911, 0.0
  %v5012 = vsel %vm4606, %v4912, 0.0
  %v5013 = vsel %vm4607, %v4913, 0.0
  %v5014 = vsel %vm4608, %v4914, 0.0
  %v5015 = vsel %vm4609, %v4915, 0.0
  %v5016 = vsel %vm4610, %v4916, 0.0
  %v5017 = vsel %vm4611, %v4917, 0.0
  %v5018 = vsel %vm4612, %v4918, 0.0
  %v5019 = vsel %vm4613, %v4919, 0.0
  %v5020 = vsel %vm4614, %v4920, 0.0
  %v5021 = vsel %vm4615, %v4921, 0.0
  %v5022 = vsel %vm4616, %v4922, 0.0
  %v5023 = vsel %vm4617, %v4923, 0.0
  %v5024 = vsel %vm4618, %v4924, 0.0
  %v5025 = vsel %vm4619, %v4925, 0.0
  %v5026 = vsel %vm4620, %v4926, 0.0
  %v5027 = vsel %vm4621, %v4927, 0.0
  %v5028 = vsel %vm4622, %v4928, 0.0
  %v5029 = vsel %vm4623, %v4929, 0.0
  %v5030 = vsel %vm4624, %v4930, 0.0
  %v5031 = vsel %vm4625, %v4931, 0.0
  %v5032 = vsel %vm4626, %v4932, 0.0
  %v5033 = vsel %vm4627, %v4933, 0.0
  %v5034 = vsel %vm4628, %v4934, 0.0
  %v5035 = vsel %vm4629, %v4935, 0.0
  %v5036 = vsel %vm4630, %v4936, 0.0
  %v5037 = vsel %vm4631, %v4937, 0.0
  %v5038 = vsel %vm4632, %v4938, 0.0
  %v5039 = vsel %vm4633, %v4939, 0.0
  %v5040 = vsel %vm4634, %v4940, 0.0
  %v5041 = vsel %vm4635, %v4941, 0.0
  %v5042 = vsel %vm4636, %v4942, 0.0
  %v5043 = vsel %vm4637, %v4943, 0.0
  %v5044 = vsel %vm4638, %v4944, 0.0
  %v5045 = vsel %vm4639, %v4945, 0.0
  %v5046 = vsel %vm4640, %v4946, 0.0
  %v5047 = vmul.f32 %v4947, %v4947
  %v5048 = vmul.f32 %v4948, %v4948
  %v5049 = vmul.f32 %v4949, %v4949
  %v5050 = vmul.f32 %v4950, %v4950
  %v5051 = vmul.f32 %v4951, %v4951
  %v5052 = vmul.f32 %v4952, %v4952
  %v5053 = vmul.f32 %v4953, %v4953
  %v5054 = vmul.f32 %v4954, %v4954
  %v5055 = vmul.f32 %v4955, %v4955
  %v5056 = vmul.f32 %v4956, %v4956
  %v5057 = vmul.f32 %v4957, %v4957
  %v5058 = vmul.f32 %v4958, %v4958
  %v5059 = vmul.f32 %v4959, %v4959
  %v5060 = vmul.f32 %v4960, %v4960
  %v5061 = vmul.f32 %v4961, %v4961
  %v5062 = vmul.f32 %v4962, %v4962
  %v5063 = vmul.f32 %v4963, %v4963
  %v5064 = vmul.f32 %v4964, %v4964
  %v5065 = vmul.f32 %v4965, %v4965
  %v5066 = vmul.f32 %v4966, %v4966
  %v5067 = vmul.f32 %v4967, %v4967
  %v5068 = vmul.f32 %v4968, %v4968
  %v5069 = vmul.f32 %v4969, %v4969
  %v5070 = vmul.f32 %v4970, %v4970
  %v5071 = vmul.f32 %v4971, %v4971
  %v5072 = vmul.f32 %v4972, %v4972
  %v5073 = vmul.f32 %v4973, %v4973
  %v5074 = vmul.f32 %v4974, %v4974
  %v5075 = vmul.f32 %v4975, %v4975
  %v5076 = vmul.f32 %v4976, %v4976
  %v5077 = vmul.f32 %v4977, %v4977
  %v5078 = vmul.f32 %v4978, %v4978
  %v5079 = vmul.f32 %v4979, %v4979
  %v5080 = vmul.f32 %v4980, %v4980
  %v5081 = vmul.f32 %v4981, %v4981
  %v5082 = vmul.f32 %v4982, %v4982
  %v5083 = vmul.f32 %v4983, %v4983
  %v5084 = vmul.f32 %v4984, %v4984
  %v5085 = vmul.f32 %v4985, %v4985
  %v5086 = vmul.f32 %v4986, %v4986
  %v5087 = vmul.f32 %v4987, %v4987
  %v5088 = vmul.f32 %v4988, %v4988
  %v5089 = vmul.f32 %v4989, %v4989
  %v5090 = vmul.f32 %v4990, %v4990
  %v5091 = vmul.f32 %v4991, %v4991
  %v5092 = vmul.f32 %v4992, %v4992
  %v5093 = vmul.f32 %v4993, %v4993
  %v5094 = vmul.f32 %v4994, %v4994
  %v5095 = vmul.f32 %v4995, %v4995
  %v5096 = vmul.f32 %v4996, %v4996
  %v5097 = vmul.f32 %v4997, %v4997
  %v5098 = vmul.f32 %v4998, %v4998
  %v5099 = vmul.f32 %v4999, %v4999
  %v5100 = vmul.f32 %v5000, %v5000
  %v5101 = vmul.f32 %v5001, %v5001
  %v5102 = vmul.f32 %v5002, %v5002
  %v5103 = vmul.f32 %v5003, %v5003
  %v5104 = vmul.f32 %v5004, %v5004
  %v5105 = vmul.f32 %v5005, %v5005
  %v5106 = vmul.f32 %v5006, %v5006
  %v5107 = vmul.f32 %v5007, %v5007
  %v5108 = vmul.f32 %v5008, %v5008
  %v5109 = vmul.f32 %v5009, %v5009
  %v5110 = vmul.f32 %v5010, %v5010
  %v5111 = vmul.f32 %v5011, %v5011
  %v5112 = vmul.f32 %v5012, %v5012
  %v5113 = vmul.f32 %v5013, %v5013
  %v5114 = vmul.f32 %v5014, %v5014
  %v5115 = vmul.f32 %v5015, %v5015
  %v5116 = vmul.f32 %v5016, %v5016
  %v5117 = vmul.f32 %v5017, %v5017
  %v5118 = vmul.f32 %v5018, %v5018
  %v5119 = vmul.f32 %v5019, %v5019
  %v5120 = vmul.f32 %v5020, %v5020
  %v5121 = vmul.f32 %v5021, %v5021
  %v5122 = vmul.f32 %v5022, %v5022
  %v5123 = vmul.f32 %v5023, %v5023
  %v5124 = vmul.f32 %v5024, %v5024
  %v5125 = vmul.f32 %v5025, %v5025
  %v5126 = vmul.f32 %v5026, %v5026
  %v5127 = vmul.f32 %v5027, %v5027
  %v5128 = vmul.f32 %v5028, %v5028
  %v5129 = vmul.f32 %v5029, %v5029
  %v5130 = vmul.f32 %v5030, %v5030
  %v5131 = vmul.f32 %v5031, %v5031
  %v5132 = vmul.f32 %v5032, %v5032
  %v5133 = vmul.f32 %v5033, %v5033
  %v5134 = vmul.f32 %v5034, %v5034
  %v5135 = vmul.f32 %v5035, %v5035
  %v5136 = vmul.f32 %v5036, %v5036
  %v5137 = vmul.f32 %v5037, %v5037
  %v5138 = vmul.f32 %v5038, %v5038
  %v5139 = vmul.f32 %v5039, %v5039
  %v5140 = vmul.f32 %v5040, %v5040
  %v5141 = vmul.f32 %v5041, %v5041
  %v5142 = vmul.f32 %v5042, %v5042
  %v5143 = vmul.f32 %v5043, %v5043
  %v5144 = vmul.f32 %v5044, %v5044
  %v5145 = vmul.f32 %v5045, %v5045
  %v5146 = vmul.f32 %v5046, %v5046
  %v5147 = vadd.f32 %v5047, %v5048
  %v5148 = vadd.f32 %v5147, %v5049
  %v5149 = vadd.f32 %v5148, %v5050
  %v5150 = vadd.f32 %v5149, %v5051
  %v5151 = vadd.f32 %v5150, %v5052
  %v5152 = vadd.f32 %v5151, %v5053
  %v5153 = vadd.f32 %v5152, %v5054
  %v5154 = vadd.f32 %v5153, %v5055
  %v5155 = vadd.f32 %v5154, %v5056
  %v5156 = vadd.f32 %v5155, %v5057
  %v5157 = vadd.f32 %v5156, %v5058
  %v5158 = vadd.f32 %v5157, %v5059
  %v5159 = vadd.f32 %v5158, %v5060
  %v5160 = vadd.f32 %v5159, %v5061
  %v5161 = vadd.f32 %v5160, %v5062
  %v5162 = vadd.f32 %v5161, %v5063
  %v5163 = vadd.f32 %v5162, %v5064
  %v5164 = vadd.f32 %v5163, %v5065
  %v5165 = vadd.f32 %v5164, %v5066
  %v5166 = vadd.f32 %v5165, %v5067
  %v5167 = vadd.f32 %v5166, %v5068
  %v5168 = vadd.f32 %v5167, %v5069
  %v5169 = vadd.f32 %v5168, %v5070
  %v5170 = vadd.f32 %v5169, %v5071
  %v5171 = vadd.f32 %v5170, %v5072
  %v5172 = vadd.f32 %v5171, %v5073
  %v5173 = vadd.f32 %v5172, %v5074
  %v5174 = vadd.f32 %v5173, %v5075
  %v5175 = vadd.f32 %v5174, %v5076
  %v5176 = vadd.f32 %v5175, %v5077
  %v5177 = vadd.f32 %v5176, %v5078
  %v5178 = vadd.f32 %v5177, %v5079
  %v5179 = vadd.f32 %v5178, %v5080
  %v5180 = vadd.f32 %v5179, %v5081
  %v5181 = vadd.f32 %v5180, %v5082
  %v5182 = vadd.f32 %v5181, %v5083
  %v5183 = vadd.f32 %v5182, %v5084
  %v5184 = vadd.f32 %v5183, %v5085
  %v5185 = vadd.f32 %v5184, %v5086
  %v5186 = vadd.f32 %v5185, %v5087
  %v5187 = vadd.f32 %v5186, %v5088
  %v5188 = vadd.f32 %v5187, %v5089
  %v5189 = vadd.f32 %v5188, %v5090
  %v5190 = vadd.f32 %v5189, %v5091
  %v5191 = vadd.f32 %v5190, %v5092
  %v5192 = vadd.f32 %v5191, %v5093
  %v5193 = vadd.f32 %v5192, %v5094
  %v5194 = vadd.f32 %v5193, %v5095
  %v5195 = vadd.f32 %v5194, %v5096
  %v5196 = vadd.f32 %v5195, %v5097
  %v5197 = vadd.f32 %v5196, %v5098
  %v5198 = vadd.f32 %v5197, %v5099
  %v5199 = vadd.f32 %v5198, %v5100
  %v5200 = vadd.f32 %v5199, %v5101
  %v5201 = vadd.f32 %v5200, %v5102
  %v5202 = vadd.f32 %v5201, %v5103
  %v5203 = vadd.f32 %v5202, %v5104
  %v5204 = vadd.f32 %v5203, %v5105
  %v5205 = vadd.f32 %v5204, %v5106
  %v5206 = vadd.f32 %v5205, %v5107
  %v5207 = vadd.f32 %v5206, %v5108
  %v5208 = vadd.f32 %v5207, %v5109
  %v5209 = vadd.f32 %v5208, %v5110
  %v5210 = vadd.f32 %v5209, %v5111
  %v5211 = vadd.f32 %v5210, %v5112
  %v5212 = vadd.f32 %v5211, %v5113
  %v5213 = vadd.f32 %v5212, %v5114
  %v5214 = vadd.f32 %v5213, %v5115
  %v5215 = vadd.f32 %v5214, %v5116
  %v5216 = vadd.f32 %v5215, %v5117
  %v5217 = vadd.f32 %v5216, %v5118
  %v5218 = vadd.f32 %v5217, %v5119
  %v5219 = vadd.f32 %v5218, %v5120
  %v5220 = vadd.f32 %v5219, %v5121
  %v5221 = vadd.f32 %v5220, %v5122
  %v5222 = vadd.f32 %v5221, %v5123
  %v5223 = vadd.f32 %v5222, %v5124
  %v5224 = vadd.f32 %v5223, %v5125
  %v5225 = vadd.f32 %v5224, %v5126
  %v5226 = vadd.f32 %v5225, %v5127
  %v5227 = vadd.f32 %v5226, %v5128
  %v5228 = vadd.f32 %v5227, %v5129
  %v5229 = vadd.f32 %v5228, %v5130
  %v5230 = vadd.f32 %v5229, %v5131
  %v5231 = vadd.f32 %v5230, %v5132
  %v5232 = vadd.f32 %v5231, %v5133
  %v5233 = vadd.f32 %v5232, %v5134
  %v5234 = vadd.f32 %v5233, %v5135
  %v5235 = vadd.f32 %v5234, %v5136
  %v5236 = vadd.f32 %v5235, %v5137
  %v5237 = vadd.f32 %v5236, %v5138
  %v5238 = vadd.f32 %v5237, %v5139
  %v5239 = vadd.f32 %v5238, %v5140
  %v5240 = vadd.f32 %v5239, %v5141
  %v5241 = vadd.f32 %v5240, %v5142
  %v5242 = vadd.f32 %v5241, %v5143
  %v5243 = vadd.f32 %v5242, %v5144
  %v5244 = vadd.f32 %v5243, %v5145
  %v5245 = vadd.f32 %v5244, %v5146
  %v5246 = vrot.slane %v5245, 4
  %v5247 = vadd.f32 %v5245, %v5246
  %v5248 = vrot.slane %v5247, 2
  %v5249 = vadd.f32 %v5247, %v5248
  %v5250 = vrot.slane %v5249, 1
  %v5251 = vadd.f32 %v5249, %v5250
  %v5252 = vmul.f32 %v5251, 0.0015432099
  %v5253 = vadd.f32 %v5252, 1e-05
  %v5254 = vrsqrt.pop %v5253
  %v5255 = vmul.f32 %v431, %v5254
  %v5256 = vmul.f32 %v4846, %v5255
  %v5258 = vrot.slane %v5256, 7
  %v5260 = vsub.f32 %v431, %v5258
  %v5261 = vlaneseq
  %v5262 = vshrl.u32 %v5261, 7
  %v5263 = vsub.s32 2, %v5262
  %v5264 = vrot.slane %v5255, %v5263
  %v5265 = vmul.f32 %v4641, %v5264
  %v5266 = vmul.f32 %v4642, %v5264
  %v5267 = vmul.f32 %v4643, %v5264
  %v5268 = vmul.f32 %v4644, %v5264
  %v5269 = vmul.f32 %v4645, %v5264
  %v5270 = vmul.f32 %v4646, %v5264
  %v5271 = vmul.f32 %v4647, %v5264
  %v5272 = vmul.f32 %v4648, %v5264
  %v5273 = vmul.f32 %v4649, %v5264
  %v5274 = vmul.f32 %v4650, %v5264
  %v5275 = vmul.f32 %v4651, %v5264
  %v5276 = vmul.f32 %v4652, %v5264
  %v5277 = vmul.f32 %v4653, %v5264
  %v5278 = vmul.f32 %v4654, %v5264
  %v5279 = vmul.f32 %v4655, %v5264
  %v5280 = vmul.f32 %v4656, %v5264
  %v5281 = vmul.f32 %v4657, %v5264
  %v5282 = vmul.f32 %v4658, %v5264
  %v5283 = vmul.f32 %v4659, %v5264
  %v5284 = vmul.f32 %v4660, %v5264
  %v5285 = vmul.f32 %v4661, %v5264
  %v5286 = vmul.f32 %v4662, %v5264
  %v5287 = vmul.f32 %v4663, %v5264
  %v5288 = vmul.f32 %v4664, %v5264
  %v5289 = vmul.f32 %v4665, %v5264
  %v5290 = vmul.f32 %v4666, %v5264
  %v5291 = vmul.f32 %v4667, %v5264
  %v5292 = vmul.f32 %v4668, %v5264
  %v5293 = vmul.f32 %v4669, %v5264
  %v5294 = vmul.f32 %v4670, %v5264
  %v5295 = vmul.f32 %v4671, %v5264
  %v5296 = vmul.f32 %v4672, %v5264
  %v5297 = vmul.f32 %v4673, %v5264
  %v5298 = vmul.f32 %v4674, %v5264
  %v5299 = vmul.f32 %v4675, %v5264
  %v5300 = vmul.f32 %v4676, %v5264
  %v5301 = vmul.f32 %v4677, %v5264
  %v5302 = vmul.f32 %v4678, %v5264
  %v5303 = vmul.f32 %v4679, %v5264
  %v5304 = vmul.f32 %v4680, %v5264
  %v5305 = vmul.f32 %v4681, %v5264
  %v5306 = vmul.f32 %v4682, %v5264
  %v5307 = vmul.f32 %v4683, %v5264
  %v5308 = vmul.f32 %v4684, %v5264
  %v5309 = vmul.f32 %v4685, %v5264
  %v5310 = vmul.f32 %v4686, %v5264
  %v5311 = vmul.f32 %v4687, %v5264
  %v5312 = vmul.f32 %v4688, %v5264
  %v5313 = vmul.f32 %v4689, %v5264
  %v5314 = vmul.f32 %v4690, %v5264
  %v5315 = vmul.f32 %v4691, %v5264
  %v5316 = vmul.f32 %v4692, %v5264
  %v5317 = vmul.f32 %v4693, %v5264
  %v5318 = vmul.f32 %v4694, %v5264
  %v5319 = vmul.f32 %v4695, %v5264
  %v5320 = vmul.f32 %v4696, %v5264
  %v5321 = vmul.f32 %v4697, %v5264
  %v5322 = vmul.f32 %v4698, %v5264
  %v5323 = vmul.f32 %v4699, %v5264
  %v5324 = vmul.f32 %v4700, %v5264
  %v5325 = vmul.f32 %v4701, %v5264
  %v5326 = vmul.f32 %v4702, %v5264
  %v5327 = vmul.f32 %v4703, %v5264
  %v5328 = vmul.f32 %v4704, %v5264
  %v5329 = vmul.f32 %v4705, %v5264
  %v5330 = vmul.f32 %v4706, %v5264
  %v5331 = vmul.f32 %v4707, %v5264
  %v5332 = vmul.f32 %v4708, %v5264
  %v5333 = vmul.f32 %v4709, %v5264
  %v5334 = vmul.f32 %v4710, %v5264
  %v5335 = vmul.f32 %v4711, %v5264
  %v5336 = vmul.f32 %v4712, %v5264
  %v5337 = vmul.f32 %v4713, %v5264
  %v5338 = vmul.f32 %v4714, %v5264
  %v5339 = vmul.f32 %v4715, %v5264
  %v5340 = vmul.f32 %v4716, %v5264
  %v5341 = vmul.f32 %v4717, %v5264
  %v5342 = vmul.f32 %v4718, %v5264
  %v5343 = vmul.f32 %v4719, %v5264
  %v5344 = vmul.f32 %v4720, %v5264
  %v5345 = vmul.f32 %v4721, %v5264
  %v5346 = vmul.f32 %v4722, %v5264
  %v5347 = vmul.f32 %v4723, %v5264
  %v5348 = vmul.f32 %v4724, %v5264
  %v5349 = vmul.f32 %v4725, %v5264
  %v5350 = vmul.f32 %v4726, %v5264
  %v5351 = vmul.f32 %v4727, %v5264
  %v5352 = vmul.f32 %v4728, %v5264
  %v5353 = vmul.f32 %v4729, %v5264
  %v5354 = vmul.f32 %v4730, %v5264
  %v5355 = vmul.f32 %v4731, %v5264
  %v5356 = vmul.f32 %v4732, %v5264
  %v5357 = vmul.f32 %v4733, %v5264
  %v5358 = vmul.f32 %v4734, %v5264
  %v5359 = vmul.f32 %v4735, %v5264
  %v5360 = vmul.f32 %v4736, %v5264
  %v5361 = vmul.f32 %v4737, %v5264
  %v5362 = vmul.f32 %v4738, %v5264
  %v5363 = vmul.f32 %v4739, %v5264
  %v5364 = vmul.f32 %v4740, %v5264
  %v5365 = vlaneseq
  %v5366 = vshrl.u32 %v5365, 7
  %v5367 = vsub.s32 3, %v5366
  %v5368 = vrot.slane %v5260, %v5367
  %v5369 = vadd.f32 %v5265, %v5368
  %v5370 = vadd.f32 %v5266, %v5368
  %v5371 = vadd.f32 %v5267, %v5368
  %v5372 = vadd.f32 %v5268, %v5368
  %v5373 = vadd.f32 %v5269, %v5368
  %v5374 = vadd.f32 %v5270, %v5368
  %v5375 = vadd.f32 %v5271, %v5368
  %v5376 = vadd.f32 %v5272, %v5368
  %v5377 = vadd.f32 %v5273, %v5368
  %v5378 = vadd.f32 %v5274, %v5368
  %v5379 = vadd.f32 %v5275, %v5368
  %v5380 = vadd.f32 %v5276, %v5368
  %v5381 = vadd.f32 %v5277, %v5368
  %v5382 = vadd.f32 %v5278, %v5368
  %v5383 = vadd.f32 %v5279, %v5368
  %v5384 = vadd.f32 %v5280, %v5368
  %v5385 = vadd.f32 %v5281, %v5368
  %v5386 = vadd.f32 %v5282, %v5368
  %v5387 = vadd.f32 %v5283, %v5368
  %v5388 = vadd.f32 %v5284, %v5368
  %v5389 = vadd.f32 %v5285, %v5368
  %v5390 = vadd.f32 %v5286, %v5368
  %v5391 = vadd.f32 %v5287, %v5368
  %v5392 = vadd.f32 %v5288, %v5368
  %v5393 = vadd.f32 %v5289, %v5368
  %v5394 = vadd.f32 %v5290, %v5368
  %v5395 = vadd.f32 %v5291, %v5368
  %v5396 = vadd.f32 %v5292, %v5368
  %v5397 = vadd.f32 %v5293, %v5368
  %v5398 = vadd.f32 %v5294, %v5368
  %v5399 = vadd.f32 %v5295, %v5368
  %v5400 = vadd.f32 %v5296, %v5368
  %v5401 = vadd.f32 %v5297, %v5368
  %v5402 = vadd.f32 %v5298, %v5368
  %v5403 = vadd.f32 %v5299, %v5368
  %v5404 = vadd.f32 %v5300, %v5368
  %v5405 = vadd.f32 %v5301, %v5368
  %v5406 = vadd.f32 %v5302, %v5368
  %v5407 = vadd.f32 %v5303, %v5368
  %v5408 = vadd.f32 %v5304, %v5368
  %v5409 = vadd.f32 %v5305, %v5368
  %v5410 = vadd.f32 %v5306, %v5368
  %v5411 = vadd.f32 %v5307, %v5368
  %v5412 = vadd.f32 %v5308, %v5368
  %v5413 = vadd.f32 %v5309, %v5368
  %v5414 = vadd.f32 %v5310, %v5368
  %v5415 = vadd.f32 %v5311, %v5368
  %v5416 = vadd.f32 %v5312, %v5368
  %v5417 = vadd.f32 %v5313, %v5368
  %v5418 = vadd.f32 %v5314, %v5368
  %v5419 = vadd.f32 %v5315, %v5368
  %v5420 = vadd.f32 %v5316, %v5368
  %v5421 = vadd.f32 %v5317, %v5368
  %v5422 = vadd.f32 %v5318, %v5368
  %v5423 = vadd.f32 %v5319, %v5368
  %v5424 = vadd.f32 %v5320, %v5368
  %v5425 = vadd.f32 %v5321, %v5368
  %v5426 = vadd.f32 %v5322, %v5368
  %v5427 = vadd.f32 %v5323, %v5368
  %v5428 = vadd.f32 %v5324, %v5368
  %v5429 = vadd.f32 %v5325, %v5368
  %v5430 = vadd.f32 %v5326, %v5368
  %v5431 = vadd.f32 %v5327, %v5368
  %v5432 = vadd.f32 %v5328, %v5368
  %v5433 = vadd.f32 %v5329, %v5368
  %v5434 = vadd.f32 %v5330, %v5368
  %v5435 = vadd.f32 %v5331, %v5368
  %v5436 = vadd.f32 %v5332, %v5368
  %v5437 = vadd.f32 %v5333, %v5368
  %v5438 = vadd.f32 %v5334, %v5368
  %v5439 = vadd.f32 %v5335, %v5368
  %v5440 = vadd.f32 %v5336, %v5368
  %v5441 = vadd.f32 %v5337, %v5368
  %v5442 = vadd.f32 %v5338, %v5368
  %v5443 = vadd.f32 %v5339, %v5368
  %v5444 = vadd.f32 %v5340, %v5368
  %v5445 = vadd.f32 %v5341, %v5368
  %v5446 = vadd.f32 %v5342, %v5368
  %v5447 = vadd.f32 %v5343, %v5368
  %v5448 = vadd.f32 %v5344, %v5368
  %v5449 = vadd.f32 %v5345, %v5368
  %v5450 = vadd.f32 %v5346, %v5368
  %v5451 = vadd.f32 %v5347, %v5368
  %v5452 = vadd.f32 %v5348, %v5368
  %v5453 = vadd.f32 %v5349, %v5368
  %v5454 = vadd.f32 %v5350, %v5368
  %v5455 = vadd.f32 %v5351, %v5368
  %v5456 = vadd.f32 %v5352, %v5368
  %v5457 = vadd.f32 %v5353, %v5368
  %v5458 = vadd.f32 %v5354, %v5368
  %v5459 = vadd.f32 %v5355, %v5368
  %v5460 = vadd.f32 %v5356, %v5368
  %v5461 = vadd.f32 %v5357, %v5368
  %v5462 = vadd.f32 %v5358, %v5368
  %v5463 = vadd.f32 %v5359, %v5368
  %v5464 = vadd.f32 %v5360, %v5368
  %v5465 = vadd.f32 %v5361, %v5368
  %v5466 = vadd.f32 %v5362, %v5368
  %v5467 = vadd.f32 %v5363, %v5368
  %v5468 = vadd.f32 %v5364, %v5368
  %v5469 = vmax.f32 %v5369, 0.0
  %v5470 = vmax.f32 %v5370, 0.0
  %v5471 = vmax.f32 %v5371, 0.0
  %v5472 = vmax.f32 %v5372, 0.0
  %v5473 = vmax.f32 %v5373, 0.0
  %v5474 = vmax.f32 %v5374, 0.0
  %v5475 = vmax.f32 %v5375, 0.0
  %v5476 = vmax.f32 %v5376, 0.0
  %v5477 = vmax.f32 %v5377, 0.0
  %v5478 = vmax.f32 %v5378, 0.0
  %v5479 = vmax.f32 %v5379, 0.0
  %v5480 = vmax.f32 %v5380, 0.0
  %v5481 = vmax.f32 %v5381, 0.0
  %v5482 = vmax.f32 %v5382, 0.0
  %v5483 = vmax.f32 %v5383, 0.0
  %v5484 = vmax.f32 %v5384, 0.0
  %v5485 = vmax.f32 %v5385, 0.0
  %v5486 = vmax.f32 %v5386, 0.0
  %v5487 = vmax.f32 %v5387, 0.0
  %v5488 = vmax.f32 %v5388, 0.0
  %v5489 = vmax.f32 %v5389, 0.0
  %v5490 = vmax.f32 %v5390, 0.0
  %v5491 = vmax.f32 %v5391, 0.0
  %v5492 = vmax.f32 %v5392, 0.0
  %v5493 = vmax.f32 %v5393, 0.0
  %v5494 = vmax.f32 %v5394, 0.0
  %v5495 = vmax.f32 %v5395, 0.0
  %v5496 = vmax.f32 %v5396, 0.0
  %v5497 = vmax.f32 %v5397, 0.0
  %v5498 = vmax.f32 %v5398, 0.0
  %v5499 = vmax.f32 %v5399, 0.0
  %v5500 = vmax.f32 %v5400, 0.0
  %v5501 = vmax.f32 %v5401, 0.0
  %v5502 = vmax.f32 %v5402, 0.0
  %v5503 = vmax.f32 %v5403, 0.0
  %v5504 = vmax.f32 %v5404, 0.0
  %v5505 = vmax.f32 %v5405, 0.0
  %v5506 = vmax.f32 %v5406, 0.0
  %v5507 = vmax.f32 %v5407, 0.0
  %v5508 = vmax.f32 %v5408, 0.0
  %v5509 = vmax.f32 %v5409, 0.0
  %v5510 = vmax.f32 %v5410, 0.0
  %v5511 = vmax.f32 %v5411, 0.0
  %v5512 = vmax.f32 %v5412, 0.0
  %v5513 = vmax.f32 %v5413, 0.0
  %v5514 = vmax.f32 %v5414, 0.0
  %v5515 = vmax.f32 %v5415, 0.0
  %v5516 = vmax.f32 %v5416, 0.0
  %v5517 = vmax.f32 %v5417, 0.0
  %v5518 = vmax.f32 %v5418, 0.0
  %v5519 = vmax.f32 %v5419, 0.0
  %v5520 = vmax.f32 %v5420, 0.0
  %v5521 = vmax.f32 %v5421, 0.0
  %v5522 = vmax.f32 %v5422, 0.0
  %v5523 = vmax.f32 %v5423, 0.0
  %v5524 = vmax.f32 %v5424, 0.0
  %v5525 = vmax.f32 %v5425, 0.0
  %v5526 = vmax.f32 %v5426, 0.0
  %v5527 = vmax.f32 %v5427, 0.0
  %v5528 = vmax.f32 %v5428, 0.0
  %v5529 = vmax.f32 %v5429, 0.0
  %v5530 = vmax.f32 %v5430, 0.0
  %v5531 = vmax.f32 %v5431, 0.0
  %v5532 = vmax.f32 %v5432, 0.0
  %v5533 = vmax.f32 %v5433, 0.0
  %v5534 = vmax.f32 %v5434, 0.0
  %v5535 = vmax.f32 %v5435, 0.0
  %v5536 = vmax.f32 %v5436, 0.0
  %v5537 = vmax.f32 %v5437, 0.0
  %v5538 = vmax.f32 %v5438, 0.0
  %v5539 = vmax.f32 %v5439, 0.0
  %v5540 = vmax.f32 %v5440, 0.0
  %v5541 = vmax.f32 %v5441, 0.0
  %v5542 = vmax.f32 %v5442, 0.0
  %v5543 = vmax.f32 %v5443, 0.0
  %v5544 = vmax.f32 %v5444, 0.0
  %v5545 = vmax.f32 %v5445, 0.0
  %v5546 = vmax.f32 %v5446, 0.0
  %v5547 = vmax.f32 %v5447, 0.0
  %v5548 = vmax.f32 %v5448, 0.0
  %v5549 = vmax.f32 %v5449, 0.0
  %v5550 = vmax.f32 %v5450, 0.0
  %v5551 = vmax.f32 %v5451, 0.0
  %v5552 = vmax.f32 %v5452, 0.0
  %v5553 = vmax.f32 %v5453, 0.0
  %v5554 = vmax.f32 %v5454, 0.0
  %v5555 = vmax.f32 %v5455, 0.0
  %v5556 = vmax.f32 %v5456, 0.0
  %v5557 = vmax.f32 %v5457, 0.0
  %v5558 = vmax.f32 %v5458, 0.0
  %v5559 = vmax.f32 %v5459, 0.0
  %v5560 = vmax.f32 %v5460, 0.0
  %v5561 = vmax.f32 %v5461, 0.0
  %v5562 = vmax.f32 %v5462, 0.0
  %v5563 = vmax.f32 %v5463, 0.0
  %v5564 = vmax.f32 %v5464, 0.0
  %v5565 = vmax.f32 %v5465, 0.0
  %v5566 = vmax.f32 %v5466, 0.0
  %v5567 = vmax.f32 %v5467, 0.0
  %v5568 = vmax.f32 %v5468, 0.0
  %v5569 = vsel %vm4541, %v5469, 0.0
  %v5570 = vsel %vm4542, %v5470, 0.0
  %v5571 = vsel %vm4543, %v5471, 0.0
  %v5572 = vsel %vm4544, %v5472, 0.0
  %v5573 = vsel %vm4545, %v5473, 0.0
  %v5574 = vsel %vm4546, %v5474, 0.0
  %v5575 = vsel %vm4547, %v5475, 0.0
  %v5576 = vsel %vm4548, %v5476, 0.0
  %v5577 = vsel %vm4549, %v5477, 0.0
  %v5578 = vsel %vm4550, %v5478, 0.0
  %v5579 = vsel %vm4551, %v5479, 0.0
  %v5580 = vsel %vm4552, %v5480, 0.0
  %v5581 = vsel %vm4553, %v5481, 0.0
  %v5582 = vsel %vm4554, %v5482, 0.0
  %v5583 = vsel %vm4555, %v5483, 0.0
  %v5584 = vsel %vm4556, %v5484, 0.0
  %v5585 = vsel %vm4557, %v5485, 0.0
  %v5586 = vsel %vm4558, %v5486, 0.0
  %v5587 = vsel %vm4559, %v5487, 0.0
  %v5588 = vsel %vm4560, %v5488, 0.0
  %v5589 = vsel %vm4561, %v5489, 0.0
  %v5590 = vsel %vm4562, %v5490, 0.0
  %v5591 = vsel %vm4563, %v5491, 0.0
  %v5592 = vsel %vm4564, %v5492, 0.0
  %v5593 = vsel %vm4565, %v5493, 0.0
  %v5594 = vsel %vm4566, %v5494, 0.0
  %v5595 = vsel %vm4567, %v5495, 0.0
  %v5596 = vsel %vm4568, %v5496, 0.0
  %v5597 = vsel %vm4569, %v5497, 0.0
  %v5598 = vsel %vm4570, %v5498, 0.0
  %v5599 = vsel %vm4571, %v5499, 0.0
  %v5600 = vsel %vm4572, %v5500, 0.0
  %v5601 = vsel %vm4573, %v5501, 0.0
  %v5602 = vsel %vm4574, %v5502, 0.0
  %v5603 = vsel %vm4575, %v5503, 0.0
  %v5604 = vsel %vm4576, %v5504, 0.0
  %v5605 = vsel %vm4577, %v5505, 0.0
  %v5606 = vsel %vm4578, %v5506, 0.0
  %v5607 = vsel %vm4579, %v5507, 0.0
  %v5608 = vsel %vm4580, %v5508, 0.0
  %v5609 = vsel %vm4581, %v5509, 0.0
  %v5610 = vsel %vm4582, %v5510, 0.0
  %v5611 = vsel %vm4583, %v5511, 0.0
  %v5612 = vsel %vm4584, %v5512, 0.0
  %v5613 = vsel %vm4585, %v5513, 0.0
  %v5614 = vsel %vm4586, %v5514, 0.0
  %v5615 = vsel %vm4587, %v5515, 0.0
  %v5616 = vsel %vm4588, %v5516, 0.0
  %v5617 = vsel %vm4589, %v5517, 0.0
  %v5618 = vsel %vm4590, %v5518, 0.0
  %v5619 = vsel %vm4591, %v5519, 0.0
  %v5620 = vsel %vm4592, %v5520, 0.0
  %v5621 = vsel %vm4593, %v5521, 0.0
  %v5622 = vsel %vm4594, %v5522, 0.0
  %v5623 = vsel %vm4595, %v5523, 0.0
  %v5624 = vsel %vm4596, %v5524, 0.0
  %v5625 = vsel %vm4597, %v5525, 0.0
  %v5626 = vsel %vm4598, %v5526, 0.0
  %v5627 = vsel %vm4599, %v5527, 0.0
  %v5628 = vsel %vm4600, %v5528, 0.0
  %v5629 = vsel %vm4601, %v5529, 0.0
  %v5630 = vsel %vm4602, %v5530, 0.0
  %v5631 = vsel %vm4603, %v5531, 0.0
  %v5632 = vsel %vm4604, %v5532, 0.0
  %v5633 = vsel %vm4605, %v5533, 0.0
  %v5634 = vsel %vm4606, %v5534, 0.0
  %v5635 = vsel %vm4607, %v5535, 0.0
  %v5636 = vsel %vm4608, %v5536, 0.0
  %v5637 = vsel %vm4609, %v5537, 0.0
  %v5638 = vsel %vm4610, %v5538, 0.0
  %v5639 = vsel %vm4611, %v5539, 0.0
  %v5640 = vsel %vm4612, %v5540, 0.0
  %v5641 = vsel %vm4613, %v5541, 0.0
  %v5642 = vsel %vm4614, %v5542, 0.0
  %v5643 = vsel %vm4615, %v5543, 0.0
  %v5644 = vsel %vm4616, %v5544, 0.0
  %v5645 = vsel %vm4617, %v5545, 0.0
  %v5646 = vsel %vm4618, %v5546, 0.0
  %v5647 = vsel %vm4619, %v5547, 0.0
  %v5648 = vsel %vm4620, %v5548, 0.0
  %v5649 = vsel %vm4621, %v5549, 0.0
  %v5650 = vsel %vm4622, %v5550, 0.0
  %v5651 = vsel %vm4623, %v5551, 0.0
  %v5652 = vsel %vm4624, %v5552, 0.0
  %v5653 = vsel %vm4625, %v5553, 0.0
  %v5654 = vsel %vm4626, %v5554, 0.0
  %v5655 = vsel %vm4627, %v5555, 0.0
  %v5656 = vsel %vm4628, %v5556, 0.0
  %v5657 = vsel %vm4629, %v5557, 0.0
  %v5658 = vsel %vm4630, %v5558, 0.0
  %v5659 = vsel %vm4631, %v5559, 0.0
  %v5660 = vsel %vm4632, %v5560, 0.0
  %v5661 = vsel %vm4633, %v5561, 0.0
  %v5662 = vsel %vm4634, %v5562, 0.0
  %v5663 = vsel %vm4635, %v5563, 0.0
  %v5664 = vsel %vm4636, %v5564, 0.0
  %v5665 = vsel %vm4637, %v5565, 0.0
  %v5666 = vsel %vm4638, %v5566, 0.0
  %v5667 = vsel %vm4639, %v5567, 0.0
  %v5668 = vsel %vm4640, %v5568, 0.0
  %5669 = vst [vmem:[#allocation2] sm:$0xff] 0.0
  %5670 = vst [vmem:[#allocation2 + $0x8] sm:$0xff] 0.0
  %5671 = vst [vmem:[#allocation2 + $0x10] sm:$0xff] 0.0
  %5672 = vst [vmem:[#allocation2 + $0x338] sm:$0xff] 0.0
  %5673 = vst [vmem:[#allocation2 + $0x340] sm:$0xff] 0.0
  %5674 = vst [vmem:[#allocation2 + $0x348] sm:$0xff] 0.0
  %5675 = vst [vmem:[#allocation2 + $0x18] sm:$0xff] %v5569
  %5676 = vst [vmem:[#allocation2 + $0x20] sm:$0xff] %v5570
  %5677 = vst [vmem:[#allocation2 + $0x28] sm:$0xff] %v5571
  %5678 = vst [vmem:[#allocation2 + $0x30] sm:$0xff] %v5572
  %5679 = vst [vmem:[#allocation2 + $0x38] sm:$0xff] %v5573
  %5680 = vst [vmem:[#allocation2 + $0x40] sm:$0xff] %v5574
  %5681 = vst [vmem:[#allocation2 + $0x48] sm:$0xff] %v5575
  %5682 = vst [vmem:[#allocation2 + $0x50] sm:$0xff] %v5576
  %5683 = vst [vmem:[#allocation2 + $0x58] sm:$0xff] %v5577
  %5684 = vst [vmem:[#allocation2 + $0x60] sm:$0xff] %v5578
  %5685 = vst [vmem:[#allocation2 + $0x68] sm:$0xff] %v5579
  %5686 = vst [vmem:[#allocation2 + $0x70] sm:$0xff] %v5580
  %5687 = vst [vmem:[#allocation2 + $0x78] sm:$0xff] %v5581
  %5688 = vst [vmem:[#allocation2 + $0x80] sm:$0xff] %v5582
  %5689 = vst [vmem:[#allocation2 + $0x88] sm:$0xff] %v5583
  %5690 = vst [vmem:[#allocation2 + $0x90] sm:$0xff] %v5584
  %5691 = vst [vmem:[#allocation2 + $0x98] sm:$0xff] %v5585
  %5692 = vst [vmem:[#allocation2 + $0xa0] sm:$0xff] %v5586
  %5693 = vst [vmem:[#allocation2 + $0xa8] sm:$0xff] %v5587
  %5694 = vst [vmem:[#allocation2 + $0xb0] sm:$0xff] %v5588
  %5695 = vst [vmem:[#allocation2 + $0xb8] sm:$0xff] %v5589
  %5696 = vst [vmem:[#allocation2 + $0xc0] sm:$0xff] %v5590
  %5697 = vst [vmem:[#allocation2 + $0xc8] sm:$0xff] %v5591
  %5698 = vst [vmem:[#allocation2 + $0xd0] sm:$0xff] %v5592
  %5699 = vst [vmem:[#allocation2 + $0xd8] sm:$0xff] %v5593
  %5700 = vst [vmem:[#allocation2 + $0xe0] sm:$0xff] %v5594
  %5701 = vst [vmem:[#allocation2 + $0xe8] sm:$0xff] %v5595
  %5702 = vst [vmem:[#allocation2 + $0xf0] sm:$0xff] %v5596
  %5703 = vst [vmem:[#allocation2 + $0xf8] sm:$0xff] %v5597
  %5704 = vst [vmem:[#allocation2 + $0x100] sm:$0xff] %v5598
  %5705 = vst [vmem:[#allocation2 + $0x108] sm:$0xff] %v5599
  %5706 = vst [vmem:[#allocation2 + $0x110] sm:$0xff] %v5600
  %5707 = vst [vmem:[#allocation2 + $0x118] sm:$0xff] %v5601
  %5708 = vst [vmem:[#allocation2 + $0x120] sm:$0xff] %v5602
  %5709 = vst [vmem:[#allocation2 + $0x128] sm:$0xff] %v5603
  %5710 = vst [vmem:[#allocation2 + $0x130] sm:$0xff] %v5604
  %5711 = vst [vmem:[#allocation2 + $0x138] sm:$0xff] %v5605
  %5712 = vst [vmem:[#allocation2 + $0x140] sm:$0xff] %v5606
  %5713 = vst [vmem:[#allocation2 + $0x148] sm:$0xff] %v5607
  %5714 = vst [vmem:[#allocation2 + $0x150] sm:$0xff] %v5608
  %5715 = vst [vmem:[#allocation2 + $0x158] sm:$0xff] %v5609
  %5716 = vst [vmem:[#allocation2 + $0x160] sm:$0xff] %v5610
  %5717 = vst [vmem:[#allocation2 + $0x168] sm:$0xff] %v5611
  %5718 = vst [vmem:[#allocation2 + $0x170] sm:$0xff] %v5612
  %5719 = vst [vmem:[#allocation2 + $0x178] sm:$0xff] %v5613
  %5720 = vst [vmem:[#allocation2 + $0x180] sm:$0xff] %v5614
  %5721 = vst [vmem:[#allocation2 + $0x188] sm:$0xff] %v5615
  %5722 = vst [vmem:[#allocation2 + $0x190] sm:$0xff] %v5616
  %5723 = vst [vmem:[#allocation2 + $0x198] sm:$0xff] %v5617
  %5724 = vst [vmem:[#allocation2 + $0x1a0] sm:$0xff] %v5618
  %5725 = vst [vmem:[#allocation2 + $0x1a8] sm:$0xff] %v5619
  %5726 = vst [vmem:[#allocation2 + $0x1b0] sm:$0xff] %v5620
  %5727 = vst [vmem:[#allocation2 + $0x1b8] sm:$0xff] %v5621
  %5728 = vst [vmem:[#allocation2 + $0x1c0] sm:$0xff] %v5622
  %5729 = vst [vmem:[#allocation2 + $0x1c8] sm:$0xff] %v5623
  %5730 = vst [vmem:[#allocation2 + $0x1d0] sm:$0xff] %v5624
  %5731 = vst [vmem:[#allocation2 + $0x1d8] sm:$0xff] %v5625
  %5732 = vst [vmem:[#allocation2 + $0x1e0] sm:$0xff] %v5626
  %5733 = vst [vmem:[#allocation2 + $0x1e8] sm:$0xff] %v5627
  %5734 = vst [vmem:[#allocation2 + $0x1f0] sm:$0xff] %v5628
  %5735 = vst [vmem:[#allocation2 + $0x1f8] sm:$0xff] %v5629
  %5736 = vst [vmem:[#allocation2 + $0x200] sm:$0xff] %v5630
  %5737 = vst [vmem:[#allocation2 + $0x208] sm:$0xff] %v5631
  %5738 = vst [vmem:[#allocation2 + $0x210] sm:$0xff] %v5632
  %5739 = vst [vmem:[#allocation2 + $0x218] sm:$0xff] %v5633
  %5740 = vst [vmem:[#allocation2 + $0x220] sm:$0xff] %v5634
  %5741 = vst [vmem:[#allocation2 + $0x228] sm:$0xff] %v5635
  %5742 = vst [vmem:[#allocation2 + $0x230] sm:$0xff] %v5636
  %5743 = vst [vmem:[#allocation2 + $0x238] sm:$0xff] %v5637
  %5744 = vst [vmem:[#allocation2 + $0x240] sm:$0xff] %v5638
  %5745 = vst [vmem:[#allocation2 + $0x248] sm:$0xff] %v5639
  %5746 = vst [vmem:[#allocation2 + $0x250] sm:$0xff] %v5640
  %5747 = vst [vmem:[#allocation2 + $0x258] sm:$0xff] %v5641
  %5748 = vst [vmem:[#allocation2 + $0x260] sm:$0xff] %v5642
  %5749 = vst [vmem:[#allocation2 + $0x268] sm:$0xff] %v5643
  %5750 = vst [vmem:[#allocation2 + $0x270] sm:$0xff] %v5644
  %5751 = vst [vmem:[#allocation2 + $0x278] sm:$0xff] %v5645
  %5752 = vst [vmem:[#allocation2 + $0x280] sm:$0xff] %v5646
  %5753 = vst [vmem:[#allocation2 + $0x288] sm:$0xff] %v5647
  %5754 = vst [vmem:[#allocation2 + $0x290] sm:$0xff] %v5648
  %5755 = vst [vmem:[#allocation2 + $0x298] sm:$0xff] %v5649
  %5756 = vst [vmem:[#allocation2 + $0x2a0] sm:$0xff] %v5650
  %5757 = vst [vmem:[#allocation2 + $0x2a8] sm:$0xff] %v5651
  %5758 = vst [vmem:[#allocation2 + $0x2b0] sm:$0xff] %v5652
  %5759 = vst [vmem:[#allocation2 + $0x2b8] sm:$0xff] %v5653
  %5760 = vst [vmem:[#allocation2 + $0x2c0] sm:$0xff] %v5654
  %5761 = vst [vmem:[#allocation2 + $0x2c8] sm:$0xff] %v5655
  %5762 = vst [vmem:[#allocation2 + $0x2d0] sm:$0xff] %v5656
  %5763 = vst [vmem:[#allocation2 + $0x2d8] sm:$0xff] %v5657
  %5764 = vst [vmem:[#allocation2 + $0x2e0] sm:$0xff] %v5658
  %5765 = vst [vmem:[#allocation2 + $0x2e8] sm:$0xff] %v5659
  %5766 = vst [vmem:[#allocation2 + $0x2f0] sm:$0xff] %v5660
  %5767 = vst [vmem:[#allocation2 + $0x2f8] sm:$0xff] %v5661
  %5768 = vst [vmem:[#allocation2 + $0x300] sm:$0xff] %v5662
  %5769 = vst [vmem:[#allocation2 + $0x308] sm:$0xff] %v5663
  %5770 = vst [vmem:[#allocation2 + $0x310] sm:$0xff] %v5664
  %5771 = vst [vmem:[#allocation2 + $0x318] sm:$0xff] %v5665
  %5772 = vst [vmem:[#allocation2 + $0x320] sm:$0xff] %v5666
  %5773 = vst [vmem:[#allocation2 + $0x328] sm:$0xff] %v5667
  %5774 = vst [vmem:[#allocation2 + $0x330] sm:$0xff] %v5668
  %v5775 = vld [vmem:[#allocation2 + $0x3] sm:$0xff]
  %v5776 = vld [vmem:[#allocation2 + $0xb] sm:$0xff]
  %v5777 = vld [vmem:[#allocation2 + $0x13] sm:$0xff]
  %v5778 = vld [vmem:[#allocation2 + $0x1b] sm:$0xff]
  %v5779 = vld [vmem:[#allocation2 + $0x23] sm:$0xff]
  %v5780 = vld [vmem:[#allocation2 + $0x2b] sm:$0xff]
  %v5781 = vld [vmem:[#allocation2 + $0x33] sm:$0xff]
  %v5782 = vld [vmem:[#allocation2 + $0x3b] sm:$0xff]
  %v5783 = vld [vmem:[#allocation2 + $0x43] sm:$0xff]
  %v5784 = vld [vmem:[#allocation2 + $0x4b] sm:$0xff]
  %v5785 = vld [vmem:[#allocation2 + $0x53] sm:$0xff]
  %v5786 = vld [vmem:[#allocation2 + $0x5b] sm:$0xff]
  %v5787 = vld [vmem:[#allocation2 + $0x63] sm:$0xff]
  %v5788 = vld [vmem:[#allocation2 + $0x6b] sm:$0xff]
  %v5789 = vld [vmem:[#allocation2 + $0x73] sm:$0xff]
  %v5790 = vld [vmem:[#allocation2 + $0x7b] sm:$0xff]
  %v5791 = vld [vmem:[#allocation2 + $0x83] sm:$0xff]
  %v5792 = vld [vmem:[#allocation2 + $0x8b] sm:$0xff]
  %v5793 = vld [vmem:[#allocation2 + $0x93] sm:$0xff]
  %v5794 = vld [vmem:[#allocation2 + $0x9b] sm:$0xff]
  %v5795 = vld [vmem:[#allocation2 + $0xa3] sm:$0xff]
  %v5796 = vld [vmem:[#allocation2 + $0xab] sm:$0xff]
  %v5797 = vld [vmem:[#allocation2 + $0xb3] sm:$0xff]
  %v5798 = vld [vmem:[#allocation2 + $0xbb] sm:$0xff]
  %v5799 = vld [vmem:[#allocation2 + $0xc3] sm:$0xff]
  %v5800 = vld [vmem:[#allocation2 + $0xcb] sm:$0xff]
  %v5801 = vld [vmem:[#allocation2 + $0xd3] sm:$0xff]
  %v5802 = vld [vmem:[#allocation2 + $0xdb] sm:$0xff]
  %v5803 = vld [vmem:[#allocation2 + $0xe3] sm:$0xff]
  %v5804 = vld [vmem:[#allocation2 + $0xeb] sm:$0xff]
  %v5805 = vld [vmem:[#allocation2 + $0xf3] sm:$0xff]
  %v5806 = vld [vmem:[#allocation2 + $0xfb] sm:$0xff]
  %v5807 = vld [vmem:[#allocation2 + $0x103] sm:$0xff]
  %v5808 = vld [vmem:[#allocation2 + $0x10b] sm:$0xff]
  %v5809 = vld [vmem:[#allocation2 + $0x113] sm:$0xff]
  %v5810 = vld [vmem:[#allocation2 + $0x11b] sm:$0xff]
  %v5811 = vld [vmem:[#allocation2 + $0x123] sm:$0xff]
  %v5812 = vld [vmem:[#allocation2 + $0x12b] sm:$0xff]
  %v5813 = vld [vmem:[#allocation2 + $0x133] sm:$0xff]
  %v5814 = vld [vmem:[#allocation2 + $0x13b] sm:$0xff]
  %v5815 = vld [vmem:[#allocation2 + $0x143] sm:$0xff]
  %v5816 = vld [vmem:[#allocation2 + $0x14b] sm:$0xff]
  %v5817 = vld [vmem:[#allocation2 + $0x153] sm:$0xff]
  %v5818 = vld [vmem:[#allocation2 + $0x15b] sm:$0xff]
  %v5819 = vld [vmem:[#allocation2 + $0x163] sm:$0xff]
  %v5820 = vld [vmem:[#allocation2 + $0x16b] sm:$0xff]
  %v5821 = vld [vmem:[#allocation2 + $0x173] sm:$0xff]
  %v5822 = vld [vmem:[#allocation2 + $0x17b] sm:$0xff]
  %v5823 = vld [vmem:[#allocation2 + $0x183] sm:$0xff]
  %v5824 = vld [vmem:[#allocation2 + $0x18b] sm:$0xff]
  %v5825 = vld [vmem:[#allocation2 + $0x193] sm:$0xff]
  %v5826 = vld [vmem:[#allocation2 + $0x19b] sm:$0xff]
  %v5827 = vld [vmem:[#allocation2 + $0x1a3] sm:$0xff]
  %v5828 = vld [vmem:[#allocation2 + $0x1ab] sm:$0xff]
  %v5829 = vld [vmem:[#allocation2 + $0x1b3] sm:$0xff]
  %v5830 = vld [vmem:[#allocation2 + $0x1bb] sm:$0xff]
  %v5831 = vld [vmem:[#allocation2 + $0x1c3] sm:$0xff]
  %v5832 = vld [vmem:[#allocation2 + $0x1cb] sm:$0xff]
  %v5833 = vld [vmem:[#allocation2 + $0x1d3] sm:$0xff]
  %v5834 = vld [vmem:[#allocation2 + $0x1db] sm:$0xff]
  %v5835 = vld [vmem:[#allocation2 + $0x1e3] sm:$0xff]
  %v5836 = vld [vmem:[#allocation2 + $0x1eb] sm:$0xff]
  %v5837 = vld [vmem:[#allocation2 + $0x1f3] sm:$0xff]
  %v5838 = vld [vmem:[#allocation2 + $0x1fb] sm:$0xff]
  %v5839 = vld [vmem:[#allocation2 + $0x203] sm:$0xff]
  %v5840 = vld [vmem:[#allocation2 + $0x20b] sm:$0xff]
  %v5841 = vld [vmem:[#allocation2 + $0x213] sm:$0xff]
  %v5842 = vld [vmem:[#allocation2 + $0x21b] sm:$0xff]
  %v5843 = vld [vmem:[#allocation2 + $0x223] sm:$0xff]
  %v5844 = vld [vmem:[#allocation2 + $0x22b] sm:$0xff]
  %v5845 = vld [vmem:[#allocation2 + $0x233] sm:$0xff]
  %v5846 = vld [vmem:[#allocation2 + $0x23b] sm:$0xff]
  %v5847 = vld [vmem:[#allocation2 + $0x243] sm:$0xff]
  %v5848 = vld [vmem:[#allocation2 + $0x24b] sm:$0xff]
  %v5849 = vld [vmem:[#allocation2 + $0x253] sm:$0xff]
  %v5850 = vld [vmem:[#allocation2 + $0x25b] sm:$0xff]
  %v5851 = vld [vmem:[#allocation2 + $0x263] sm:$0xff]
  %v5852 = vld [vmem:[#allocation2 + $0x26b] sm:$0xff]
  %v5853 = vld [vmem:[#allocation2 + $0x273] sm:$0xff]
  %v5854 = vld [vmem:[#allocation2 + $0x27b] sm:$0xff]
  %v5855 = vld [vmem:[#allocation2 + $0x283] sm:$0xff]
  %v5856 = vld [vmem:[#allocation2 + $0x28b] sm:$0xff]
  %v5857 = vld [vmem:[#allocation2 + $0x293] sm:$0xff]
  %v5858 = vld [vmem:[#allocation2 + $0x29b] sm:$0xff]
  %v5859 = vld [vmem:[#allocation2 + $0x2a3] sm:$0xff]
  %v5860 = vld [vmem:[#allocation2 + $0x2ab] sm:$0xff]
  %v5861 = vld [vmem:[#allocation2 + $0x2b3] sm:$0xff]
  %v5862 = vld [vmem:[#allocation2 + $0x2bb] sm:$0xff]
  %v5863 = vld [vmem:[#allocation2 + $0x2c3] sm:$0xff]
  %v5864 = vld [vmem:[#allocation2 + $0x2cb] sm:$0xff]
  %v5865 = vld [vmem:[#allocation2 + $0x2d3] sm:$0xff]
  %v5866 = vld [vmem:[#allocation2 + $0x2db] sm:$0xff]
  %v5867 = vld [vmem:[#allocation2 + $0x2e3] sm:$0xff]
  %v5868 = vld [vmem:[#allocation2 + $0x2eb] sm:$0xff]
  %v5869 = vld [vmem:[#allocation2 + $0x2f3] sm:$0xff]
  %v5870 = vld [vmem:[#allocation2 + $0x2fb] sm:$0xff]
  %v5871 = vld [vmem:[#allocation2 + $0x303] sm:$0xff]
  %v5872 = vld [vmem:[#allocation2 + $0x30b] sm:$0xff]
  %v5873 = vld [vmem:[#allocation2 + $0x313] sm:$0xff]
  %v5874 = vld [vmem:[#allocation2 + $0x31b] sm:$0xff]
  %v5875 = vld [vmem:[%s3] sm:$0x1]
  %v5876 = vlaneseq
  %v5877 = vshrl.u32 %v5876, 7
  %v5878 = vsub.s32 0, %v5877
  %v5879 = vrot.slane %v5875, %v5878
  %v5880 = vmul.f32 %v5879, %v5775
  %v5881 = vmul.f32 %v5879, %v5776
  %v5882 = vmul.f32 %v5879, %v5777
  %v5883 = vmul.f32 %v5879, %v5778
  %v5884 = vmul.f32 %v5879, %v5779
  %v5885 = vmul.f32 %v5879, %v5780
  %v5886 = vmul.f32 %v5879, %v5781
  %v5887 = vmul.f32 %v5879, %v5782
  %v5888 = vmul.f32 %v5879, %v5783
  %v5889 = vmul.f32 %v5879, %v5784
  %v5890 = vmul.f32 %v5879, %v5785
  %v5891 = vmul.f32 %v5879, %v5786
  %v5892 = vmul.f32 %v5879, %v5787
  %v5893 = vmul.f32 %v5879, %v5788
  %v5894 = vmul.f32 %v5879, %v5789
  %v5895 = vmul.f32 %v5879, %v5790
  %v5896 = vmul.f32 %v5879, %v5791
  %v5897 = vmul.f32 %v5879, %v5792
  %v5898 = vmul.f32 %v5879, %v5793
  %v5899 = vmul.f32 %v5879, %v5794
  %v5900 = vmul.f32 %v5879, %v5795
  %v5901 = vmul.f32 %v5879, %v5796
  %v5902 = vmul.f32 %v5879, %v5797
  %v5903 = vmul.f32 %v5879, %v5798
  %v5904 = vmul.f32 %v5879, %v5799
  %v5905 = vmul.f32 %v5879, %v5800
  %v5906 = vmul.f32 %v5879, %v5801
  %v5907 = vmul.f32 %v5879, %v5802
  %v5908 = vmul.f32 %v5879, %v5803
  %v5909 = vmul.f32 %v5879, %v5804
  %v5910 = vmul.f32 %v5879, %v5805
  %v5911 = vmul.f32 %v5879, %v5806
  %v5912 = vmul.f32 %v5879, %v5807
  %v5913 = vmul.f32 %v5879, %v5808
  %v5914 = vmul.f32 %v5879, %v5809
  %v5915 = vmul.f32 %v5879, %v5810
  %v5916 = vmul.f32 %v5879, %v5811
  %v5917 = vmul.f32 %v5879, %v5812
  %v5918 = vmul.f32 %v5879, %v5813
  %v5919 = vmul.f32 %v5879, %v5814
  %v5920 = vmul.f32 %v5879, %v5815
  %v5921 = vmul.f32 %v5879, %v5816
  %v5922 = vmul.f32 %v5879, %v5817
  %v5923 = vmul.f32 %v5879, %v5818
  %v5924 = vmul.f32 %v5879, %v5819
  %v5925 = vmul.f32 %v5879, %v5820
  %v5926 = vmul.f32 %v5879, %v5821
  %v5927 = vmul.f32 %v5879, %v5822
  %v5928 = vmul.f32 %v5879, %v5823
  %v5929 = vmul.f32 %v5879, %v5824
  %v5930 = vmul.f32 %v5879, %v5825
  %v5931 = vmul.f32 %v5879, %v5826
  %v5932 = vmul.f32 %v5879, %v5827
  %v5933 = vmul.f32 %v5879, %v5828
  %v5934 = vmul.f32 %v5879, %v5829
  %v5935 = vmul.f32 %v5879, %v5830
  %v5936 = vmul.f32 %v5879, %v5831
  %v5937 = vmul.f32 %v5879, %v5832
  %v5938 = vmul.f32 %v5879, %v5833
  %v5939 = vmul.f32 %v5879, %v5834
  %v5940 = vmul.f32 %v5879, %v5835
  %v5941 = vmul.f32 %v5879, %v5836
  %v5942 = vmul.f32 %v5879, %v5837
  %v5943 = vmul.f32 %v5879, %v5838
  %v5944 = vmul.f32 %v5879, %v5839
  %v5945 = vmul.f32 %v5879, %v5840
  %v5946 = vmul.f32 %v5879, %v5841
  %v5947 = vmul.f32 %v5879, %v5842
  %v5948 = vmul.f32 %v5879, %v5843
  %v5949 = vmul.f32 %v5879, %v5844
  %v5950 = vmul.f32 %v5879, %v5845
  %v5951 = vmul.f32 %v5879, %v5846
  %v5952 = vmul.f32 %v5879, %v5847
  %v5953 = vmul.f32 %v5879, %v5848
  %v5954 = vmul.f32 %v5879, %v5849
  %v5955 = vmul.f32 %v5879, %v5850
  %v5956 = vmul.f32 %v5879, %v5851
  %v5957 = vmul.f32 %v5879, %v5852
  %v5958 = vmul.f32 %v5879, %v5853
  %v5959 = vmul.f32 %v5879, %v5854
  %v5960 = vmul.f32 %v5879, %v5855
  %v5961 = vmul.f32 %v5879, %v5856
  %v5962 = vmul.f32 %v5879, %v5857
  %v5963 = vmul.f32 %v5879, %v5858
  %v5964 = vmul.f32 %v5879, %v5859
  %v5965 = vmul.f32 %v5879, %v5860
  %v5966 = vmul.f32 %v5879, %v5861
  %v5967 = vmul.f32 %v5879, %v5862
  %v5968 = vmul.f32 %v5879, %v5863
  %v5969 = vmul.f32 %v5879, %v5864
  %v5970 = vmul.f32 %v5879, %v5865
  %v5971 = vmul.f32 %v5879, %v5866
  %v5972 = vmul.f32 %v5879, %v5867
  %v5973 = vmul.f32 %v5879, %v5868
  %v5974 = vmul.f32 %v5879, %v5869
  %v5975 = vmul.f32 %v5879, %v5870
  %v5976 = vmul.f32 %v5879, %v5871
  %v5977 = vmul.f32 %v5879, %v5872
  %v5978 = vmul.f32 %v5879, %v5873
  %v5979 = vmul.f32 %v5879, %v5874
  %v5980 = vld [vmem:[#allocation2 + $0x4] sm:$0xff]
  %v5981 = vld [vmem:[#allocation2 + $0xc] sm:$0xff]
  %v5982 = vld [vmem:[#allocation2 + $0x14] sm:$0xff]
  %v5983 = vld [vmem:[#allocation2 + $0x1c] sm:$0xff]
  %v5984 = vld [vmem:[#allocation2 + $0x24] sm:$0xff]
  %v5985 = vld [vmem:[#allocation2 + $0x2c] sm:$0xff]
  %v5986 = vld [vmem:[#allocation2 + $0x34] sm:$0xff]
  %v5987 = vld [vmem:[#allocation2 + $0x3c] sm:$0xff]
  %v5988 = vld [vmem:[#allocation2 + $0x44] sm:$0xff]
  %v5989 = vld [vmem:[#allocation2 + $0x4c] sm:$0xff]
  %v5990 = vld [vmem:[#allocation2 + $0x54] sm:$0xff]
  %v5991 = vld [vmem:[#allocation2 + $0x5c] sm:$0xff]
  %v5992 = vld [vmem:[#allocation2 + $0x64] sm:$0xff]
  %v5993 = vld [vmem:[#allocation2 + $0x6c] sm:$0xff]
  %v5994 = vld [vmem:[#allocation2 + $0x74] sm:$0xff]
  %v5995 = vld [vmem:[#allocation2 + $0x7c] sm:$0xff]
  %v5996 = vld [vmem:[#allocation2 + $0x84] sm:$0xff]
  %v5997 = vld [vmem:[#allocation2 + $0x8c] sm:$0xff]
  %v5998 = vld [vmem:[#allocation2 + $0x94] sm:$0xff]
  %v5999 = vld [vmem:[#allocation2 + $0x9c] sm:$0xff]
  %v6000 = vld [vmem:[#allocation2 + $0xa4] sm:$0xff]
  %v6001 = vld [vmem:[#allocation2 + $0xac] sm:$0xff]
  %v6002 = vld [vmem:[#allocation2 + $0xb4] sm:$0xff]
  %v6003 = vld [vmem:[#allocation2 + $0xbc] sm:$0xff]
  %v6004 = vld [vmem:[#allocation2 + $0xc4] sm:$0xff]
  %v6005 = vld [vmem:[#allocation2 + $0xcc] sm:$0xff]
  %v6006 = vld [vmem:[#allocation2 + $0xd4] sm:$0xff]
  %v6007 = vld [vmem:[#allocation2 + $0xdc] sm:$0xff]
  %v6008 = vld [vmem:[#allocation2 + $0xe4] sm:$0xff]
  %v6009 = vld [vmem:[#allocation2 + $0xec] sm:$0xff]
  %v6010 = vld [vmem:[#allocation2 + $0xf4] sm:$0xff]
  %v6011 = vld [vmem:[#allocation2 + $0xfc] sm:$0xff]
  %v6012 = vld [vmem:[#allocation2 + $0x104] sm:$0xff]
  %v6013 = vld [vmem:[#allocation2 + $0x10c] sm:$0xff]
  %v6014 = vld [vmem:[#allocation2 + $0x114] sm:$0xff]
  %v6015 = vld [vmem:[#allocation2 + $0x11c] sm:$0xff]
  %v6016 = vld [vmem:[#allocation2 + $0x124] sm:$0xff]
  %v6017 = vld [vmem:[#allocation2 + $0x12c] sm:$0xff]
  %v6018 = vld [vmem:[#allocation2 + $0x134] sm:$0xff]
  %v6019 = vld [vmem:[#allocation2 + $0x13c] sm:$0xff]
  %v6020 = vld [vmem:[#allocation2 + $0x144] sm:$0xff]
  %v6021 = vld [vmem:[#allocation2 + $0x14c] sm:$0xff]
  %v6022 = vld [vmem:[#allocation2 + $0x154] sm:$0xff]
  %v6023 = vld [vmem:[#allocation2 + $0x15c] sm:$0xff]
  %v6024 = vld [vmem:[#allocation2 + $0x164] sm:$0xff]
  %v6025 = vld [vmem:[#allocation2 + $0x16c] sm:$0xff]
  %v6026 = vld [vmem:[#allocation2 + $0x174] sm:$0xff]
  %v6027 = vld [vmem:[#allocation2 + $0x17c] sm:$0xff]
  %v6028 = vld [vmem:[#allocation2 + $0x184] sm:$0xff]
  %v6029 = vld [vmem:[#allocation2 + $0x18c] sm:$0xff]
  %v6030 = vld [vmem:[#allocation2 + $0x194] sm:$0xff]
  %v6031 = vld [vmem:[#allocation2 + $0x19c] sm:$0xff]
  %v6032 = vld [vmem:[#allocation2 + $0x1a4] sm:$0xff]
  %v6033 = vld [vmem:[#allocation2 + $0x1ac] sm:$0xff]
  %v6034 = vld [vmem:[#allocation2 + $0x1b4] sm:$0xff]
  %v6035 = vld [vmem:[#allocation2 + $0x1bc] sm:$0xff]
  %v6036 = vld [vmem:[#allocation2 + $0x1c4] sm:$0xff]
  %v6037 = vld [vmem:[#allocation2 + $0x1cc] sm:$0xff]
  %v6038 = vld [vmem:[#allocation2 + $0x1d4] sm:$0xff]
  %v6039 = vld [vmem:[#allocation2 + $0x1dc] sm:$0xff]
  %v6040 = vld [vmem:[#allocation2 + $0x1e4] sm:$0xff]
  %v6041 = vld [vmem:[#allocation2 + $0x1ec] sm:$0xff]
  %v6042 = vld [vmem:[#allocation2 + $0x1f4] sm:$0xff]
  %v6043 = vld [vmem:[#allocation2 + $0x1fc] sm:$0xff]
  %v6044 = vld [vmem:[#allocation2 + $0x204] sm:$0xff]
  %v6045 = vld [vmem:[#allocation2 + $0x20c] sm:$0xff]
  %v6046 = vld [vmem:[#allocation2 + $0x214] sm:$0xff]
  %v6047 = vld [vmem:[#allocation2 + $0x21c] sm:$0xff]
  %v6048 = vld [vmem:[#allocation2 + $0x224] sm:$0xff]
  %v6049 = vld [vmem:[#allocation2 + $0x22c] sm:$0xff]
  %v6050 = vld [vmem:[#allocation2 + $0x234] sm:$0xff]
  %v6051 = vld [vmem:[#allocation2 + $0x23c] sm:$0xff]
  %v6052 = vld [vmem:[#allocation2 + $0x244] sm:$0xff]
  %v6053 = vld [vmem:[#allocation2 + $0x24c] sm:$0xff]
  %v6054 = vld [vmem:[#allocation2 + $0x254] sm:$0xff]
  %v6055 = vld [vmem:[#allocation2 + $0x25c] sm:$0xff]
  %v6056 = vld [vmem:[#allocation2 + $0x264] sm:$0xff]
  %v6057 = vld [vmem:[#allocation2 + $0x26c] sm:$0xff]
  %v6058 = vld [vmem:[#allocation2 + $0x274] sm:$0xff]
  %v6059 = vld [vmem:[#allocation2 + $0x27c] sm:$0xff]
  %v6060 = vld [vmem:[#allocation2 + $0x284] sm:$0xff]
  %v6061 = vld [vmem:[#allocation2 + $0x28c] sm:$0xff]
  %v6062 = vld [vmem:[#allocation2 + $0x294] sm:$0xff]
  %v6063 = vld [vmem:[#allocation2 + $0x29c] sm:$0xff]
  %v6064 = vld [vmem:[#allocation2 + $0x2a4] sm:$0xff]
  %v6065 = vld [vmem:[#allocation2 + $0x2ac] sm:$0xff]
  %v6066 = vld [vmem:[#allocation2 + $0x2b4] sm:$0xff]
  %v6067 = vld [vmem:[#allocation2 + $0x2bc] sm:$0xff]
  %v6068 = vld [vmem:[#allocation2 + $0x2c4] sm:$0xff]
  %v6069 = vld [vmem:[#allocation2 + $0x2cc] sm:$0xff]
  %v6070 = vld [vmem:[#allocation2 + $0x2d4] sm:$0xff]
  %v6071 = vld [vmem:[#allocation2 + $0x2dc] sm:$0xff]
  %v6072 = vld [vmem:[#allocation2 + $0x2e4] sm:$0xff]
  %v6073 = vld [vmem:[#allocation2 + $0x2ec] sm:$0xff]
  %v6074 = vld [vmem:[#allocation2 + $0x2f4] sm:$0xff]
  %v6075 = vld [vmem:[#allocation2 + $0x2fc] sm:$0xff]
  %v6076 = vld [vmem:[#allocation2 + $0x304] sm:$0xff]
  %v6077 = vld [vmem:[#allocation2 + $0x30c] sm:$0xff]
  %v6078 = vld [vmem:[#allocation2 + $0x314] sm:$0xff]
  %v6079 = vld [vmem:[#allocation2 + $0x31c] sm:$0xff]
  %v6080 = vld [vmem:[%s3 + $0x1] sm:$0x1]
  %v6081 = vlaneseq
  %v6082 = vshrl.u32 %v6081, 7
  %v6083 = vsub.s32 0, %v6082
  %v6084 = vrot.slane %v6080, %v6083
  %v6085 = vmul.f32 %v6084, %v5980
  %v6086 = vmul.f32 %v6084, %v5981
  %v6087 = vmul.f32 %v6084, %v5982
  %v6088 = vmul.f32 %v6084, %v5983
  %v6089 = vmul.f32 %v6084, %v5984
  %v6090 = vmul.f32 %v6084, %v5985
  %v6091 = vmul.f32 %v6084, %v5986
  %v6092 = vmul.f32 %v6084, %v5987
  %v6093 = vmul.f32 %v6084, %v5988
  %v6094 = vmul.f32 %v6084, %v5989
  %v6095 = vmul.f32 %v6084, %v5990
  %v6096 = vmul.f32 %v6084, %v5991
  %v6097 = vmul.f32 %v6084, %v5992
  %v6098 = vmul.f32 %v6084, %v5993
  %v6099 = vmul.f32 %v6084, %v5994
  %v6100 = vmul.f32 %v6084, %v5995
  %v6101 = vmul.f32 %v6084, %v5996
  %v6102 = vmul.f32 %v6084, %v5997
  %v6103 = vmul.f32 %v6084, %v5998
  %v6104 = vmul.f32 %v6084, %v5999
  %v6105 = vmul.f32 %v6084, %v6000
  %v6106 = vmul.f32 %v6084, %v6001
  %v6107 = vmul.f32 %v6084, %v6002
  %v6108 = vmul.f32 %v6084, %v6003
  %v6109 = vmul.f32 %v6084, %v6004
  %v6110 = vmul.f32 %v6084, %v6005
  %v6111 = vmul.f32 %v6084, %v6006
  %v6112 = vmul.f32 %v6084, %v6007
  %v6113 = vmul.f32 %v6084, %v6008
  %v6114 = vmul.f32 %v6084, %v6009
  %v6115 = vmul.f32 %v6084, %v6010
  %v6116 = vmul.f32 %v6084, %v6011
  %v6117 = vmul.f32 %v6084, %v6012
  %v6118 = vmul.f32 %v6084, %v6013
  %v6119 = vmul.f32 %v6084, %v6014
  %v6120 = vmul.f32 %v6084, %v6015
  %v6121 = vmul.f32 %v6084, %v6016
  %v6122 = vmul.f32 %v6084, %v6017
  %v6123 = vmul.f32 %v6084, %v6018
  %v6124 = vmul.f32 %v6084, %v6019
  %v6125 = vmul.f32 %v6084, %v6020
  %v6126 = vmul.f32 %v6084, %v6021
  %v6127 = vmul.f32 %v6084, %v6022
  %v6128 = vmul.f32 %v6084, %v6023
  %v6129 = vmul.f32 %v6084, %v6024
  %v6130 = vmul.f32 %v6084, %v6025
  %v6131 = vmul.f32 %v6084, %v6026
  %v6132 = vmul.f32 %v6084, %v6027
  %v6133 = vmul.f32 %v6084, %v6028
  %v6134 = vmul.f32 %v6084, %v6029
  %v6135 = vmul.f32 %v6084, %v6030
  %v6136 = vmul.f32 %v6084, %v6031
  %v6137 = vmul.f32 %v6084, %v6032
  %v6138 = vmul.f32 %v6084, %v6033
  %v6139 = vmul.f32 %v6084, %v6034
  %v6140 = vmul.f32 %v6084, %v6035
  %v6141 = vmul.f32 %v6084, %v6036
  %v6142 = vmul.f32 %v6084, %v6037
  %v6143 = vmul.f32 %v6084, %v6038
  %v6144 = vmul.f32 %v6084, %v6039
  %v6145 = vmul.f32 %v6084, %v6040
  %v6146 = vmul.f32 %v6084, %v6041
  %v6147 = vmul.f32 %v6084, %v6042
  %v6148 = vmul.f32 %v6084, %v6043
  %v6149 = vmul.f32 %v6084, %v6044
  %v6150 = vmul.f32 %v6084, %v6045
  %v6151 = vmul.f32 %v6084, %v6046
  %v6152 = vmul.f32 %v6084, %v6047
  %v6153 = vmul.f32 %v6084, %v6048
  %v6154 = vmul.f32 %v6084, %v6049
  %v6155 = vmul.f32 %v6084, %v6050
  %v6156 = vmul.f32 %v6084, %v6051
  %v6157 = vmul.f32 %v6084, %v6052
  %v6158 = vmul.f32 %v6084, %v6053
  %v6159 = vmul.f32 %v6084, %v6054
  %v6160 = vmul.f32 %v6084, %v6055
  %v6161 = vmul.f32 %v6084, %v6056
  %v6162 = vmul.f32 %v6084, %v6057
  %v6163 = vmul.f32 %v6084, %v6058
  %v6164 = vmul.f32 %v6084, %v6059
  %v6165 = vmul.f32 %v6084, %v6060
  %v6166 = vmul.f32 %v6084, %v6061
  %v6167 = vmul.f32 %v6084, %v6062
  %v6168 = vmul.f32 %v6084, %v6063
  %v6169 = vmul.f32 %v6084, %v6064
  %v6170 = vmul.f32 %v6084, %v6065
  %v6171 = vmul.f32 %v6084, %v6066
  %v6172 = vmul.f32 %v6084, %v6067
  %v6173 = vmul.f32 %v6084, %v6068
  %v6174 = vmul.f32 %v6084, %v6069
  %v6175 = vmul.f32 %v6084, %v6070
  %v6176 = vmul.f32 %v6084, %v6071
  %v6177 = vmul.f32 %v6084, %v6072
  %v6178 = vmul.f32 %v6084, %v6073
  %v6179 = vmul.f32 %v6084, %v6074
  %v6180 = vmul.f32 %v6084, %v6075
  %v6181 = vmul.f32 %v6084, %v6076
  %v6182 = vmul.f32 %v6084, %v6077
  %v6183 = vmul.f32 %v6084, %v6078
  %v6184 = vmul.f32 %v6084, %v6079
  %v6185 = vadd.f32 %v5880, %v6085
  %v6186 = vadd.f32 %v5881, %v6086
  %v6187 = vadd.f32 %v5882, %v6087
  %v6188 = vadd.f32 %v5883, %v6088
  %v6189 = vadd.f32 %v5884, %v6089
  %v6190 = vadd.f32 %v5885, %v6090
  %v6191 = vadd.f32 %v5886, %v6091
  %v6192 = vadd.f32 %v5887, %v6092
  %v6193 = vadd.f32 %v5888, %v6093
  %v6194 = vadd.f32 %v5889, %v6094
  %v6195 = vadd.f32 %v5890, %v6095
  %v6196 = vadd.f32 %v5891, %v6096
  %v6197 = vadd.f32 %v5892, %v6097
  %v6198 = vadd.f32 %v5893, %v6098
  %v6199 = vadd.f32 %v5894, %v6099
  %v6200 = vadd.f32 %v5895, %v6100
  %v6201 = vadd.f32 %v5896, %v6101
  %v6202 = vadd.f32 %v5897, %v6102
  %v6203 = vadd.f32 %v5898, %v6103
  %v6204 = vadd.f32 %v5899, %v6104
  %v6205 = vadd.f32 %v5900, %v6105
  %v6206 = vadd.f32 %v5901, %v6106
  %v6207 = vadd.f32 %v5902, %v6107
  %v6208 = vadd.f32 %v5903, %v6108
  %v6209 = vadd.f32 %v5904, %v6109
  %v6210 = vadd.f32 %v5905, %v6110
  %v6211 = vadd.f32 %v5906, %v6111
  %v6212 = vadd.f32 %v5907, %v6112
  %v6213 = vadd.f32 %v5908, %v6113
  %v6214 = vadd.f32 %v5909, %v6114
  %v6215 = vadd.f32 %v5910, %v6115
  %v6216 = vadd.f32 %v5911, %v6116
  %v6217 = vadd.f32 %v5912, %v6117
  %v6218 = vadd.f32 %v5913, %v6118
  %v6219 = vadd.f32 %v5914, %v6119
  %v6220 = vadd.f32 %v5915, %v6120
  %v6221 = vadd.f32 %v5916, %v6121
  %v6222 = vadd.f32 %v5917, %v6122
  %v6223 = vadd.f32 %v5918, %v6123
  %v6224 = vadd.f32 %v5919, %v6124
  %v6225 = vadd.f32 %v5920, %v6125
  %v6226 = vadd.f32 %v5921, %v6126
  %v6227 = vadd.f32 %v5922, %v6127
  %v6228 = vadd.f32 %v5923, %v6128
  %v6229 = vadd.f32 %v5924, %v6129
  %v6230 = vadd.f32 %v5925, %v6130
  %v6231 = vadd.f32 %v5926, %v6131
  %v6232 = vadd.f32 %v5927, %v6132
  %v6233 = vadd.f32 %v5928, %v6133
  %v6234 = vadd.f32 %v5929, %v6134
  %v6235 = vadd.f32 %v5930, %v6135
  %v6236 = vadd.f32 %v5931, %v6136
  %v6237 = vadd.f32 %v5932, %v6137
  %v6238 = vadd.f32 %v5933, %v6138
  %v6239 = vadd.f32 %v5934, %v6139
  %v6240 = vadd.f32 %v5935, %v6140
  %v6241 = vadd.f32 %v5936, %v6141
  %v6242 = vadd.f32 %v5937, %v6142
  %v6243 = vadd.f32 %v5938, %v6143
  %v6244 = vadd.f32 %v5939, %v6144
  %v6245 = vadd.f32 %v5940, %v6145
  %v6246 = vadd.f32 %v5941, %v6146
  %v6247 = vadd.f32 %v5942, %v6147
  %v6248 = vadd.f32 %v5943, %v6148
  %v6249 = vadd.f32 %v5944, %v6149
  %v6250 = vadd.f32 %v5945, %v6150
  %v6251 = vadd.f32 %v5946, %v6151
  %v6252 = vadd.f32 %v5947, %v6152
  %v6253 = vadd.f32 %v5948, %v6153
  %v6254 = vadd.f32 %v5949, %v6154
  %v6255 = vadd.f32 %v5950, %v6155
  %v6256 = vadd.f32 %v5951, %v6156
  %v6257 = vadd.f32 %v5952, %v6157
  %v6258 = vadd.f32 %v5953, %v6158
  %v6259 = vadd.f32 %v5954, %v6159
  %v6260 = vadd.f32 %v5955, %v6160
  %v6261 = vadd.f32 %v5956, %v6161
  %v6262 = vadd.f32 %v5957, %v6162
  %v6263 = vadd.f32 %v5958, %v6163
  %v6264 = vadd.f32 %v5959, %v6164
  %v6265 = vadd.f32 %v5960, %v6165
  %v6266 = vadd.f32 %v5961, %v6166
  %v6267 = vadd.f32 %v5962, %v6167
  %v6268 = vadd.f32 %v5963, %v6168
  %v6269 = vadd.f32 %v5964, %v6169
  %v6270 = vadd.f32 %v5965, %v6170
  %v6271 = vadd.f32 %v5966, %v6171
  %v6272 = vadd.f32 %v5967, %v6172
  %v6273 = vadd.f32 %v5968, %v6173
  %v6274 = vadd.f32 %v5969, %v6174
  %v6275 = vadd.f32 %v5970, %v6175
  %v6276 = vadd.f32 %v5971, %v6176
  %v6277 = vadd.f32 %v5972, %v6177
  %v6278 = vadd.f32 %v5973, %v6178
  %v6279 = vadd.f32 %v5974, %v6179
  %v6280 = vadd.f32 %v5975, %v6180
  %v6281 = vadd.f32 %v5976, %v6181
  %v6282 = vadd.f32 %v5977, %v6182
  %v6283 = vadd.f32 %v5978, %v6183
  %v6284 = vadd.f32 %v5979, %v6184
  %v6285 = vld [vmem:[#allocation2 + $0x5] sm:$0xff]
  %v6286 = vld [vmem:[#allocation2 + $0xd] sm:$0xff]
  %v6287 = vld [vmem:[#allocation2 + $0x15] sm:$0xff]
  %v6288 = vld [vmem:[#allocation2 + $0x1d] sm:$0xff]
  %v6289 = vld [vmem:[#allocation2 + $0x25] sm:$0xff]
  %v6290 = vld [vmem:[#allocation2 + $0x2d] sm:$0xff]
  %v6291 = vld [vmem:[#allocation2 + $0x35] sm:$0xff]
  %v6292 = vld [vmem:[#allocation2 + $0x3d] sm:$0xff]
  %v6293 = vld [vmem:[#allocation2 + $0x45] sm:$0xff]
  %v6294 = vld [vmem:[#allocation2 + $0x4d] sm:$0xff]
  %v6295 = vld [vmem:[#allocation2 + $0x55] sm:$0xff]
  %v6296 = vld [vmem:[#allocation2 + $0x5d] sm:$0xff]
  %v6297 = vld [vmem:[#allocation2 + $0x65] sm:$0xff]
  %v6298 = vld [vmem:[#allocation2 + $0x6d] sm:$0xff]
  %v6299 = vld [vmem:[#allocation2 + $0x75] sm:$0xff]
  %v6300 = vld [vmem:[#allocation2 + $0x7d] sm:$0xff]
  %v6301 = vld [vmem:[#allocation2 + $0x85] sm:$0xff]
  %v6302 = vld [vmem:[#allocation2 + $0x8d] sm:$0xff]
  %v6303 = vld [vmem:[#allocation2 + $0x95] sm:$0xff]
  %v6304 = vld [vmem:[#allocation2 + $0x9d] sm:$0xff]
  %v6305 = vld [vmem:[#allocation2 + $0xa5] sm:$0xff]
  %v6306 = vld [vmem:[#allocation2 + $0xad] sm:$0xff]
  %v6307 = vld [vmem:[#allocation2 + $0xb5] sm:$0xff]
  %v6308 = vld [vmem:[#allocation2 + $0xbd] sm:$0xff]
  %v6309 = vld [vmem:[#allocation2 + $0xc5] sm:$0xff]
  %v6310 = vld [vmem:[#allocation2 + $0xcd] sm:$0xff]
  %v6311 = vld [vmem:[#allocation2 + $0xd5] sm:$0xff]
  %v6312 = vld [vmem:[#allocation2 + $0xdd] sm:$0xff]
  %v6313 = vld [vmem:[#allocation2 + $0xe5] sm:$0xff]
  %v6314 = vld [vmem:[#allocation2 + $0xed] sm:$0xff]
  %v6315 = vld [vmem:[#allocation2 + $0xf5] sm:$0xff]
  %v6316 = vld [vmem:[#allocation2 + $0xfd] sm:$0xff]
  %v6317 = vld [vmem:[#allocation2 + $0x105] sm:$0xff]
  %v6318 = vld [vmem:[#allocation2 + $0x10d] sm:$0xff]
  %v6319 = vld [vmem:[#allocation2 + $0x115] sm:$0xff]
  %v6320 = vld [vmem:[#allocation2 + $0x11d] sm:$0xff]
  %v6321 = vld [vmem:[#allocation2 + $0x125] sm:$0xff]
  %v6322 = vld [vmem:[#allocation2 + $0x12d] sm:$0xff]
  %v6323 = vld [vmem:[#allocation2 + $0x135] sm:$0xff]
  %v6324 = vld [vmem:[#allocation2 + $0x13d] sm:$0xff]
  %v6325 = vld [vmem:[#allocation2 + $0x145] sm:$0xff]
  %v6326 = vld [vmem:[#allocation2 + $0x14d] sm:$0xff]
  %v6327 = vld [vmem:[#allocation2 + $0x155] sm:$0xff]
  %v6328 = vld [vmem:[#allocation2 + $0x15d] sm:$0xff]
  %v6329 = vld [vmem:[#allocation2 + $0x165] sm:$0xff]
  %v6330 = vld [vmem:[#allocation2 + $0x16d] sm:$0xff]
  %v6331 = vld [vmem:[#allocation2 + $0x175] sm:$0xff]
  %v6332 = vld [vmem:[#allocation2 + $0x17d] sm:$0xff]
  %v6333 = vld [vmem:[#allocation2 + $0x185] sm:$0xff]
  %v6334 = vld [vmem:[#allocation2 + $0x18d] sm:$0xff]
  %v6335 = vld [vmem:[#allocation2 + $0x195] sm:$0xff]
  %v6336 = vld [vmem:[#allocation2 + $0x19d] sm:$0xff]
  %v6337 = vld [vmem:[#allocation2 + $0x1a5] sm:$0xff]
  %v6338 = vld [vmem:[#allocation2 + $0x1ad] sm:$0xff]
  %v6339 = vld [vmem:[#allocation2 + $0x1b5] sm:$0xff]
  %v6340 = vld [vmem:[#allocation2 + $0x1bd] sm:$0xff]
  %v6341 = vld [vmem:[#allocation2 + $0x1c5] sm:$0xff]
  %v6342 = vld [vmem:[#allocation2 + $0x1cd] sm:$0xff]
  %v6343 = vld [vmem:[#allocation2 + $0x1d5] sm:$0xff]
  %v6344 = vld [vmem:[#allocation2 + $0x1dd] sm:$0xff]
  %v6345 = vld [vmem:[#allocation2 + $0x1e5] sm:$0xff]
  %v6346 = vld [vmem:[#allocation2 + $0x1ed] sm:$0xff]
  %v6347 = vld [vmem:[#allocation2 + $0x1f5] sm:$0xff]
  %v6348 = vld [vmem:[#allocation2 + $0x1fd] sm:$0xff]
  %v6349 = vld [vmem:[#allocation2 + $0x205] sm:$0xff]
  %v6350 = vld [vmem:[#allocation2 + $0x20d] sm:$0xff]
  %v6351 = vld [vmem:[#allocation2 + $0x215] sm:$0xff]
  %v6352 = vld [vmem:[#allocation2 + $0x21d] sm:$0xff]
  %v6353 = vld [vmem:[#allocation2 + $0x225] sm:$0xff]
  %v6354 = vld [vmem:[#allocation2 + $0x22d] sm:$0xff]
  %v6355 = vld [vmem:[#allocation2 + $0x235] sm:$0xff]
  %v6356 = vld [vmem:[#allocation2 + $0x23d] sm:$0xff]
  %v6357 = vld [vmem:[#allocation2 + $0x245] sm:$0xff]
  %v6358 = vld [vmem:[#allocation2 + $0x24d] sm:$0xff]
  %v6359 = vld [vmem:[#allocation2 + $0x255] sm:$0xff]
  %v6360 = vld [vmem:[#allocation2 + $0x25d] sm:$0xff]
  %v6361 = vld [vmem:[#allocation2 + $0x265] sm:$0xff]
  %v6362 = vld [vmem:[#allocation2 + $0x26d] sm:$0xff]
  %v6363 = vld [vmem:[#allocation2 + $0x275] sm:$0xff]
  %v6364 = vld [vmem:[#allocation2 + $0x27d] sm:$0xff]
  %v6365 = vld [vmem:[#allocation2 + $0x285] sm:$0xff]
  %v6366 = vld [vmem:[#allocation2 + $0x28d] sm:$0xff]
  %v6367 = vld [vmem:[#allocation2 + $0x295] sm:$0xff]
  %v6368 = vld [vmem:[#allocation2 + $0x29d] sm:$0xff]
  %v6369 = vld [vmem:[#allocation2 + $0x2a5] sm:$0xff]
  %v6370 = vld [vmem:[#allocation2 + $0x2ad] sm:$0xff]
  %v6371 = vld [vmem:[#allocation2 + $0x2b5] sm:$0xff]
  %v6372 = vld [vmem:[#allocation2 + $0x2bd] sm:$0xff]
  %v6373 = vld [vmem:[#allocation2 + $0x2c5] sm:$0xff]
  %v6374 = vld [vmem:[#allocation2 + $0x2cd] sm:$0xff]
  %v6375 = vld [vmem:[#allocation2 + $0x2d5] sm:$0xff]
  %v6376 = vld [vmem:[#allocation2 + $0x2dd] sm:$0xff]
  %v6377 = vld [vmem:[#allocation2 + $0x2e5] sm:$0xff]
  %v6378 = vld [vmem:[#allocation2 + $0x2ed] sm:$0xff]
  %v6379 = vld [vmem:[#allocation2 + $0x2f5] sm:$0xff]
  %v6380 = vld [vmem:[#allocation2 + $0x2fd] sm:$0xff]
  %v6381 = vld [vmem:[#allocation2 + $0x305] sm:$0xff]
  %v6382 = vld [vmem:[#allocation2 + $0x30d] sm:$0xff]
  %v6383 = vld [vmem:[#allocation2 + $0x315] sm:$0xff]
  %v6384 = vld [vmem:[#allocation2 + $0x31d] sm:$0xff]
  %v6385 = vld [vmem:[%s3 + $0x2] sm:$0x1]
  %v6386 = vlaneseq
  %v6387 = vshrl.u32 %v6386, 7
  %v6388 = vsub.s32 0, %v6387
  %v6389 = vrot.slane %v6385, %v6388
  %v6390 = vmul.f32 %v6389, %v6285
  %v6391 = vmul.f32 %v6389, %v6286
  %v6392 = vmul.f32 %v6389, %v6287
  %v6393 = vmul.f32 %v6389, %v6288
  %v6394 = vmul.f32 %v6389, %v6289
  %v6395 = vmul.f32 %v6389, %v6290
  %v6396 = vmul.f32 %v6389, %v6291
  %v6397 = vmul.f32 %v6389, %v6292
  %v6398 = vmul.f32 %v6389, %v6293
  %v6399 = vmul.f32 %v6389, %v6294
  %v6400 = vmul.f32 %v6389, %v6295
  %v6401 = vmul.f32 %v6389, %v6296
  %v6402 = vmul.f32 %v6389, %v6297
  %v6403 = vmul.f32 %v6389, %v6298
  %v6404 = vmul.f32 %v6389, %v6299
  %v6405 = vmul.f32 %v6389, %v6300
  %v6406 = vmul.f32 %v6389, %v6301
  %v6407 = vmul.f32 %v6389, %v6302
  %v6408 = vmul.f32 %v6389, %v6303
  %v6409 = vmul.f32 %v6389, %v6304
  %v6410 = vmul.f32 %v6389, %v6305
  %v6411 = vmul.f32 %v6389, %v6306
  %v6412 = vmul.f32 %v6389, %v6307
  %v6413 = vmul.f32 %v6389, %v6308
  %v6414 = vmul.f32 %v6389, %v6309
  %v6415 = vmul.f32 %v6389, %v6310
  %v6416 = vmul.f32 %v6389, %v6311
  %v6417 = vmul.f32 %v6389, %v6312
  %v6418 = vmul.f32 %v6389, %v6313
  %v6419 = vmul.f32 %v6389, %v6314
  %v6420 = vmul.f32 %v6389, %v6315
  %v6421 = vmul.f32 %v6389, %v6316
  %v6422 = vmul.f32 %v6389, %v6317
  %v6423 = vmul.f32 %v6389, %v6318
  %v6424 = vmul.f32 %v6389, %v6319
  %v6425 = vmul.f32 %v6389, %v6320
  %v6426 = vmul.f32 %v6389, %v6321
  %v6427 = vmul.f32 %v6389, %v6322
  %v6428 = vmul.f32 %v6389, %v6323
  %v6429 = vmul.f32 %v6389, %v6324
  %v6430 = vmul.f32 %v6389, %v6325
  %v6431 = vmul.f32 %v6389, %v6326
  %v6432 = vmul.f32 %v6389, %v6327
  %v6433 = vmul.f32 %v6389, %v6328
  %v6434 = vmul.f32 %v6389, %v6329
  %v6435 = vmul.f32 %v6389, %v6330
  %v6436 = vmul.f32 %v6389, %v6331
  %v6437 = vmul.f32 %v6389, %v6332
  %v6438 = vmul.f32 %v6389, %v6333
  %v6439 = vmul.f32 %v6389, %v6334
  %v6440 = vmul.f32 %v6389, %v6335
  %v6441 = vmul.f32 %v6389, %v6336
  %v6442 = vmul.f32 %v6389, %v6337
  %v6443 = vmul.f32 %v6389, %v6338
  %v6444 = vmul.f32 %v6389, %v6339
  %v6445 = vmul.f32 %v6389, %v6340
  %v6446 = vmul.f32 %v6389, %v6341
  %v6447 = vmul.f32 %v6389, %v6342
  %v6448 = vmul.f32 %v6389, %v6343
  %v6449 = vmul.f32 %v6389, %v6344
  %v6450 = vmul.f32 %v6389, %v6345
  %v6451 = vmul.f32 %v6389, %v6346
  %v6452 = vmul.f32 %v6389, %v6347
  %v6453 = vmul.f32 %v6389, %v6348
  %v6454 = vmul.f32 %v6389, %v6349
  %v6455 = vmul.f32 %v6389, %v6350
  %v6456 = vmul.f32 %v6389, %v6351
  %v6457 = vmul.f32 %v6389, %v6352
  %v6458 = vmul.f32 %v6389, %v6353
  %v6459 = vmul.f32 %v6389, %v6354
  %v6460 = vmul.f32 %v6389, %v6355
  %v6461 = vmul.f32 %v6389, %v6356
  %v6462 = vmul.f32 %v6389, %v6357
  %v6463 = vmul.f32 %v6389, %v6358
  %v6464 = vmul.f32 %v6389, %v6359
  %v6465 = vmul.f32 %v6389, %v6360
  %v6466 = vmul.f32 %v6389, %v6361
  %v6467 = vmul.f32 %v6389, %v6362
  %v6468 = vmul.f32 %v6389, %v6363
  %v6469 = vmul.f32 %v6389, %v6364
  %v6470 = vmul.f32 %v6389, %v6365
  %v6471 = vmul.f32 %v6389, %v6366
  %v6472 = vmul.f32 %v6389, %v6367
  %v6473 = vmul.f32 %v6389, %v6368
  %v6474 = vmul.f32 %v6389, %v6369
  %v6475 = vmul.f32 %v6389, %v6370
  %v6476 = vmul.f32 %v6389, %v6371
  %v6477 = vmul.f32 %v6389, %v6372
  %v6478 = vmul.f32 %v6389, %v6373
  %v6479 = vmul.f32 %v6389, %v6374
  %v6480 = vmul.f32 %v6389, %v6375
  %v6481 = vmul.f32 %v6389, %v6376
  %v6482 = vmul.f32 %v6389, %v6377
  %v6483 = vmul.f32 %v6389, %v6378
  %v6484 = vmul.f32 %v6389, %v6379
  %v6485 = vmul.f32 %v6389, %v6380
  %v6486 = vmul.f32 %v6389, %v6381
  %v6487 = vmul.f32 %v6389, %v6382
  %v6488 = vmul.f32 %v6389, %v6383
  %v6489 = vmul.f32 %v6389, %v6384
  %v6490 = vadd.f32 %v6185, %v6390
  %v6491 = vadd.f32 %v6186, %v6391
  %v6492 = vadd.f32 %v6187, %v6392
  %v6493 = vadd.f32 %v6188, %v6393
  %v6494 = vadd.f32 %v6189, %v6394
  %v6495 = vadd.f32 %v6190, %v6395
  %v6496 = vadd.f32 %v6191, %v6396
  %v6497 = vadd.f32 %v6192, %v6397
  %v6498 = vadd.f32 %v6193, %v6398
  %v6499 = vadd.f32 %v6194, %v6399
  %v6500 = vadd.f32 %v6195, %v6400
  %v6501 = vadd.f32 %v6196, %v6401
  %v6502 = vadd.f32 %v6197, %v6402
  %v6503 = vadd.f32 %v6198, %v6403
  %v6504 = vadd.f32 %v6199, %v6404
  %v6505 = vadd.f32 %v6200, %v6405
  %v6506 = vadd.f32 %v6201, %v6406
  %v6507 = vadd.f32 %v6202, %v6407
  %v6508 = vadd.f32 %v6203, %v6408
  %v6509 = vadd.f32 %v6204, %v6409
  %v6510 = vadd.f32 %v6205, %v6410
  %v6511 = vadd.f32 %v6206, %v6411
  %v6512 = vadd.f32 %v6207, %v6412
  %v6513 = vadd.f32 %v6208, %v6413
  %v6514 = vadd.f32 %v6209, %v6414
  %v6515 = vadd.f32 %v6210, %v6415
  %v6516 = vadd.f32 %v6211, %v6416
  %v6517 = vadd.f32 %v6212, %v6417
  %v6518 = vadd.f32 %v6213, %v6418
  %v6519 = vadd.f32 %v6214, %v6419
  %v6520 = vadd.f32 %v6215, %v6420
  %v6521 = vadd.f32 %v6216, %v6421
  %v6522 = vadd.f32 %v6217, %v6422
  %v6523 = vadd.f32 %v6218, %v6423
  %v6524 = vadd.f32 %v6219, %v6424
  %v6525 = vadd.f32 %v6220, %v6425
  %v6526 = vadd.f32 %v6221, %v6426
  %v6527 = vadd.f32 %v6222, %v6427
  %v6528 = vadd.f32 %v6223, %v6428
  %v6529 = vadd.f32 %v6224, %v6429
  %v6530 = vadd.f32 %v6225, %v6430
  %v6531 = vadd.f32 %v6226, %v6431
  %v6532 = vadd.f32 %v6227, %v6432
  %v6533 = vadd.f32 %v6228, %v6433
  %v6534 = vadd.f32 %v6229, %v6434
  %v6535 = vadd.f32 %v6230, %v6435
  %v6536 = vadd.f32 %v6231, %v6436
  %v6537 = vadd.f32 %v6232, %v6437
  %v6538 = vadd.f32 %v6233, %v6438
  %v6539 = vadd.f32 %v6234, %v6439
  %v6540 = vadd.f32 %v6235, %v6440
  %v6541 = vadd.f32 %v6236, %v6441
  %v6542 = vadd.f32 %v6237, %v6442
  %v6543 = vadd.f32 %v6238, %v6443
  %v6544 = vadd.f32 %v6239, %v6444
  %v6545 = vadd.f32 %v6240, %v6445
  %v6546 = vadd.f32 %v6241, %v6446
  %v6547 = vadd.f32 %v6242, %v6447
  %v6548 = vadd.f32 %v6243, %v6448
  %v6549 = vadd.f32 %v6244, %v6449
  %v6550 = vadd.f32 %v6245, %v6450
  %v6551 = vadd.f32 %v6246, %v6451
  %v6552 = vadd.f32 %v6247, %v6452
  %v6553 = vadd.f32 %v6248, %v6453
  %v6554 = vadd.f32 %v6249, %v6454
  %v6555 = vadd.f32 %v6250, %v6455
  %v6556 = vadd.f32 %v6251, %v6456
  %v6557 = vadd.f32 %v6252, %v6457
  %v6558 = vadd.f32 %v6253, %v6458
  %v6559 = vadd.f32 %v6254, %v6459
  %v6560 = vadd.f32 %v6255, %v6460
  %v6561 = vadd.f32 %v6256, %v6461
  %v6562 = vadd.f32 %v6257, %v6462
  %v6563 = vadd.f32 %v6258, %v6463
  %v6564 = vadd.f32 %v6259, %v6464
  %v6565 = vadd.f32 %v6260, %v6465
  %v6566 = vadd.f32 %v6261, %v6466
  %v6567 = vadd.f32 %v6262, %v6467
  %v6568 = vadd.f32 %v6263, %v6468
  %v6569 = vadd.f32 %v6264, %v6469
  %v6570 = vadd.f32 %v6265, %v6470
  %v6571 = vadd.f32 %v6266, %v6471
  %v6572 = vadd.f32 %v6267, %v6472
  %v6573 = vadd.f32 %v6268, %v6473
  %v6574 = vadd.f32 %v6269, %v6474
  %v6575 = vadd.f32 %v6270, %v6475
  %v6576 = vadd.f32 %v6271, %v6476
  %v6577 = vadd.f32 %v6272, %v6477
  %v6578 = vadd.f32 %v6273, %v6478
  %v6579 = vadd.f32 %v6274, %v6479
  %v6580 = vadd.f32 %v6275, %v6480
  %v6581 = vadd.f32 %v6276, %v6481
  %v6582 = vadd.f32 %v6277, %v6482
  %v6583 = vadd.f32 %v6278, %v6483
  %v6584 = vadd.f32 %v6279, %v6484
  %v6585 = vadd.f32 %v6280, %v6485
  %v6586 = vadd.f32 %v6281, %v6486
  %v6587 = vadd.f32 %v6282, %v6487
  %v6588 = vadd.f32 %v6283, %v6488
  %v6589 = vadd.f32 %v6284, %v6489
  %v6590 = vld [vmem:[#allocation2 + $0x17] sm:$0xff]
  %v6591 = vld [vmem:[#allocation2 + $0x1f] sm:$0xff]
  %v6592 = vld [vmem:[#allocation2 + $0x27] sm:$0xff]
  %v6593 = vld [vmem:[#allocation2 + $0x2f] sm:$0xff]
  %v6594 = vld [vmem:[#allocation2 + $0x37] sm:$0xff]
  %v6595 = vld [vmem:[#allocation2 + $0x3f] sm:$0xff]
  %v6596 = vld [vmem:[#allocation2 + $0x47] sm:$0xff]
  %v6597 = vld [vmem:[#allocation2 + $0x4f] sm:$0xff]
  %v6598 = vld [vmem:[#allocation2 + $0x57] sm:$0xff]
  %v6599 = vld [vmem:[#allocation2 + $0x5f] sm:$0xff]
  %v6600 = vld [vmem:[#allocation2 + $0x67] sm:$0xff]
  %v6601 = vld [vmem:[#allocation2 + $0x6f] sm:$0xff]
  %v6602 = vld [vmem:[#allocation2 + $0x77] sm:$0xff]
  %v6603 = vld [vmem:[#allocation2 + $0x7f] sm:$0xff]
  %v6604 = vld [vmem:[#allocation2 + $0x87] sm:$0xff]
  %v6605 = vld [vmem:[#allocation2 + $0x8f] sm:$0xff]
  %v6606 = vld [vmem:[#allocation2 + $0x97] sm:$0xff]
  %v6607 = vld [vmem:[#allocation2 + $0x9f] sm:$0xff]
  %v6608 = vld [vmem:[#allocation2 + $0xa7] sm:$0xff]
  %v6609 = vld [vmem:[#allocation2 + $0xaf] sm:$0xff]
  %v6610 = vld [vmem:[#allocation2 + $0xb7] sm:$0xff]
  %v6611 = vld [vmem:[#allocation2 + $0xbf] sm:$0xff]
  %v6612 = vld [vmem:[#allocation2 + $0xc7] sm:$0xff]
  %v6613 = vld [vmem:[#allocation2 + $0xcf] sm:$0xff]
  %v6614 = vld [vmem:[#allocation2 + $0xd7] sm:$0xff]
  %v6615 = vld [vmem:[#allocation2 + $0xdf] sm:$0xff]
  %v6616 = vld [vmem:[#allocation2 + $0xe7] sm:$0xff]
  %v6617 = vld [vmem:[#allocation2 + $0xef] sm:$0xff]
  %v6618 = vld [vmem:[#allocation2 + $0xf7] sm:$0xff]
  %v6619 = vld [vmem:[#allocation2 + $0xff] sm:$0xff]
  %v6620 = vld [vmem:[#allocation2 + $0x107] sm:$0xff]
  %v6621 = vld [vmem:[#allocation2 + $0x10f] sm:$0xff]
  %v6622 = vld [vmem:[#allocation2 + $0x117] sm:$0xff]
  %v6623 = vld [vmem:[#allocation2 + $0x11f] sm:$0xff]
  %v6624 = vld [vmem:[#allocation2 + $0x127] sm:$0xff]
  %v6625 = vld [vmem:[#allocation2 + $0x12f] sm:$0xff]
  %v6626 = vld [vmem:[#allocation2 + $0x137] sm:$0xff]
  %v6627 = vld [vmem:[#allocation2 + $0x13f] sm:$0xff]
  %v6628 = vld [vmem:[#allocation2 + $0x147] sm:$0xff]
  %v6629 = vld [vmem:[#allocation2 + $0x14f] sm:$0xff]
  %v6630 = vld [vmem:[#allocation2 + $0x157] sm:$0xff]
  %v6631 = vld [vmem:[#allocation2 + $0x15f] sm:$0xff]
  %v6632 = vld [vmem:[#allocation2 + $0x167] sm:$0xff]
  %v6633 = vld [vmem:[#allocation2 + $0x16f] sm:$0xff]
  %v6634 = vld [vmem:[#allocation2 + $0x177] sm:$0xff]
  %v6635 = vld [vmem:[#allocation2 + $0x17f] sm:$0xff]
  %v6636 = vld [vmem:[#allocation2 + $0x187] sm:$0xff]
  %v6637 = vld [vmem:[#allocation2 + $0x18f] sm:$0xff]
  %v6638 = vld [vmem:[#allocation2 + $0x197] sm:$0xff]
  %v6639 = vld [vmem:[#allocation2 + $0x19f] sm:$0xff]
  %v6640 = vld [vmem:[#allocation2 + $0x1a7] sm:$0xff]
  %v6641 = vld [vmem:[#allocation2 + $0x1af] sm:$0xff]
  %v6642 = vld [vmem:[#allocation2 + $0x1b7] sm:$0xff]
  %v6643 = vld [vmem:[#allocation2 + $0x1bf] sm:$0xff]
  %v6644 = vld [vmem:[#allocation2 + $0x1c7] sm:$0xff]
  %v6645 = vld [vmem:[#allocation2 + $0x1cf] sm:$0xff]
  %v6646 = vld [vmem:[#allocation2 + $0x1d7] sm:$0xff]
  %v6647 = vld [vmem:[#allocation2 + $0x1df] sm:$0xff]
  %v6648 = vld [vmem:[#allocation2 + $0x1e7] sm:$0xff]
  %v6649 = vld [vmem:[#allocation2 + $0x1ef] sm:$0xff]
  %v6650 = vld [vmem:[#allocation2 + $0x1f7] sm:$0xff]
  %v6651 = vld [vmem:[#allocation2 + $0x1ff] sm:$0xff]
  %v6652 = vld [vmem:[#allocation2 + $0x207] sm:$0xff]
  %v6653 = vld [vmem:[#allocation2 + $0x20f] sm:$0xff]
  %v6654 = vld [vmem:[#allocation2 + $0x217] sm:$0xff]
  %v6655 = vld [vmem:[#allocation2 + $0x21f] sm:$0xff]
  %v6656 = vld [vmem:[#allocation2 + $0x227] sm:$0xff]
  %v6657 = vld [vmem:[#allocation2 + $0x22f] sm:$0xff]
  %v6658 = vld [vmem:[#allocation2 + $0x237] sm:$0xff]
  %v6659 = vld [vmem:[#allocation2 + $0x23f] sm:$0xff]
  %v6660 = vld [vmem:[#allocation2 + $0x247] sm:$0xff]
  %v6661 = vld [vmem:[#allocation2 + $0x24f] sm:$0xff]
  %v6662 = vld [vmem:[#allocation2 + $0x257] sm:$0xff]
  %v6663 = vld [vmem:[#allocation2 + $0x25f] sm:$0xff]
  %v6664 = vld [vmem:[#allocation2 + $0x267] sm:$0xff]
  %v6665 = vld [vmem:[#allocation2 + $0x26f] sm:$0xff]
  %v6666 = vld [vmem:[#allocation2 + $0x277] sm:$0xff]
  %v6667 = vld [vmem:[#allocation2 + $0x27f] sm:$0xff]
  %v6668 = vld [vmem:[#allocation2 + $0x287] sm:$0xff]
  %v6669 = vld [vmem:[#allocation2 + $0x28f] sm:$0xff]
  %v6670 = vld [vmem:[#allocation2 + $0x297] sm:$0xff]
  %v6671 = vld [vmem:[#allocation2 + $0x29f] sm:$0xff]
  %v6672 = vld [vmem:[#allocation2 + $0x2a7] sm:$0xff]
  %v6673 = vld [vmem:[#allocation2 + $0x2af] sm:$0xff]
  %v6674 = vld [vmem:[#allocation2 + $0x2b7] sm:$0xff]
  %v6675 = vld [vmem:[#allocation2 + $0x2bf] sm:$0xff]
  %v6676 = vld [vmem:[#allocation2 + $0x2c7] sm:$0xff]
  %v6677 = vld [vmem:[#allocation2 + $0x2cf] sm:$0xff]
  %v6678 = vld [vmem:[#allocation2 + $0x2d7] sm:$0xff]
  %v6679 = vld [vmem:[#allocation2 + $0x2df] sm:$0xff]
  %v6680 = vld [vmem:[#allocation2 + $0x2e7] sm:$0xff]
  %v6681 = vld [vmem:[#allocation2 + $0x2ef] sm:$0xff]
  %v6682 = vld [vmem:[#allocation2 + $0x2f7] sm:$0xff]
  %v6683 = vld [vmem:[#allocation2 + $0x2ff] sm:$0xff]
  %v6684 = vld [vmem:[#allocation2 + $0x307] sm:$0xff]
  %v6685 = vld [vmem:[#allocation2 + $0x30f] sm:$0xff]
  %v6686 = vld [vmem:[#allocation2 + $0x317] sm:$0xff]
  %v6687 = vld [vmem:[#allocation2 + $0x31f] sm:$0xff]
  %v6688 = vld [vmem:[#allocation2 + $0x327] sm:$0xff]
  %v6689 = vld [vmem:[#allocation2 + $0x32f] sm:$0xff]
  %v6690 = vld [vmem:[%s3 + $0x3] sm:$0x1]
  %v6691 = vlaneseq
  %v6692 = vshrl.u32 %v6691, 7
  %v6693 = vsub.s32 0, %v6692
  %v6694 = vrot.slane %v6690, %v6693
  %v6695 = vmul.f32 %v6694, %v6590
  %v6696 = vmul.f32 %v6694, %v6591
  %v6697 = vmul.f32 %v6694, %v6592
  %v6698 = vmul.f32 %v6694, %v6593
  %v6699 = vmul.f32 %v6694, %v6594
  %v6700 = vmul.f32 %v6694, %v6595
  %v6701 = vmul.f32 %v6694, %v6596
  %v6702 = vmul.f32 %v6694, %v6597
  %v6703 = vmul.f32 %v6694, %v6598
  %v6704 = vmul.f32 %v6694, %v6599
  %v6705 = vmul.f32 %v6694, %v6600
  %v6706 = vmul.f32 %v6694, %v6601
  %v6707 = vmul.f32 %v6694, %v6602
  %v6708 = vmul.f32 %v6694, %v6603
  %v6709 = vmul.f32 %v6694, %v6604
  %v6710 = vmul.f32 %v6694, %v6605
  %v6711 = vmul.f32 %v6694, %v6606
  %v6712 = vmul.f32 %v6694, %v6607
  %v6713 = vmul.f32 %v6694, %v6608
  %v6714 = vmul.f32 %v6694, %v6609
  %v6715 = vmul.f32 %v6694, %v6610
  %v6716 = vmul.f32 %v6694, %v6611
  %v6717 = vmul.f32 %v6694, %v6612
  %v6718 = vmul.f32 %v6694, %v6613
  %v6719 = vmul.f32 %v6694, %v6614
  %v6720 = vmul.f32 %v6694, %v6615
  %v6721 = vmul.f32 %v6694, %v6616
  %v6722 = vmul.f32 %v6694, %v6617
  %v6723 = vmul.f32 %v6694, %v6618
  %v6724 = vmul.f32 %v6694, %v6619
  %v6725 = vmul.f32 %v6694, %v6620
  %v6726 = vmul.f32 %v6694, %v6621
  %v6727 = vmul.f32 %v6694, %v6622
  %v6728 = vmul.f32 %v6694, %v6623
  %v6729 = vmul.f32 %v6694, %v6624
  %v6730 = vmul.f32 %v6694, %v6625
  %v6731 = vmul.f32 %v6694, %v6626
  %v6732 = vmul.f32 %v6694, %v6627
  %v6733 = vmul.f32 %v6694, %v6628
  %v6734 = vmul.f32 %v6694, %v6629
  %v6735 = vmul.f32 %v6694, %v6630
  %v6736 = vmul.f32 %v6694, %v6631
  %v6737 = vmul.f32 %v6694, %v6632
  %v6738 = vmul.f32 %v6694, %v6633
  %v6739 = vmul.f32 %v6694, %v6634
  %v6740 = vmul.f32 %v6694, %v6635
  %v6741 = vmul.f32 %v6694, %v6636
  %v6742 = vmul.f32 %v6694, %v6637
  %v6743 = vmul.f32 %v6694, %v6638
  %v6744 = vmul.f32 %v6694, %v6639
  %v6745 = vmul.f32 %v6694, %v6640
  %v6746 = vmul.f32 %v6694, %v6641
  %v6747 = vmul.f32 %v6694, %v6642
  %v6748 = vmul.f32 %v6694, %v6643
  %v6749 = vmul.f32 %v6694, %v6644
  %v6750 = vmul.f32 %v6694, %v6645
  %v6751 = vmul.f32 %v6694, %v6646
  %v6752 = vmul.f32 %v6694, %v6647
  %v6753 = vmul.f32 %v6694, %v6648
  %v6754 = vmul.f32 %v6694, %v6649
  %v6755 = vmul.f32 %v6694, %v6650
  %v6756 = vmul.f32 %v6694, %v6651
  %v6757 = vmul.f32 %v6694, %v6652
  %v6758 = vmul.f32 %v6694, %v6653
  %v6759 = vmul.f32 %v6694, %v6654
  %v6760 = vmul.f32 %v6694, %v6655
  %v6761 = vmul.f32 %v6694, %v6656
  %v6762 = vmul.f32 %v6694, %v6657
  %v6763 = vmul.f32 %v6694, %v6658
  %v6764 = vmul.f32 %v6694, %v6659
  %v6765 = vmul.f32 %v6694, %v6660
  %v6766 = vmul.f32 %v6694, %v6661
  %v6767 = vmul.f32 %v6694, %v6662
  %v6768 = vmul.f32 %v6694, %v6663
  %v6769 = vmul.f32 %v6694, %v6664
  %v6770 = vmul.f32 %v6694, %v6665
  %v6771 = vmul.f32 %v6694, %v6666
  %v6772 = vmul.f32 %v6694, %v6667
  %v6773 = vmul.f32 %v6694, %v6668
  %v6774 = vmul.f32 %v6694, %v6669
  %v6775 = vmul.f32 %v6694, %v6670
  %v6776 = vmul.f32 %v6694, %v6671
  %v6777 = vmul.f32 %v6694, %v6672
  %v6778 = vmul.f32 %v6694, %v6673
  %v6779 = vmul.f32 %v6694, %v6674
  %v6780 = vmul.f32 %v6694, %v6675
  %v6781 = vmul.f32 %v6694, %v6676
  %v6782 = vmul.f32 %v6694, %v6677
  %v6783 = vmul.f32 %v6694, %v6678
  %v6784 = vmul.f32 %v6694, %v6679
  %v6785 = vmul.f32 %v6694, %v6680
  %v6786 = vmul.f32 %v6694, %v6681
  %v6787 = vmul.f32 %v6694, %v6682
  %v6788 = vmul.f32 %v6694, %v6683
  %v6789 = vmul.f32 %v6694, %v6684
  %v6790 = vmul.f32 %v6694, %v6685
  %v6791 = vmul.f32 %v6694, %v6686
  %v6792 = vmul.f32 %v6694, %v6687
  %v6793 = vmul.f32 %v6694, %v6688
  %v6794 = vmul.f32 %v6694, %v6689
  %v6795 = vadd.f32 %v6490, %v6695
  %v6796 = vadd.f32 %v6491, %v6696
  %v6797 = vadd.f32 %v6492, %v6697
  %v6798 = vadd.f32 %v6493, %v6698
  %v6799 = vadd.f32 %v6494, %v6699
  %v6800 = vadd.f32 %v6495, %v6700
  %v6801 = vadd.f32 %v6496, %v6701
  %v6802 = vadd.f32 %v6497, %v6702
  %v6803 = vadd.f32 %v6498, %v6703
  %v6804 = vadd.f32 %v6499, %v6704
  %v6805 = vadd.f32 %v6500, %v6705
  %v6806 = vadd.f32 %v6501, %v6706
  %v6807 = vadd.f32 %v6502, %v6707
  %v6808 = vadd.f32 %v6503, %v6708
  %v6809 = vadd.f32 %v6504, %v6709
  %v6810 = vadd.f32 %v6505, %v6710
  %v6811 = vadd.f32 %v6506, %v6711
  %v6812 = vadd.f32 %v6507, %v6712
  %v6813 = vadd.f32 %v6508, %v6713
  %v6814 = vadd.f32 %v6509, %v6714
  %v6815 = vadd.f32 %v6510, %v6715
  %v6816 = vadd.f32 %v6511, %v6716
  %v6817 = vadd.f32 %v6512, %v6717
  %v6818 = vadd.f32 %v6513, %v6718
  %v6819 = vadd.f32 %v6514, %v6719
  %v6820 = vadd.f32 %v6515, %v6720
  %v6821 = vadd.f32 %v6516, %v6721
  %v6822 = vadd.f32 %v6517, %v6722
  %v6823 = vadd.f32 %v6518, %v6723
  %v6824 = vadd.f32 %v6519, %v6724
  %v6825 = vadd.f32 %v6520, %v6725
  %v6826 = vadd.f32 %v6521, %v6726
  %v6827 = vadd.f32 %v6522, %v6727
  %v6828 = vadd.f32 %v6523, %v6728
  %v6829 = vadd.f32 %v6524, %v6729
  %v6830 = vadd.f32 %v6525, %v6730
  %v6831 = vadd.f32 %v6526, %v6731
  %v6832 = vadd.f32 %v6527, %v6732
  %v6833 = vadd.f32 %v6528, %v6733
  %v6834 = vadd.f32 %v6529, %v6734
  %v6835 = vadd.f32 %v6530, %v6735
  %v6836 = vadd.f32 %v6531, %v6736
  %v6837 = vadd.f32 %v6532, %v6737
  %v6838 = vadd.f32 %v6533, %v6738
  %v6839 = vadd.f32 %v6534, %v6739
  %v6840 = vadd.f32 %v6535, %v6740
  %v6841 = vadd.f32 %v6536, %v6741
  %v6842 = vadd.f32 %v6537, %v6742
  %v6843 = vadd.f32 %v6538, %v6743
  %v6844 = vadd.f32 %v6539, %v6744
  %v6845 = vadd.f32 %v6540, %v6745
  %v6846 = vadd.f32 %v6541, %v6746
  %v6847 = vadd.f32 %v6542, %v6747
  %v6848 = vadd.f32 %v6543, %v6748
  %v6849 = vadd.f32 %v6544, %v6749
  %v6850 = vadd.f32 %v6545, %v6750
  %v6851 = vadd.f32 %v6546, %v6751
  %v6852 = vadd.f32 %v6547, %v6752
  %v6853 = vadd.f32 %v6548, %v6753
  %v6854 = vadd.f32 %v6549, %v6754
  %v6855 = vadd.f32 %v6550, %v6755
  %v6856 = vadd.f32 %v6551, %v6756
  %v6857 = vadd.f32 %v6552, %v6757
  %v6858 = vadd.f32 %v6553, %v6758
  %v6859 = vadd.f32 %v6554, %v6759
  %v6860 = vadd.f32 %v6555, %v6760
  %v6861 = vadd.f32 %v6556, %v6761
  %v6862 = vadd.f32 %v6557, %v6762
  %v6863 = vadd.f32 %v6558, %v6763
  %v6864 = vadd.f32 %v6559, %v6764
  %v6865 = vadd.f32 %v6560, %v6765
  %v6866 = vadd.f32 %v6561, %v6766
  %v6867 = vadd.f32 %v6562, %v6767
  %v6868 = vadd.f32 %v6563, %v6768
  %v6869 = vadd.f32 %v6564, %v6769
  %v6870 = vadd.f32 %v6565, %v6770
  %v6871 = vadd.f32 %v6566, %v6771
  %v6872 = vadd.f32 %v6567, %v6772
  %v6873 = vadd.f32 %v6568, %v6773
  %v6874 = vadd.f32 %v6569, %v6774
  %v6875 = vadd.f32 %v6570, %v6775
  %v6876 = vadd.f32 %v6571, %v6776
  %v6877 = vadd.f32 %v6572, %v6777
  %v6878 = vadd.f32 %v6573, %v6778
  %v6879 = vadd.f32 %v6574, %v6779
  %v6880 = vadd.f32 %v6575, %v6780
  %v6881 = vadd.f32 %v6576, %v6781
  %v6882 = vadd.f32 %v6577, %v6782
  %v6883 = vadd.f32 %v6578, %v6783
  %v6884 = vadd.f32 %v6579, %v6784
  %v6885 = vadd.f32 %v6580, %v6785
  %v6886 = vadd.f32 %v6581, %v6786
  %v6887 = vadd.f32 %v6582, %v6787
  %v6888 = vadd.f32 %v6583, %v6788
  %v6889 = vadd.f32 %v6584, %v6789
  %v6890 = vadd.f32 %v6585, %v6790
  %v6891 = vadd.f32 %v6586, %v6791
  %v6892 = vadd.f32 %v6587, %v6792
  %v6893 = vadd.f32 %v6588, %v6793
  %v6894 = vadd.f32 %v6589, %v6794
  %v6895 = vld [vmem:[#allocation2 + $0x18] sm:$0xff]
  %v6896 = vld [vmem:[#allocation2 + $0x20] sm:$0xff]
  %v6897 = vld [vmem:[#allocation2 + $0x28] sm:$0xff]
  %v6898 = vld [vmem:[#allocation2 + $0x30] sm:$0xff]
  %v6899 = vld [vmem:[#allocation2 + $0x38] sm:$0xff]
  %v6900 = vld [vmem:[#allocation2 + $0x40] sm:$0xff]
  %v6901 = vld [vmem:[#allocation2 + $0x48] sm:$0xff]
  %v6902 = vld [vmem:[#allocation2 + $0x50] sm:$0xff]
  %v6903 = vld [vmem:[#allocation2 + $0x58] sm:$0xff]
  %v6904 = vld [vmem:[#allocation2 + $0x60] sm:$0xff]
  %v6905 = vld [vmem:[#allocation2 + $0x68] sm:$0xff]
  %v6906 = vld [vmem:[#allocation2 + $0x70] sm:$0xff]
  %v6907 = vld [vmem:[#allocation2 + $0x78] sm:$0xff]
  %v6908 = vld [vmem:[#allocation2 + $0x80] sm:$0xff]
  %v6909 = vld [vmem:[#allocation2 + $0x88] sm:$0xff]
  %v6910 = vld [vmem:[#allocation2 + $0x90] sm:$0xff]
  %v6911 = vld [vmem:[#allocation2 + $0x98] sm:$0xff]
  %v6912 = vld [vmem:[#allocation2 + $0xa0] sm:$0xff]
  %v6913 = vld [vmem:[#allocation2 + $0xa8] sm:$0xff]
  %v6914 = vld [vmem:[#allocation2 + $0xb0] sm:$0xff]
  %v6915 = vld [vmem:[#allocation2 + $0xb8] sm:$0xff]
  %v6916 = vld [vmem:[#allocation2 + $0xc0] sm:$0xff]
  %v6917 = vld [vmem:[#allocation2 + $0xc8] sm:$0xff]
  %v6918 = vld [vmem:[#allocation2 + $0xd0] sm:$0xff]
  %v6919 = vld [vmem:[#allocation2 + $0xd8] sm:$0xff]
  %v6920 = vld [vmem:[#allocation2 + $0xe0] sm:$0xff]
  %v6921 = vld [vmem:[#allocation2 + $0xe8] sm:$0xff]
  %v6922 = vld [vmem:[#allocation2 + $0xf0] sm:$0xff]
  %v6923 = vld [vmem:[#allocation2 + $0xf8] sm:$0xff]
  %v6924 = vld [vmem:[#allocation2 + $0x100] sm:$0xff]
  %v6925 = vld [vmem:[#allocation2 + $0x108] sm:$0xff]
  %v6926 = vld [vmem:[#allocation2 + $0x110] sm:$0xff]
  %v6927 = vld [vmem:[#allocation2 + $0x118] sm:$0xff]
  %v6928 = vld [vmem:[#allocation2 + $0x120] sm:$0xff]
  %v6929 = vld [vmem:[#allocation2 + $0x128] sm:$0xff]
  %v6930 = vld [vmem:[#allocation2 + $0x130] sm:$0xff]
  %v6931 = vld [vmem:[#allocation2 + $0x138] sm:$0xff]
  %v6932 = vld [vmem:[#allocation2 + $0x140] sm:$0xff]
  %v6933 = vld [vmem:[#allocation2 + $0x148] sm:$0xff]
  %v6934 = vld [vmem:[#allocation2 + $0x150] sm:$0xff]
  %v6935 = vld [vmem:[#allocation2 + $0x158] sm:$0xff]
  %v6936 = vld [vmem:[#allocation2 + $0x160] sm:$0xff]
  %v6937 = vld [vmem:[#allocation2 + $0x168] sm:$0xff]
  %v6938 = vld [vmem:[#allocation2 + $0x170] sm:$0xff]
  %v6939 = vld [vmem:[#allocation2 + $0x178] sm:$0xff]
  %v6940 = vld [vmem:[#allocation2 + $0x180] sm:$0xff]
  %v6941 = vld [vmem:[#allocation2 + $0x188] sm:$0xff]
  %v6942 = vld [vmem:[#allocation2 + $0x190] sm:$0xff]
  %v6943 = vld [vmem:[#allocation2 + $0x198] sm:$0xff]
  %v6944 = vld [vmem:[#allocation2 + $0x1a0] sm:$0xff]
  %v6945 = vld [vmem:[#allocation2 + $0x1a8] sm:$0xff]
  %v6946 = vld [vmem:[#allocation2 + $0x1b0] sm:$0xff]
  %v6947 = vld [vmem:[#allocation2 + $0x1b8] sm:$0xff]
  %v6948 = vld [vmem:[#allocation2 + $0x1c0] sm:$0xff]
  %v6949 = vld [vmem:[#allocation2 + $0x1c8] sm:$0xff]
  %v6950 = vld [vmem:[#allocation2 + $0x1d0] sm:$0xff]
  %v6951 = vld [vmem:[#allocation2 + $0x1d8] sm:$0xff]
  %v6952 = vld [vmem:[#allocation2 + $0x1e0] sm:$0xff]
  %v6953 = vld [vmem:[#allocation2 + $0x1e8] sm:$0xff]
  %v6954 = vld [vmem:[#allocation2 + $0x1f0] sm:$0xff]
  %v6955 = vld [vmem:[#allocation2 + $0x1f8] sm:$0xff]
  %v6956 = vld [vmem:[#allocation2 + $0x200] sm:$0xff]
  %v6957 = vld [vmem:[#allocation2 + $0x208] sm:$0xff]
  %v6958 = vld [vmem:[#allocation2 + $0x210] sm:$0xff]
  %v6959 = vld [vmem:[#allocation2 + $0x218] sm:$0xff]
  %v6960 = vld [vmem:[#allocation2 + $0x220] sm:$0xff]
  %v6961 = vld [vmem:[#allocation2 + $0x228] sm:$0xff]
  %v6962 = vld [vmem:[#allocation2 + $0x230] sm:$0xff]
  %v6963 = vld [vmem:[#allocation2 + $0x238] sm:$0xff]
  %v6964 = vld [vmem:[#allocation2 + $0x240] sm:$0xff]
  %v6965 = vld [vmem:[#allocation2 + $0x248] sm:$0xff]
  %v6966 = vld [vmem:[#allocation2 + $0x250] sm:$0xff]
  %v6967 = vld [vmem:[#allocation2 + $0x258] sm:$0xff]
  %v6968 = vld [vmem:[#allocation2 + $0x260] sm:$0xff]
  %v6969 = vld [vmem:[#allocation2 + $0x268] sm:$0xff]
  %v6970 = vld [vmem:[#allocation2 + $0x270] sm:$0xff]
  %v6971 = vld [vmem:[#allocation2 + $0x278] sm:$0xff]
  %v6972 = vld [vmem:[#allocation2 + $0x280] sm:$0xff]
  %v6973 = vld [vmem:[#allocation2 + $0x288] sm:$0xff]
  %v6974 = vld [vmem:[#allocation2 + $0x290] sm:$0xff]
  %v6975 = vld [vmem:[#allocation2 + $0x298] sm:$0xff]
  %v6976 = vld [vmem:[#allocation2 + $0x2a0] sm:$0xff]
  %v6977 = vld [vmem:[#allocation2 + $0x2a8] sm:$0xff]
  %v6978 = vld [vmem:[#allocation2 + $0x2b0] sm:$0xff]
  %v6979 = vld [vmem:[#allocation2 + $0x2b8] sm:$0xff]
  %v6980 = vld [vmem:[#allocation2 + $0x2c0] sm:$0xff]
  %v6981 = vld [vmem:[#allocation2 + $0x2c8] sm:$0xff]
  %v6982 = vld [vmem:[#allocation2 + $0x2d0] sm:$0xff]
  %v6983 = vld [vmem:[#allocation2 + $0x2d8] sm:$0xff]
  %v6984 = vld [vmem:[#allocation2 + $0x2e0] sm:$0xff]
  %v6985 = vld [vmem:[#allocation2 + $0x2e8] sm:$0xff]
  %v6986 = vld [vmem:[#allocation2 + $0x2f0] sm:$0xff]
  %v6987 = vld [vmem:[#allocation2 + $0x2f8] sm:$0xff]
  %v6988 = vld [vmem:[#allocation2 + $0x300] sm:$0xff]
  %v6989 = vld [vmem:[#allocation2 + $0x308] sm:$0xff]
  %v6990 = vld [vmem:[#allocation2 + $0x310] sm:$0xff]
  %v6991 = vld [vmem:[#allocation2 + $0x318] sm:$0xff]
  %v6992 = vld [vmem:[#allocation2 + $0x320] sm:$0xff]
  %v6993 = vld [vmem:[#allocation2 + $0x328] sm:$0xff]
  %v6994 = vld [vmem:[#allocation2 + $0x330] sm:$0xff]
  %v6995 = vld [vmem:[%s3 + $0x4] sm:$0x1]
  %v6996 = vlaneseq
  %v6997 = vshrl.u32 %v6996, 7
  %v6998 = vsub.s32 0, %v6997
  %v6999 = vrot.slane %v6995, %v6998
  %v7000 = vmul.f32 %v6999, %v6895
  %v7001 = vmul.f32 %v6999, %v6896
  %v7002 = vmul.f32 %v6999, %v6897
  %v7003 = vmul.f32 %v6999, %v6898
  %v7004 = vmul.f32 %v6999, %v6899
  %v7005 = vmul.f32 %v6999, %v6900
  %v7006 = vmul.f32 %v6999, %v6901
  %v7007 = vmul.f32 %v6999, %v6902
  %v7008 = vmul.f32 %v6999, %v6903
  %v7009 = vmul.f32 %v6999, %v6904
  %v7010 = vmul.f32 %v6999, %v6905
  %v7011 = vmul.f32 %v6999, %v6906
  %v7012 = vmul.f32 %v6999, %v6907
  %v7013 = vmul.f32 %v6999, %v6908
  %v7014 = vmul.f32 %v6999, %v6909
  %v7015 = vmul.f32 %v6999, %v6910
  %v7016 = vmul.f32 %v6999, %v6911
  %v7017 = vmul.f32 %v6999, %v6912
  %v7018 = vmul.f32 %v6999, %v6913
  %v7019 = vmul.f32 %v6999, %v6914
  %v7020 = vmul.f32 %v6999, %v6915
  %v7021 = vmul.f32 %v6999, %v6916
  %v7022 = vmul.f32 %v6999, %v6917
  %v7023 = vmul.f32 %v6999, %v6918
  %v7024 = vmul.f32 %v6999, %v6919
  %v7025 = vmul.f32 %v6999, %v6920
  %v7026 = vmul.f32 %v6999, %v6921
  %v7027 = vmul.f32 %v6999, %v6922
  %v7028 = vmul.f32 %v6999, %v6923
  %v7029 = vmul.f32 %v6999, %v6924
  %v7030 = vmul.f32 %v6999, %v6925
  %v7031 = vmul.f32 %v6999, %v6926
  %v7032 = vmul.f32 %v6999, %v6927
  %v7033 = vmul.f32 %v6999, %v6928
  %v7034 = vmul.f32 %v6999, %v6929
  %v7035 = vmul.f32 %v6999, %v6930
  %v7036 = vmul.f32 %v6999, %v6931
  %v7037 = vmul.f32 %v6999, %v6932
  %v7038 = vmul.f32 %v6999, %v6933
  %v7039 = vmul.f32 %v6999, %v6934
  %v7040 = vmul.f32 %v6999, %v6935
  %v7041 = vmul.f32 %v6999, %v6936
  %v7042 = vmul.f32 %v6999, %v6937
  %v7043 = vmul.f32 %v6999, %v6938
  %v7044 = vmul.f32 %v6999, %v6939
  %v7045 = vmul.f32 %v6999, %v6940
  %v7046 = vmul.f32 %v6999, %v6941
  %v7047 = vmul.f32 %v6999, %v6942
  %v7048 = vmul.f32 %v6999, %v6943
  %v7049 = vmul.f32 %v6999, %v6944
  %v7050 = vmul.f32 %v6999, %v6945
  %v7051 = vmul.f32 %v6999, %v6946
  %v7052 = vmul.f32 %v6999, %v6947
  %v7053 = vmul.f32 %v6999, %v6948
  %v7054 = vmul.f32 %v6999, %v6949
  %v7055 = vmul.f32 %v6999, %v6950
  %v7056 = vmul.f32 %v6999, %v6951
  %v7057 = vmul.f32 %v6999, %v6952
  %v7058 = vmul.f32 %v6999, %v6953
  %v7059 = vmul.f32 %v6999, %v6954
  %v7060 = vmul.f32 %v6999, %v6955
  %v7061 = vmul.f32 %v6999, %v6956
  %v7062 = vmul.f32 %v6999, %v6957
  %v7063 = vmul.f32 %v6999, %v6958
  %v7064 = vmul.f32 %v6999, %v6959
  %v7065 = vmul.f32 %v6999, %v6960
  %v7066 = vmul.f32 %v6999, %v6961
  %v7067 = vmul.f32 %v6999, %v6962
  %v7068 = vmul.f32 %v6999, %v6963
  %v7069 = vmul.f32 %v6999, %v6964
  %v7070 = vmul.f32 %v6999, %v6965
  %v7071 = vmul.f32 %v6999, %v6966
  %v7072 = vmul.f32 %v6999, %v6967
  %v7073 = vmul.f32 %v6999, %v6968
  %v7074 = vmul.f32 %v6999, %v6969
  %v7075 = vmul.f32 %v6999, %v6970
  %v7076 = vmul.f32 %v6999, %v6971
  %v7077 = vmul.f32 %v6999, %v6972
  %v7078 = vmul.f32 %v6999, %v6973
  %v7079 = vmul.f32 %v6999, %v6974
  %v7080 = vmul.f32 %v6999, %v6975
  %v7081 = vmul.f32 %v6999, %v6976
  %v7082 = vmul.f32 %v6999, %v6977
  %v7083 = vmul.f32 %v6999, %v6978
  %v7084 = vmul.f32 %v6999, %v6979
  %v7085 = vmul.f32 %v6999, %v6980
  %v7086 = vmul.f32 %v6999, %v6981
  %v7087 = vmul.f32 %v6999, %v6982
  %v7088 = vmul.f32 %v6999, %v6983
  %v7089 = vmul.f32 %v6999, %v6984
  %v7090 = vmul.f32 %v6999, %v6985
  %v7091 = vmul.f32 %v6999, %v6986
  %v7092 = vmul.f32 %v6999, %v6987
  %v7093 = vmul.f32 %v6999, %v6988
  %v7094 = vmul.f32 %v6999, %v6989
  %v7095 = vmul.f32 %v6999, %v6990
  %v7096 = vmul.f32 %v6999, %v6991
  %v7097 = vmul.f32 %v6999, %v6992
  %v7098 = vmul.f32 %v6999, %v6993
  %v7099 = vmul.f32 %v6999, %v6994
  %v7100 = vadd.f32 %v6795, %v7000
  %v7101 = vadd.f32 %v6796, %v7001
  %v7102 = vadd.f32 %v6797, %v7002
  %v7103 = vadd.f32 %v6798, %v7003
  %v7104 = vadd.f32 %v6799, %v7004
  %v7105 = vadd.f32 %v6800, %v7005
  %v7106 = vadd.f32 %v6801, %v7006
  %v7107 = vadd.f32 %v6802, %v7007
  %v7108 = vadd.f32 %v6803, %v7008
  %v7109 = vadd.f32 %v6804, %v7009
  %v7110 = vadd.f32 %v6805, %v7010
  %v7111 = vadd.f32 %v6806, %v7011
  %v7112 = vadd.f32 %v6807, %v7012
  %v7113 = vadd.f32 %v6808, %v7013
  %v7114 = vadd.f32 %v6809, %v7014
  %v7115 = vadd.f32 %v6810, %v7015
  %v7116 = vadd.f32 %v6811, %v7016
  %v7117 = vadd.f32 %v6812, %v7017
  %v7118 = vadd.f32 %v6813, %v7018
  %v7119 = vadd.f32 %v6814, %v7019
  %v7120 = vadd.f32 %v6815, %v7020
  %v7121 = vadd.f32 %v6816, %v7021
  %v7122 = vadd.f32 %v6817, %v7022
  %v7123 = vadd.f32 %v6818, %v7023
  %v7124 = vadd.f32 %v6819, %v7024
  %v7125 = vadd.f32 %v6820, %v7025
  %v7126 = vadd.f32 %v6821, %v7026
  %v7127 = vadd.f32 %v6822, %v7027
  %v7128 = vadd.f32 %v6823, %v7028
  %v7129 = vadd.f32 %v6824, %v7029
  %v7130 = vadd.f32 %v6825, %v7030
  %v7131 = vadd.f32 %v6826, %v7031
  %v7132 = vadd.f32 %v6827, %v7032
  %v7133 = vadd.f32 %v6828, %v7033
  %v7134 = vadd.f32 %v6829, %v7034
  %v7135 = vadd.f32 %v6830, %v7035
  %v7136 = vadd.f32 %v6831, %v7036
  %v7137 = vadd.f32 %v6832, %v7037
  %v7138 = vadd.f32 %v6833, %v7038
  %v7139 = vadd.f32 %v6834, %v7039
  %v7140 = vadd.f32 %v6835, %v7040
  %v7141 = vadd.f32 %v6836, %v7041
  %v7142 = vadd.f32 %v6837, %v7042
  %v7143 = vadd.f32 %v6838, %v7043
  %v7144 = vadd.f32 %v6839, %v7044
  %v7145 = vadd.f32 %v6840, %v7045
  %v7146 = vadd.f32 %v6841, %v7046
  %v7147 = vadd.f32 %v6842, %v7047
  %v7148 = vadd.f32 %v6843, %v7048
  %v7149 = vadd.f32 %v6844, %v7049
  %v7150 = vadd.f32 %v6845, %v7050
  %v7151 = vadd.f32 %v6846, %v7051
  %v7152 = vadd.f32 %v6847, %v7052
  %v7153 = vadd.f32 %v6848, %v7053
  %v7154 = vadd.f32 %v6849, %v7054
  %v7155 = vadd.f32 %v6850, %v7055
  %v7156 = vadd.f32 %v6851, %v7056
  %v7157 = vadd.f32 %v6852, %v7057
  %v7158 = vadd.f32 %v6853, %v7058
  %v7159 = vadd.f32 %v6854, %v7059
  %v7160 = vadd.f32 %v6855, %v7060
  %v7161 = vadd.f32 %v6856, %v7061
  %v7162 = vadd.f32 %v6857, %v7062
  %v7163 = vadd.f32 %v6858, %v7063
  %v7164 = vadd.f32 %v6859, %v7064
  %v7165 = vadd.f32 %v6860, %v7065
  %v7166 = vadd.f32 %v6861, %v7066
  %v7167 = vadd.f32 %v6862, %v7067
  %v7168 = vadd.f32 %v6863, %v7068
  %v7169 = vadd.f32 %v6864, %v7069
  %v7170 = vadd.f32 %v6865, %v7070
  %v7171 = vadd.f32 %v6866, %v7071
  %v7172 = vadd.f32 %v6867, %v7072
  %v7173 = vadd.f32 %v6868, %v7073
  %v7174 = vadd.f32 %v6869, %v7074
  %v7175 = vadd.f32 %v6870, %v7075
  %v7176 = vadd.f32 %v6871, %v7076
  %v7177 = vadd.f32 %v6872, %v7077
  %v7178 = vadd.f32 %v6873, %v7078
  %v7179 = vadd.f32 %v6874, %v7079
  %v7180 = vadd.f32 %v6875, %v7080
  %v7181 = vadd.f32 %v6876, %v7081
  %v7182 = vadd.f32 %v6877, %v7082
  %v7183 = vadd.f32 %v6878, %v7083
  %v7184 = vadd.f32 %v6879, %v7084
  %v7185 = vadd.f32 %v6880, %v7085
  %v7186 = vadd.f32 %v6881, %v7086
  %v7187 = vadd.f32 %v6882, %v7087
  %v7188 = vadd.f32 %v6883, %v7088
  %v7189 = vadd.f32 %v6884, %v7089
  %v7190 = vadd.f32 %v6885, %v7090
  %v7191 = vadd.f32 %v6886, %v7091
  %v7192 = vadd.f32 %v6887, %v7092
  %v7193 = vadd.f32 %v6888, %v7093
  %v7194 = vadd.f32 %v6889, %v7094
  %v7195 = vadd.f32 %v6890, %v7095
  %v7196 = vadd.f32 %v6891, %v7096
  %v7197 = vadd.f32 %v6892, %v7097
  %v7198 = vadd.f32 %v6893, %v7098
  %v7199 = vadd.f32 %v6894, %v7099
  %v7200 = vld [vmem:[#allocation2 + $0x19] sm:$0xff]
  %v7201 = vld [vmem:[#allocation2 + $0x21] sm:$0xff]
  %v7202 = vld [vmem:[#allocation2 + $0x29] sm:$0xff]
  %v7203 = vld [vmem:[#allocation2 + $0x31] sm:$0xff]
  %v7204 = vld [vmem:[#allocation2 + $0x39] sm:$0xff]
  %v7205 = vld [vmem:[#allocation2 + $0x41] sm:$0xff]
  %v7206 = vld [vmem:[#allocation2 + $0x49] sm:$0xff]
  %v7207 = vld [vmem:[#allocation2 + $0x51] sm:$0xff]
  %v7208 = vld [vmem:[#allocation2 + $0x59] sm:$0xff]
  %v7209 = vld [vmem:[#allocation2 + $0x61] sm:$0xff]
  %v7210 = vld [vmem:[#allocation2 + $0x69] sm:$0xff]
  %v7211 = vld [vmem:[#allocation2 + $0x71] sm:$0xff]
  %v7212 = vld [vmem:[#allocation2 + $0x79] sm:$0xff]
  %v7213 = vld [vmem:[#allocation2 + $0x81] sm:$0xff]
  %v7214 = vld [vmem:[#allocation2 + $0x89] sm:$0xff]
  %v7215 = vld [vmem:[#allocation2 + $0x91] sm:$0xff]
  %v7216 = vld [vmem:[#allocation2 + $0x99] sm:$0xff]
  %v7217 = vld [vmem:[#allocation2 + $0xa1] sm:$0xff]
  %v7218 = vld [vmem:[#allocation2 + $0xa9] sm:$0xff]
  %v7219 = vld [vmem:[#allocation2 + $0xb1] sm:$0xff]
  %v7220 = vld [vmem:[#allocation2 + $0xb9] sm:$0xff]
  %v7221 = vld [vmem:[#allocation2 + $0xc1] sm:$0xff]
  %v7222 = vld [vmem:[#allocation2 + $0xc9] sm:$0xff]
  %v7223 = vld [vmem:[#allocation2 + $0xd1] sm:$0xff]
  %v7224 = vld [vmem:[#allocation2 + $0xd9] sm:$0xff]
  %v7225 = vld [vmem:[#allocation2 + $0xe1] sm:$0xff]
  %v7226 = vld [vmem:[#allocation2 + $0xe9] sm:$0xff]
  %v7227 = vld [vmem:[#allocation2 + $0xf1] sm:$0xff]
  %v7228 = vld [vmem:[#allocation2 + $0xf9] sm:$0xff]
  %v7229 = vld [vmem:[#allocation2 + $0x101] sm:$0xff]
  %v7230 = vld [vmem:[#allocation2 + $0x109] sm:$0xff]
  %v7231 = vld [vmem:[#allocation2 + $0x111] sm:$0xff]
  %v7232 = vld [vmem:[#allocation2 + $0x119] sm:$0xff]
  %v7233 = vld [vmem:[#allocation2 + $0x121] sm:$0xff]
  %v7234 = vld [vmem:[#allocation2 + $0x129] sm:$0xff]
  %v7235 = vld [vmem:[#allocation2 + $0x131] sm:$0xff]
  %v7236 = vld [vmem:[#allocation2 + $0x139] sm:$0xff]
  %v7237 = vld [vmem:[#allocation2 + $0x141] sm:$0xff]
  %v7238 = vld [vmem:[#allocation2 + $0x149] sm:$0xff]
  %v7239 = vld [vmem:[#allocation2 + $0x151] sm:$0xff]
  %v7240 = vld [vmem:[#allocation2 + $0x159] sm:$0xff]
  %v7241 = vld [vmem:[#allocation2 + $0x161] sm:$0xff]
  %v7242 = vld [vmem:[#allocation2 + $0x169] sm:$0xff]
  %v7243 = vld [vmem:[#allocation2 + $0x171] sm:$0xff]
  %v7244 = vld [vmem:[#allocation2 + $0x179] sm:$0xff]
  %v7245 = vld [vmem:[#allocation2 + $0x181] sm:$0xff]
  %v7246 = vld [vmem:[#allocation2 + $0x189] sm:$0xff]
  %v7247 = vld [vmem:[#allocation2 + $0x191] sm:$0xff]
  %v7248 = vld [vmem:[#allocation2 + $0x199] sm:$0xff]
  %v7249 = vld [vmem:[#allocation2 + $0x1a1] sm:$0xff]
  %v7250 = vld [vmem:[#allocation2 + $0x1a9] sm:$0xff]
  %v7251 = vld [vmem:[#allocation2 + $0x1b1] sm:$0xff]
  %v7252 = vld [vmem:[#allocation2 + $0x1b9] sm:$0xff]
  %v7253 = vld [vmem:[#allocation2 + $0x1c1] sm:$0xff]
  %v7254 = vld [vmem:[#allocation2 + $0x1c9] sm:$0xff]
  %v7255 = vld [vmem:[#allocation2 + $0x1d1] sm:$0xff]
  %v7256 = vld [vmem:[#allocation2 + $0x1d9] sm:$0xff]
  %v7257 = vld [vmem:[#allocation2 + $0x1e1] sm:$0xff]
  %v7258 = vld [vmem:[#allocation2 + $0x1e9] sm:$0xff]
  %v7259 = vld [vmem:[#allocation2 + $0x1f1] sm:$0xff]
  %v7260 = vld [vmem:[#allocation2 + $0x1f9] sm:$0xff]
  %v7261 = vld [vmem:[#allocation2 + $0x201] sm:$0xff]
  %v7262 = vld [vmem:[#allocation2 + $0x209] sm:$0xff]
  %v7263 = vld [vmem:[#allocation2 + $0x211] sm:$0xff]
  %v7264 = vld [vmem:[#allocation2 + $0x219] sm:$0xff]
  %v7265 = vld [vmem:[#allocation2 + $0x221] sm:$0xff]
  %v7266 = vld [vmem:[#allocation2 + $0x229] sm:$0xff]
  %v7267 = vld [vmem:[#allocation2 + $0x231] sm:$0xff]
  %v7268 = vld [vmem:[#allocation2 + $0x239] sm:$0xff]
  %v7269 = vld [vmem:[#allocation2 + $0x241] sm:$0xff]
  %v7270 = vld [vmem:[#allocation2 + $0x249] sm:$0xff]
  %v7271 = vld [vmem:[#allocation2 + $0x251] sm:$0xff]
  %v7272 = vld [vmem:[#allocation2 + $0x259] sm:$0xff]
  %v7273 = vld [vmem:[#allocation2 + $0x261] sm:$0xff]
  %v7274 = vld [vmem:[#allocation2 + $0x269] sm:$0xff]
  %v7275 = vld [vmem:[#allocation2 + $0x271] sm:$0xff]
  %v7276 = vld [vmem:[#allocation2 + $0x279] sm:$0xff]
  %v7277 = vld [vmem:[#allocation2 + $0x281] sm:$0xff]
  %v7278 = vld [vmem:[#allocation2 + $0x289] sm:$0xff]
  %v7279 = vld [vmem:[#allocation2 + $0x291] sm:$0xff]
  %v7280 = vld [vmem:[#allocation2 + $0x299] sm:$0xff]
  %v7281 = vld [vmem:[#allocation2 + $0x2a1] sm:$0xff]
  %v7282 = vld [vmem:[#allocation2 + $0x2a9] sm:$0xff]
  %v7283 = vld [vmem:[#allocation2 + $0x2b1] sm:$0xff]
  %v7284 = vld [vmem:[#allocation2 + $0x2b9] sm:$0xff]
  %v7285 = vld [vmem:[#allocation2 + $0x2c1] sm:$0xff]
  %v7286 = vld [vmem:[#allocation2 + $0x2c9] sm:$0xff]
  %v7287 = vld [vmem:[#allocation2 + $0x2d1] sm:$0xff]
  %v7288 = vld [vmem:[#allocation2 + $0x2d9] sm:$0xff]
  %v7289 = vld [vmem:[#allocation2 + $0x2e1] sm:$0xff]
  %v7290 = vld [vmem:[#allocation2 + $0x2e9] sm:$0xff]
  %v7291 = vld [vmem:[#allocation2 + $0x2f1] sm:$0xff]
  %v7292 = vld [vmem:[#allocation2 + $0x2f9] sm:$0xff]
  %v7293 = vld [vmem:[#allocation2 + $0x301] sm:$0xff]
  %v7294 = vld [vmem:[#allocation2 + $0x309] sm:$0xff]
  %v7295 = vld [vmem:[#allocation2 + $0x311] sm:$0xff]
  %v7296 = vld [vmem:[#allocation2 + $0x319] sm:$0xff]
  %v7297 = vld [vmem:[#allocation2 + $0x321] sm:$0xff]
  %v7298 = vld [vmem:[#allocation2 + $0x329] sm:$0xff]
  %v7299 = vld [vmem:[#allocation2 + $0x331] sm:$0xff]
  %v7300 = vld [vmem:[%s3 + $0x5] sm:$0x1]
  %v7301 = vlaneseq
  %v7302 = vshrl.u32 %v7301, 7
  %v7303 = vsub.s32 0, %v7302
  %v7304 = vrot.slane %v7300, %v7303
  %v7305 = vmul.f32 %v7304, %v7200
  %v7306 = vmul.f32 %v7304, %v7201
  %v7307 = vmul.f32 %v7304, %v7202
  %v7308 = vmul.f32 %v7304, %v7203
  %v7309 = vmul.f32 %v7304, %v7204
  %v7310 = vmul.f32 %v7304, %v7205
  %v7311 = vmul.f32 %v7304, %v7206
  %v7312 = vmul.f32 %v7304, %v7207
  %v7313 = vmul.f32 %v7304, %v7208
  %v7314 = vmul.f32 %v7304, %v7209
  %v7315 = vmul.f32 %v7304, %v7210
  %v7316 = vmul.f32 %v7304, %v7211
  %v7317 = vmul.f32 %v7304, %v7212
  %v7318 = vmul.f32 %v7304, %v7213
  %v7319 = vmul.f32 %v7304, %v7214
  %v7320 = vmul.f32 %v7304, %v7215
  %v7321 = vmul.f32 %v7304, %v7216
  %v7322 = vmul.f32 %v7304, %v7217
  %v7323 = vmul.f32 %v7304, %v7218
  %v7324 = vmul.f32 %v7304, %v7219
  %v7325 = vmul.f32 %v7304, %v7220
  %v7326 = vmul.f32 %v7304, %v7221
  %v7327 = vmul.f32 %v7304, %v7222
  %v7328 = vmul.f32 %v7304, %v7223
  %v7329 = vmul.f32 %v7304, %v7224
  %v7330 = vmul.f32 %v7304, %v7225
  %v7331 = vmul.f32 %v7304, %v7226
  %v7332 = vmul.f32 %v7304, %v7227
  %v7333 = vmul.f32 %v7304, %v7228
  %v7334 = vmul.f32 %v7304, %v7229
  %v7335 = vmul.f32 %v7304, %v7230
  %v7336 = vmul.f32 %v7304, %v7231
  %v7337 = vmul.f32 %v7304, %v7232
  %v7338 = vmul.f32 %v7304, %v7233
  %v7339 = vmul.f32 %v7304, %v7234
  %v7340 = vmul.f32 %v7304, %v7235
  %v7341 = vmul.f32 %v7304, %v7236
  %v7342 = vmul.f32 %v7304, %v7237
  %v7343 = vmul.f32 %v7304, %v7238
  %v7344 = vmul.f32 %v7304, %v7239
  %v7345 = vmul.f32 %v7304, %v7240
  %v7346 = vmul.f32 %v7304, %v7241
  %v7347 = vmul.f32 %v7304, %v7242
  %v7348 = vmul.f32 %v7304, %v7243
  %v7349 = vmul.f32 %v7304, %v7244
  %v7350 = vmul.f32 %v7304, %v7245
  %v7351 = vmul.f32 %v7304, %v7246
  %v7352 = vmul.f32 %v7304, %v7247
  %v7353 = vmul.f32 %v7304, %v7248
  %v7354 = vmul.f32 %v7304, %v7249
  %v7355 = vmul.f32 %v7304, %v7250
  %v7356 = vmul.f32 %v7304, %v7251
  %v7357 = vmul.f32 %v7304, %v7252
  %v7358 = vmul.f32 %v7304, %v7253
  %v7359 = vmul.f32 %v7304, %v7254
  %v7360 = vmul.f32 %v7304, %v7255
  %v7361 = vmul.f32 %v7304, %v7256
  %v7362 = vmul.f32 %v7304, %v7257
  %v7363 = vmul.f32 %v7304, %v7258
  %v7364 = vmul.f32 %v7304, %v7259
  %v7365 = vmul.f32 %v7304, %v7260
  %v7366 = vmul.f32 %v7304, %v7261
  %v7367 = vmul.f32 %v7304, %v7262
  %v7368 = vmul.f32 %v7304, %v7263
  %v7369 = vmul.f32 %v7304, %v7264
  %v7370 = vmul.f32 %v7304, %v7265
  %v7371 = vmul.f32 %v7304, %v7266
  %v7372 = vmul.f32 %v7304, %v7267
  %v7373 = vmul.f32 %v7304, %v7268
  %v7374 = vmul.f32 %v7304, %v7269
  %v7375 = vmul.f32 %v7304, %v7270
  %v7376 = vmul.f32 %v7304, %v7271
  %v7377 = vmul.f32 %v7304, %v7272
  %v7378 = vmul.f32 %v7304, %v7273
  %v7379 = vmul.f32 %v7304, %v7274
  %v7380 = vmul.f32 %v7304, %v7275
  %v7381 = vmul.f32 %v7304, %v7276
  %v7382 = vmul.f32 %v7304, %v7277
  %v7383 = vmul.f32 %v7304, %v7278
  %v7384 = vmul.f32 %v7304, %v7279
  %v7385 = vmul.f32 %v7304, %v7280
  %v7386 = vmul.f32 %v7304, %v7281
  %v7387 = vmul.f32 %v7304, %v7282
  %v7388 = vmul.f32 %v7304, %v7283
  %v7389 = vmul.f32 %v7304, %v7284
  %v7390 = vmul.f32 %v7304, %v7285
  %v7391 = vmul.f32 %v7304, %v7286
  %v7392 = vmul.f32 %v7304, %v7287
  %v7393 = vmul.f32 %v7304, %v7288
  %v7394 = vmul.f32 %v7304, %v7289
  %v7395 = vmul.f32 %v7304, %v7290
  %v7396 = vmul.f32 %v7304, %v7291
  %v7397 = vmul.f32 %v7304, %v7292
  %v7398 = vmul.f32 %v7304, %v7293
  %v7399 = vmul.f32 %v7304, %v7294
  %v7400 = vmul.f32 %v7304, %v7295
  %v7401 = vmul.f32 %v7304, %v7296
  %v7402 = vmul.f32 %v7304, %v7297
  %v7403 = vmul.f32 %v7304, %v7298
  %v7404 = vmul.f32 %v7304, %v7299
  %v7405 = vadd.f32 %v7100, %v7305
  %v7406 = vadd.f32 %v7101, %v7306
  %v7407 = vadd.f32 %v7102, %v7307
  %v7408 = vadd.f32 %v7103, %v7308
  %v7409 = vadd.f32 %v7104, %v7309
  %v7410 = vadd.f32 %v7105, %v7310
  %v7411 = vadd.f32 %v7106, %v7311
  %v7412 = vadd.f32 %v7107, %v7312
  %v7413 = vadd.f32 %v7108, %v7313
  %v7414 = vadd.f32 %v7109, %v7314
  %v7415 = vadd.f32 %v7110, %v7315
  %v7416 = vadd.f32 %v7111, %v7316
  %v7417 = vadd.f32 %v7112, %v7317
  %v7418 = vadd.f32 %v7113, %v7318
  %v7419 = vadd.f32 %v7114, %v7319
  %v7420 = vadd.f32 %v7115, %v7320
  %v7421 = vadd.f32 %v7116, %v7321
  %v7422 = vadd.f32 %v7117, %v7322
  %v7423 = vadd.f32 %v7118, %v7323
  %v7424 = vadd.f32 %v7119, %v7324
  %v7425 = vadd.f32 %v7120, %v7325
  %v7426 = vadd.f32 %v7121, %v7326
  %v7427 = vadd.f32 %v7122, %v7327
  %v7428 = vadd.f32 %v7123, %v7328
  %v7429 = vadd.f32 %v7124, %v7329
  %v7430 = vadd.f32 %v7125, %v7330
  %v7431 = vadd.f32 %v7126, %v7331
  %v7432 = vadd.f32 %v7127, %v7332
  %v7433 = vadd.f32 %v7128, %v7333
  %v7434 = vadd.f32 %v7129, %v7334
  %v7435 = vadd.f32 %v7130, %v7335
  %v7436 = vadd.f32 %v7131, %v7336
  %v7437 = vadd.f32 %v7132, %v7337
  %v7438 = vadd.f32 %v7133, %v7338
  %v7439 = vadd.f32 %v7134, %v7339
  %v7440 = vadd.f32 %v7135, %v7340
  %v7441 = vadd.f32 %v7136, %v7341
  %v7442 = vadd.f32 %v7137, %v7342
  %v7443 = vadd.f32 %v7138, %v7343
  %v7444 = vadd.f32 %v7139, %v7344
  %v7445 = vadd.f32 %v7140, %v7345
  %v7446 = vadd.f32 %v7141, %v7346
  %v7447 = vadd.f32 %v7142, %v7347
  %v7448 = vadd.f32 %v7143, %v7348
  %v7449 = vadd.f32 %v7144, %v7349
  %v7450 = vadd.f32 %v7145, %v7350
  %v7451 = vadd.f32 %v7146, %v7351
  %v7452 = vadd.f32 %v7147, %v7352
  %v7453 = vadd.f32 %v7148, %v7353
  %v7454 = vadd.f32 %v7149, %v7354
  %v7455 = vadd.f32 %v7150, %v7355
  %v7456 = vadd.f32 %v7151, %v7356
  %v7457 = vadd.f32 %v7152, %v7357
  %v7458 = vadd.f32 %v7153, %v7358
  %v7459 = vadd.f32 %v7154, %v7359
  %v7460 = vadd.f32 %v7155, %v7360
  %v7461 = vadd.f32 %v7156, %v7361
  %v7462 = vadd.f32 %v7157, %v7362
  %v7463 = vadd.f32 %v7158, %v7363
  %v7464 = vadd.f32 %v7159, %v7364
  %v7465 = vadd.f32 %v7160, %v7365
  %v7466 = vadd.f32 %v7161, %v7366
  %v7467 = vadd.f32 %v7162, %v7367
  %v7468 = vadd.f32 %v7163, %v7368
  %v7469 = vadd.f32 %v7164, %v7369
  %v7470 = vadd.f32 %v7165, %v7370
  %v7471 = vadd.f32 %v7166, %v7371
  %v7472 = vadd.f32 %v7167, %v7372
  %v7473 = vadd.f32 %v7168, %v7373
  %v7474 = vadd.f32 %v7169, %v7374
  %v7475 = vadd.f32 %v7170, %v7375
  %v7476 = vadd.f32 %v7171, %v7376
  %v7477 = vadd.f32 %v7172, %v7377
  %v7478 = vadd.f32 %v7173, %v7378
  %v7479 = vadd.f32 %v7174, %v7379
  %v7480 = vadd.f32 %v7175, %v7380
  %v7481 = vadd.f32 %v7176, %v7381
  %v7482 = vadd.f32 %v7177, %v7382
  %v7483 = vadd.f32 %v7178, %v7383
  %v7484 = vadd.f32 %v7179, %v7384
  %v7485 = vadd.f32 %v7180, %v7385
  %v7486 = vadd.f32 %v7181, %v7386
  %v7487 = vadd.f32 %v7182, %v7387
  %v7488 = vadd.f32 %v7183, %v7388
  %v7489 = vadd.f32 %v7184, %v7389
  %v7490 = vadd.f32 %v7185, %v7390
  %v7491 = vadd.f32 %v7186, %v7391
  %v7492 = vadd.f32 %v7187, %v7392
  %v7493 = vadd.f32 %v7188, %v7393
  %v7494 = vadd.f32 %v7189, %v7394
  %v7495 = vadd.f32 %v7190, %v7395
  %v7496 = vadd.f32 %v7191, %v7396
  %v7497 = vadd.f32 %v7192, %v7397
  %v7498 = vadd.f32 %v7193, %v7398
  %v7499 = vadd.f32 %v7194, %v7399
  %v7500 = vadd.f32 %v7195, %v7400
  %v7501 = vadd.f32 %v7196, %v7401
  %v7502 = vadd.f32 %v7197, %v7402
  %v7503 = vadd.f32 %v7198, %v7403
  %v7504 = vadd.f32 %v7199, %v7404
  %v7505 = vld [vmem:[#allocation2 + $0x323] sm:$0xff]
  %v7506 = vld [vmem:[#allocation2 + $0x32b] sm:$0xff]
  %v7507 = vld [vmem:[#allocation2 + $0x333] sm:$0xff]
  %v7508 = vld [vmem:[#allocation2 + $0x33b] sm:$0xff]
  %v7509 = vld [vmem:[#allocation2 + $0x343] sm:$0xff]
  %v7510 = vld [vmem:[%s3 + $0x6] sm:$0x1]
  %v7511 = vlaneseq
  %v7512 = vshrl.u32 %v7511, 7
  %v7513 = vsub.s32 0, %v7512
  %v7514 = vrot.slane %v7510, %v7513
  %v7515 = vmul.f32 %v7514, %v5780
  %v7516 = vmul.f32 %v7514, %v5781
  %v7517 = vmul.f32 %v7514, %v5782
  %v7518 = vmul.f32 %v7514, %v5783
  %v7519 = vmul.f32 %v7514, %v5784
  %v7520 = vmul.f32 %v7514, %v5785
  %v7521 = vmul.f32 %v7514, %v5786
  %v7522 = vmul.f32 %v7514, %v5787
  %v7523 = vmul.f32 %v7514, %v5788
  %v7524 = vmul.f32 %v7514, %v5789
  %v7525 = vmul.f32 %v7514, %v5790
  %v7526 = vmul.f32 %v7514, %v5791
  %v7527 = vmul.f32 %v7514, %v5792
  %v7528 = vmul.f32 %v7514, %v5793
  %v7529 = vmul.f32 %v7514, %v5794
  %v7530 = vmul.f32 %v7514, %v5795
  %v7531 = vmul.f32 %v7514, %v5796
  %v7532 = vmul.f32 %v7514, %v5797
  %v7533 = vmul.f32 %v7514, %v5798
  %v7534 = vmul.f32 %v7514, %v5799
  %v7535 = vmul.f32 %v7514, %v5800
  %v7536 = vmul.f32 %v7514, %v5801
  %v7537 = vmul.f32 %v7514, %v5802
  %v7538 = vmul.f32 %v7514, %v5803
  %v7539 = vmul.f32 %v7514, %v5804
  %v7540 = vmul.f32 %v7514, %v5805
  %v7541 = vmul.f32 %v7514, %v5806
  %v7542 = vmul.f32 %v7514, %v5807
  %v7543 = vmul.f32 %v7514, %v5808
  %v7544 = vmul.f32 %v7514, %v5809
  %v7545 = vmul.f32 %v7514, %v5810
  %v7546 = vmul.f32 %v7514, %v5811
  %v7547 = vmul.f32 %v7514, %v5812
  %v7548 = vmul.f32 %v7514, %v5813
  %v7549 = vmul.f32 %v7514, %v5814
  %v7550 = vmul.f32 %v7514, %v5815
  %v7551 = vmul.f32 %v7514, %v5816
  %v7552 = vmul.f32 %v7514, %v5817
  %v7553 = vmul.f32 %v7514, %v5818
  %v7554 = vmul.f32 %v7514, %v5819
  %v7555 = vmul.f32 %v7514, %v5820
  %v7556 = vmul.f32 %v7514, %v5821
  %v7557 = vmul.f32 %v7514, %v5822
  %v7558 = vmul.f32 %v7514, %v5823
  %v7559 = vmul.f32 %v7514, %v5824
  %v7560 = vmul.f32 %v7514, %v5825
  %v7561 = vmul.f32 %v7514, %v5826
  %v7562 = vmul.f32 %v7514, %v5827
  %v7563 = vmul.f32 %v7514, %v5828
  %v7564 = vmul.f32 %v7514, %v5829
  %v7565 = vmul.f32 %v7514, %v5830
  %v7566 = vmul.f32 %v7514, %v5831
  %v7567 = vmul.f32 %v7514, %v5832
  %v7568 = vmul.f32 %v7514, %v5833
  %v7569 = vmul.f32 %v7514, %v5834
  %v7570 = vmul.f32 %v7514, %v5835
  %v7571 = vmul.f32 %v7514, %v5836
  %v7572 = vmul.f32 %v7514, %v5837
  %v7573 = vmul.f32 %v7514, %v5838
  %v7574 = vmul.f32 %v7514, %v5839
  %v7575 = vmul.f32 %v7514, %v5840
  %v7576 = vmul.f32 %v7514, %v5841
  %v7577 = vmul.f32 %v7514, %v5842
  %v7578 = vmul.f32 %v7514, %v5843
  %v7579 = vmul.f32 %v7514, %v5844
  %v7580 = vmul.f32 %v7514, %v5845
  %v7581 = vmul.f32 %v7514, %v5846
  %v7582 = vmul.f32 %v7514, %v5847
  %v7583 = vmul.f32 %v7514, %v5848
  %v7584 = vmul.f32 %v7514, %v5849
  %v7585 = vmul.f32 %v7514, %v5850
  %v7586 = vmul.f32 %v7514, %v5851
  %v7587 = vmul.f32 %v7514, %v5852
  %v7588 = vmul.f32 %v7514, %v5853
  %v7589 = vmul.f32 %v7514, %v5854
  %v7590 = vmul.f32 %v7514, %v5855
  %v7591 = vmul.f32 %v7514, %v5856
  %v7592 = vmul.f32 %v7514, %v5857
  %v7593 = vmul.f32 %v7514, %v5858
  %v7594 = vmul.f32 %v7514, %v5859
  %v7595 = vmul.f32 %v7514, %v5860
  %v7596 = vmul.f32 %v7514, %v5861
  %v7597 = vmul.f32 %v7514, %v5862
  %v7598 = vmul.f32 %v7514, %v5863
  %v7599 = vmul.f32 %v7514, %v5864
  %v7600 = vmul.f32 %v7514, %v5865
  %v7601 = vmul.f32 %v7514, %v5866
  %v7602 = vmul.f32 %v7514, %v5867
  %v7603 = vmul.f32 %v7514, %v5868
  %v7604 = vmul.f32 %v7514, %v5869
  %v7605 = vmul.f32 %v7514, %v5870
  %v7606 = vmul.f32 %v7514, %v5871
  %v7607 = vmul.f32 %v7514, %v5872
  %v7608 = vmul.f32 %v7514, %v5873
  %v7609 = vmul.f32 %v7514, %v5874
  %v7610 = vmul.f32 %v7514, %v7505
  %v7611 = vmul.f32 %v7514, %v7506
  %v7612 = vmul.f32 %v7514, %v7507
  %v7613 = vmul.f32 %v7514, %v7508
  %v7614 = vmul.f32 %v7514, %v7509
  %v7615 = vadd.f32 %v7405, %v7515
  %v7616 = vadd.f32 %v7406, %v7516
  %v7617 = vadd.f32 %v7407, %v7517
  %v7618 = vadd.f32 %v7408, %v7518
  %v7619 = vadd.f32 %v7409, %v7519
  %v7620 = vadd.f32 %v7410, %v7520
  %v7621 = vadd.f32 %v7411, %v7521
  %v7622 = vadd.f32 %v7412, %v7522
  %v7623 = vadd.f32 %v7413, %v7523
  %v7624 = vadd.f32 %v7414, %v7524
  %v7625 = vadd.f32 %v7415, %v7525
  %v7626 = vadd.f32 %v7416, %v7526
  %v7627 = vadd.f32 %v7417, %v7527
  %v7628 = vadd.f32 %v7418, %v7528
  %v7629 = vadd.f32 %v7419, %v7529
  %v7630 = vadd.f32 %v7420, %v7530
  %v7631 = vadd.f32 %v7421, %v7531
  %v7632 = vadd.f32 %v7422, %v7532
  %v7633 = vadd.f32 %v7423, %v7533
  %v7634 = vadd.f32 %v7424, %v7534
  %v7635 = vadd.f32 %v7425, %v7535
  %v7636 = vadd.f32 %v7426, %v7536
  %v7637 = vadd.f32 %v7427, %v7537
  %v7638 = vadd.f32 %v7428, %v7538
  %v7639 = vadd.f32 %v7429, %v7539
  %v7640 = vadd.f32 %v7430, %v7540
  %v7641 = vadd.f32 %v7431, %v7541
  %v7642 = vadd.f32 %v7432, %v7542
  %v7643 = vadd.f32 %v7433, %v7543
  %v7644 = vadd.f32 %v7434, %v7544
  %v7645 = vadd.f32 %v7435, %v7545
  %v7646 = vadd.f32 %v7436, %v7546
  %v7647 = vadd.f32 %v7437, %v7547
  %v7648 = vadd.f32 %v7438, %v7548
  %v7649 = vadd.f32 %v7439, %v7549
  %v7650 = vadd.f32 %v7440, %v7550
  %v7651 = vadd.f32 %v7441, %v7551
  %v7652 = vadd.f32 %v7442, %v7552
  %v7653 = vadd.f32 %v7443, %v7553
  %v7654 = vadd.f32 %v7444, %v7554
  %v7655 = vadd.f32 %v7445, %v7555
  %v7656 = vadd.f32 %v7446, %v7556
  %v7657 = vadd.f32 %v7447, %v7557
  %v7658 = vadd.f32 %v7448, %v7558
  %v7659 = vadd.f32 %v7449, %v7559
  %v7660 = vadd.f32 %v7450, %v7560
  %v7661 = vadd.f32 %v7451, %v7561
  %v7662 = vadd.f32 %v7452, %v7562
  %v7663 = vadd.f32 %v7453, %v7563
  %v7664 = vadd.f32 %v7454, %v7564
  %v7665 = vadd.f32 %v7455, %v7565
  %v7666 = vadd.f32 %v7456, %v7566
  %v7667 = vadd.f32 %v7457, %v7567
  %v7668 = vadd.f32 %v7458, %v7568
  %v7669 = vadd.f32 %v7459, %v7569
  %v7670 = vadd.f32 %v7460, %v7570
  %v7671 = vadd.f32 %v7461, %v7571
  %v7672 = vadd.f32 %v7462, %v7572
  %v7673 = vadd.f32 %v7463, %v7573
  %v7674 = vadd.f32 %v7464, %v7574
  %v7675 = vadd.f32 %v7465, %v7575
  %v7676 = vadd.f32 %v7466, %v7576
  %v7677 = vadd.f32 %v7467, %v7577
  %v7678 = vadd.f32 %v7468, %v7578
  %v7679 = vadd.f32 %v7469, %v7579
  %v7680 = vadd.f32 %v7470, %v7580
  %v7681 = vadd.f32 %v7471, %v7581
  %v7682 = vadd.f32 %v7472, %v7582
  %v7683 = vadd.f32 %v7473, %v7583
  %v7684 = vadd.f32 %v7474, %v7584
  %v7685 = vadd.f32 %v7475, %v7585
  %v7686 = vadd.f32 %v7476, %v7586
  %v7687 = vadd.f32 %v7477, %v7587
  %v7688 = vadd.f32 %v7478, %v7588
  %v7689 = vadd.f32 %v7479, %v7589
  %v7690 = vadd.f32 %v7480, %v7590
  %v7691 = vadd.f32 %v7481, %v7591
  %v7692 = vadd.f32 %v7482, %v7592
  %v7693 = vadd.f32 %v7483, %v7593
  %v7694 = vadd.f32 %v7484, %v7594
  %v7695 = vadd.f32 %v7485, %v7595
  %v7696 = vadd.f32 %v7486, %v7596
  %v7697 = vadd.f32 %v7487, %v7597
  %v7698 = vadd.f32 %v7488, %v7598
  %v7699 = vadd.f32 %v7489, %v7599
  %v7700 = vadd.f32 %v7490, %v7600
  %v7701 = vadd.f32 %v7491, %v7601
  %v7702 = vadd.f32 %v7492, %v7602
  %v7703 = vadd.f32 %v7493, %v7603
  %v7704 = vadd.f32 %v7494, %v7604
  %v7705 = vadd.f32 %v7495, %v7605
  %v7706 = vadd.f32 %v7496, %v7606
  %v7707 = vadd.f32 %v7497, %v7607
  %v7708 = vadd.f32 %v7498, %v7608
  %v7709 = vadd.f32 %v7499, %v7609
  %v7710 = vadd.f32 %v7500, %v7610
  %v7711 = vadd.f32 %v7501, %v7611
  %v7712 = vadd.f32 %v7502, %v7612
  %v7713 = vadd.f32 %v7503, %v7613
  %v7714 = vadd.f32 %v7504, %v7614
  %v7715 = vld [vmem:[#allocation2 + $0x324] sm:$0xff]
  %v7716 = vld [vmem:[#allocation2 + $0x32c] sm:$0xff]
  %v7717 = vld [vmem:[#allocation2 + $0x334] sm:$0xff]
  %v7718 = vld [vmem:[#allocation2 + $0x33c] sm:$0xff]
  %v7719 = vld [vmem:[#allocation2 + $0x344] sm:$0xff]
  %v7720 = vld [vmem:[%s3 + $0x7] sm:$0x1]
  %v7721 = vlaneseq
  %v7722 = vshrl.u32 %v7721, 7
  %v7723 = vsub.s32 0, %v7722
  %v7724 = vrot.slane %v7720, %v7723
  %v7725 = vmul.f32 %v7724, %v5985
  %v7726 = vmul.f32 %v7724, %v5986
  %v7727 = vmul.f32 %v7724, %v5987
  %v7728 = vmul.f32 %v7724, %v5988
  %v7729 = vmul.f32 %v7724, %v5989
  %v7730 = vmul.f32 %v7724, %v5990
  %v7731 = vmul.f32 %v7724, %v5991
  %v7732 = vmul.f32 %v7724, %v5992
  %v7733 = vmul.f32 %v7724, %v5993
  %v7734 = vmul.f32 %v7724, %v5994
  %v7735 = vmul.f32 %v7724, %v5995
  %v7736 = vmul.f32 %v7724, %v5996
  %v7737 = vmul.f32 %v7724, %v5997
  %v7738 = vmul.f32 %v7724, %v5998
  %v7739 = vmul.f32 %v7724, %v5999
  %v7740 = vmul.f32 %v7724, %v6000
  %v7741 = vmul.f32 %v7724, %v6001
  %v7742 = vmul.f32 %v7724, %v6002
  %v7743 = vmul.f32 %v7724, %v6003
  %v7744 = vmul.f32 %v7724, %v6004
  %v7745 = vmul.f32 %v7724, %v6005
  %v7746 = vmul.f32 %v7724, %v6006
  %v7747 = vmul.f32 %v7724, %v6007
  %v7748 = vmul.f32 %v7724, %v6008
  %v7749 = vmul.f32 %v7724, %v6009
  %v7750 = vmul.f32 %v7724, %v6010
  %v7751 = vmul.f32 %v7724, %v6011
  %v7752 = vmul.f32 %v7724, %v6012
  %v7753 = vmul.f32 %v7724, %v6013
  %v7754 = vmul.f32 %v7724, %v6014
  %v7755 = vmul.f32 %v7724, %v6015
  %v7756 = vmul.f32 %v7724, %v6016
  %v7757 = vmul.f32 %v7724, %v6017
  %v7758 = vmul.f32 %v7724, %v6018
  %v7759 = vmul.f32 %v7724, %v6019
  %v7760 = vmul.f32 %v7724, %v6020
  %v7761 = vmul.f32 %v7724, %v6021
  %v7762 = vmul.f32 %v7724, %v6022
  %v7763 = vmul.f32 %v7724, %v6023
  %v7764 = vmul.f32 %v7724, %v6024
  %v7765 = vmul.f32 %v7724, %v6025
  %v7766 = vmul.f32 %v7724, %v6026
  %v7767 = vmul.f32 %v7724, %v6027
  %v7768 = vmul.f32 %v7724, %v6028
  %v7769 = vmul.f32 %v7724, %v6029
  %v7770 = vmul.f32 %v7724, %v6030
  %v7771 = vmul.f32 %v7724, %v6031
  %v7772 = vmul.f32 %v7724, %v6032
  %v7773 = vmul.f32 %v7724, %v6033
  %v7774 = vmul.f32 %v7724, %v6034
  %v7775 = vmul.f32 %v7724, %v6035
  %v7776 = vmul.f32 %v7724, %v6036
  %v7777 = vmul.f32 %v7724, %v6037
  %v7778 = vmul.f32 %v7724, %v6038
  %v7779 = vmul.f32 %v7724, %v6039
  %v7780 = vmul.f32 %v7724, %v6040
  %v7781 = vmul.f32 %v7724, %v6041
  %v7782 = vmul.f32 %v7724, %v6042
  %v7783 = vmul.f32 %v7724, %v6043
  %v7784 = vmul.f32 %v7724, %v6044
  %v7785 = vmul.f32 %v7724, %v6045
  %v7786 = vmul.f32 %v7724, %v6046
  %v7787 = vmul.f32 %v7724, %v6047
  %v7788 = vmul.f32 %v7724, %v6048
  %v7789 = vmul.f32 %v7724, %v6049
  %v7790 = vmul.f32 %v7724, %v6050
  %v7791 = vmul.f32 %v7724, %v6051
  %v7792 = vmul.f32 %v7724, %v6052
  %v7793 = vmul.f32 %v7724, %v6053
  %v7794 = vmul.f32 %v7724, %v6054
  %v7795 = vmul.f32 %v7724, %v6055
  %v7796 = vmul.f32 %v7724, %v6056
  %v7797 = vmul.f32 %v7724, %v6057
  %v7798 = vmul.f32 %v7724, %v6058
  %v7799 = vmul.f32 %v7724, %v6059
  %v7800 = vmul.f32 %v7724, %v6060
  %v7801 = vmul.f32 %v7724, %v6061
  %v7802 = vmul.f32 %v7724, %v6062
  %v7803 = vmul.f32 %v7724, %v6063
  %v7804 = vmul.f32 %v7724, %v6064
  %v7805 = vmul.f32 %v7724, %v6065
  %v7806 = vmul.f32 %v7724, %v6066
  %v7807 = vmul.f32 %v7724, %v6067
  %v7808 = vmul.f32 %v7724, %v6068
  %v7809 = vmul.f32 %v7724, %v6069
  %v7810 = vmul.f32 %v7724, %v6070
  %v7811 = vmul.f32 %v7724, %v6071
  %v7812 = vmul.f32 %v7724, %v6072
  %v7813 = vmul.f32 %v7724, %v6073
  %v7814 = vmul.f32 %v7724, %v6074
  %v7815 = vmul.f32 %v7724, %v6075
  %v7816 = vmul.f32 %v7724, %v6076
  %v7817 = vmul.f32 %v7724, %v6077
  %v7818 = vmul.f32 %v7724, %v6078
  %v7819 = vmul.f32 %v7724, %v6079
  %v7820 = vmul.f32 %v7724, %v7715
  %v7821 = vmul.f32 %v7724, %v7716
  %v7822 = vmul.f32 %v7724, %v7717
  %v7823 = vmul.f32 %v7724, %v7718
  %v7824 = vmul.f32 %v7724, %v7719
  %v7825 = vadd.f32 %v7615, %v7725
  %v7826 = vadd.f32 %v7616, %v7726
  %v7827 = vadd.f32 %v7617, %v7727
  %v7828 = vadd.f32 %v7618, %v7728
  %v7829 = vadd.f32 %v7619, %v7729
  %v7830 = vadd.f32 %v7620, %v7730
  %v7831 = vadd.f32 %v7621, %v7731
  %v7832 = vadd.f32 %v7622, %v7732
  %v7833 = vadd.f32 %v7623, %v7733
  %v7834 = vadd.f32 %v7624, %v7734
  %v7835 = vadd.f32 %v7625, %v7735
  %v7836 = vadd.f32 %v7626, %v7736
  %v7837 = vadd.f32 %v7627, %v7737
  %v7838 = vadd.f32 %v7628, %v7738
  %v7839 = vadd.f32 %v7629, %v7739
  %v7840 = vadd.f32 %v7630, %v7740
  %v7841 = vadd.f32 %v7631, %v7741
  %v7842 = vadd.f32 %v7632, %v7742
  %v7843 = vadd.f32 %v7633, %v7743
  %v7844 = vadd.f32 %v7634, %v7744
  %v7845 = vadd.f32 %v7635, %v7745
  %v7846 = vadd.f32 %v7636, %v7746
  %v7847 = vadd.f32 %v7637, %v7747
  %v7848 = vadd.f32 %v7638, %v7748
  %v7849 = vadd.f32 %v7639, %v7749
  %v7850 = vadd.f32 %v7640, %v7750
  %v7851 = vadd.f32 %v7641, %v7751
  %v7852 = vadd.f32 %v7642, %v7752
  %v7853 = vadd.f32 %v7643, %v7753
  %v7854 = vadd.f32 %v7644, %v7754
  %v7855 = vadd.f32 %v7645, %v7755
  %v7856 = vadd.f32 %v7646, %v7756
  %v7857 = vadd.f32 %v7647, %v7757
  %v7858 = vadd.f32 %v7648, %v7758
  %v7859 = vadd.f32 %v7649, %v7759
  %v7860 = vadd.f32 %v7650, %v7760
  %v7861 = vadd.f32 %v7651, %v7761
  %v7862 = vadd.f32 %v7652, %v7762
  %v7863 = vadd.f32 %v7653, %v7763
  %v7864 = vadd.f32 %v7654, %v7764
  %v7865 = vadd.f32 %v7655, %v7765
  %v7866 = vadd.f32 %v7656, %v7766
  %v7867 = vadd.f32 %v7657, %v7767
  %v7868 = vadd.f32 %v7658, %v7768
  %v7869 = vadd.f32 %v7659, %v7769
  %v7870 = vadd.f32 %v7660, %v7770
  %v7871 = vadd.f32 %v7661, %v7771
  %v7872 = vadd.f32 %v7662, %v7772
  %v7873 = vadd.f32 %v7663, %v7773
  %v7874 = vadd.f32 %v7664, %v7774
  %v7875 = vadd.f32 %v7665, %v7775
  %v7876 = vadd.f32 %v7666, %v7776
  %v7877 = vadd.f32 %v7667, %v7777
  %v7878 = vadd.f32 %v7668, %v7778
  %v7879 = vadd.f32 %v7669, %v7779
  %v7880 = vadd.f32 %v7670, %v7780
  %v7881 = vadd.f32 %v7671, %v7781
  %v7882 = vadd.f32 %v7672, %v7782
  %v7883 = vadd.f32 %v7673, %v7783
  %v7884 = vadd.f32 %v7674, %v7784
  %v7885 = vadd.f32 %v7675, %v7785
  %v7886 = vadd.f32 %v7676, %v7786
  %v7887 = vadd.f32 %v7677, %v7787
  %v7888 = vadd.f32 %v7678, %v7788
  %v7889 = vadd.f32 %v7679, %v7789
  %v7890 = vadd.f32 %v7680, %v7790
  %v7891 = vadd.f32 %v7681, %v7791
  %v7892 = vadd.f32 %v7682, %v7792
  %v7893 = vadd.f32 %v7683, %v7793
  %v7894 = vadd.f32 %v7684, %v7794
  %v7895 = vadd.f32 %v7685, %v7795
  %v7896 = vadd.f32 %v7686, %v7796
  %v7897 = vadd.f32 %v7687, %v7797
  %v7898 = vadd.f32 %v7688, %v7798
  %v7899 = vadd.f32 %v7689, %v7799
  %v7900 = vadd.f32 %v7690, %v7800
  %v7901 = vadd.f32 %v7691, %v7801
  %v7902 = vadd.f32 %v7692, %v7802
  %v7903 = vadd.f32 %v7693, %v7803
  %v7904 = vadd.f32 %v7694, %v7804
  %v7905 = vadd.f32 %v7695, %v7805
  %v7906 = vadd.f32 %v7696, %v7806
  %v7907 = vadd.f32 %v7697, %v7807
  %v7908 = vadd.f32 %v7698, %v7808
  %v7909 = vadd.f32 %v7699, %v7809
  %v7910 = vadd.f32 %v7700, %v7810
  %v7911 = vadd.f32 %v7701, %v7811
  %v7912 = vadd.f32 %v7702, %v7812
  %v7913 = vadd.f32 %v7703, %v7813
  %v7914 = vadd.f32 %v7704, %v7814
  %v7915 = vadd.f32 %v7705, %v7815
  %v7916 = vadd.f32 %v7706, %v7816
  %v7917 = vadd.f32 %v7707, %v7817
  %v7918 = vadd.f32 %v7708, %v7818
  %v7919 = vadd.f32 %v7709, %v7819
  %v7920 = vadd.f32 %v7710, %v7820
  %v7921 = vadd.f32 %v7711, %v7821
  %v7922 = vadd.f32 %v7712, %v7822
  %v7923 = vadd.f32 %v7713, %v7823
  %v7924 = vadd.f32 %v7714, %v7824
  %v7925 = vld [vmem:[#allocation2 + $0x325] sm:$0xff]
  %v7926 = vld [vmem:[#allocation2 + $0x32d] sm:$0xff]
  %v7927 = vld [vmem:[#allocation2 + $0x335] sm:$0xff]
  %v7928 = vld [vmem:[#allocation2 + $0x33d] sm:$0xff]
  %v7929 = vld [vmem:[#allocation2 + $0x345] sm:$0xff]
  %v7930 = vld [vmem:[%s3 + $0x8] sm:$0x1]
  %v7931 = vlaneseq
  %v7932 = vshrl.u32 %v7931, 7
  %v7933 = vsub.s32 0, %v7932
  %v7934 = vrot.slane %v7930, %v7933
  %v7935 = vmul.f32 %v7934, %v6290
  %v7936 = vmul.f32 %v7934, %v6291
  %v7937 = vmul.f32 %v7934, %v6292
  %v7938 = vmul.f32 %v7934, %v6293
  %v7939 = vmul.f32 %v7934, %v6294
  %v7940 = vmul.f32 %v7934, %v6295
  %v7941 = vmul.f32 %v7934, %v6296
  %v7942 = vmul.f32 %v7934, %v6297
  %v7943 = vmul.f32 %v7934, %v6298
  %v7944 = vmul.f32 %v7934, %v6299
  %v7945 = vmul.f32 %v7934, %v6300
  %v7946 = vmul.f32 %v7934, %v6301
  %v7947 = vmul.f32 %v7934, %v6302
  %v7948 = vmul.f32 %v7934, %v6303
  %v7949 = vmul.f32 %v7934, %v6304
  %v7950 = vmul.f32 %v7934, %v6305
  %v7951 = vmul.f32 %v7934, %v6306
  %v7952 = vmul.f32 %v7934, %v6307
  %v7953 = vmul.f32 %v7934, %v6308
  %v7954 = vmul.f32 %v7934, %v6309
  %v7955 = vmul.f32 %v7934, %v6310
  %v7956 = vmul.f32 %v7934, %v6311
  %v7957 = vmul.f32 %v7934, %v6312
  %v7958 = vmul.f32 %v7934, %v6313
  %v7959 = vmul.f32 %v7934, %v6314
  %v7960 = vmul.f32 %v7934, %v6315
  %v7961 = vmul.f32 %v7934, %v6316
  %v7962 = vmul.f32 %v7934, %v6317
  %v7963 = vmul.f32 %v7934, %v6318
  %v7964 = vmul.f32 %v7934, %v6319
  %v7965 = vmul.f32 %v7934, %v6320
  %v7966 = vmul.f32 %v7934, %v6321
  %v7967 = vmul.f32 %v7934, %v6322
  %v7968 = vmul.f32 %v7934, %v6323
  %v7969 = vmul.f32 %v7934, %v6324
  %v7970 = vmul.f32 %v7934, %v6325
  %v7971 = vmul.f32 %v7934, %v6326
  %v7972 = vmul.f32 %v7934, %v6327
  %v7973 = vmul.f32 %v7934, %v6328
  %v7974 = vmul.f32 %v7934, %v6329
  %v7975 = vmul.f32 %v7934, %v6330
  %v7976 = vmul.f32 %v7934, %v6331
  %v7977 = vmul.f32 %v7934, %v6332
  %v7978 = vmul.f32 %v7934, %v6333
  %v7979 = vmul.f32 %v7934, %v6334
  %v7980 = vmul.f32 %v7934, %v6335
  %v7981 = vmul.f32 %v7934, %v6336
  %v7982 = vmul.f32 %v7934, %v6337
  %v7983 = vmul.f32 %v7934, %v6338
  %v7984 = vmul.f32 %v7934, %v6339
  %v7985 = vmul.f32 %v7934, %v6340
  %v7986 = vmul.f32 %v7934, %v6341
  %v7987 = vmul.f32 %v7934, %v6342
  %v7988 = vmul.f32 %v7934, %v6343
  %v7989 = vmul.f32 %v7934, %v6344
  %v7990 = vmul.f32 %v7934, %v6345
  %v7991 = vmul.f32 %v7934, %v6346
  %v7992 = vmul.f32 %v7934, %v6347
  %v7993 = vmul.f32 %v7934, %v6348
  %v7994 = vmul.f32 %v7934, %v6349
  %v7995 = vmul.f32 %v7934, %v6350
  %v7996 = vmul.f32 %v7934, %v6351
  %v7997 = vmul.f32 %v7934, %v6352
  %v7998 = vmul.f32 %v7934, %v6353
  %v7999 = vmul.f32 %v7934, %v6354
  %v8000 = vmul.f32 %v7934, %v6355
  %v8001 = vmul.f32 %v7934, %v6356
  %v8002 = vmul.f32 %v7934, %v6357
  %v8003 = vmul.f32 %v7934, %v6358
  %v8004 = vmul.f32 %v7934, %v6359
  %v8005 = vmul.f32 %v7934, %v6360
  %v8006 = vmul.f32 %v7934, %v6361
  %v8007 = vmul.f32 %v7934, %v6362
  %v8008 = vmul.f32 %v7934, %v6363
  %v8009 = vmul.f32 %v7934, %v6364
  %v8010 = vmul.f32 %v7934, %v6365
  %v8011 = vmul.f32 %v7934, %v6366
  %v8012 = vmul.f32 %v7934, %v6367
  %v8013 = vmul.f32 %v7934, %v6368
  %v8014 = vmul.f32 %v7934, %v6369
  %v8015 = vmul.f32 %v7934, %v6370
  %v8016 = vmul.f32 %v7934, %v6371
  %v8017 = vmul.f32 %v7934, %v6372
  %v8018 = vmul.f32 %v7934, %v6373
  %v8019 = vmul.f32 %v7934, %v6374
  %v8020 = vmul.f32 %v7934, %v6375
  %v8021 = vmul.f32 %v7934, %v6376
  %v8022 = vmul.f32 %v7934, %v6377
  %v8023 = vmul.f32 %v7934, %v6378
  %v8024 = vmul.f32 %v7934, %v6379
  %v8025 = vmul.f32 %v7934, %v6380
  %v8026 = vmul.f32 %v7934, %v6381
  %v8027 = vmul.f32 %v7934, %v6382
  %v8028 = vmul.f32 %v7934, %v6383
  %v8029 = vmul.f32 %v7934, %v6384
  %v8030 = vmul.f32 %v7934, %v7925
  %v8031 = vmul.f32 %v7934, %v7926
  %v8032 = vmul.f32 %v7934, %v7927
  %v8033 = vmul.f32 %v7934, %v7928
  %v8034 = vmul.f32 %v7934, %v7929
  %v8035 = vadd.f32 %v7825, %v7935
  %v8036 = vadd.f32 %v7826, %v7936
  %v8037 = vadd.f32 %v7827, %v7937
  %v8038 = vadd.f32 %v7828, %v7938
  %v8039 = vadd.f32 %v7829, %v7939
  %v8040 = vadd.f32 %v7830, %v7940
  %v8041 = vadd.f32 %v7831, %v7941
  %v8042 = vadd.f32 %v7832, %v7942
  %v8043 = vadd.f32 %v7833, %v7943
  %v8044 = vadd.f32 %v7834, %v7944
  %v8045 = vadd.f32 %v7835, %v7945
  %v8046 = vadd.f32 %v7836, %v7946
  %v8047 = vadd.f32 %v7837, %v7947
  %v8048 = vadd.f32 %v7838, %v7948
  %v8049 = vadd.f32 %v7839, %v7949
  %v8050 = vadd.f32 %v7840, %v7950
  %v8051 = vadd.f32 %v7841, %v7951
  %v8052 = vadd.f32 %v7842, %v7952
  %v8053 = vadd.f32 %v7843, %v7953
  %v8054 = vadd.f32 %v7844, %v7954
  %v8055 = vadd.f32 %v7845, %v7955
  %v8056 = vadd.f32 %v7846, %v7956
  %v8057 = vadd.f32 %v7847, %v7957
  %v8058 = vadd.f32 %v7848, %v7958
  %v8059 = vadd.f32 %v7849, %v7959
  %v8060 = vadd.f32 %v7850, %v7960
  %v8061 = vadd.f32 %v7851, %v7961
  %v8062 = vadd.f32 %v7852, %v7962
  %v8063 = vadd.f32 %v7853, %v7963
  %v8064 = vadd.f32 %v7854, %v7964
  %v8065 = vadd.f32 %v7855, %v7965
  %v8066 = vadd.f32 %v7856, %v7966
  %v8067 = vadd.f32 %v7857, %v7967
  %v8068 = vadd.f32 %v7858, %v7968
  %v8069 = vadd.f32 %v7859, %v7969
  %v8070 = vadd.f32 %v7860, %v7970
  %v8071 = vadd.f32 %v7861, %v7971
  %v8072 = vadd.f32 %v7862, %v7972
  %v8073 = vadd.f32 %v7863, %v7973
  %v8074 = vadd.f32 %v7864, %v7974
  %v8075 = vadd.f32 %v7865, %v7975
  %v8076 = vadd.f32 %v7866, %v7976
  %v8077 = vadd.f32 %v7867, %v7977
  %v8078 = vadd.f32 %v7868, %v7978
  %v8079 = vadd.f32 %v7869, %v7979
  %v8080 = vadd.f32 %v7870, %v7980
  %v8081 = vadd.f32 %v7871, %v7981
  %v8082 = vadd.f32 %v7872, %v7982
  %v8083 = vadd.f32 %v7873, %v7983
  %v8084 = vadd.f32 %v7874, %v7984
  %v8085 = vadd.f32 %v7875, %v7985
  %v8086 = vadd.f32 %v7876, %v7986
  %v8087 = vadd.f32 %v7877, %v7987
  %v8088 = vadd.f32 %v7878, %v7988
  %v8089 = vadd.f32 %v7879, %v7989
  %v8090 = vadd.f32 %v7880, %v7990
  %v8091 = vadd.f32 %v7881, %v7991
  %v8092 = vadd.f32 %v7882, %v7992
  %v8093 = vadd.f32 %v7883, %v7993
  %v8094 = vadd.f32 %v7884, %v7994
  %v8095 = vadd.f32 %v7885, %v7995
  %v8096 = vadd.f32 %v7886, %v7996
  %v8097 = vadd.f32 %v7887, %v7997
  %v8098 = vadd.f32 %v7888, %v7998
  %v8099 = vadd.f32 %v7889, %v7999
  %v8100 = vadd.f32 %v7890, %v8000
  %v8101 = vadd.f32 %v7891, %v8001
  %v8102 = vadd.f32 %v7892, %v8002
  %v8103 = vadd.f32 %v7893, %v8003
  %v8104 = vadd.f32 %v7894, %v8004
  %v8105 = vadd.f32 %v7895, %v8005
  %v8106 = vadd.f32 %v7896, %v8006
  %v8107 = vadd.f32 %v7897, %v8007
  %v8108 = vadd.f32 %v7898, %v8008
  %v8109 = vadd.f32 %v7899, %v8009
  %v8110 = vadd.f32 %v7900, %v8010
  %v8111 = vadd.f32 %v7901, %v8011
  %v8112 = vadd.f32 %v7902, %v8012
  %v8113 = vadd.f32 %v7903, %v8013
  %v8114 = vadd.f32 %v7904, %v8014
  %v8115 = vadd.f32 %v7905, %v8015
  %v8116 = vadd.f32 %v7906, %v8016
  %v8117 = vadd.f32 %v7907, %v8017
  %v8118 = vadd.f32 %v7908, %v8018
  %v8119 = vadd.f32 %v7909, %v8019
  %v8120 = vadd.f32 %v7910, %v8020
  %v8121 = vadd.f32 %v7911, %v8021
  %v8122 = vadd.f32 %v7912, %v8022
  %v8123 = vadd.f32 %v7913, %v8023
  %v8124 = vadd.f32 %v7914, %v8024
  %v8125 = vadd.f32 %v7915, %v8025
  %v8126 = vadd.f32 %v7916, %v8026
  %v8127 = vadd.f32 %v7917, %v8027
  %v8128 = vadd.f32 %v7918, %v8028
  %v8129 = vadd.f32 %v7919, %v8029
  %v8130 = vadd.f32 %v7920, %v8030
  %v8131 = vadd.f32 %v7921, %v8031
  %v8132 = vadd.f32 %v7922, %v8032
  %v8133 = vadd.f32 %v7923, %v8033
  %v8134 = vadd.f32 %v7924, %v8034
  %v8135 = vlaneseq
  %v8136 = vshrl.u32 %v8135, 7
  %v8137 = vsub.s32 0, %v8136
  %v8138 = vrot.slane %v431, %v8137
  %v8139 = vadd.f32 %v8035, %v8138
  %v8140 = vadd.f32 %v8036, %v8138
  %v8141 = vadd.f32 %v8037, %v8138
  %v8142 = vadd.f32 %v8038, %v8138
  %v8143 = vadd.f32 %v8039, %v8138
  %v8144 = vadd.f32 %v8040, %v8138
  %v8145 = vadd.f32 %v8041, %v8138
  %v8146 = vadd.f32 %v8042, %v8138
  %v8147 = vadd.f32 %v8043, %v8138
  %v8148 = vadd.f32 %v8044, %v8138
  %v8149 = vadd.f32 %v8045, %v8138
  %v8150 = vadd.f32 %v8046, %v8138
  %v8151 = vadd.f32 %v8047, %v8138
  %v8152 = vadd.f32 %v8048, %v8138
  %v8153 = vadd.f32 %v8049, %v8138
  %v8154 = vadd.f32 %v8050, %v8138
  %v8155 = vadd.f32 %v8051, %v8138
  %v8156 = vadd.f32 %v8052, %v8138
  %v8157 = vadd.f32 %v8053, %v8138
  %v8158 = vadd.f32 %v8054, %v8138
  %v8159 = vadd.f32 %v8055, %v8138
  %v8160 = vadd.f32 %v8056, %v8138
  %v8161 = vadd.f32 %v8057, %v8138
  %v8162 = vadd.f32 %v8058, %v8138
  %v8163 = vadd.f32 %v8059, %v8138
  %v8164 = vadd.f32 %v8060, %v8138
  %v8165 = vadd.f32 %v8061, %v8138
  %v8166 = vadd.f32 %v8062, %v8138
  %v8167 = vadd.f32 %v8063, %v8138
  %v8168 = vadd.f32 %v8064, %v8138
  %v8169 = vadd.f32 %v8065, %v8138
  %v8170 = vadd.f32 %v8066, %v8138
  %v8171 = vadd.f32 %v8067, %v8138
  %v8172 = vadd.f32 %v8068, %v8138
  %v8173 = vadd.f32 %v8069, %v8138
  %v8174 = vadd.f32 %v8070, %v8138
  %v8175 = vadd.f32 %v8071, %v8138
  %v8176 = vadd.f32 %v8072, %v8138
  %v8177 = vadd.f32 %v8073, %v8138
  %v8178 = vadd.f32 %v8074, %v8138
  %v8179 = vadd.f32 %v8075, %v8138
  %v8180 = vadd.f32 %v8076, %v8138
  %v8181 = vadd.f32 %v8077, %v8138
  %v8182 = vadd.f32 %v8078, %v8138
  %v8183 = vadd.f32 %v8079, %v8138
  %v8184 = vadd.f32 %v8080, %v8138
  %v8185 = vadd.f32 %v8081, %v8138
  %v8186 = vadd.f32 %v8082, %v8138
  %v8187 = vadd.f32 %v8083, %v8138
  %v8188 = vadd.f32 %v8084, %v8138
  %v8189 = vadd.f32 %v8085, %v8138
  %v8190 = vadd.f32 %v8086, %v8138
  %v8191 = vadd.f32 %v8087, %v8138
  %v8192 = vadd.f32 %v8088, %v8138
  %v8193 = vadd.f32 %v8089, %v8138
  %v8194 = vadd.f32 %v8090, %v8138
  %v8195 = vadd.f32 %v8091, %v8138
  %v8196 = vadd.f32 %v8092, %v8138
  %v8197 = vadd.f32 %v8093, %v8138
  %v8198 = vadd.f32 %v8094, %v8138
  %v8199 = vadd.f32 %v8095, %v8138
  %v8200 = vadd.f32 %v8096, %v8138
  %v8201 = vadd.f32 %v8097, %v8138
  %v8202 = vadd.f32 %v8098, %v8138
  %v8203 = vadd.f32 %v8099, %v8138
  %v8204 = vadd.f32 %v8100, %v8138
  %v8205 = vadd.f32 %v8101, %v8138
  %v8206 = vadd.f32 %v8102, %v8138
  %v8207 = vadd.f32 %v8103, %v8138
  %v8208 = vadd.f32 %v8104, %v8138
  %v8209 = vadd.f32 %v8105, %v8138
  %v8210 = vadd.f32 %v8106, %v8138
  %v8211 = vadd.f32 %v8107, %v8138
  %v8212 = vadd.f32 %v8108, %v8138
  %v8213 = vadd.f32 %v8109, %v8138
  %v8214 = vadd.f32 %v8110, %v8138
  %v8215 = vadd.f32 %v8111, %v8138
  %v8216 = vadd.f32 %v8112, %v8138
  %v8217 = vadd.f32 %v8113, %v8138
  %v8218 = vadd.f32 %v8114, %v8138
  %v8219 = vadd.f32 %v8115, %v8138
  %v8220 = vadd.f32 %v8116, %v8138
  %v8221 = vadd.f32 %v8117, %v8138
  %v8222 = vadd.f32 %v8118, %v8138
  %v8223 = vadd.f32 %v8119, %v8138
  %v8224 = vadd.f32 %v8120, %v8138
  %v8225 = vadd.f32 %v8121, %v8138
  %v8226 = vadd.f32 %v8122, %v8138
  %v8227 = vadd.f32 %v8123, %v8138
  %v8228 = vadd.f32 %v8124, %v8138
  %v8229 = vadd.f32 %v8125, %v8138
  %v8230 = vadd.f32 %v8126, %v8138
  %v8231 = vadd.f32 %v8127, %v8138
  %v8232 = vadd.f32 %v8128, %v8138
  %v8233 = vadd.f32 %v8129, %v8138
  %v8234 = vadd.f32 %v8130, %v8138
  %v8235 = vadd.f32 %v8131, %v8138
  %v8236 = vadd.f32 %v8132, %v8138
  %v8237 = vadd.f32 %v8133, %v8138
  %v8238 = vadd.f32 %v8134, %v8138
  %v8239 = vsel %vm4541, %v8139, 0.0
  %v8240 = vsel %vm4542, %v8140, 0.0
  %v8241 = vsel %vm4543, %v8141, 0.0
  %v8242 = vsel %vm4544, %v8142, 0.0
  %v8243 = vsel %vm4545, %v8143, 0.0
  %v8244 = vsel %vm4546, %v8144, 0.0
  %v8245 = vsel %vm4547, %v8145, 0.0
  %v8246 = vsel %vm4548, %v8146, 0.0
  %v8247 = vsel %vm4549, %v8147, 0.0
  %v8248 = vsel %vm4550, %v8148, 0.0
  %v8249 = vsel %vm4551, %v8149, 0.0
  %v8250 = vsel %vm4552, %v8150, 0.0
  %v8251 = vsel %vm4553, %v8151, 0.0
  %v8252 = vsel %vm4554, %v8152, 0.0
  %v8253 = vsel %vm4555, %v8153, 0.0
  %v8254 = vsel %vm4556, %v8154, 0.0
  %v8255 = vsel %vm4557, %v8155, 0.0
  %v8256 = vsel %vm4558, %v8156, 0.0
  %v8257 = vsel %vm4559, %v8157, 0.0
  %v8258 = vsel %vm4560, %v8158, 0.0
  %v8259 = vsel %vm4561, %v8159, 0.0
  %v8260 = vsel %vm4562, %v8160, 0.0
  %v8261 = vsel %vm4563, %v8161, 0.0
  %v8262 = vsel %vm4564, %v8162, 0.0
  %v8263 = vsel %vm4565, %v8163, 0.0
  %v8264 = vsel %vm4566, %v8164, 0.0
  %v8265 = vsel %vm4567, %v8165, 0.0
  %v8266 = vsel %vm4568, %v8166, 0.0
  %v8267 = vsel %vm4569, %v8167, 0.0
  %v8268 = vsel %vm4570, %v8168, 0.0
  %v8269 = vsel %vm4571, %v8169, 0.0
  %v8270 = vsel %vm4572, %v8170, 0.0
  %v8271 = vsel %vm4573, %v8171, 0.0
  %v8272 = vsel %vm4574, %v8172, 0.0
  %v8273 = vsel %vm4575, %v8173, 0.0
  %v8274 = vsel %vm4576, %v8174, 0.0
  %v8275 = vsel %vm4577, %v8175, 0.0
  %v8276 = vsel %vm4578, %v8176, 0.0
  %v8277 = vsel %vm4579, %v8177, 0.0
  %v8278 = vsel %vm4580, %v8178, 0.0
  %v8279 = vsel %vm4581, %v8179, 0.0
  %v8280 = vsel %vm4582, %v8180, 0.0
  %v8281 = vsel %vm4583, %v8181, 0.0
  %v8282 = vsel %vm4584, %v8182, 0.0
  %v8283 = vsel %vm4585, %v8183, 0.0
  %v8284 = vsel %vm4586, %v8184, 0.0
  %v8285 = vsel %vm4587, %v8185, 0.0
  %v8286 = vsel %vm4588, %v8186, 0.0
  %v8287 = vsel %vm4589, %v8187, 0.0
  %v8288 = vsel %vm4590, %v8188, 0.0
  %v8289 = vsel %vm4591, %v8189, 0.0
  %v8290 = vsel %vm4592, %v8190, 0.0
  %v8291 = vsel %vm4593, %v8191, 0.0
  %v8292 = vsel %vm4594, %v8192, 0.0
  %v8293 = vsel %vm4595, %v8193, 0.0
  %v8294 = vsel %vm4596, %v8194, 0.0
  %v8295 = vsel %vm4597, %v8195, 0.0
  %v8296 = vsel %vm4598, %v8196, 0.0
  %v8297 = vsel %vm4599, %v8197, 0.0
  %v8298 = vsel %vm4600, %v8198, 0.0
  %v8299 = vsel %vm4601, %v8199, 0.0
  %v8300 = vsel %vm4602, %v8200, 0.0
  %v8301 = vsel %vm4603, %v8201, 0.0
  %v8302 = vsel %vm4604, %v8202, 0.0
  %v8303 = vsel %vm4605, %v8203, 0.0
  %v8304 = vsel %vm4606, %v8204, 0.0
  %v8305 = vsel %vm4607, %v8205, 0.0
  %v8306 = vsel %vm4608, %v8206, 0.0
  %v8307 = vsel %vm4609, %v8207, 0.0
  %v8308 = vsel %vm4610, %v8208, 0.0
  %v8309 = vsel %vm4611, %v8209, 0.0
  %v8310 = vsel %vm4612, %v8210, 0.0
  %v8311 = vsel %vm4613, %v8211, 0.0
  %v8312 = vsel %vm4614, %v8212, 0.0
  %v8313 = vsel %vm4615, %v8213, 0.0
  %v8314 = vsel %vm4616, %v8214, 0.0
  %v8315 = vsel %vm4617, %v8215, 0.0
  %v8316 = vsel %vm4618, %v8216, 0.0
  %v8317 = vsel %vm4619, %v8217, 0.0
  %v8318 = vsel %vm4620, %v8218, 0.0
  %v8319 = vsel %vm4621, %v8219, 0.0
  %v8320 = vsel %vm4622, %v8220, 0.0
  %v8321 = vsel %vm4623, %v8221, 0.0
  %v8322 = vsel %vm4624, %v8222, 0.0
  %v8323 = vsel %vm4625, %v8223, 0.0
  %v8324 = vsel %vm4626, %v8224, 0.0
  %v8325 = vsel %vm4627, %v8225, 0.0
  %v8326 = vsel %vm4628, %v8226, 0.0
  %v8327 = vsel %vm4629, %v8227, 0.0
  %v8328 = vsel %vm4630, %v8228, 0.0
  %v8329 = vsel %vm4631, %v8229, 0.0
  %v8330 = vsel %vm4632, %v8230, 0.0
  %v8331 = vsel %vm4633, %v8231, 0.0
  %v8332 = vsel %vm4634, %v8232, 0.0
  %v8333 = vsel %vm4635, %v8233, 0.0
  %v8334 = vsel %vm4636, %v8234, 0.0
  %v8335 = vsel %vm4637, %v8235, 0.0
  %v8336 = vsel %vm4638, %v8236, 0.0
  %v8337 = vsel %vm4639, %v8237, 0.0
  %v8338 = vsel %vm4640, %v8238, 0.0
  %v8339 = vpack.c.bf16 %v8240, %v8239
  %v8340 = vpack.c.bf16 %v8242, %v8241
  %v8341 = vpack.c.bf16 %v8244, %v8243
  %v8342 = vpack.c.bf16 %v8246, %v8245
  %v8343 = vpack.c.bf16 %v8248, %v8247
  %v8344 = vpack.c.bf16 %v8250, %v8249
  %v8345 = vpack.c.bf16 %v8252, %v8251
  %v8346 = vpack.c.bf16 %v8254, %v8253
  %v8347 = vpack.c.bf16 %v8256, %v8255
  %v8348 = vpack.c.bf16 %v8258, %v8257
  %v8349 = vpack.c.bf16 %v8260, %v8259
  %v8350 = vpack.c.bf16 %v8262, %v8261
  %v8351 = vpack.c.bf16 %v8264, %v8263
  %v8352 = vpack.c.bf16 %v8266, %v8265
  %v8353 = vpack.c.bf16 %v8268, %v8267
  %v8354 = vpack.c.bf16 %v8270, %v8269
  %v8355 = vpack.c.bf16 %v8272, %v8271
  %v8356 = vpack.c.bf16 %v8274, %v8273
  %v8357 = vpack.c.bf16 %v8276, %v8275
  %v8358 = vpack.c.bf16 %v8278, %v8277
  %v8359 = vpack.c.bf16 %v8280, %v8279
  %v8360 = vpack.c.bf16 %v8282, %v8281
  %v8361 = vpack.c.bf16 %v8284, %v8283
  %v8362 = vpack.c.bf16 %v8286, %v8285
  %v8363 = vpack.c.bf16 %v8288, %v8287
  %v8364 = vpack.c.bf16 %v8290, %v8289
  %v8365 = vpack.c.bf16 %v8292, %v8291
  %v8366 = vpack.c.bf16 %v8294, %v8293
  %v8367 = vpack.c.bf16 %v8296, %v8295
  %v8368 = vpack.c.bf16 %v8298, %v8297
  %v8369 = vpack.c.bf16 %v8300, %v8299
  %v8370 = vpack.c.bf16 %v8302, %v8301
  %v8371 = vpack.c.bf16 %v8304, %v8303
  %v8372 = vpack.c.bf16 %v8306, %v8305
  %v8373 = vpack.c.bf16 %v8308, %v8307
  %v8374 = vpack.c.bf16 %v8310, %v8309
  %v8375 = vpack.c.bf16 %v8312, %v8311
  %v8376 = vpack.c.bf16 %v8314, %v8313
  %v8377 = vpack.c.bf16 %v8316, %v8315
  %v8378 = vpack.c.bf16 %v8318, %v8317
  %v8379 = vpack.c.bf16 %v8320, %v8319
  %v8380 = vpack.c.bf16 %v8322, %v8321
  %v8381 = vpack.c.bf16 %v8324, %v8323
  %v8382 = vpack.c.bf16 %v8326, %v8325
  %v8383 = vpack.c.bf16 %v8328, %v8327
  %v8384 = vpack.c.bf16 %v8330, %v8329
  %v8385 = vpack.c.bf16 %v8332, %v8331
  %v8386 = vpack.c.bf16 %v8334, %v8333
  %v8387 = vpack.c.bf16 %v8336, %v8335
  %v8388 = vpack.c.bf16 %v8338, %v8337
  %v8389 = vld [vmem:[%s5] sm:$0xf]
  %v8390 = vld [vmem:[%s5 + $0x4] sm:$0xf]
  %v8391 = vld [vmem:[%s5 + $0x8] sm:$0xf]
  %v8392 = vld [vmem:[%s5 + $0xc] sm:$0xf]
  %v8393 = vld [vmem:[%s5 + $0x10] sm:$0xf]
  %v8394 = vld [vmem:[%s5 + $0x14] sm:$0xf]
  %v8395 = vld [vmem:[%s5 + $0x18] sm:$0xf]
  %v8396 = vld [vmem:[%s5 + $0x1c] sm:$0xf]
  %v8397 = vld [vmem:[%s5 + $0x20] sm:$0xf]
  %v8398 = vld [vmem:[%s5 + $0x24] sm:$0xf]
  %v8399 = vld [vmem:[%s5 + $0x28] sm:$0xf]
  %v8400 = vld [vmem:[%s5 + $0x2c] sm:$0xf]
  %v8401 = vld [vmem:[%s5 + $0x30] sm:$0xf]
  %v8402 = vld [vmem:[%s5 + $0x34] sm:$0xf]
  %v8403 = vld [vmem:[%s5 + $0x38] sm:$0xf]
  %v8404 = vld [vmem:[%s5 + $0x3c] sm:$0xf]
  %v8405 = vlaneseq
  %v8406 = vshrl.u32 %v8405, 7
  %v8407 = vsub.s32 4, %v8406
  %v8408 = vrot.slane %v431, %v8407
  %v8425 = vunpack.c.l.b16 %v8389
  %v8426 = vunpack.c.l.b16 %v8390
  %v8427 = vunpack.c.l.b16 %v8391
  %v8428 = vunpack.c.l.b16 %v8392
  %v8429 = vunpack.c.l.b16 %v8393
  %v8430 = vunpack.c.l.b16 %v8394
  %v8431 = vunpack.c.l.b16 %v8395
  %v8432 = vunpack.c.l.b16 %v8396
  %v8433 = vunpack.c.l.b16 %v8397
  %v8434 = vunpack.c.l.b16 %v8398
  %v8435 = vunpack.c.l.b16 %v8399
  %v8436 = vunpack.c.l.b16 %v8400
  %v8437 = vunpack.c.l.b16 %v8401
  %v8438 = vunpack.c.l.b16 %v8402
  %v8439 = vunpack.c.l.b16 %v8403
  %v8440 = vunpack.c.l.b16 %v8404
  %v8441 = vpack.c.b16 %v8426, %v8425
  %v8442 = vpack.c.b16 %v8428, %v8427
  %v8443 = vpack.c.b16 %v8430, %v8429
  %v8444 = vpack.c.b16 %v8432, %v8431
  %v8445 = vpack.c.b16 %v8434, %v8433
  %v8446 = vpack.c.b16 %v8436, %v8435
  %v8447 = vpack.c.b16 %v8438, %v8437
  %v8448 = vpack.c.b16 %v8440, %v8439
  %8457 = vmatprep.subr.bf16.mxu0 0
  %8458 = vmatpush1.bf16.msra.mxu0 %v8448
  %8459 = vmatprep.subr.bf16.mxu0 0
  %8460 = vmatpush1.bf16.msra.mxu0 %v8447
  %8461 = vmatprep.subr.bf16.mxu0 0
  %8462 = vmatpush1.bf16.msra.mxu0 %v8446
  %8463 = vmatprep.subr.bf16.mxu0 0
  %8464 = vmatpush1.bf16.msra.mxu0 %v8445
  %8465 = vmatprep.subr.bf16.mxu0 0
  %8466 = vmatpush1.bf16.msra.mxu0 %v8444
  %8467 = vmatprep.subr.bf16.mxu0 0
  %8468 = vmatpush1.bf16.msra.mxu0 %v8443
  %8469 = vmatprep.subr.bf16.mxu0 0
  %8470 = vmatpush1.bf16.msra.mxu0 %v8442
  %8471 = vmatprep.subr.bf16.mxu0 0
  %8472 = vmatpush1.bf16.msra.mxu0 %v8441
  %8473 = vmatprep.subr.bf16.mxu0 0
  %8474 = vmatpush2.bf16.msra.mxu0 0
  %8475 = vmatprep.subr.bf16.mxu0 0
  %8476 = vmatpush2.bf16.msra.mxu0 0
  %8477 = vmatprep.subr.bf16.mxu0 0
  %8478 = vmatpush2.bf16.msra.mxu0 0
  %8479 = vmatprep.subr.bf16.mxu0 0
  %8480 = vmatpush2.bf16.msra.mxu0 0
  %8481 = vmatprep.subr.bf16.mxu0 0
  %8482 = vmatpush2.bf16.msra.mxu0 0
  %8483 = vmatprep.subr.bf16.mxu0 0
  %8484 = vmatpush2.bf16.msra.mxu0 0
  %8485 = vmatprep.subr.bf16.mxu0 0
  %8486 = vmatpush2.bf16.msra.mxu0 0
  %8487 = vmatprep.subr.bf16.mxu0 0
  %8488 = vmatpush2.bf16.msra.mxu0 0
  %8489 = vmatprep.mubr.bf16.mxu0 0
  %8490 = vmatmul.mubr.bf16.gmra.mxu0 %v8339
  %v8491 = vpop.f32.mrf.mxu0
  %v8492 = vadd.f32 %v8408, %v8491
  %v8493 = vpop.f32.mrf.mxu0
  %v8494 = vpop.f32.mrf.mxu0
  %v8495 = vadd.f32 %v8408, %v8494
  %v8496 = vpop.f32.mrf.mxu0
  %8497 = vmatprep.mubr.bf16.mxu0 0
  %8498 = vmatmul.mubr.bf16.gmra.mxu0 %v8340
  %v8499 = vpop.f32.mrf.mxu0
  %v8500 = vadd.f32 %v8408, %v8499
  %v8501 = vpop.f32.mrf.mxu0
  %v8502 = vpop.f32.mrf.mxu0
  %v8503 = vadd.f32 %v8408, %v8502
  %v8504 = vpop.f32.mrf.mxu0
  %8505 = vmatprep.mubr.bf16.mxu0 0
  %8506 = vmatmul.mubr.bf16.gmra.mxu0 %v8341
  %v8507 = vpop.f32.mrf.mxu0
  %v8508 = vadd.f32 %v8408, %v8507
  %v8509 = vpop.f32.mrf.mxu0
  %v8510 = vpop.f32.mrf.mxu0
  %v8511 = vadd.f32 %v8408, %v8510
  %v8512 = vpop.f32.mrf.mxu0
  %8513 = vmatprep.mubr.bf16.mxu0 0
  %8514 = vmatmul.mubr.bf16.gmra.mxu0 %v8342
  %v8515 = vpop.f32.mrf.mxu0
  %v8516 = vadd.f32 %v8408, %v8515
  %v8517 = vpop.f32.mrf.mxu0
  %v8518 = vpop.f32.mrf.mxu0
  %v8519 = vadd.f32 %v8408, %v8518
  %v8520 = vpop.f32.mrf.mxu0
  %8521 = vmatprep.mubr.bf16.mxu0 0
  %8522 = vmatmul.mubr.bf16.gmra.mxu0 %v8343
  %v8523 = vpop.f32.mrf.mxu0
  %v8524 = vadd.f32 %v8408, %v8523
  %v8525 = vpop.f32.mrf.mxu0
  %v8526 = vpop.f32.mrf.mxu0
  %v8527 = vadd.f32 %v8408, %v8526
  %v8528 = vpop.f32.mrf.mxu0
  %8529 = vmatprep.mubr.bf16.mxu0 0
  %8530 = vmatmul.mubr.bf16.gmra.mxu0 %v8344
  %v8531 = vpop.f32.mrf.mxu0
  %v8532 = vadd.f32 %v8408, %v8531
  %v8533 = vpop.f32.mrf.mxu0
  %v8534 = vpop.f32.mrf.mxu0
  %v8535 = vadd.f32 %v8408, %v8534
  %v8536 = vpop.f32.mrf.mxu0
  %8537 = vmatprep.mubr.bf16.mxu0 0
  %8538 = vmatmul.mubr.bf16.gmra.mxu0 %v8345
  %v8539 = vpop.f32.mrf.mxu0
  %v8540 = vadd.f32 %v8408, %v8539
  %v8541 = vpop.f32.mrf.mxu0
  %v8542 = vpop.f32.mrf.mxu0
  %v8543 = vadd.f32 %v8408, %v8542
  %v8544 = vpop.f32.mrf.mxu0
  %8545 = vmatprep.mubr.bf16.mxu0 0
  %8546 = vmatmul.mubr.bf16.gmra.mxu0 %v8346
  %v8547 = vpop.f32.mrf.mxu0
  %v8548 = vadd.f32 %v8408, %v8547
  %v8549 = vpop.f32.mrf.mxu0
  %v8550 = vpop.f32.mrf.mxu0
  %v8551 = vadd.f32 %v8408, %v8550
  %v8552 = vpop.f32.mrf.mxu0
  %8553 = vmatprep.mubr.bf16.mxu0 0
  %8554 = vmatmul.mubr.bf16.gmra.mxu0 %v8347
  %v8555 = vpop.f32.mrf.mxu0
  %v8556 = vadd.f32 %v8408, %v8555
  %v8557 = vpop.f32.mrf.mxu0
  %v8558 = vpop.f32.mrf.mxu0
  %v8559 = vadd.f32 %v8408, %v8558
  %v8560 = vpop.f32.mrf.mxu0
  %8561 = vmatprep.mubr.bf16.mxu0 0
  %8562 = vmatmul.mubr.bf16.gmra.mxu0 %v8348
  %v8563 = vpop.f32.mrf.mxu0
  %v8564 = vadd.f32 %v8408, %v8563
  %v8565 = vpop.f32.mrf.mxu0
  %v8566 = vpop.f32.mrf.mxu0
  %v8567 = vadd.f32 %v8408, %v8566
  %v8568 = vpop.f32.mrf.mxu0
  %8569 = vmatprep.mubr.bf16.mxu0 0
  %8570 = vmatmul.mubr.bf16.gmra.mxu0 %v8349
  %v8571 = vpop.f32.mrf.mxu0
  %v8572 = vadd.f32 %v8408, %v8571
  %v8573 = vpop.f32.mrf.mxu0
  %v8574 = vpop.f32.mrf.mxu0
  %v8575 = vadd.f32 %v8408, %v8574
  %v8576 = vpop.f32.mrf.mxu0
  %8577 = vmatprep.mubr.bf16.mxu0 0
  %8578 = vmatmul.mubr.bf16.gmra.mxu0 %v8350
  %v8579 = vpop.f32.mrf.mxu0
  %v8580 = vadd.f32 %v8408, %v8579
  %v8581 = vpop.f32.mrf.mxu0
  %v8582 = vpop.f32.mrf.mxu0
  %v8583 = vadd.f32 %v8408, %v8582
  %v8584 = vpop.f32.mrf.mxu0
  %8585 = vmatprep.mubr.bf16.mxu0 0
  %8586 = vmatmul.mubr.bf16.gmra.mxu0 %v8351
  %v8587 = vpop.f32.mrf.mxu0
  %v8588 = vadd.f32 %v8408, %v8587
  %v8589 = vpop.f32.mrf.mxu0
  %v8590 = vpop.f32.mrf.mxu0
  %v8591 = vadd.f32 %v8408, %v8590
  %v8592 = vpop.f32.mrf.mxu0
  %8593 = vmatprep.mubr.bf16.mxu0 0
  %8594 = vmatmul.mubr.bf16.gmra.mxu0 %v8352
  %v8595 = vpop.f32.mrf.mxu0
  %v8596 = vadd.f32 %v8408, %v8595
  %v8597 = vpop.f32.mrf.mxu0
  %v8598 = vpop.f32.mrf.mxu0
  %v8599 = vadd.f32 %v8408, %v8598
  %v8600 = vpop.f32.mrf.mxu0
  %8601 = vmatprep.mubr.bf16.mxu0 0
  %8602 = vmatmul.mubr.bf16.gmra.mxu0 %v8353
  %v8603 = vpop.f32.mrf.mxu0
  %v8604 = vadd.f32 %v8408, %v8603
  %v8605 = vpop.f32.mrf.mxu0
  %v8606 = vpop.f32.mrf.mxu0
  %v8607 = vadd.f32 %v8408, %v8606
  %v8608 = vpop.f32.mrf.mxu0
  %8609 = vmatprep.mubr.bf16.mxu0 0
  %8610 = vmatmul.mubr.bf16.gmra.mxu0 %v8354
  %v8611 = vpop.f32.mrf.mxu0
  %v8612 = vadd.f32 %v8408, %v8611
  %v8613 = vpop.f32.mrf.mxu0
  %v8614 = vpop.f32.mrf.mxu0
  %v8615 = vadd.f32 %v8408, %v8614
  %v8616 = vpop.f32.mrf.mxu0
  %8617 = vmatprep.mubr.bf16.mxu0 0
  %8618 = vmatmul.mubr.bf16.gmra.mxu0 %v8355
  %v8619 = vpop.f32.mrf.mxu0
  %v8620 = vadd.f32 %v8408, %v8619
  %v8621 = vpop.f32.mrf.mxu0
  %v8622 = vpop.f32.mrf.mxu0
  %v8623 = vadd.f32 %v8408, %v8622
  %v8624 = vpop.f32.mrf.mxu0
  %8625 = vmatprep.mubr.bf16.mxu0 0
  %8626 = vmatmul.mubr.bf16.gmra.mxu0 %v8356
  %v8627 = vpop.f32.mrf.mxu0
  %v8628 = vadd.f32 %v8408, %v8627
  %v8629 = vpop.f32.mrf.mxu0
  %v8630 = vpop.f32.mrf.mxu0
  %v8631 = vadd.f32 %v8408, %v8630
  %v8632 = vpop.f32.mrf.mxu0
  %8633 = vmatprep.mubr.bf16.mxu0 0
  %8634 = vmatmul.mubr.bf16.gmra.mxu0 %v8357
  %v8635 = vpop.f32.mrf.mxu0
  %v8636 = vadd.f32 %v8408, %v8635
  %v8637 = vpop.f32.mrf.mxu0
  %v8638 = vpop.f32.mrf.mxu0
  %v8639 = vadd.f32 %v8408, %v8638
  %v8640 = vpop.f32.mrf.mxu0
  %8641 = vmatprep.mubr.bf16.mxu0 0
  %8642 = vmatmul.mubr.bf16.gmra.mxu0 %v8358
  %v8643 = vpop.f32.mrf.mxu0
  %v8644 = vadd.f32 %v8408, %v8643
  %v8645 = vpop.f32.mrf.mxu0
  %v8646 = vpop.f32.mrf.mxu0
  %v8647 = vadd.f32 %v8408, %v8646
  %v8648 = vpop.f32.mrf.mxu0
  %8649 = vmatprep.mubr.bf16.mxu0 0
  %8650 = vmatmul.mubr.bf16.gmra.mxu0 %v8359
  %v8651 = vpop.f32.mrf.mxu0
  %v8652 = vadd.f32 %v8408, %v8651
  %v8653 = vpop.f32.mrf.mxu0
  %v8654 = vpop.f32.mrf.mxu0
  %v8655 = vadd.f32 %v8408, %v8654
  %v8656 = vpop.f32.mrf.mxu0
  %8657 = vmatprep.mubr.bf16.mxu0 0
  %8658 = vmatmul.mubr.bf16.gmra.mxu0 %v8360
  %v8659 = vpop.f32.mrf.mxu0
  %v8660 = vadd.f32 %v8408, %v8659
  %v8661 = vpop.f32.mrf.mxu0
  %v8662 = vpop.f32.mrf.mxu0
  %v8663 = vadd.f32 %v8408, %v8662
  %v8664 = vpop.f32.mrf.mxu0
  %8665 = vmatprep.mubr.bf16.mxu0 0
  %8666 = vmatmul.mubr.bf16.gmra.mxu0 %v8361
  %v8667 = vpop.f32.mrf.mxu0
  %v8668 = vadd.f32 %v8408, %v8667
  %v8669 = vpop.f32.mrf.mxu0
  %v8670 = vpop.f32.mrf.mxu0
  %v8671 = vadd.f32 %v8408, %v8670
  %v8672 = vpop.f32.mrf.mxu0
  %8673 = vmatprep.mubr.bf16.mxu0 0
  %8674 = vmatmul.mubr.bf16.gmra.mxu0 %v8362
  %v8675 = vpop.f32.mrf.mxu0
  %v8676 = vadd.f32 %v8408, %v8675
  %v8677 = vpop.f32.mrf.mxu0
  %v8678 = vpop.f32.mrf.mxu0
  %v8679 = vadd.f32 %v8408, %v8678
  %v8680 = vpop.f32.mrf.mxu0
  %8681 = vmatprep.mubr.bf16.mxu0 0
  %8682 = vmatmul.mubr.bf16.gmra.mxu0 %v8363
  %v8683 = vpop.f32.mrf.mxu0
  %v8684 = vadd.f32 %v8408, %v8683
  %v8685 = vpop.f32.mrf.mxu0
  %v8686 = vpop.f32.mrf.mxu0
  %v8687 = vadd.f32 %v8408, %v8686
  %v8688 = vpop.f32.mrf.mxu0
  %8689 = vmatprep.mubr.bf16.mxu0 0
  %8690 = vmatmul.mubr.bf16.gmra.mxu0 %v8364
  %v8691 = vpop.f32.mrf.mxu0
  %v8692 = vadd.f32 %v8408, %v8691
  %v8693 = vpop.f32.mrf.mxu0
  %v8694 = vpop.f32.mrf.mxu0
  %v8695 = vadd.f32 %v8408, %v8694
  %v8696 = vpop.f32.mrf.mxu0
  %8697 = vmatprep.mubr.bf16.mxu0 0
  %8698 = vmatmul.mubr.bf16.gmra.mxu0 %v8365
  %v8699 = vpop.f32.mrf.mxu0
  %v8700 = vadd.f32 %v8408, %v8699
  %v8701 = vpop.f32.mrf.mxu0
  %v8702 = vpop.f32.mrf.mxu0
  %v8703 = vadd.f32 %v8408, %v8702
  %v8704 = vpop.f32.mrf.mxu0
  %8705 = vmatprep.mubr.bf16.mxu0 0
  %8706 = vmatmul.mubr.bf16.gmra.mxu0 %v8366
  %v8707 = vpop.f32.mrf.mxu0
  %v8708 = vadd.f32 %v8408, %v8707
  %v8709 = vpop.f32.mrf.mxu0
  %v8710 = vpop.f32.mrf.mxu0
  %v8711 = vadd.f32 %v8408, %v8710
  %v8712 = vpop.f32.mrf.mxu0
  %8713 = vmatprep.mubr.bf16.mxu0 0
  %8714 = vmatmul.mubr.bf16.gmra.mxu0 %v8367
  %v8715 = vpop.f32.mrf.mxu0
  %v8716 = vadd.f32 %v8408, %v8715
  %v8717 = vpop.f32.mrf.mxu0
  %v8718 = vpop.f32.mrf.mxu0
  %v8719 = vadd.f32 %v8408, %v8718
  %v8720 = vpop.f32.mrf.mxu0
  %8721 = vmatprep.mubr.bf16.mxu0 0
  %8722 = vmatmul.mubr.bf16.gmra.mxu0 %v8368
  %v8723 = vpop.f32.mrf.mxu0
  %v8724 = vadd.f32 %v8408, %v8723
  %v8725 = vpop.f32.mrf.mxu0
  %v8726 = vpop.f32.mrf.mxu0
  %v8727 = vadd.f32 %v8408, %v8726
  %v8728 = vpop.f32.mrf.mxu0
  %8729 = vmatprep.mubr.bf16.mxu0 0
  %8730 = vmatmul.mubr.bf16.gmra.mxu0 %v8369
  %v8731 = vpop.f32.mrf.mxu0
  %v8732 = vadd.f32 %v8408, %v8731
  %v8733 = vpop.f32.mrf.mxu0
  %v8734 = vpop.f32.mrf.mxu0
  %v8735 = vadd.f32 %v8408, %v8734
  %v8736 = vpop.f32.mrf.mxu0
  %8737 = vmatprep.mubr.bf16.mxu0 0
  %8738 = vmatmul.mubr.bf16.gmra.mxu0 %v8370
  %v8739 = vpop.f32.mrf.mxu0
  %v8740 = vadd.f32 %v8408, %v8739
  %v8741 = vpop.f32.mrf.mxu0
  %v8742 = vpop.f32.mrf.mxu0
  %v8743 = vadd.f32 %v8408, %v8742
  %v8744 = vpop.f32.mrf.mxu0
  %8745 = vmatprep.mubr.bf16.mxu0 0
  %8746 = vmatmul.mubr.bf16.gmra.mxu0 %v8371
  %v8747 = vpop.f32.mrf.mxu0
  %v8748 = vadd.f32 %v8408, %v8747
  %v8749 = vpop.f32.mrf.mxu0
  %v8750 = vpop.f32.mrf.mxu0
  %v8751 = vadd.f32 %v8408, %v8750
  %v8752 = vpop.f32.mrf.mxu0
  %8753 = vmatprep.mubr.bf16.mxu0 0
  %8754 = vmatmul.mubr.bf16.gmra.mxu0 %v8372
  %v8755 = vpop.f32.mrf.mxu0
  %v8756 = vadd.f32 %v8408, %v8755
  %v8757 = vpop.f32.mrf.mxu0
  %v8758 = vpop.f32.mrf.mxu0
  %v8759 = vadd.f32 %v8408, %v8758
  %v8760 = vpop.f32.mrf.mxu0
  %8761 = vmatprep.mubr.bf16.mxu0 0
  %8762 = vmatmul.mubr.bf16.gmra.mxu0 %v8373
  %v8763 = vpop.f32.mrf.mxu0
  %v8764 = vadd.f32 %v8408, %v8763
  %v8765 = vpop.f32.mrf.mxu0
  %v8766 = vpop.f32.mrf.mxu0
  %v8767 = vadd.f32 %v8408, %v8766
  %v8768 = vpop.f32.mrf.mxu0
  %8769 = vmatprep.mubr.bf16.mxu0 0
  %8770 = vmatmul.mubr.bf16.gmra.mxu0 %v8374
  %v8771 = vpop.f32.mrf.mxu0
  %v8772 = vadd.f32 %v8408, %v8771
  %v8773 = vpop.f32.mrf.mxu0
  %v8774 = vpop.f32.mrf.mxu0
  %v8775 = vadd.f32 %v8408, %v8774
  %v8776 = vpop.f32.mrf.mxu0
  %8777 = vmatprep.mubr.bf16.mxu0 0
  %8778 = vmatmul.mubr.bf16.gmra.mxu0 %v8375
  %v8779 = vpop.f32.mrf.mxu0
  %v8780 = vadd.f32 %v8408, %v8779
  %v8781 = vpop.f32.mrf.mxu0
  %v8782 = vpop.f32.mrf.mxu0
  %v8783 = vadd.f32 %v8408, %v8782
  %v8784 = vpop.f32.mrf.mxu0
  %8785 = vmatprep.mubr.bf16.mxu0 0
  %8786 = vmatmul.mubr.bf16.gmra.mxu0 %v8376
  %v8787 = vpop.f32.mrf.mxu0
  %v8788 = vadd.f32 %v8408, %v8787
  %v8789 = vpop.f32.mrf.mxu0
  %v8790 = vpop.f32.mrf.mxu0
  %v8791 = vadd.f32 %v8408, %v8790
  %v8792 = vpop.f32.mrf.mxu0
  %8793 = vmatprep.mubr.bf16.mxu0 0
  %8794 = vmatmul.mubr.bf16.gmra.mxu0 %v8377
  %v8795 = vpop.f32.mrf.mxu0
  %v8796 = vadd.f32 %v8408, %v8795
  %v8797 = vpop.f32.mrf.mxu0
  %v8798 = vpop.f32.mrf.mxu0
  %v8799 = vadd.f32 %v8408, %v8798
  %v8800 = vpop.f32.mrf.mxu0
  %8801 = vmatprep.mubr.bf16.mxu0 0
  %8802 = vmatmul.mubr.bf16.gmra.mxu0 %v8378
  %v8803 = vpop.f32.mrf.mxu0
  %v8804 = vadd.f32 %v8408, %v8803
  %v8805 = vpop.f32.mrf.mxu0
  %v8806 = vpop.f32.mrf.mxu0
  %v8807 = vadd.f32 %v8408, %v8806
  %v8808 = vpop.f32.mrf.mxu0
  %8809 = vmatprep.mubr.bf16.mxu0 0
  %8810 = vmatmul.mubr.bf16.gmra.mxu0 %v8379
  %v8811 = vpop.f32.mrf.mxu0
  %v8812 = vadd.f32 %v8408, %v8811
  %v8813 = vpop.f32.mrf.mxu0
  %v8814 = vpop.f32.mrf.mxu0
  %v8815 = vadd.f32 %v8408, %v8814
  %v8816 = vpop.f32.mrf.mxu0
  %8817 = vmatprep.mubr.bf16.mxu0 0
  %8818 = vmatmul.mubr.bf16.gmra.mxu0 %v8380
  %v8819 = vpop.f32.mrf.mxu0
  %v8820 = vadd.f32 %v8408, %v8819
  %v8821 = vpop.f32.mrf.mxu0
  %v8822 = vpop.f32.mrf.mxu0
  %v8823 = vadd.f32 %v8408, %v8822
  %v8824 = vpop.f32.mrf.mxu0
  %8825 = vmatprep.mubr.bf16.mxu0 0
  %8826 = vmatmul.mubr.bf16.gmra.mxu0 %v8381
  %v8827 = vpop.f32.mrf.mxu0
  %v8828 = vadd.f32 %v8408, %v8827
  %v8829 = vpop.f32.mrf.mxu0
  %v8830 = vpop.f32.mrf.mxu0
  %v8831 = vadd.f32 %v8408, %v8830
  %v8832 = vpop.f32.mrf.mxu0
  %8833 = vmatprep.mubr.bf16.mxu0 0
  %8834 = vmatmul.mubr.bf16.gmra.mxu0 %v8382
  %v8835 = vpop.f32.mrf.mxu0
  %v8836 = vadd.f32 %v8408, %v8835
  %v8837 = vpop.f32.mrf.mxu0
  %v8838 = vpop.f32.mrf.mxu0
  %v8839 = vadd.f32 %v8408, %v8838
  %v8840 = vpop.f32.mrf.mxu0
  %8841 = vmatprep.mubr.bf16.mxu0 0
  %8842 = vmatmul.mubr.bf16.gmra.mxu0 %v8383
  %v8843 = vpop.f32.mrf.mxu0
  %v8844 = vadd.f32 %v8408, %v8843
  %v8845 = vpop.f32.mrf.mxu0
  %v8846 = vpop.f32.mrf.mxu0
  %v8847 = vadd.f32 %v8408, %v8846
  %v8848 = vpop.f32.mrf.mxu0
  %8849 = vmatprep.mubr.bf16.mxu0 0
  %8850 = vmatmul.mubr.bf16.gmra.mxu0 %v8384
  %v8851 = vpop.f32.mrf.mxu0
  %v8852 = vadd.f32 %v8408, %v8851
  %v8853 = vpop.f32.mrf.mxu0
  %v8854 = vpop.f32.mrf.mxu0
  %v8855 = vadd.f32 %v8408, %v8854
  %v8856 = vpop.f32.mrf.mxu0
  %8857 = vmatprep.mubr.bf16.mxu0 0
  %8858 = vmatmul.mubr.bf16.gmra.mxu0 %v8385
  %v8859 = vpop.f32.mrf.mxu0
  %v8860 = vadd.f32 %v8408, %v8859
  %v8861 = vpop.f32.mrf.mxu0
  %v8862 = vpop.f32.mrf.mxu0
  %v8863 = vadd.f32 %v8408, %v8862
  %v8864 = vpop.f32.mrf.mxu0
  %8865 = vmatprep.mubr.bf16.mxu0 0
  %8866 = vmatmul.mubr.bf16.gmra.mxu0 %v8386
  %v8867 = vpop.f32.mrf.mxu0
  %v8868 = vadd.f32 %v8408, %v8867
  %v8869 = vpop.f32.mrf.mxu0
  %v8870 = vpop.f32.mrf.mxu0
  %v8871 = vadd.f32 %v8408, %v8870
  %v8872 = vpop.f32.mrf.mxu0
  %8873 = vmatprep.mubr.bf16.mxu0 0
  %8874 = vmatmul.mubr.bf16.gmra.mxu0 %v8387
  %v8875 = vpop.f32.mrf.mxu0
  %v8876 = vadd.f32 %v8408, %v8875
  %v8877 = vpop.f32.mrf.mxu0
  %v8878 = vpop.f32.mrf.mxu0
  %v8879 = vadd.f32 %v8408, %v8878
  %v8880 = vpop.f32.mrf.mxu0
  %8881 = vmatprep.mubr.bf16.mxu0 0
  %8882 = vmatmul.mubr.bf16.gmra.mxu0 %v8388
  %v8883 = vpop.f32.mrf.mxu0
  %v8884 = vadd.f32 %v8408, %v8883
  %v8885 = vpop.f32.mrf.mxu0
  %v8886 = vpop.f32.mrf.mxu0
  %v8887 = vadd.f32 %v8408, %v8886
  %v8888 = vpop.f32.mrf.mxu0
  %8889 = vdwg.mxu0
  %v8890 = vsel %vm330, 1, 0
  %v8891 = vsel %vm331, 1, 0
  %v8892 = vsel %vm332, 1, 0
  %v8893 = vsel %vm333, 1, 0
  %v8894 = vsel %vm334, 1, 0
  %v8895 = vsel %vm335, 1, 0
  %v8896 = vsel %vm336, 1, 0
  %v8897 = vsel %vm337, 1, 0
  %v8898 = vsel %vm338, 1, 0
  %v8899 = vsel %vm339, 1, 0
  %v8900 = vsel %vm340, 1, 0
  %v8901 = vsel %vm341, 1, 0
  %v8902 = vsel %vm342, 1, 0
  %v8903 = vsel %vm343, 1, 0
  %v8904 = vsel %vm344, 1, 0
  %v8905 = vsel %vm345, 1, 0
  %v8906 = vsel %vm346, 1, 0
  %v8907 = vsel %vm347, 1, 0
  %v8908 = vsel %vm348, 1, 0
  %v8909 = vsel %vm349, 1, 0
  %v8910 = vsel %vm350, 1, 0
  %v8911 = vsel %vm351, 1, 0
  %v8912 = vsel %vm352, 1, 0
  %v8913 = vsel %vm353, 1, 0
  %v8914 = vsel %vm354, 1, 0
  %v8915 = vsel %vm355, 1, 0
  %v8916 = vsel %vm356, 1, 0
  %v8917 = vsel %vm357, 1, 0
  %v8918 = vsel %vm358, 1, 0
  %v8919 = vsel %vm359, 1, 0
  %v8920 = vsel %vm360, 1, 0
  %v8921 = vsel %vm361, 1, 0
  %v8922 = vsel %vm362, 1, 0
  %v8923 = vsel %vm363, 1, 0
  %v8924 = vsel %vm364, 1, 0
  %v8925 = vsel %vm365, 1, 0
  %v8926 = vsel %vm366, 1, 0
  %v8927 = vsel %vm367, 1, 0
  %v8928 = vsel %vm368, 1, 0
  %v8929 = vsel %vm369, 1, 0
  %v8930 = vsel %vm370, 1, 0
  %v8931 = vsel %vm371, 1, 0
  %v8932 = vsel %vm372, 1, 0
  %v8933 = vsel %vm373, 1, 0
  %v8934 = vsel %vm374, 1, 0
  %v8935 = vsel %vm375, 1, 0
  %v8936 = vsel %vm376, 1, 0
  %v8937 = vsel %vm377, 1, 0
  %v8938 = vsel %vm378, 1, 0
  %v8939 = vsel %vm379, 1, 0
  %v8940 = vsel %vm380, 1, 0
  %v8941 = vsel %vm381, 1, 0
  %v8942 = vsel %vm382, 1, 0
  %v8943 = vsel %vm383, 1, 0
  %v8944 = vsel %vm384, 1, 0
  %v8945 = vsel %vm385, 1, 0
  %v8946 = vsel %vm386, 1, 0
  %v8947 = vsel %vm387, 1, 0
  %v8948 = vsel %vm388, 1, 0
  %v8949 = vsel %vm389, 1, 0
  %v8950 = vsel %vm390, 1, 0
  %v8951 = vsel %vm391, 1, 0
  %v8952 = vsel %vm392, 1, 0
  %v8953 = vsel %vm393, 1, 0
  %v8954 = vsel %vm394, 1, 0
  %v8955 = vsel %vm395, 1, 0
  %v8956 = vsel %vm396, 1, 0
  %v8957 = vsel %vm397, 1, 0
  %v8958 = vsel %vm398, 1, 0
  %v8959 = vsel %vm399, 1, 0
  %v8960 = vsel %vm400, 1, 0
  %v8961 = vsel %vm401, 1, 0
  %v8962 = vsel %vm402, 1, 0
  %v8963 = vsel %vm403, 1, 0
  %v8964 = vsel %vm404, 1, 0
  %v8965 = vsel %vm405, 1, 0
  %v8966 = vsel %vm406, 1, 0
  %v8967 = vsel %vm407, 1, 0
  %v8968 = vsel %vm408, 1, 0
  %v8969 = vsel %vm409, 1, 0
  %v8970 = vsel %vm410, 1, 0
  %v8971 = vsel %vm411, 1, 0
  %v8972 = vsel %vm412, 1, 0
  %v8973 = vsel %vm413, 1, 0
  %v8974 = vsel %vm414, 1, 0
  %v8975 = vsel %vm415, 1, 0
  %v8976 = vsel %vm416, 1, 0
  %v8977 = vsel %vm417, 1, 0
  %v8978 = vsel %vm418, 1, 0
  %v8979 = vsel %vm419, 1, 0
  %v8980 = vsel %vm420, 1, 0
  %v8981 = vsel %vm421, 1, 0
  %v8982 = vsel %vm422, 1, 0
  %v8983 = vsel %vm423, 1, 0
  %v8984 = vsel %vm424, 1, 0
  %v8985 = vsel %vm425, 1, 0
  %v8986 = vsel %vm426, 1, 0
  %v8987 = vsel %vm427, 1, 0
  %v8988 = vsel %vm428, 1, 0
  %v8989 = vsel %vm429, 1, 0
  %8990 = vset.pattern.permute.xlu0 0
  %8991 = vperm.xlu0 %8990, %v8890
  %v8992 = vpop.permute.xlu0 %8991
  %8993 = vset.pattern.permute.xlu0 0
  %8994 = vperm.xlu0 %8993, %v8891
  %v8995 = vpop.permute.xlu0 %8994
  %8996 = vset.pattern.permute.xlu0 0
  %8997 = vperm.xlu0 %8996, %v8892
  %v8998 = vpop.permute.xlu0 %8997
  %8999 = vset.pattern.permute.xlu0 0
  %9000 = vperm.xlu0 %8999, %v8893
  %v9001 = vpop.permute.xlu0 %9000
  %9002 = vset.pattern.permute.xlu0 0
  %9003 = vperm.xlu0 %9002, %v8894
  %v9004 = vpop.permute.xlu0 %9003
  %9005 = vset.pattern.permute.xlu0 0
  %9006 = vperm.xlu0 %9005, %v8895
  %v9007 = vpop.permute.xlu0 %9006
  %9008 = vset.pattern.permute.xlu0 0
  %9009 = vperm.xlu0 %9008, %v8896
  %v9010 = vpop.permute.xlu0 %9009
  %9011 = vset.pattern.permute.xlu0 0
  %9012 = vperm.xlu0 %9011, %v8897
  %v9013 = vpop.permute.xlu0 %9012
  %9014 = vset.pattern.permute.xlu0 0
  %9015 = vperm.xlu0 %9014, %v8898
  %v9016 = vpop.permute.xlu0 %9015
  %9017 = vset.pattern.permute.xlu0 0
  %9018 = vperm.xlu0 %9017, %v8899
  %v9019 = vpop.permute.xlu0 %9018
  %9020 = vset.pattern.permute.xlu0 0
  %9021 = vperm.xlu0 %9020, %v8900
  %v9022 = vpop.permute.xlu0 %9021
  %9023 = vset.pattern.permute.xlu0 0
  %9024 = vperm.xlu0 %9023, %v8901
  %v9025 = vpop.permute.xlu0 %9024
  %9026 = vset.pattern.permute.xlu0 0
  %9027 = vperm.xlu0 %9026, %v8902
  %v9028 = vpop.permute.xlu0 %9027
  %9029 = vset.pattern.permute.xlu0 0
  %9030 = vperm.xlu0 %9029, %v8903
  %v9031 = vpop.permute.xlu0 %9030
  %9032 = vset.pattern.permute.xlu0 0
  %9033 = vperm.xlu0 %9032, %v8904
  %v9034 = vpop.permute.xlu0 %9033
  %9035 = vset.pattern.permute.xlu0 0
  %9036 = vperm.xlu0 %9035, %v8905
  %v9037 = vpop.permute.xlu0 %9036
  %9038 = vset.pattern.permute.xlu0 0
  %9039 = vperm.xlu0 %9038, %v8906
  %v9040 = vpop.permute.xlu0 %9039
  %9041 = vset.pattern.permute.xlu0 0
  %9042 = vperm.xlu0 %9041, %v8907
  %v9043 = vpop.permute.xlu0 %9042
  %9044 = vset.pattern.permute.xlu0 0
  %9045 = vperm.xlu0 %9044, %v8908
  %v9046 = vpop.permute.xlu0 %9045
  %9047 = vset.pattern.permute.xlu0 0
  %9048 = vperm.xlu0 %9047, %v8909
  %v9049 = vpop.permute.xlu0 %9048
  %9050 = vset.pattern.permute.xlu0 0
  %9051 = vperm.xlu0 %9050, %v8910
  %v9052 = vpop.permute.xlu0 %9051
  %9053 = vset.pattern.permute.xlu0 0
  %9054 = vperm.xlu0 %9053, %v8911
  %v9055 = vpop.permute.xlu0 %9054
  %9056 = vset.pattern.permute.xlu0 0
  %9057 = vperm.xlu0 %9056, %v8912
  %v9058 = vpop.permute.xlu0 %9057
  %9059 = vset.pattern.permute.xlu0 0
  %9060 = vperm.xlu0 %9059, %v8913
  %v9061 = vpop.permute.xlu0 %9060
  %9062 = vset.pattern.permute.xlu0 0
  %9063 = vperm.xlu0 %9062, %v8914
  %v9064 = vpop.permute.xlu0 %9063
  %9065 = vset.pattern.permute.xlu0 0
  %9066 = vperm.xlu0 %9065, %v8915
  %v9067 = vpop.permute.xlu0 %9066
  %9068 = vset.pattern.permute.xlu0 0
  %9069 = vperm.xlu0 %9068, %v8916
  %v9070 = vpop.permute.xlu0 %9069
  %9071 = vset.pattern.permute.xlu0 0
  %9072 = vperm.xlu0 %9071, %v8917
  %v9073 = vpop.permute.xlu0 %9072
  %9074 = vset.pattern.permute.xlu0 0
  %9075 = vperm.xlu0 %9074, %v8918
  %v9076 = vpop.permute.xlu0 %9075
  %9077 = vset.pattern.permute.xlu0 0
  %9078 = vperm.xlu0 %9077, %v8919
  %v9079 = vpop.permute.xlu0 %9078
  %9080 = vset.pattern.permute.xlu0 0
  %9081 = vperm.xlu0 %9080, %v8920
  %v9082 = vpop.permute.xlu0 %9081
  %9083 = vset.pattern.permute.xlu0 0
  %9084 = vperm.xlu0 %9083, %v8921
  %v9085 = vpop.permute.xlu0 %9084
  %9086 = vset.pattern.permute.xlu0 0
  %9087 = vperm.xlu0 %9086, %v8922
  %v9088 = vpop.permute.xlu0 %9087
  %9089 = vset.pattern.permute.xlu0 0
  %9090 = vperm.xlu0 %9089, %v8923
  %v9091 = vpop.permute.xlu0 %9090
  %9092 = vset.pattern.permute.xlu0 0
  %9093 = vperm.xlu0 %9092, %v8924
  %v9094 = vpop.permute.xlu0 %9093
  %9095 = vset.pattern.permute.xlu0 0
  %9096 = vperm.xlu0 %9095, %v8925
  %v9097 = vpop.permute.xlu0 %9096
  %9098 = vset.pattern.permute.xlu0 0
  %9099 = vperm.xlu0 %9098, %v8926
  %v9100 = vpop.permute.xlu0 %9099
  %9101 = vset.pattern.permute.xlu0 0
  %9102 = vperm.xlu0 %9101, %v8927
  %v9103 = vpop.permute.xlu0 %9102
  %9104 = vset.pattern.permute.xlu0 0
  %9105 = vperm.xlu0 %9104, %v8928
  %v9106 = vpop.permute.xlu0 %9105
  %9107 = vset.pattern.permute.xlu0 0
  %9108 = vperm.xlu0 %9107, %v8929
  %v9109 = vpop.permute.xlu0 %9108
  %9110 = vset.pattern.permute.xlu0 0
  %9111 = vperm.xlu0 %9110, %v8930
  %v9112 = vpop.permute.xlu0 %9111
  %9113 = vset.pattern.permute.xlu0 0
  %9114 = vperm.xlu0 %9113, %v8931
  %v9115 = vpop.permute.xlu0 %9114
  %9116 = vset.pattern.permute.xlu0 0
  %9117 = vperm.xlu0 %9116, %v8932
  %v9118 = vpop.permute.xlu0 %9117
  %9119 = vset.pattern.permute.xlu0 0
  %9120 = vperm.xlu0 %9119, %v8933
  %v9121 = vpop.permute.xlu0 %9120
  %9122 = vset.pattern.permute.xlu0 0
  %9123 = vperm.xlu0 %9122, %v8934
  %v9124 = vpop.permute.xlu0 %9123
  %9125 = vset.pattern.permute.xlu0 0
  %9126 = vperm.xlu0 %9125, %v8935
  %v9127 = vpop.permute.xlu0 %9126
  %9128 = vset.pattern.permute.xlu0 0
  %9129 = vperm.xlu0 %9128, %v8936
  %v9130 = vpop.permute.xlu0 %9129
  %9131 = vset.pattern.permute.xlu0 0
  %9132 = vperm.xlu0 %9131, %v8937
  %v9133 = vpop.permute.xlu0 %9132
  %9134 = vset.pattern.permute.xlu0 0
  %9135 = vperm.xlu0 %9134, %v8938
  %v9136 = vpop.permute.xlu0 %9135
  %9137 = vset.pattern.permute.xlu0 0
  %9138 = vperm.xlu0 %9137, %v8939
  %v9139 = vpop.permute.xlu0 %9138
  %9140 = vset.pattern.permute.xlu0 0
  %9141 = vperm.xlu0 %9140, %v8940
  %v9142 = vpop.permute.xlu0 %9141
  %9143 = vset.pattern.permute.xlu0 0
  %9144 = vperm.xlu0 %9143, %v8941
  %v9145 = vpop.permute.xlu0 %9144
  %9146 = vset.pattern.permute.xlu0 0
  %9147 = vperm.xlu0 %9146, %v8942
  %v9148 = vpop.permute.xlu0 %9147
  %9149 = vset.pattern.permute.xlu0 0
  %9150 = vperm.xlu0 %9149, %v8943
  %v9151 = vpop.permute.xlu0 %9150
  %9152 = vset.pattern.permute.xlu0 0
  %9153 = vperm.xlu0 %9152, %v8944
  %v9154 = vpop.permute.xlu0 %9153
  %9155 = vset.pattern.permute.xlu0 0
  %9156 = vperm.xlu0 %9155, %v8945
  %v9157 = vpop.permute.xlu0 %9156
  %9158 = vset.pattern.permute.xlu0 0
  %9159 = vperm.xlu0 %9158, %v8946
  %v9160 = vpop.permute.xlu0 %9159
  %9161 = vset.pattern.permute.xlu0 0
  %9162 = vperm.xlu0 %9161, %v8947
  %v9163 = vpop.permute.xlu0 %9162
  %9164 = vset.pattern.permute.xlu0 0
  %9165 = vperm.xlu0 %9164, %v8948
  %v9166 = vpop.permute.xlu0 %9165
  %9167 = vset.pattern.permute.xlu0 0
  %9168 = vperm.xlu0 %9167, %v8949
  %v9169 = vpop.permute.xlu0 %9168
  %9170 = vset.pattern.permute.xlu0 0
  %9171 = vperm.xlu0 %9170, %v8950
  %v9172 = vpop.permute.xlu0 %9171
  %9173 = vset.pattern.permute.xlu0 0
  %9174 = vperm.xlu0 %9173, %v8951
  %v9175 = vpop.permute.xlu0 %9174
  %9176 = vset.pattern.permute.xlu0 0
  %9177 = vperm.xlu0 %9176, %v8952
  %v9178 = vpop.permute.xlu0 %9177
  %9179 = vset.pattern.permute.xlu0 0
  %9180 = vperm.xlu0 %9179, %v8953
  %v9181 = vpop.permute.xlu0 %9180
  %9182 = vset.pattern.permute.xlu0 0
  %9183 = vperm.xlu0 %9182, %v8954
  %v9184 = vpop.permute.xlu0 %9183
  %9185 = vset.pattern.permute.xlu0 0
  %9186 = vperm.xlu0 %9185, %v8955
  %v9187 = vpop.permute.xlu0 %9186
  %9188 = vset.pattern.permute.xlu0 0
  %9189 = vperm.xlu0 %9188, %v8956
  %v9190 = vpop.permute.xlu0 %9189
  %9191 = vset.pattern.permute.xlu0 0
  %9192 = vperm.xlu0 %9191, %v8957
  %v9193 = vpop.permute.xlu0 %9192
  %9194 = vset.pattern.permute.xlu0 0
  %9195 = vperm.xlu0 %9194, %v8958
  %v9196 = vpop.permute.xlu0 %9195
  %9197 = vset.pattern.permute.xlu0 0
  %9198 = vperm.xlu0 %9197, %v8959
  %v9199 = vpop.permute.xlu0 %9198
  %9200 = vset.pattern.permute.xlu0 0
  %9201 = vperm.xlu0 %9200, %v8960
  %v9202 = vpop.permute.xlu0 %9201
  %9203 = vset.pattern.permute.xlu0 0
  %9204 = vperm.xlu0 %9203, %v8961
  %v9205 = vpop.permute.xlu0 %9204
  %9206 = vset.pattern.permute.xlu0 0
  %9207 = vperm.xlu0 %9206, %v8962
  %v9208 = vpop.permute.xlu0 %9207
  %9209 = vset.pattern.permute.xlu0 0
  %9210 = vperm.xlu0 %9209, %v8963
  %v9211 = vpop.permute.xlu0 %9210
  %9212 = vset.pattern.permute.xlu0 0
  %9213 = vperm.xlu0 %9212, %v8964
  %v9214 = vpop.permute.xlu0 %9213
  %9215 = vset.pattern.permute.xlu0 0
  %9216 = vperm.xlu0 %9215, %v8965
  %v9217 = vpop.permute.xlu0 %9216
  %9218 = vset.pattern.permute.xlu0 0
  %9219 = vperm.xlu0 %9218, %v8966
  %v9220 = vpop.permute.xlu0 %9219
  %9221 = vset.pattern.permute.xlu0 0
  %9222 = vperm.xlu0 %9221, %v8967
  %v9223 = vpop.permute.xlu0 %9222
  %9224 = vset.pattern.permute.xlu0 0
  %9225 = vperm.xlu0 %9224, %v8968
  %v9226 = vpop.permute.xlu0 %9225
  %9227 = vset.pattern.permute.xlu0 0
  %9228 = vperm.xlu0 %9227, %v8969
  %v9229 = vpop.permute.xlu0 %9228
  %9230 = vset.pattern.permute.xlu0 0
  %9231 = vperm.xlu0 %9230, %v8970
  %v9232 = vpop.permute.xlu0 %9231
  %9233 = vset.pattern.permute.xlu0 0
  %9234 = vperm.xlu0 %9233, %v8971
  %v9235 = vpop.permute.xlu0 %9234
  %9236 = vset.pattern.permute.xlu0 0
  %9237 = vperm.xlu0 %9236, %v8972
  %v9238 = vpop.permute.xlu0 %9237
  %9239 = vset.pattern.permute.xlu0 0
  %9240 = vperm.xlu0 %9239, %v8973
  %v9241 = vpop.permute.xlu0 %9240
  %9242 = vset.pattern.permute.xlu0 0
  %9243 = vperm.xlu0 %9242, %v8974
  %v9244 = vpop.permute.xlu0 %9243
  %9245 = vset.pattern.permute.xlu0 0
  %9246 = vperm.xlu0 %9245, %v8975
  %v9247 = vpop.permute.xlu0 %9246
  %9248 = vset.pattern.permute.xlu0 0
  %9249 = vperm.xlu0 %9248, %v8976
  %v9250 = vpop.permute.xlu0 %9249
  %9251 = vset.pattern.permute.xlu0 0
  %9252 = vperm.xlu0 %9251, %v8977
  %v9253 = vpop.permute.xlu0 %9252
  %9254 = vset.pattern.permute.xlu0 0
  %9255 = vperm.xlu0 %9254, %v8978
  %v9256 = vpop.permute.xlu0 %9255
  %9257 = vset.pattern.permute.xlu0 0
  %9258 = vperm.xlu0 %9257, %v8979
  %v9259 = vpop.permute.xlu0 %9258
  %9260 = vset.pattern.permute.xlu0 0
  %9261 = vperm.xlu0 %9260, %v8980
  %v9262 = vpop.permute.xlu0 %9261
  %9263 = vset.pattern.permute.xlu0 0
  %9264 = vperm.xlu0 %9263, %v8981
  %v9265 = vpop.permute.xlu0 %9264
  %9266 = vset.pattern.permute.xlu0 0
  %9267 = vperm.xlu0 %9266, %v8982
  %v9268 = vpop.permute.xlu0 %9267
  %9269 = vset.pattern.permute.xlu0 0
  %9270 = vperm.xlu0 %9269, %v8983
  %v9271 = vpop.permute.xlu0 %9270
  %9272 = vset.pattern.permute.xlu0 0
  %9273 = vperm.xlu0 %9272, %v8984
  %v9274 = vpop.permute.xlu0 %9273
  %9275 = vset.pattern.permute.xlu0 0
  %9276 = vperm.xlu0 %9275, %v8985
  %v9277 = vpop.permute.xlu0 %9276
  %9278 = vset.pattern.permute.xlu0 0
  %9279 = vperm.xlu0 %9278, %v8986
  %v9280 = vpop.permute.xlu0 %9279
  %9281 = vset.pattern.permute.xlu0 0
  %9282 = vperm.xlu0 %9281, %v8987
  %v9283 = vpop.permute.xlu0 %9282
  %9284 = vset.pattern.permute.xlu0 0
  %9285 = vperm.xlu0 %9284, %v8988
  %v9286 = vpop.permute.xlu0 %9285
  %9287 = vset.pattern.permute.xlu0 0
  %9288 = vperm.xlu0 %9287, %v8989
  %v9289 = vpop.permute.xlu0 %9288
  %vm9290 = vcmp.eq.s32.totalorder %v8992, 1
  %vm9291 = vcmp.eq.s32.totalorder %v8995, 1
  %vm9292 = vcmp.eq.s32.totalorder %v8998, 1
  %vm9293 = vcmp.eq.s32.totalorder %v9001, 1
  %vm9294 = vcmp.eq.s32.totalorder %v9004, 1
  %vm9295 = vcmp.eq.s32.totalorder %v9007, 1
  %vm9296 = vcmp.eq.s32.totalorder %v9010, 1
  %vm9297 = vcmp.eq.s32.totalorder %v9013, 1
  %vm9298 = vcmp.eq.s32.totalorder %v9016, 1
  %vm9299 = vcmp.eq.s32.totalorder %v9019, 1
  %vm9300 = vcmp.eq.s32.totalorder %v9022, 1
  %vm9301 = vcmp.eq.s32.totalorder %v9025, 1
  %vm9302 = vcmp.eq.s32.totalorder %v9028, 1
  %vm9303 = vcmp.eq.s32.totalorder %v9031, 1
  %vm9304 = vcmp.eq.s32.totalorder %v9034, 1
  %vm9305 = vcmp.eq.s32.totalorder %v9037, 1
  %vm9306 = vcmp.eq.s32.totalorder %v9040, 1
  %vm9307 = vcmp.eq.s32.totalorder %v9043, 1
  %vm9308 = vcmp.eq.s32.totalorder %v9046, 1
  %vm9309 = vcmp.eq.s32.totalorder %v9049, 1
  %vm9310 = vcmp.eq.s32.totalorder %v9052, 1
  %vm9311 = vcmp.eq.s32.totalorder %v9055, 1
  %vm9312 = vcmp.eq.s32.totalorder %v9058, 1
  %vm9313 = vcmp.eq.s32.totalorder %v9061, 1
  %vm9314 = vcmp.eq.s32.totalorder %v9064, 1
  %vm9315 = vcmp.eq.s32.totalorder %v9067, 1
  %vm9316 = vcmp.eq.s32.totalorder %v9070, 1
  %vm9317 = vcmp.eq.s32.totalorder %v9073, 1
  %vm9318 = vcmp.eq.s32.totalorder %v9076, 1
  %vm9319 = vcmp.eq.s32.totalorder %v9079, 1
  %vm9320 = vcmp.eq.s32.totalorder %v9082, 1
  %vm9321 = vcmp.eq.s32.totalorder %v9085, 1
  %vm9322 = vcmp.eq.s32.totalorder %v9088, 1
  %vm9323 = vcmp.eq.s32.totalorder %v9091, 1
  %vm9324 = vcmp.eq.s32.totalorder %v9094, 1
  %vm9325 = vcmp.eq.s32.totalorder %v9097, 1
  %vm9326 = vcmp.eq.s32.totalorder %v9100, 1
  %vm9327 = vcmp.eq.s32.totalorder %v9103, 1
  %vm9328 = vcmp.eq.s32.totalorder %v9106, 1
  %vm9329 = vcmp.eq.s32.totalorder %v9109, 1
  %vm9330 = vcmp.eq.s32.totalorder %v9112, 1
  %vm9331 = vcmp.eq.s32.totalorder %v9115, 1
  %vm9332 = vcmp.eq.s32.totalorder %v9118, 1
  %vm9333 = vcmp.eq.s32.totalorder %v9121, 1
  %vm9334 = vcmp.eq.s32.totalorder %v9124, 1
  %vm9335 = vcmp.eq.s32.totalorder %v9127, 1
  %vm9336 = vcmp.eq.s32.totalorder %v9130, 1
  %vm9337 = vcmp.eq.s32.totalorder %v9133, 1
  %vm9338 = vcmp.eq.s32.totalorder %v9136, 1
  %vm9339 = vcmp.eq.s32.totalorder %v9139, 1
  %vm9340 = vcmp.eq.s32.totalorder %v9142, 1
  %vm9341 = vcmp.eq.s32.totalorder %v9145, 1
  %vm9342 = vcmp.eq.s32.totalorder %v9148, 1
  %vm9343 = vcmp.eq.s32.totalorder %v9151, 1
  %vm9344 = vcmp.eq.s32.totalorder %v9154, 1
  %vm9345 = vcmp.eq.s32.totalorder %v9157, 1
  %vm9346 = vcmp.eq.s32.totalorder %v9160, 1
  %vm9347 = vcmp.eq.s32.totalorder %v9163, 1
  %vm9348 = vcmp.eq.s32.totalorder %v9166, 1
  %vm9349 = vcmp.eq.s32.totalorder %v9169, 1
  %vm9350 = vcmp.eq.s32.totalorder %v9172, 1
  %vm9351 = vcmp.eq.s32.totalorder %v9175, 1
  %vm9352 = vcmp.eq.s32.totalorder %v9178, 1
  %vm9353 = vcmp.eq.s32.totalorder %v9181, 1
  %vm9354 = vcmp.eq.s32.totalorder %v9184, 1
  %vm9355 = vcmp.eq.s32.totalorder %v9187, 1
  %vm9356 = vcmp.eq.s32.totalorder %v9190, 1
  %vm9357 = vcmp.eq.s32.totalorder %v9193, 1
  %vm9358 = vcmp.eq.s32.totalorder %v9196, 1
  %vm9359 = vcmp.eq.s32.totalorder %v9199, 1
  %vm9360 = vcmp.eq.s32.totalorder %v9202, 1
  %vm9361 = vcmp.eq.s32.totalorder %v9205, 1
  %vm9362 = vcmp.eq.s32.totalorder %v9208, 1
  %vm9363 = vcmp.eq.s32.totalorder %v9211, 1
  %vm9364 = vcmp.eq.s32.totalorder %v9214, 1
  %vm9365 = vcmp.eq.s32.totalorder %v9217, 1
  %vm9366 = vcmp.eq.s32.totalorder %v9220, 1
  %vm9367 = vcmp.eq.s32.totalorder %v9223, 1
  %vm9368 = vcmp.eq.s32.totalorder %v9226, 1
  %vm9369 = vcmp.eq.s32.totalorder %v9229, 1
  %vm9370 = vcmp.eq.s32.totalorder %v9232, 1
  %vm9371 = vcmp.eq.s32.totalorder %v9235, 1
  %vm9372 = vcmp.eq.s32.totalorder %v9238, 1
  %vm9373 = vcmp.eq.s32.totalorder %v9241, 1
  %vm9374 = vcmp.eq.s32.totalorder %v9244, 1
  %vm9375 = vcmp.eq.s32.totalorder %v9247, 1
  %vm9376 = vcmp.eq.s32.totalorder %v9250, 1
  %vm9377 = vcmp.eq.s32.totalorder %v9253, 1
  %vm9378 = vcmp.eq.s32.totalorder %v9256, 1
  %vm9379 = vcmp.eq.s32.totalorder %v9259, 1
  %vm9380 = vcmp.eq.s32.totalorder %v9262, 1
  %vm9381 = vcmp.eq.s32.totalorder %v9265, 1
  %vm9382 = vcmp.eq.s32.totalorder %v9268, 1
  %vm9383 = vcmp.eq.s32.totalorder %v9271, 1
  %vm9384 = vcmp.eq.s32.totalorder %v9274, 1
  %vm9385 = vcmp.eq.s32.totalorder %v9277, 1
  %vm9386 = vcmp.eq.s32.totalorder %v9280, 1
  %vm9387 = vcmp.eq.s32.totalorder %v9283, 1
  %vm9388 = vcmp.eq.s32.totalorder %v9286, 1
  %vm9389 = vcmp.eq.s32.totalorder %v9289, 1
  %v9390 = vsel %vm9290, %v8492, 0.0
  %v9391 = vsel %vm9291, %v8495, 0.0
  %v9392 = vsel %vm9292, %v8500, 0.0
  %v9393 = vsel %vm9293, %v8503, 0.0
  %v9394 = vsel %vm9294, %v8508, 0.0
  %v9395 = vsel %vm9295, %v8511, 0.0
  %v9396 = vsel %vm9296, %v8516, 0.0
  %v9397 = vsel %vm9297, %v8519, 0.0
  %v9398 = vsel %vm9298, %v8524, 0.0
  %v9399 = vsel %vm9299, %v8527, 0.0
  %v9400 = vsel %vm9300, %v8532, 0.0
  %v9401 = vsel %vm9301, %v8535, 0.0
  %v9402 = vsel %vm9302, %v8540, 0.0
  %v9403 = vsel %vm9303, %v8543, 0.0
  %v9404 = vsel %vm9304, %v8548, 0.0
  %v9405 = vsel %vm9305, %v8551, 0.0
  %v9406 = vsel %vm9306, %v8556, 0.0
  %v9407 = vsel %vm9307, %v8559, 0.0
  %v9408 = vsel %vm9308, %v8564, 0.0
  %v9409 = vsel %vm9309, %v8567, 0.0
  %v9410 = vsel %vm9310, %v8572, 0.0
  %v9411 = vsel %vm9311, %v8575, 0.0
  %v9412 = vsel %vm9312, %v8580, 0.0
  %v9413 = vsel %vm9313, %v8583, 0.0
  %v9414 = vsel %vm9314, %v8588, 0.0
  %v9415 = vsel %vm9315, %v8591, 0.0
  %v9416 = vsel %vm9316, %v8596, 0.0
  %v9417 = vsel %vm9317, %v8599, 0.0
  %v9418 = vsel %vm9318, %v8604, 0.0
  %v9419 = vsel %vm9319, %v8607, 0.0
  %v9420 = vsel %vm9320, %v8612, 0.0
  %v9421 = vsel %vm9321, %v8615, 0.0
  %v9422 = vsel %vm9322, %v8620, 0.0
  %v9423 = vsel %vm9323, %v8623, 0.0
  %v9424 = vsel %vm9324, %v8628, 0.0
  %v9425 = vsel %vm9325, %v8631, 0.0
  %v9426 = vsel %vm9326, %v8636, 0.0
  %v9427 = vsel %vm9327, %v8639, 0.0
  %v9428 = vsel %vm9328, %v8644, 0.0
  %v9429 = vsel %vm9329, %v8647, 0.0
  %v9430 = vsel %vm9330, %v8652, 0.0
  %v9431 = vsel %vm9331, %v8655, 0.0
  %v9432 = vsel %vm9332, %v8660, 0.0
  %v9433 = vsel %vm9333, %v8663, 0.0
  %v9434 = vsel %vm9334, %v8668, 0.0
  %v9435 = vsel %vm9335, %v8671, 0.0
  %v9436 = vsel %vm9336, %v8676, 0.0
  %v9437 = vsel %vm9337, %v8679, 0.0
  %v9438 = vsel %vm9338, %v8684, 0.0
  %v9439 = vsel %vm9339, %v8687, 0.0
  %v9440 = vsel %vm9340, %v8692, 0.0
  %v9441 = vsel %vm9341, %v8695, 0.0
  %v9442 = vsel %vm9342, %v8700, 0.0
  %v9443 = vsel %vm9343, %v8703, 0.0
  %v9444 = vsel %vm9344, %v8708, 0.0
  %v9445 = vsel %vm9345, %v8711, 0.0
  %v9446 = vsel %vm9346, %v8716, 0.0
  %v9447 = vsel %vm9347, %v8719, 0.0
  %v9448 = vsel %vm9348, %v8724, 0.0
  %v9449 = vsel %vm9349, %v8727, 0.0
  %v9450 = vsel %vm9350, %v8732, 0.0
  %v9451 = vsel %vm9351, %v8735, 0.0
  %v9452 = vsel %vm9352, %v8740, 0.0
  %v9453 = vsel %vm9353, %v8743, 0.0
  %v9454 = vsel %vm9354, %v8748, 0.0
  %v9455 = vsel %vm9355, %v8751, 0.0
  %v9456 = vsel %vm9356, %v8756, 0.0
  %v9457 = vsel %vm9357, %v8759, 0.0
  %v9458 = vsel %vm9358, %v8764, 0.0
  %v9459 = vsel %vm9359, %v8767, 0.0
  %v9460 = vsel %vm9360, %v8772, 0.0
  %v9461 = vsel %vm9361, %v8775, 0.0
  %v9462 = vsel %vm9362, %v8780, 0.0
  %v9463 = vsel %vm9363, %v8783, 0.0
  %v9464 = vsel %vm9364, %v8788, 0.0
  %v9465 = vsel %vm9365, %v8791, 0.0
  %v9466 = vsel %vm9366, %v8796, 0.0
  %v9467 = vsel %vm9367, %v8799, 0.0
  %v9468 = vsel %vm9368, %v8804, 0.0
  %v9469 = vsel %vm9369, %v8807, 0.0
  %v9470 = vsel %vm9370, %v8812, 0.0
  %v9471 = vsel %vm9371, %v8815, 0.0
  %v9472 = vsel %vm9372, %v8820, 0.0
  %v9473 = vsel %vm9373, %v8823, 0.0
  %v9474 = vsel %vm9374, %v8828, 0.0
  %v9475 = vsel %vm9375, %v8831, 0.0
  %v9476 = vsel %vm9376, %v8836, 0.0
  %v9477 = vsel %vm9377, %v8839, 0.0
  %v9478 = vsel %vm9378, %v8844, 0.0
  %v9479 = vsel %vm9379, %v8847, 0.0
  %v9480 = vsel %vm9380, %v8852, 0.0
  %v9481 = vsel %vm9381, %v8855, 0.0
  %v9482 = vsel %vm9382, %v8860, 0.0
  %v9483 = vsel %vm9383, %v8863, 0.0
  %v9484 = vsel %vm9384, %v8868, 0.0
  %v9485 = vsel %vm9385, %v8871, 0.0
  %v9486 = vsel %vm9386, %v8876, 0.0
  %v9487 = vsel %vm9387, %v8879, 0.0
  %v9488 = vsel %vm9388, %v8884, 0.0
  %v9489 = vsel %vm9389, %v8887, 0.0
  %v9490 = vadd.f32 %v9390, %v9391
  %v9491 = vadd.f32 %v9490, %v9392
  %v9492 = vadd.f32 %v9491, %v9393
  %v9493 = vadd.f32 %v9492, %v9394
  %v9494 = vadd.f32 %v9493, %v9395
  %v9495 = vadd.f32 %v9494, %v9396
  %v9496 = vadd.f32 %v9495, %v9397
  %v9497 = vadd.f32 %v9496, %v9398
  %v9498 = vadd.f32 %v9497, %v9399
  %v9499 = vadd.f32 %v9498, %v9400
  %v9500 = vadd.f32 %v9499, %v9401
  %v9501 = vadd.f32 %v9500, %v9402
  %v9502 = vadd.f32 %v9501, %v9403
  %v9503 = vadd.f32 %v9502, %v9404
  %v9504 = vadd.f32 %v9503, %v9405
  %v9505 = vadd.f32 %v9504, %v9406
  %v9506 = vadd.f32 %v9505, %v9407
  %v9507 = vadd.f32 %v9506, %v9408
  %v9508 = vadd.f32 %v9507, %v9409
  %v9509 = vadd.f32 %v9508, %v9410
  %v9510 = vadd.f32 %v9509, %v9411
  %v9511 = vadd.f32 %v9510, %v9412
  %v9512 = vadd.f32 %v9511, %v9413
  %v9513 = vadd.f32 %v9512, %v9414
  %v9514 = vadd.f32 %v9513, %v9415
  %v9515 = vadd.f32 %v9514, %v9416
  %v9516 = vadd.f32 %v9515, %v9417
  %v9517 = vadd.f32 %v9516, %v9418
  %v9518 = vadd.f32 %v9517, %v9419
  %v9519 = vadd.f32 %v9518, %v9420
  %v9520 = vadd.f32 %v9519, %v9421
  %v9521 = vadd.f32 %v9520, %v9422
  %v9522 = vadd.f32 %v9521, %v9423
  %v9523 = vadd.f32 %v9522, %v9424
  %v9524 = vadd.f32 %v9523, %v9425
  %v9525 = vadd.f32 %v9524, %v9426
  %v9526 = vadd.f32 %v9525, %v9427
  %v9527 = vadd.f32 %v9526, %v9428
  %v9528 = vadd.f32 %v9527, %v9429
  %v9529 = vadd.f32 %v9528, %v9430
  %v9530 = vadd.f32 %v9529, %v9431
  %v9531 = vadd.f32 %v9530, %v9432
  %v9532 = vadd.f32 %v9531, %v9433
  %v9533 = vadd.f32 %v9532, %v9434
  %v9534 = vadd.f32 %v9533, %v9435
  %v9535 = vadd.f32 %v9534, %v9436
  %v9536 = vadd.f32 %v9535, %v9437
  %v9537 = vadd.f32 %v9536, %v9438
  %v9538 = vadd.f32 %v9537, %v9439
  %v9539 = vadd.f32 %v9538, %v9440
  %v9540 = vadd.f32 %v9539, %v9441
  %v9541 = vadd.f32 %v9540, %v9442
  %v9542 = vadd.f32 %v9541, %v9443
  %v9543 = vadd.f32 %v9542, %v9444
  %v9544 = vadd.f32 %v9543, %v9445
  %v9545 = vadd.f32 %v9544, %v9446
  %v9546 = vadd.f32 %v9545, %v9447
  %v9547 = vadd.f32 %v9546, %v9448
  %v9548 = vadd.f32 %v9547, %v9449
  %v9549 = vadd.f32 %v9548, %v9450
  %v9550 = vadd.f32 %v9549, %v9451
  %v9551 = vadd.f32 %v9550, %v9452
  %v9552 = vadd.f32 %v9551, %v9453
  %v9553 = vadd.f32 %v9552, %v9454
  %v9554 = vadd.f32 %v9553, %v9455
  %v9555 = vadd.f32 %v9554, %v9456
  %v9556 = vadd.f32 %v9555, %v9457
  %v9557 = vadd.f32 %v9556, %v9458
  %v9558 = vadd.f32 %v9557, %v9459
  %v9559 = vadd.f32 %v9558, %v9460
  %v9560 = vadd.f32 %v9559, %v9461
  %v9561 = vadd.f32 %v9560, %v9462
  %v9562 = vadd.f32 %v9561, %v9463
  %v9563 = vadd.f32 %v9562, %v9464
  %v9564 = vadd.f32 %v9563, %v9465
  %v9565 = vadd.f32 %v9564, %v9466
  %v9566 = vadd.f32 %v9565, %v9467
  %v9567 = vadd.f32 %v9566, %v9468
  %v9568 = vadd.f32 %v9567, %v9469
  %v9569 = vadd.f32 %v9568, %v9470
  %v9570 = vadd.f32 %v9569, %v9471
  %v9571 = vadd.f32 %v9570, %v9472
  %v9572 = vadd.f32 %v9571, %v9473
  %v9573 = vadd.f32 %v9572, %v9474
  %v9574 = vadd.f32 %v9573, %v9475
  %v9575 = vadd.f32 %v9574, %v9476
  %v9576 = vadd.f32 %v9575, %v9477
  %v9577 = vadd.f32 %v9576, %v9478
  %v9578 = vadd.f32 %v9577, %v9479
  %v9579 = vadd.f32 %v9578, %v9480
  %v9580 = vadd.f32 %v9579, %v9481
  %v9581 = vadd.f32 %v9580, %v9482
  %v9582 = vadd.f32 %v9581, %v9483
  %v9583 = vadd.f32 %v9582, %v9484
  %v9584 = vadd.f32 %v9583, %v9485
  %v9585 = vadd.f32 %v9584, %v9486
  %v9586 = vadd.f32 %v9585, %v9487
  %v9587 = vadd.f32 %v9586, %v9488
  %v9588 = vadd.f32 %v9587, %v9489
  %v9589 = vrot.slane %v9588, 4
  %v9590 = vadd.f32 %v9588, %v9589
  %v9591 = vrot.slane %v9590, 2
  %v9592 = vadd.f32 %v9590, %v9591
  %v9593 = vrot.slane %v9592, 1
  %v9594 = vadd.f32 %v9592, %v9593
  %v9595 = vmul.f32 %v9594, 0.00125
  %v9596 = vsub.f32 %v9390, %v9595
  %v9597 = vsub.f32 %v9391, %v9595
  %v9598 = vsub.f32 %v9392, %v9595
  %v9599 = vsub.f32 %v9393, %v9595
  %v9600 = vsub.f32 %v9394, %v9595
  %v9601 = vsub.f32 %v9395, %v9595
  %v9602 = vsub.f32 %v9396, %v9595
  %v9603 = vsub.f32 %v9397, %v9595
  %v9604 = vsub.f32 %v9398, %v9595
  %v9605 = vsub.f32 %v9399, %v9595
  %v9606 = vsub.f32 %v9400, %v9595
  %v9607 = vsub.f32 %v9401, %v9595
  %v9608 = vsub.f32 %v9402, %v9595
  %v9609 = vsub.f32 %v9403, %v9595
  %v9610 = vsub.f32 %v9404, %v9595
  %v9611 = vsub.f32 %v9405, %v9595
  %v9612 = vsub.f32 %v9406, %v9595
  %v9613 = vsub.f32 %v9407, %v9595
  %v9614 = vsub.f32 %v9408, %v9595
  %v9615 = vsub.f32 %v9409, %v9595
  %v9616 = vsub.f32 %v9410, %v9595
  %v9617 = vsub.f32 %v9411, %v9595
  %v9618 = vsub.f32 %v9412, %v9595
  %v9619 = vsub.f32 %v9413, %v9595
  %v9620 = vsub.f32 %v9414, %v9595
  %v9621 = vsub.f32 %v9415, %v9595
  %v9622 = vsub.f32 %v9416, %v9595
  %v9623 = vsub.f32 %v9417, %v9595
  %v9624 = vsub.f32 %v9418, %v9595
  %v9625 = vsub.f32 %v9419, %v9595
  %v9626 = vsub.f32 %v9420, %v9595
  %v9627 = vsub.f32 %v9421, %v9595
  %v9628 = vsub.f32 %v9422, %v9595
  %v9629 = vsub.f32 %v9423, %v9595
  %v9630 = vsub.f32 %v9424, %v9595
  %v9631 = vsub.f32 %v9425, %v9595
  %v9632 = vsub.f32 %v9426, %v9595
  %v9633 = vsub.f32 %v9427, %v9595
  %v9634 = vsub.f32 %v9428, %v9595
  %v9635 = vsub.f32 %v9429, %v9595
  %v9636 = vsub.f32 %v9430, %v9595
  %v9637 = vsub.f32 %v9431, %v9595
  %v9638 = vsub.f32 %v9432, %v9595
  %v9639 = vsub.f32 %v9433, %v9595
  %v9640 = vsub.f32 %v9434, %v9595
  %v9641 = vsub.f32 %v9435, %v9595
  %v9642 = vsub.f32 %v9436, %v9595
  %v9643 = vsub.f32 %v9437, %v9595
  %v9644 = vsub.f32 %v9438, %v9595
  %v9645 = vsub.f32 %v9439, %v9595
  %v9646 = vsub.f32 %v9440, %v9595
  %v9647 = vsub.f32 %v9441, %v9595
  %v9648 = vsub.f32 %v9442, %v9595
  %v9649 = vsub.f32 %v9443, %v9595
  %v9650 = vsub.f32 %v9444, %v9595
  %v9651 = vsub.f32 %v9445, %v9595
  %v9652 = vsub.f32 %v9446, %v9595
  %v9653 = vsub.f32 %v9447, %v9595
  %v9654 = vsub.f32 %v9448, %v9595
  %v9655 = vsub.f32 %v9449, %v9595
  %v9656 = vsub.f32 %v9450, %v9595
  %v9657 = vsub.f32 %v9451, %v9595
  %v9658 = vsub.f32 %v9452, %v9595
  %v9659 = vsub.f32 %v9453, %v9595
  %v9660 = vsub.f32 %v9454, %v9595
  %v9661 = vsub.f32 %v9455, %v9595
  %v9662 = vsub.f32 %v9456, %v9595
  %v9663 = vsub.f32 %v9457, %v9595
  %v9664 = vsub.f32 %v9458, %v9595
  %v9665 = vsub.f32 %v9459, %v9595
  %v9666 = vsub.f32 %v9460, %v9595
  %v9667 = vsub.f32 %v9461, %v9595
  %v9668 = vsub.f32 %v9462, %v9595
  %v9669 = vsub.f32 %v9463, %v9595
  %v9670 = vsub.f32 %v9464, %v9595
  %v9671 = vsub.f32 %v9465, %v9595
  %v9672 = vsub.f32 %v9466, %v9595
  %v9673 = vsub.f32 %v9467, %v9595
  %v9674 = vsub.f32 %v9468, %v9595
  %v9675 = vsub.f32 %v9469, %v9595
  %v9676 = vsub.f32 %v9470, %v9595
  %v9677 = vsub.f32 %v9471, %v9595
  %v9678 = vsub.f32 %v9472, %v9595
  %v9679 = vsub.f32 %v9473, %v9595
  %v9680 = vsub.f32 %v9474, %v9595
  %v9681 = vsub.f32 %v9475, %v9595
  %v9682 = vsub.f32 %v9476, %v9595
  %v9683 = vsub.f32 %v9477, %v9595
  %v9684 = vsub.f32 %v9478, %v9595
  %v9685 = vsub.f32 %v9479, %v9595
  %v9686 = vsub.f32 %v9480, %v9595
  %v9687 = vsub.f32 %v9481, %v9595
  %v9688 = vsub.f32 %v9482, %v9595
  %v9689 = vsub.f32 %v9483, %v9595
  %v9690 = vsub.f32 %v9484, %v9595
  %v9691 = vsub.f32 %v9485, %v9595
  %v9692 = vsub.f32 %v9486, %v9595
  %v9693 = vsub.f32 %v9487, %v9595
  %v9694 = vsub.f32 %v9488, %v9595
  %v9695 = vsub.f32 %v9489, %v9595
  %v9696 = vsel %vm9290, %v9596, 0.0
  %v9697 = vsel %vm9291, %v9597, 0.0
  %v9698 = vsel %vm9292, %v9598, 0.0
  %v9699 = vsel %vm9293, %v9599, 0.0
  %v9700 = vsel %vm9294, %v9600, 0.0
  %v9701 = vsel %vm9295, %v9601, 0.0
  %v9702 = vsel %vm9296, %v9602, 0.0
  %v9703 = vsel %vm9297, %v9603, 0.0
  %v9704 = vsel %vm9298, %v9604, 0.0
  %v9705 = vsel %vm9299, %v9605, 0.0
  %v9706 = vsel %vm9300, %v9606, 0.0
  %v9707 = vsel %vm9301, %v9607, 0.0
  %v9708 = vsel %vm9302, %v9608, 0.0
  %v9709 = vsel %vm9303, %v9609, 0.0
  %v9710 = vsel %vm9304, %v9610, 0.0
  %v9711 = vsel %vm9305, %v9611, 0.0
  %v9712 = vsel %vm9306, %v9612, 0.0
  %v9713 = vsel %vm9307, %v9613, 0.0
  %v9714 = vsel %vm9308, %v9614, 0.0
  %v9715 = vsel %vm9309, %v9615, 0.0
  %v9716 = vsel %vm9310, %v9616, 0.0
  %v9717 = vsel %vm9311, %v9617, 0.0
  %v9718 = vsel %vm9312, %v9618, 0.0
  %v9719 = vsel %vm9313, %v9619, 0.0
  %v9720 = vsel %vm9314, %v9620, 0.0
  %v9721 = vsel %vm9315, %v9621, 0.0
  %v9722 = vsel %vm9316, %v9622, 0.0
  %v9723 = vsel %vm9317, %v9623, 0.0
  %v9724 = vsel %vm9318, %v9624, 0.0
  %v9725 = vsel %vm9319, %v9625, 0.0
  %v9726 = vsel %vm9320, %v9626, 0.0
  %v9727 = vsel %vm9321, %v9627, 0.0
  %v9728 = vsel %vm9322, %v9628, 0.0
  %v9729 = vsel %vm9323, %v9629, 0.0
  %v9730 = vsel %vm9324, %v9630, 0.0
  %v9731 = vsel %vm9325, %v9631, 0.0
  %v9732 = vsel %vm9326, %v9632, 0.0
  %v9733 = vsel %vm9327, %v9633, 0.0
  %v9734 = vsel %vm9328, %v9634, 0.0
  %v9735 = vsel %vm9329, %v9635, 0.0
  %v9736 = vsel %vm9330, %v9636, 0.0
  %v9737 = vsel %vm9331, %v9637, 0.0
  %v9738 = vsel %vm9332, %v9638, 0.0
  %v9739 = vsel %vm9333, %v9639, 0.0
  %v9740 = vsel %vm9334, %v9640, 0.0
  %v9741 = vsel %vm9335, %v9641, 0.0
  %v9742 = vsel %vm9336, %v9642, 0.0
  %v9743 = vsel %vm9337, %v9643, 0.0
  %v9744 = vsel %vm9338, %v9644, 0.0
  %v9745 = vsel %vm9339, %v9645, 0.0
  %v9746 = vsel %vm9340, %v9646, 0.0
  %v9747 = vsel %vm9341, %v9647, 0.0
  %v9748 = vsel %vm9342, %v9648, 0.0
  %v9749 = vsel %vm9343, %v9649, 0.0
  %v9750 = vsel %vm9344, %v9650, 0.0
  %v9751 = vsel %vm9345, %v9651, 0.0
  %v9752 = vsel %vm9346, %v9652, 0.0
  %v9753 = vsel %vm9347, %v9653, 0.0
  %v9754 = vsel %vm9348, %v9654, 0.0
  %v9755 = vsel %vm9349, %v9655, 0.0
  %v9756 = vsel %vm9350, %v9656, 0.0
  %v9757 = vsel %vm9351, %v9657, 0.0
  %v9758 = vsel %vm9352, %v9658, 0.0
  %v9759 = vsel %vm9353, %v9659, 0.0
  %v9760 = vsel %vm9354, %v9660, 0.0
  %v9761 = vsel %vm9355, %v9661, 0.0
  %v9762 = vsel %vm9356, %v9662, 0.0
  %v9763 = vsel %vm9357, %v9663, 0.0
  %v9764 = vsel %vm9358, %v9664, 0.0
  %v9765 = vsel %vm9359, %v9665, 0.0
  %v9766 = vsel %vm9360, %v9666, 0.0
  %v9767 = vsel %vm9361, %v9667, 0.0
  %v9768 = vsel %vm9362, %v9668, 0.0
  %v9769 = vsel %vm9363, %v9669, 0.0
  %v9770 = vsel %vm9364, %v9670, 0.0
  %v9771 = vsel %vm9365, %v9671, 0.0
  %v9772 = vsel %vm9366, %v9672, 0.0
  %v9773 = vsel %vm9367, %v9673, 0.0
  %v9774 = vsel %vm9368, %v9674, 0.0
  %v9775 = vsel %vm9369, %v9675, 0.0
  %v9776 = vsel %vm9370, %v9676, 0.0
  %v9777 = vsel %vm9371, %v9677, 0.0
  %v9778 = vsel %vm9372, %v9678, 0.0
  %v9779 = vsel %vm9373, %v9679, 0.0
  %v9780 = vsel %vm9374, %v9680, 0.0
  %v9781 = vsel %vm9375, %v9681, 0.0
  %v9782 = vsel %vm9376, %v9682, 0.0
  %v9783 = vsel %vm9377, %v9683, 0.0
  %v9784 = vsel %vm9378, %v9684, 0.0
  %v9785 = vsel %vm9379, %v9685, 0.0
  %v9786 = vsel %vm9380, %v9686, 0.0
  %v9787 = vsel %vm9381, %v9687, 0.0
  %v9788 = vsel %vm9382, %v9688, 0.0
  %v9789 = vsel %vm9383, %v9689, 0.0
  %v9790 = vsel %vm9384, %v9690, 0.0
  %v9791 = vsel %vm9385, %v9691, 0.0
  %v9792 = vsel %vm9386, %v9692, 0.0
  %v9793 = vsel %vm9387, %v9693, 0.0
  %v9794 = vsel %vm9388, %v9694, 0.0
  %v9795 = vsel %vm9389, %v9695, 0.0
  %v9796 = vmul.f32 %v9696, %v9696
  %v9797 = vmul.f32 %v9697, %v9697
  %v9798 = vmul.f32 %v9698, %v9698
  %v9799 = vmul.f32 %v9699, %v9699
  %v9800 = vmul.f32 %v9700, %v9700
  %v9801 = vmul.f32 %v9701, %v9701
  %v9802 = vmul.f32 %v9702, %v9702
  %v9803 = vmul.f32 %v9703, %v9703
  %v9804 = vmul.f32 %v9704, %v9704
  %v9805 = vmul.f32 %v9705, %v9705
  %v9806 = vmul.f32 %v9706, %v9706
  %v9807 = vmul.f32 %v9707, %v9707
  %v9808 = vmul.f32 %v9708, %v9708
  %v9809 = vmul.f32 %v9709, %v9709
  %v9810 = vmul.f32 %v9710, %v9710
  %v9811 = vmul.f32 %v9711, %v9711
  %v9812 = vmul.f32 %v9712, %v9712
  %v9813 = vmul.f32 %v9713, %v9713
  %v9814 = vmul.f32 %v9714, %v9714
  %v9815 = vmul.f32 %v9715, %v9715
  %v9816 = vmul.f32 %v9716, %v9716
  %v9817 = vmul.f32 %v9717, %v9717
  %v9818 = vmul.f32 %v9718, %v9718
  %v9819 = vmul.f32 %v9719, %v9719
  %v9820 = vmul.f32 %v9720, %v9720
  %v9821 = vmul.f32 %v9721, %v9721
  %v9822 = vmul.f32 %v9722, %v9722
  %v9823 = vmul.f32 %v9723, %v9723
  %v9824 = vmul.f32 %v9724, %v9724
  %v9825 = vmul.f32 %v9725, %v9725
  %v9826 = vmul.f32 %v9726, %v9726
  %v9827 = vmul.f32 %v9727, %v9727
  %v9828 = vmul.f32 %v9728, %v9728
  %v9829 = vmul.f32 %v9729, %v9729
  %v9830 = vmul.f32 %v9730, %v9730
  %v9831 = vmul.f32 %v9731, %v9731
  %v9832 = vmul.f32 %v9732, %v9732
  %v9833 = vmul.f32 %v9733, %v9733
  %v9834 = vmul.f32 %v9734, %v9734
  %v9835 = vmul.f32 %v9735, %v9735
  %v9836 = vmul.f32 %v9736, %v9736
  %v9837 = vmul.f32 %v9737, %v9737
  %v9838 = vmul.f32 %v9738, %v9738
  %v9839 = vmul.f32 %v9739, %v9739
  %v9840 = vmul.f32 %v9740, %v9740
  %v9841 = vmul.f32 %v9741, %v9741
  %v9842 = vmul.f32 %v9742, %v9742
  %v9843 = vmul.f32 %v9743, %v9743
  %v9844 = vmul.f32 %v9744, %v9744
  %v9845 = vmul.f32 %v9745, %v9745
  %v9846 = vmul.f32 %v9746, %v9746
  %v9847 = vmul.f32 %v9747, %v9747
  %v9848 = vmul.f32 %v9748, %v9748
  %v9849 = vmul.f32 %v9749, %v9749
  %v9850 = vmul.f32 %v9750, %v9750
  %v9851 = vmul.f32 %v9751, %v9751
  %v9852 = vmul.f32 %v9752, %v9752
  %v9853 = vmul.f32 %v9753, %v9753
  %v9854 = vmul.f32 %v9754, %v9754
  %v9855 = vmul.f32 %v9755, %v9755
  %v9856 = vmul.f32 %v9756, %v9756
  %v9857 = vmul.f32 %v9757, %v9757
  %v9858 = vmul.f32 %v9758, %v9758
  %v9859 = vmul.f32 %v9759, %v9759
  %v9860 = vmul.f32 %v9760, %v9760
  %v9861 = vmul.f32 %v9761, %v9761
  %v9862 = vmul.f32 %v9762, %v9762
  %v9863 = vmul.f32 %v9763, %v9763
  %v9864 = vmul.f32 %v9764, %v9764
  %v9865 = vmul.f32 %v9765, %v9765
  %v9866 = vmul.f32 %v9766, %v9766
  %v9867 = vmul.f32 %v9767, %v9767
  %v9868 = vmul.f32 %v9768, %v9768
  %v9869 = vmul.f32 %v9769, %v9769
  %v9870 = vmul.f32 %v9770, %v9770
  %v9871 = vmul.f32 %v9771, %v9771
  %v9872 = vmul.f32 %v9772, %v9772
  %v9873 = vmul.f32 %v9773, %v9773
  %v9874 = vmul.f32 %v9774, %v9774
  %v9875 = vmul.f32 %v9775, %v9775
  %v9876 = vmul.f32 %v9776, %v9776
  %v9877 = vmul.f32 %v9777, %v9777
  %v9878 = vmul.f32 %v9778, %v9778
  %v9879 = vmul.f32 %v9779, %v9779
  %v9880 = vmul.f32 %v9780, %v9780
  %v9881 = vmul.f32 %v9781, %v9781
  %v9882 = vmul.f32 %v9782, %v9782
  %v9883 = vmul.f32 %v9783, %v9783
  %v9884 = vmul.f32 %v9784, %v9784
  %v9885 = vmul.f32 %v9785, %v9785
  %v9886 = vmul.f32 %v9786, %v9786
  %v9887 = vmul.f32 %v9787, %v9787
  %v9888 = vmul.f32 %v9788, %v9788
  %v9889 = vmul.f32 %v9789, %v9789
  %v9890 = vmul.f32 %v9790, %v9790
  %v9891 = vmul.f32 %v9791, %v9791
  %v9892 = vmul.f32 %v9792, %v9792
  %v9893 = vmul.f32 %v9793, %v9793
  %v9894 = vmul.f32 %v9794, %v9794
  %v9895 = vmul.f32 %v9795, %v9795
  %v9896 = vadd.f32 %v9796, %v9797
  %v9897 = vadd.f32 %v9896, %v9798
  %v9898 = vadd.f32 %v9897, %v9799
  %v9899 = vadd.f32 %v9898, %v9800
  %v9900 = vadd.f32 %v9899, %v9801
  %v9901 = vadd.f32 %v9900, %v9802
  %v9902 = vadd.f32 %v9901, %v9803
  %v9903 = vadd.f32 %v9902, %v9804
  %v9904 = vadd.f32 %v9903, %v9805
  %v9905 = vadd.f32 %v9904, %v9806
  %v9906 = vadd.f32 %v9905, %v9807
  %v9907 = vadd.f32 %v9906, %v9808
  %v9908 = vadd.f32 %v9907, %v9809
  %v9909 = vadd.f32 %v9908, %v9810
  %v9910 = vadd.f32 %v9909, %v9811
  %v9911 = vadd.f32 %v9910, %v9812
  %v9912 = vadd.f32 %v9911, %v9813
  %v9913 = vadd.f32 %v9912, %v9814
  %v9914 = vadd.f32 %v9913, %v9815
  %v9915 = vadd.f32 %v9914, %v9816
  %v9916 = vadd.f32 %v9915, %v9817
  %v9917 = vadd.f32 %v9916, %v9818
  %v9918 = vadd.f32 %v9917, %v9819
  %v9919 = vadd.f32 %v9918, %v9820
  %v9920 = vadd.f32 %v9919, %v9821
  %v9921 = vadd.f32 %v9920, %v9822
  %v9922 = vadd.f32 %v9921, %v9823
  %v9923 = vadd.f32 %v9922, %v9824
  %v9924 = vadd.f32 %v9923, %v9825
  %v9925 = vadd.f32 %v9924, %v9826
  %v9926 = vadd.f32 %v9925, %v9827
  %v9927 = vadd.f32 %v9926, %v9828
  %v9928 = vadd.f32 %v9927, %v9829
  %v9929 = vadd.f32 %v9928, %v9830
  %v9930 = vadd.f32 %v9929, %v9831
  %v9931 = vadd.f32 %v9930, %v9832
  %v9932 = vadd.f32 %v9931, %v9833
  %v9933 = vadd.f32 %v9932, %v9834
  %v9934 = vadd.f32 %v9933, %v9835
  %v9935 = vadd.f32 %v9934, %v9836
  %v9936 = vadd.f32 %v9935, %v9837
  %v9937 = vadd.f32 %v9936, %v9838
  %v9938 = vadd.f32 %v9937, %v9839
  %v9939 = vadd.f32 %v9938, %v9840
  %v9940 = vadd.f32 %v9939, %v9841
  %v9941 = vadd.f32 %v9940, %v9842
  %v9942 = vadd.f32 %v9941, %v9843
  %v9943 = vadd.f32 %v9942, %v9844
  %v9944 = vadd.f32 %v9943, %v9845
  %v9945 = vadd.f32 %v9944, %v9846
  %v9946 = vadd.f32 %v9945, %v9847
  %v9947 = vadd.f32 %v9946, %v9848
  %v9948 = vadd.f32 %v9947, %v9849
  %v9949 = vadd.f32 %v9948, %v9850
  %v9950 = vadd.f32 %v9949, %v9851
  %v9951 = vadd.f32 %v9950, %v9852
  %v9952 = vadd.f32 %v9951, %v9853
  %v9953 = vadd.f32 %v9952, %v9854
  %v9954 = vadd.f32 %v9953, %v9855
  %v9955 = vadd.f32 %v9954, %v9856
  %v9956 = vadd.f32 %v9955, %v9857
  %v9957 = vadd.f32 %v9956, %v9858
  %v9958 = vadd.f32 %v9957, %v9859
  %v9959 = vadd.f32 %v9958, %v9860
  %v9960 = vadd.f32 %v9959, %v9861
  %v9961 = vadd.f32 %v9960, %v9862
  %v9962 = vadd.f32 %v9961, %v9863
  %v9963 = vadd.f32 %v9962, %v9864
  %v9964 = vadd.f32 %v9963, %v9865
  %v9965 = vadd.f32 %v9964, %v9866
  %v9966 = vadd.f32 %v9965, %v9867
  %v9967 = vadd.f32 %v9966, %v9868
  %v9968 = vadd.f32 %v9967, %v9869
  %v9969 = vadd.f32 %v9968, %v9870
  %v9970 = vadd.f32 %v9969, %v9871
  %v9971 = vadd.f32 %v9970, %v9872
  %v9972 = vadd.f32 %v9971, %v9873
  %v9973 = vadd.f32 %v9972, %v9874
  %v9974 = vadd.f32 %v9973, %v9875
  %v9975 = vadd.f32 %v9974, %v9876
  %v9976 = vadd.f32 %v9975, %v9877
  %v9977 = vadd.f32 %v9976, %v9878
  %v9978 = vadd.f32 %v9977, %v9879
  %v9979 = vadd.f32 %v9978, %v9880
  %v9980 = vadd.f32 %v9979, %v9881
  %v9981 = vadd.f32 %v9980, %v9882
  %v9982 = vadd.f32 %v9981, %v9883
  %v9983 = vadd.f32 %v9982, %v9884
  %v9984 = vadd.f32 %v9983, %v9885
  %v9985 = vadd.f32 %v9984, %v9886
  %v9986 = vadd.f32 %v9985, %v9887
  %v9987 = vadd.f32 %v9986, %v9888
  %v9988 = vadd.f32 %v9987, %v9889
  %v9989 = vadd.f32 %v9988, %v9890
  %v9990 = vadd.f32 %v9989, %v9891
  %v9991 = vadd.f32 %v9990, %v9892
  %v9992 = vadd.f32 %v9991, %v9893
  %v9993 = vadd.f32 %v9992, %v9894
  %v9994 = vadd.f32 %v9993, %v9895
  %v9995 = vrot.slane %v9994, 4
  %v9996 = vadd.f32 %v9994, %v9995
  %v9997 = vrot.slane %v9996, 2
  %v9998 = vadd.f32 %v9996, %v9997
  %v9999 = vrot.slane %v9998, 1
  %v10000 = vadd.f32 %v9998, %v9999
  %v10001 = vmul.f32 %v10000, 0.00125
  %v10002 = vadd.f32 %v10001, 1e-05
  %v10003 = vrsqrt.pop %v10002
  %v10004 = vmul.f32 %v431, %v10003
  %v10005 = vmul.f32 %v9595, %v10004
  %v10007 = vrot.slane %v10005, 7
  %v10009 = vsub.f32 %v431, %v10007
  %v10010 = vlaneseq
  %v10011 = vshrl.u32 %v10010, 7
  %v10012 = vsub.s32 5, %v10011
  %v10013 = vrot.slane %v10004, %v10012
  %v10014 = vmul.f32 %v9390, %v10013
  %v10015 = vmul.f32 %v9391, %v10013
  %v10016 = vmul.f32 %v9392, %v10013
  %v10017 = vmul.f32 %v9393, %v10013
  %v10018 = vmul.f32 %v9394, %v10013
  %v10019 = vmul.f32 %v9395, %v10013
  %v10020 = vmul.f32 %v9396, %v10013
  %v10021 = vmul.f32 %v9397, %v10013
  %v10022 = vmul.f32 %v9398, %v10013
  %v10023 = vmul.f32 %v9399, %v10013
  %v10024 = vmul.f32 %v9400, %v10013
  %v10025 = vmul.f32 %v9401, %v10013
  %v10026 = vmul.f32 %v9402, %v10013
  %v10027 = vmul.f32 %v9403, %v10013
  %v10028 = vmul.f32 %v9404, %v10013
  %v10029 = vmul.f32 %v9405, %v10013
  %v10030 = vmul.f32 %v9406, %v10013
  %v10031 = vmul.f32 %v9407, %v10013
  %v10032 = vmul.f32 %v9408, %v10013
  %v10033 = vmul.f32 %v9409, %v10013
  %v10034 = vmul.f32 %v9410, %v10013
  %v10035 = vmul.f32 %v9411, %v10013
  %v10036 = vmul.f32 %v9412, %v10013
  %v10037 = vmul.f32 %v9413, %v10013
  %v10038 = vmul.f32 %v9414, %v10013
  %v10039 = vmul.f32 %v9415, %v10013
  %v10040 = vmul.f32 %v9416, %v10013
  %v10041 = vmul.f32 %v9417, %v10013
  %v10042 = vmul.f32 %v9418, %v10013
  %v10043 = vmul.f32 %v9419, %v10013
  %v10044 = vmul.f32 %v9420, %v10013
  %v10045 = vmul.f32 %v9421, %v10013
  %v10046 = vmul.f32 %v9422, %v10013
  %v10047 = vmul.f32 %v9423, %v10013
  %v10048 = vmul.f32 %v9424, %v10013
  %v10049 = vmul.f32 %v9425, %v10013
  %v10050 = vmul.f32 %v9426, %v10013
  %v10051 = vmul.f32 %v9427, %v10013
  %v10052 = vmul.f32 %v9428, %v10013
  %v10053 = vmul.f32 %v9429, %v10013
  %v10054 = vmul.f32 %v9430, %v10013
  %v10055 = vmul.f32 %v9431, %v10013
  %v10056 = vmul.f32 %v9432, %v10013
  %v10057 = vmul.f32 %v9433, %v10013
  %v10058 = vmul.f32 %v9434, %v10013
  %v10059 = vmul.f32 %v9435, %v10013
  %v10060 = vmul.f32 %v9436, %v10013
  %v10061 = vmul.f32 %v9437, %v10013
  %v10062 = vmul.f32 %v9438, %v10013
  %v10063 = vmul.f32 %v9439, %v10013
  %v10064 = vmul.f32 %v9440, %v10013
  %v10065 = vmul.f32 %v9441, %v10013
  %v10066 = vmul.f32 %v9442, %v10013
  %v10067 = vmul.f32 %v9443, %v10013
  %v10068 = vmul.f32 %v9444, %v10013
  %v10069 = vmul.f32 %v9445, %v10013
  %v10070 = vmul.f32 %v9446, %v10013
  %v10071 = vmul.f32 %v9447, %v10013
  %v10072 = vmul.f32 %v9448, %v10013
  %v10073 = vmul.f32 %v9449, %v10013
  %v10074 = vmul.f32 %v9450, %v10013
  %v10075 = vmul.f32 %v9451, %v10013
  %v10076 = vmul.f32 %v9452, %v10013
  %v10077 = vmul.f32 %v9453, %v10013
  %v10078 = vmul.f32 %v9454, %v10013
  %v10079 = vmul.f32 %v9455, %v10013
  %v10080 = vmul.f32 %v9456, %v10013
  %v10081 = vmul.f32 %v9457, %v10013
  %v10082 = vmul.f32 %v9458, %v10013
  %v10083 = vmul.f32 %v9459, %v10013
  %v10084 = vmul.f32 %v9460, %v10013
  %v10085 = vmul.f32 %v9461, %v10013
  %v10086 = vmul.f32 %v9462, %v10013
  %v10087 = vmul.f32 %v9463, %v10013
  %v10088 = vmul.f32 %v9464, %v10013
  %v10089 = vmul.f32 %v9465, %v10013
  %v10090 = vmul.f32 %v9466, %v10013
  %v10091 = vmul.f32 %v9467, %v10013
  %v10092 = vmul.f32 %v9468, %v10013
  %v10093 = vmul.f32 %v9469, %v10013
  %v10094 = vmul.f32 %v9470, %v10013
  %v10095 = vmul.f32 %v9471, %v10013
  %v10096 = vmul.f32 %v9472, %v10013
  %v10097 = vmul.f32 %v9473, %v10013
  %v10098 = vmul.f32 %v9474, %v10013
  %v10099 = vmul.f32 %v9475, %v10013
  %v10100 = vmul.f32 %v9476, %v10013
  %v10101 = vmul.f32 %v9477, %v10013
  %v10102 = vmul.f32 %v9478, %v10013
  %v10103 = vmul.f32 %v9479, %v10013
  %v10104 = vmul.f32 %v9480, %v10013
  %v10105 = vmul.f32 %v9481, %v10013
  %v10106 = vmul.f32 %v9482, %v10013
  %v10107 = vmul.f32 %v9483, %v10013
  %v10108 = vmul.f32 %v9484, %v10013
  %v10109 = vmul.f32 %v9485, %v10013
  %v10110 = vmul.f32 %v9486, %v10013
  %v10111 = vmul.f32 %v9487, %v10013
  %v10112 = vmul.f32 %v9488, %v10013
  %v10113 = vmul.f32 %v9489, %v10013
  %v10114 = vlaneseq
  %v10115 = vshrl.u32 %v10114, 7
  %v10116 = vsub.s32 6, %v10115
  %v10117 = vrot.slane %v10009, %v10116
  %v10118 = vadd.f32 %v10014, %v10117
  %v10119 = vadd.f32 %v10015, %v10117
  %v10120 = vadd.f32 %v10016, %v10117
  %v10121 = vadd.f32 %v10017, %v10117
  %v10122 = vadd.f32 %v10018, %v10117
  %v10123 = vadd.f32 %v10019, %v10117
  %v10124 = vadd.f32 %v10020, %v10117
  %v10125 = vadd.f32 %v10021, %v10117
  %v10126 = vadd.f32 %v10022, %v10117
  %v10127 = vadd.f32 %v10023, %v10117
  %v10128 = vadd.f32 %v10024, %v10117
  %v10129 = vadd.f32 %v10025, %v10117
  %v10130 = vadd.f32 %v10026, %v10117
  %v10131 = vadd.f32 %v10027, %v10117
  %v10132 = vadd.f32 %v10028, %v10117
  %v10133 = vadd.f32 %v10029, %v10117
  %v10134 = vadd.f32 %v10030, %v10117
  %v10135 = vadd.f32 %v10031, %v10117
  %v10136 = vadd.f32 %v10032, %v10117
  %v10137 = vadd.f32 %v10033, %v10117
  %v10138 = vadd.f32 %v10034, %v10117
  %v10139 = vadd.f32 %v10035, %v10117
  %v10140 = vadd.f32 %v10036, %v10117
  %v10141 = vadd.f32 %v10037, %v10117
  %v10142 = vadd.f32 %v10038, %v10117
  %v10143 = vadd.f32 %v10039, %v10117
  %v10144 = vadd.f32 %v10040, %v10117
  %v10145 = vadd.f32 %v10041, %v10117
  %v10146 = vadd.f32 %v10042, %v10117
  %v10147 = vadd.f32 %v10043, %v10117
  %v10148 = vadd.f32 %v10044, %v10117
  %v10149 = vadd.f32 %v10045, %v10117
  %v10150 = vadd.f32 %v10046, %v10117
  %v10151 = vadd.f32 %v10047, %v10117
  %v10152 = vadd.f32 %v10048, %v10117
  %v10153 = vadd.f32 %v10049, %v10117
  %v10154 = vadd.f32 %v10050, %v10117
  %v10155 = vadd.f32 %v10051, %v10117
  %v10156 = vadd.f32 %v10052, %v10117
  %v10157 = vadd.f32 %v10053, %v10117
  %v10158 = vadd.f32 %v10054, %v10117
  %v10159 = vadd.f32 %v10055, %v10117
  %v10160 = vadd.f32 %v10056, %v10117
  %v10161 = vadd.f32 %v10057, %v10117
  %v10162 = vadd.f32 %v10058, %v10117
  %v10163 = vadd.f32 %v10059, %v10117
  %v10164 = vadd.f32 %v10060, %v10117
  %v10165 = vadd.f32 %v10061, %v10117
  %v10166 = vadd.f32 %v10062, %v10117
  %v10167 = vadd.f32 %v10063, %v10117
  %v10168 = vadd.f32 %v10064, %v10117
  %v10169 = vadd.f32 %v10065, %v10117
  %v10170 = vadd.f32 %v10066, %v10117
  %v10171 = vadd.f32 %v10067, %v10117
  %v10172 = vadd.f32 %v10068, %v10117
  %v10173 = vadd.f32 %v10069, %v10117
  %v10174 = vadd.f32 %v10070, %v10117
  %v10175 = vadd.f32 %v10071, %v10117
  %v10176 = vadd.f32 %v10072, %v10117
  %v10177 = vadd.f32 %v10073, %v10117
  %v10178 = vadd.f32 %v10074, %v10117
  %v10179 = vadd.f32 %v10075, %v10117
  %v10180 = vadd.f32 %v10076, %v10117
  %v10181 = vadd.f32 %v10077, %v10117
  %v10182 = vadd.f32 %v10078, %v10117
  %v10183 = vadd.f32 %v10079, %v10117
  %v10184 = vadd.f32 %v10080, %v10117
  %v10185 = vadd.f32 %v10081, %v10117
  %v10186 = vadd.f32 %v10082, %v10117
  %v10187 = vadd.f32 %v10083, %v10117
  %v10188 = vadd.f32 %v10084, %v10117
  %v10189 = vadd.f32 %v10085, %v10117
  %v10190 = vadd.f32 %v10086, %v10117
  %v10191 = vadd.f32 %v10087, %v10117
  %v10192 = vadd.f32 %v10088, %v10117
  %v10193 = vadd.f32 %v10089, %v10117
  %v10194 = vadd.f32 %v10090, %v10117
  %v10195 = vadd.f32 %v10091, %v10117
  %v10196 = vadd.f32 %v10092, %v10117
  %v10197 = vadd.f32 %v10093, %v10117
  %v10198 = vadd.f32 %v10094, %v10117
  %v10199 = vadd.f32 %v10095, %v10117
  %v10200 = vadd.f32 %v10096, %v10117
  %v10201 = vadd.f32 %v10097, %v10117
  %v10202 = vadd.f32 %v10098, %v10117
  %v10203 = vadd.f32 %v10099, %v10117
  %v10204 = vadd.f32 %v10100, %v10117
  %v10205 = vadd.f32 %v10101, %v10117
  %v10206 = vadd.f32 %v10102, %v10117
  %v10207 = vadd.f32 %v10103, %v10117
  %v10208 = vadd.f32 %v10104, %v10117
  %v10209 = vadd.f32 %v10105, %v10117
  %v10210 = vadd.f32 %v10106, %v10117
  %v10211 = vadd.f32 %v10107, %v10117
  %v10212 = vadd.f32 %v10108, %v10117
  %v10213 = vadd.f32 %v10109, %v10117
  %v10214 = vadd.f32 %v10110, %v10117
  %v10215 = vadd.f32 %v10111, %v10117
  %v10216 = vadd.f32 %v10112, %v10117
  %v10217 = vadd.f32 %v10113, %v10117
  %v10218 = vmax.f32 %v10118, 0.0
  %v10219 = vmax.f32 %v10119, 0.0
  %v10220 = vmax.f32 %v10120, 0.0
  %v10221 = vmax.f32 %v10121, 0.0
  %v10222 = vmax.f32 %v10122, 0.0
  %v10223 = vmax.f32 %v10123, 0.0
  %v10224 = vmax.f32 %v10124, 0.0
  %v10225 = vmax.f32 %v10125, 0.0
  %v10226 = vmax.f32 %v10126, 0.0
  %v10227 = vmax.f32 %v10127, 0.0
  %v10228 = vmax.f32 %v10128, 0.0
  %v10229 = vmax.f32 %v10129, 0.0
  %v10230 = vmax.f32 %v10130, 0.0
  %v10231 = vmax.f32 %v10131, 0.0
  %v10232 = vmax.f32 %v10132, 0.0
  %v10233 = vmax.f32 %v10133, 0.0
  %v10234 = vmax.f32 %v10134, 0.0
  %v10235 = vmax.f32 %v10135, 0.0
  %v10236 = vmax.f32 %v10136, 0.0
  %v10237 = vmax.f32 %v10137, 0.0
  %v10238 = vmax.f32 %v10138, 0.0
  %v10239 = vmax.f32 %v10139, 0.0
  %v10240 = vmax.f32 %v10140, 0.0
  %v10241 = vmax.f32 %v10141, 0.0
  %v10242 = vmax.f32 %v10142, 0.0
  %v10243 = vmax.f32 %v10143, 0.0
  %v10244 = vmax.f32 %v10144, 0.0
  %v10245 = vmax.f32 %v10145, 0.0
  %v10246 = vmax.f32 %v10146, 0.0
  %v10247 = vmax.f32 %v10147, 0.0
  %v10248 = vmax.f32 %v10148, 0.0
  %v10249 = vmax.f32 %v10149, 0.0
  %v10250 = vmax.f32 %v10150, 0.0
  %v10251 = vmax.f32 %v10151, 0.0
  %v10252 = vmax.f32 %v10152, 0.0
  %v10253 = vmax.f32 %v10153, 0.0
  %v10254 = vmax.f32 %v10154, 0.0
  %v10255 = vmax.f32 %v10155, 0.0
  %v10256 = vmax.f32 %v10156, 0.0
  %v10257 = vmax.f32 %v10157, 0.0
  %v10258 = vmax.f32 %v10158, 0.0
  %v10259 = vmax.f32 %v10159, 0.0
  %v10260 = vmax.f32 %v10160, 0.0
  %v10261 = vmax.f32 %v10161, 0.0
  %v10262 = vmax.f32 %v10162, 0.0
  %v10263 = vmax.f32 %v10163, 0.0
  %v10264 = vmax.f32 %v10164, 0.0
  %v10265 = vmax.f32 %v10165, 0.0
  %v10266 = vmax.f32 %v10166, 0.0
  %v10267 = vmax.f32 %v10167, 0.0
  %v10268 = vmax.f32 %v10168, 0.0
  %v10269 = vmax.f32 %v10169, 0.0
  %v10270 = vmax.f32 %v10170, 0.0
  %v10271 = vmax.f32 %v10171, 0.0
  %v10272 = vmax.f32 %v10172, 0.0
  %v10273 = vmax.f32 %v10173, 0.0
  %v10274 = vmax.f32 %v10174, 0.0
  %v10275 = vmax.f32 %v10175, 0.0
  %v10276 = vmax.f32 %v10176, 0.0
  %v10277 = vmax.f32 %v10177, 0.0
  %v10278 = vmax.f32 %v10178, 0.0
  %v10279 = vmax.f32 %v10179, 0.0
  %v10280 = vmax.f32 %v10180, 0.0
  %v10281 = vmax.f32 %v10181, 0.0
  %v10282 = vmax.f32 %v10182, 0.0
  %v10283 = vmax.f32 %v10183, 0.0
  %v10284 = vmax.f32 %v10184, 0.0
  %v10285 = vmax.f32 %v10185, 0.0
  %v10286 = vmax.f32 %v10186, 0.0
  %v10287 = vmax.f32 %v10187, 0.0
  %v10288 = vmax.f32 %v10188, 0.0
  %v10289 = vmax.f32 %v10189, 0.0
  %v10290 = vmax.f32 %v10190, 0.0
  %v10291 = vmax.f32 %v10191, 0.0
  %v10292 = vmax.f32 %v10192, 0.0
  %v10293 = vmax.f32 %v10193, 0.0
  %v10294 = vmax.f32 %v10194, 0.0
  %v10295 = vmax.f32 %v10195, 0.0
  %v10296 = vmax.f32 %v10196, 0.0
  %v10297 = vmax.f32 %v10197, 0.0
  %v10298 = vmax.f32 %v10198, 0.0
  %v10299 = vmax.f32 %v10199, 0.0
  %v10300 = vmax.f32 %v10200, 0.0
  %v10301 = vmax.f32 %v10201, 0.0
  %v10302 = vmax.f32 %v10202, 0.0
  %v10303 = vmax.f32 %v10203, 0.0
  %v10304 = vmax.f32 %v10204, 0.0
  %v10305 = vmax.f32 %v10205, 0.0
  %v10306 = vmax.f32 %v10206, 0.0
  %v10307 = vmax.f32 %v10207, 0.0
  %v10308 = vmax.f32 %v10208, 0.0
  %v10309 = vmax.f32 %v10209, 0.0
  %v10310 = vmax.f32 %v10210, 0.0
  %v10311 = vmax.f32 %v10211, 0.0
  %v10312 = vmax.f32 %v10212, 0.0
  %v10313 = vmax.f32 %v10213, 0.0
  %v10314 = vmax.f32 %v10214, 0.0
  %v10315 = vmax.f32 %v10215, 0.0
  %v10316 = vmax.f32 %v10216, 0.0
  %v10317 = vmax.f32 %v10217, 0.0
  %v10318 = vsel %vm9290, %v10218, 0.0
  %v10319 = vsel %vm9291, %v10219, 0.0
  %v10320 = vsel %vm9292, %v10220, 0.0
  %v10321 = vsel %vm9293, %v10221, 0.0
  %v10322 = vsel %vm9294, %v10222, 0.0
  %v10323 = vsel %vm9295, %v10223, 0.0
  %v10324 = vsel %vm9296, %v10224, 0.0
  %v10325 = vsel %vm9297, %v10225, 0.0
  %v10326 = vsel %vm9298, %v10226, 0.0
  %v10327 = vsel %vm9299, %v10227, 0.0
  %v10328 = vsel %vm9300, %v10228, 0.0
  %v10329 = vsel %vm9301, %v10229, 0.0
  %v10330 = vsel %vm9302, %v10230, 0.0
  %v10331 = vsel %vm9303, %v10231, 0.0
  %v10332 = vsel %vm9304, %v10232, 0.0
  %v10333 = vsel %vm9305, %v10233, 0.0
  %v10334 = vsel %vm9306, %v10234, 0.0
  %v10335 = vsel %vm9307, %v10235, 0.0
  %v10336 = vsel %vm9308, %v10236, 0.0
  %v10337 = vsel %vm9309, %v10237, 0.0
  %v10338 = vsel %vm9310, %v10238, 0.0
  %v10339 = vsel %vm9311, %v10239, 0.0
  %v10340 = vsel %vm9312, %v10240, 0.0
  %v10341 = vsel %vm9313, %v10241, 0.0
  %v10342 = vsel %vm9314, %v10242, 0.0
  %v10343 = vsel %vm9315, %v10243, 0.0
  %v10344 = vsel %vm9316, %v10244, 0.0
  %v10345 = vsel %vm9317, %v10245, 0.0
  %v10346 = vsel %vm9318, %v10246, 0.0
  %v10347 = vsel %vm9319, %v10247, 0.0
  %v10348 = vsel %vm9320, %v10248, 0.0
  %v10349 = vsel %vm9321, %v10249, 0.0
  %v10350 = vsel %vm9322, %v10250, 0.0
  %v10351 = vsel %vm9323, %v10251, 0.0
  %v10352 = vsel %vm9324, %v10252, 0.0
  %v10353 = vsel %vm9325, %v10253, 0.0
  %v10354 = vsel %vm9326, %v10254, 0.0
  %v10355 = vsel %vm9327, %v10255, 0.0
  %v10356 = vsel %vm9328, %v10256, 0.0
  %v10357 = vsel %vm9329, %v10257, 0.0
  %v10358 = vsel %vm9330, %v10258, 0.0
  %v10359 = vsel %vm9331, %v10259, 0.0
  %v10360 = vsel %vm9332, %v10260, 0.0
  %v10361 = vsel %vm9333, %v10261, 0.0
  %v10362 = vsel %vm9334, %v10262, 0.0
  %v10363 = vsel %vm9335, %v10263, 0.0
  %v10364 = vsel %vm9336, %v10264, 0.0
  %v10365 = vsel %vm9337, %v10265, 0.0
  %v10366 = vsel %vm9338, %v10266, 0.0
  %v10367 = vsel %vm9339, %v10267, 0.0
  %v10368 = vsel %vm9340, %v10268, 0.0
  %v10369 = vsel %vm9341, %v10269, 0.0
  %v10370 = vsel %vm9342, %v10270, 0.0
  %v10371 = vsel %vm9343, %v10271, 0.0
  %v10372 = vsel %vm9344, %v10272, 0.0
  %v10373 = vsel %vm9345, %v10273, 0.0
  %v10374 = vsel %vm9346, %v10274, 0.0
  %v10375 = vsel %vm9347, %v10275, 0.0
  %v10376 = vsel %vm9348, %v10276, 0.0
  %v10377 = vsel %vm9349, %v10277, 0.0
  %v10378 = vsel %vm9350, %v10278, 0.0
  %v10379 = vsel %vm9351, %v10279, 0.0
  %v10380 = vsel %vm9352, %v10280, 0.0
  %v10381 = vsel %vm9353, %v10281, 0.0
  %v10382 = vsel %vm9354, %v10282, 0.0
  %v10383 = vsel %vm9355, %v10283, 0.0
  %v10384 = vsel %vm9356, %v10284, 0.0
  %v10385 = vsel %vm9357, %v10285, 0.0
  %v10386 = vsel %vm9358, %v10286, 0.0
  %v10387 = vsel %vm9359, %v10287, 0.0
  %v10388 = vsel %vm9360, %v10288, 0.0
  %v10389 = vsel %vm9361, %v10289, 0.0
  %v10390 = vsel %vm9362, %v10290, 0.0
  %v10391 = vsel %vm9363, %v10291, 0.0
  %v10392 = vsel %vm9364, %v10292, 0.0
  %v10393 = vsel %vm9365, %v10293, 0.0
  %v10394 = vsel %vm9366, %v10294, 0.0
  %v10395 = vsel %vm9367, %v10295, 0.0
  %v10396 = vsel %vm9368, %v10296, 0.0
  %v10397 = vsel %vm9369, %v10297, 0.0
  %v10398 = vsel %vm9370, %v10298, 0.0
  %v10399 = vsel %vm9371, %v10299, 0.0
  %v10400 = vsel %vm9372, %v10300, 0.0
  %v10401 = vsel %vm9373, %v10301, 0.0
  %v10402 = vsel %vm9374, %v10302, 0.0
  %v10403 = vsel %vm9375, %v10303, 0.0
  %v10404 = vsel %vm9376, %v10304, 0.0
  %v10405 = vsel %vm9377, %v10305, 0.0
  %v10406 = vsel %vm9378, %v10306, 0.0
  %v10407 = vsel %vm9379, %v10307, 0.0
  %v10408 = vsel %vm9380, %v10308, 0.0
  %v10409 = vsel %vm9381, %v10309, 0.0
  %v10410 = vsel %vm9382, %v10310, 0.0
  %v10411 = vsel %vm9383, %v10311, 0.0
  %v10412 = vsel %vm9384, %v10312, 0.0
  %v10413 = vsel %vm9385, %v10313, 0.0
  %v10414 = vsel %vm9386, %v10314, 0.0
  %v10415 = vsel %vm9387, %v10315, 0.0
  %v10416 = vsel %vm9388, %v10316, 0.0
  %v10417 = vsel %vm9389, %v10317, 0.0
  %10418 = vst [vmem:[%s8] sm:$0xff] %v10318
  %10419 = vst [vmem:[%s8 + $0x8] sm:$0xff] %v10319
  %10420 = vst [vmem:[%s8 + $0x10] sm:$0xff] %v10320
  %10421 = vst [vmem:[%s8 + $0x18] sm:$0xff] %v10321
  %10422 = vst [vmem:[%s8 + $0x20] sm:$0xff] %v10322
  %10423 = vst [vmem:[%s8 + $0x28] sm:$0xff] %v10323
  %10424 = vst [vmem:[%s8 + $0x30] sm:$0xff] %v10324
  %10425 = vst [vmem:[%s8 + $0x38] sm:$0xff] %v10325
  %10426 = vst [vmem:[%s8 + $0x40] sm:$0xff] %v10326
  %10427 = vst [vmem:[%s8 + $0x48] sm:$0xff] %v10327
  %10428 = vst [vmem:[%s8 + $0x50] sm:$0xff] %v10328
  %10429 = vst [vmem:[%s8 + $0x58] sm:$0xff] %v10329
  %10430 = vst [vmem:[%s8 + $0x60] sm:$0xff] %v10330
  %10431 = vst [vmem:[%s8 + $0x68] sm:$0xff] %v10331
  %10432 = vst [vmem:[%s8 + $0x70] sm:$0xff] %v10332
  %10433 = vst [vmem:[%s8 + $0x78] sm:$0xff] %v10333
  %10434 = vst [vmem:[%s8 + $0x80] sm:$0xff] %v10334
  %10435 = vst [vmem:[%s8 + $0x88] sm:$0xff] %v10335
  %10436 = vst [vmem:[%s8 + $0x90] sm:$0xff] %v10336
  %10437 = vst [vmem:[%s8 + $0x98] sm:$0xff] %v10337
  %10438 = vst [vmem:[%s8 + $0xa0] sm:$0xff] %v10338
  %10439 = vst [vmem:[%s8 + $0xa8] sm:$0xff] %v10339
  %10440 = vst [vmem:[%s8 + $0xb0] sm:$0xff] %v10340
  %10441 = vst [vmem:[%s8 + $0xb8] sm:$0xff] %v10341
  %10442 = vst [vmem:[%s8 + $0xc0] sm:$0xff] %v10342
  %10443 = vst [vmem:[%s8 + $0xc8] sm:$0xff] %v10343
  %10444 = vst [vmem:[%s8 + $0xd0] sm:$0xff] %v10344
  %10445 = vst [vmem:[%s8 + $0xd8] sm:$0xff] %v10345
  %10446 = vst [vmem:[%s8 + $0xe0] sm:$0xff] %v10346
  %10447 = vst [vmem:[%s8 + $0xe8] sm:$0xff] %v10347
  %10448 = vst [vmem:[%s8 + $0xf0] sm:$0xff] %v10348
  %10449 = vst [vmem:[%s8 + $0xf8] sm:$0xff] %v10349
  %10450 = vst [vmem:[%s8 + $0x100] sm:$0xff] %v10350
  %10451 = vst [vmem:[%s8 + $0x108] sm:$0xff] %v10351
  %10452 = vst [vmem:[%s8 + $0x110] sm:$0xff] %v10352
  %10453 = vst [vmem:[%s8 + $0x118] sm:$0xff] %v10353
  %10454 = vst [vmem:[%s8 + $0x120] sm:$0xff] %v10354
  %10455 = vst [vmem:[%s8 + $0x128] sm:$0xff] %v10355
  %10456 = vst [vmem:[%s8 + $0x130] sm:$0xff] %v10356
  %10457 = vst [vmem:[%s8 + $0x138] sm:$0xff] %v10357
  %10458 = vst [vmem:[%s8 + $0x140] sm:$0xff] %v10358
  %10459 = vst [vmem:[%s8 + $0x148] sm:$0xff] %v10359
  %10460 = vst [vmem:[%s8 + $0x150] sm:$0xff] %v10360
  %10461 = vst [vmem:[%s8 + $0x158] sm:$0xff] %v10361
  %10462 = vst [vmem:[%s8 + $0x160] sm:$0xff] %v10362
  %10463 = vst [vmem:[%s8 + $0x168] sm:$0xff] %v10363
  %10464 = vst [vmem:[%s8 + $0x170] sm:$0xff] %v10364
  %10465 = vst [vmem:[%s8 + $0x178] sm:$0xff] %v10365
  %10466 = vst [vmem:[%s8 + $0x180] sm:$0xff] %v10366
  %10467 = vst [vmem:[%s8 + $0x188] sm:$0xff] %v10367
  %10468 = vst [vmem:[%s8 + $0x190] sm:$0xff] %v10368
  %10469 = vst [vmem:[%s8 + $0x198] sm:$0xff] %v10369
  %10470 = vst [vmem:[%s8 + $0x1a0] sm:$0xff] %v10370
  %10471 = vst [vmem:[%s8 + $0x1a8] sm:$0xff] %v10371
  %10472 = vst [vmem:[%s8 + $0x1b0] sm:$0xff] %v10372
  %10473 = vst [vmem:[%s8 + $0x1b8] sm:$0xff] %v10373
  %10474 = vst [vmem:[%s8 + $0x1c0] sm:$0xff] %v10374
  %10475 = vst [vmem:[%s8 + $0x1c8] sm:$0xff] %v10375
  %10476 = vst [vmem:[%s8 + $0x1d0] sm:$0xff] %v10376
  %10477 = vst [vmem:[%s8 + $0x1d8] sm:$0xff] %v10377
  %10478 = vst [vmem:[%s8 + $0x1e0] sm:$0xff] %v10378
  %10479 = vst [vmem:[%s8 + $0x1e8] sm:$0xff] %v10379
  %10480 = vst [vmem:[%s8 + $0x1f0] sm:$0xff] %v10380
  %10481 = vst [vmem:[%s8 + $0x1f8] sm:$0xff] %v10381
  %10482 = vst [vmem:[%s8 + $0x200] sm:$0xff] %v10382
  %10483 = vst [vmem:[%s8 + $0x208] sm:$0xff] %v10383
  %10484 = vst [vmem:[%s8 + $0x210] sm:$0xff] %v10384
  %10485 = vst [vmem:[%s8 + $0x218] sm:$0xff] %v10385
  %10486 = vst [vmem:[%s8 + $0x220] sm:$0xff] %v10386
  %10487 = vst [vmem:[%s8 + $0x228] sm:$0xff] %v10387
  %10488 = vst [vmem:[%s8 + $0x230] sm:$0xff] %v10388
  %10489 = vst [vmem:[%s8 + $0x238] sm:$0xff] %v10389
  %10490 = vst [vmem:[%s8 + $0x240] sm:$0xff] %v10390
  %10491 = vst [vmem:[%s8 + $0x248] sm:$0xff] %v10391
  %10492 = vst [vmem:[%s8 + $0x250] sm:$0xff] %v10392
  %10493 = vst [vmem:[%s8 + $0x258] sm:$0xff] %v10393
  %10494 = vst [vmem:[%s8 + $0x260] sm:$0xff] %v10394
  %10495 = vst [vmem:[%s8 + $0x268] sm:$0xff] %v10395
  %10496 = vst [vmem:[%s8 + $0x270] sm:$0xff] %v10396
  %10497 = vst [vmem:[%s8 + $0x278] sm:$0xff] %v10397
  %10498 = vst [vmem:[%s8 + $0x280] sm:$0xff] %v10398
  %10499 = vst [vmem:[%s8 + $0x288] sm:$0xff] %v10399
  %10500 = vst [vmem:[%s8 + $0x290] sm:$0xff] %v10400
  %10501 = vst [vmem:[%s8 + $0x298] sm:$0xff] %v10401
  %10502 = vst [vmem:[%s8 + $0x2a0] sm:$0xff] %v10402
  %10503 = vst [vmem:[%s8 + $0x2a8] sm:$0xff] %v10403
  %10504 = vst [vmem:[%s8 + $0x2b0] sm:$0xff] %v10404
  %10505 = vst [vmem:[%s8 + $0x2b8] sm:$0xff] %v10405
  %10506 = vst [vmem:[%s8 + $0x2c0] sm:$0xff] %v10406
  %10507 = vst [vmem:[%s8 + $0x2c8] sm:$0xff] %v10407
  %10508 = vst [vmem:[%s8 + $0x2d0] sm:$0xff] %v10408
  %10509 = vst [vmem:[%s8 + $0x2d8] sm:$0xff] %v10409
  %10510 = vst [vmem:[%s8 + $0x2e0] sm:$0xff] %v10410
  %10511 = vst [vmem:[%s8 + $0x2e8] sm:$0xff] %v10411
  %10512 = vst [vmem:[%s8 + $0x2f0] sm:$0xff] %v10412
  %10513 = vst [vmem:[%s8 + $0x2f8] sm:$0xff] %v10413
  %10514 = vst [vmem:[%s8 + $0x300] sm:$0xff] %v10414
  %10515 = vst [vmem:[%s8 + $0x308] sm:$0xff] %v10415
  %10516 = vst [vmem:[%s8 + $0x310] sm:$0xff] %v10416
  %10517 = vst [vmem:[%s8 + $0x318] sm:$0xff] %v10417
  // Predicated region
  $region34: #{_lambda_.1} parent=0 // pred_check
    _
  $region35: #{_lambda_.1} parent=0 // pred_check_branch
    %10519 = sbr.rel (0) target = $region37
  $region36: #{_lambda_.1} parent=0 // pred_region
    _
  $region37: #{_lambda_.1} parent=0 // pred_fallthru
    _
  // Predicated region
  $region38: #{_lambda_.1} parent=0 // pred_check
    _
  $region39: #{_lambda_.1} parent=0 // pred_check_branch
    %10521 = sbr.rel (0) target = $region41
  $region40: #{_lambda_.1} parent=0 // pred_region
    _
  $region41: #{_lambda_.1} parent=0 // pred_fallthru
    _

</llo_original>
